<compile_context>
chip_gen: v7x
topology: tpu7x:2x2x1
jax: 0.10.0
libtpu: 0.0.40
codegen_flags: <defaults>
</compile_context>

<pallas_src>
import functools
import math

import numpy as np
import jax
import jax.numpy as jnp
from jax.experimental import pallas as pl
from jax.experimental.pallas import tpu as pltpu


def _silu(y):
    return y * (1.0 / (1.0 + jnp.exp(-y)))


# --------------------------------------------------------------------------
# Window / mask helpers (static layout math)
# --------------------------------------------------------------------------
def _window_partition(x, ws):
    """(B, H, W, C) -> (B * nW, ws, ws, C)."""
    B, H, W, C = x.shape
    x = x.reshape(B, H // ws, ws, W // ws, ws, C)
    x = jnp.transpose(x, (0, 1, 3, 2, 4, 5))
    return x.reshape(-1, ws, ws, C)


def _window_reverse(wins, ws, H, W):
    """(B * nW, ws, ws, C) -> (B, H, W, C)."""
    B = wins.shape[0] // ((H // ws) * (W // ws))
    x = wins.reshape(B, H // ws, W // ws, ws, ws, -1)
    x = jnp.transpose(x, (0, 1, 3, 2, 4, 5))
    return x.reshape(B, H, W, -1)


def _relative_position_index_np(ws):
    coords = np.stack(np.meshgrid(np.arange(ws), np.arange(ws), indexing="ij"))
    cf = coords.reshape(2, -1)
    rel = (cf[:, :, None] - cf[:, None, :]).transpose(1, 2, 0).astype(np.int64)
    rel[:, :, 0] += ws - 1
    rel[:, :, 1] += ws - 1
    rel[:, :, 0] *= 2 * ws - 1
    return rel.sum(-1)                                   # (N, N)


def _attention_mask_np(Hp, Wp, ws, shift):
    """Shifted-window attention mask, (nW, N, N) with 0 / -100."""
    img = np.zeros((1, Hp, Wp, 1), np.float32)
    cnt = 0
    for hs in (slice(0, -ws), slice(-ws, -shift), slice(-shift, None)):
        for wsl in (slice(0, -ws), slice(-ws, -shift), slice(-shift, None)):
            img[:, hs, wsl, :] = cnt
            cnt += 1
    m = img.reshape(1, Hp // ws, ws, Wp // ws, ws, 1)
    m = m.transpose(0, 1, 3, 2, 4, 5).reshape(-1, ws * ws)       # (nW, N)
    am = m[:, None, :] - m[:, :, None]
    return np.where(am != 0, np.float32(-100.0), np.float32(0.0))


# --------------------------------------------------------------------------
# Fused per-layer Pallas kernel
# --------------------------------------------------------------------------
def _swin_layer_kernel(*refs, nh, has_mask, has_conv):
    """One full SwinTransformerLayer (optionally preceded by the 1x1 Conv+BN+SiLU)
    on a block of WB attention windows.

    Ref order: xw (WB,N,Cin), rel (nh,N,N), [mask (WB,N,N)],
               [wconv (Cin,C), bconv (1,C)],
               n1g, n1b (1,C), wqkv (C,3C), bqkv (1,3C), wproj (C,C), bproj (1,C),
               n2g, n2b (1,C), wfc1 (C,hid), bfc1 (1,hid), wfc2 (hid,C), bfc2 (1,C),
               out (WB,N,C)
    """
    it = iter(refs)
    xw_ref = next(it)
    rel_ref = next(it)
    mask_ref = next(it) if has_mask else None
    wconv_ref = next(it) if has_conv else None
    bconv_ref = next(it) if has_conv else None
    n1g_ref, n1b_ref = next(it), next(it)
    wqkv_ref, bqkv_ref = next(it), next(it)
    wproj_ref, bproj_ref = next(it), next(it)
    n2g_ref, n2b_ref = next(it), next(it)
    wfc1_ref, bfc1_ref = next(it), next(it)
    wfc2_ref, bfc2_ref = next(it), next(it)
    o_ref = next(it)

    WB, N, Cin = xw_ref.shape
    C = o_ref.shape[-1]
    hd = C // nh
    M = WB * N
    eps = 1e-5
    f32, bf16 = jnp.float32, jnp.bfloat16

    def mm(a, b):  # MXU matmul: bf16 operands, f32 accumulation
        return jnp.dot(a.astype(bf16), b.astype(bf16), preferred_element_type=f32)

    def layer_norm(z, g_ref, b_ref):  # (M, C), f32 VPU math
        mu = jnp.mean(z, axis=-1, keepdims=True)
        zc = z - mu
        var = jnp.mean(zc * zc, axis=-1, keepdims=True)
        return zc * jax.lax.rsqrt(var + eps) * g_ref[...] + b_ref[...]

    xin = xw_ref[...].astype(f32).reshape(M, Cin)
    if has_conv:                      # fused Conv(c1,c2,k=1) + BN (pre-folded) + SiLU
        x = _silu(mm(xin, wconv_ref[...]) + bconv_ref[...])        # (M, C)
    else:
        x = xin                                                    # (M, C), Cin == C

    # ---- window attention ----
    xn = layer_norm(x, n1g_ref, n1b_ref)
    qkv = mm(xn, wqkv_ref[...]) + bqkv_ref[...]                    # (M, 3C), one wide matmul

    heads = []
    for h in range(nh):                                            # static unroll over heads
        q = qkv[:, h * hd:(h + 1) * hd].reshape(WB, N, hd)         # qk scale already folded
        k = qkv[:, C + h * hd:C + (h + 1) * hd].reshape(WB, N, hd)
        v = qkv[:, 2 * C + h * hd:2 * C + (h + 1) * hd].reshape(WB, N, hd)

        logits = jnp.einsum('wnd,wmd->wnm', q.astype(bf16), k.astype(bf16),
                            preferred_element_type=f32)            # (WB, N, N)
        logits = logits + rel_ref[h]                               # resident rel-pos bias
        if has_mask:
            logits = logits + mask_ref[...]                        # shift mask per window
        logits = logits - jnp.max(logits, axis=-1, keepdims=True)
        p = jnp.exp(logits)
        p = p * pl.reciprocal(jnp.sum(p, axis=-1, keepdims=True), approx=True)
        heads.append(jnp.einsum('wnm,wmd->wnd', p.astype(bf16), v.astype(bf16),
                                preferred_element_type=f32))       # (WB, N, hd)

    o = jnp.concatenate(heads, axis=-1).reshape(M, C)              # concat heads on lanes
    x = x + mm(o, wproj_ref[...]) + bproj_ref[...]                 # single (M,C)@(C,C) proj

    # ---- MLP ----
    xn2 = layer_norm(x, n2g_ref, n2b_ref)
    h1 = _silu(mm(xn2, wfc1_ref[...]) + bfc1_ref[...])
    x = x + mm(h1, wfc2_ref[...]) + bfc2_ref[...]

    o_ref[...] = x.reshape(WB, N, C).astype(o_ref.dtype)


# --------------------------------------------------------------------------
# Wrappers
# --------------------------------------------------------------------------
def _pick_window_block(TW, nW, N, shifted, target_tokens=2048):
    """Largest WB dividing TW with WB*N <= target, grid >= 2, mask-tileable."""
    best = 1
    for wb in range(1, TW + 1):
        if TW % wb:
            continue
        if wb * N > target_tokens:
            continue
        if TW >= 2 and TW // wb < 2:        # keep >= 2 grid steps (v7x dual-TC)
            continue
        if shifted and not (nW % wb == 0 or wb % nW == 0):
            continue
        best = wb
    return best


def swin_layer_forward(x_nhwc, lp, num_heads, ws, conv=None):
    shift = lp['shift_size']
    B, H, W, Cin = x_nhwc.shape
    C = lp['wproj'].shape[0]
    hidden = lp['wfc1'].shape[1]
    pad_b = (ws - H % ws) % ws
    pad_r = (ws - W % ws) % ws
    xp = x_nhwc
    if pad_b or pad_r:
        xp = jnp.pad(x_nhwc, ((0, 0), (0, pad_b), (0, pad_r), (0, 0)))
    Hp, Wp = H + pad_b, W + pad_r
    N = ws * ws
    nW = (Hp // ws) * (Wp // ws)

    xs = jnp.roll(xp, shift=(-shift, -shift), axis=(1, 2)) if shift > 0 else xp
    xw = _window_partition(xs, ws).reshape(-1, N, Cin)              # (TW, N, Cin)
    TW = xw.shape[0]

    has_mask = shift > 0
    has_conv = conv is not None
    WB = _pick_window_block(TW, nW, N, shifted=has_mask)
    grid = (TW // WB,)

    # fold the qk scale into the q columns of the fused qkv weight / bias
    hd = C // num_heads
    qscale = jnp.concatenate([jnp.full((C,), hd ** -0.5, jnp.float32),
                              jnp.ones((2 * C,), jnp.float32)])
    wqkv = lp['wqkv'] * qscale[None, :]
    bqkv = (lp['bqkv'] * qscale).reshape(1, 3 * C)

    win_in_spec = pl.BlockSpec((WB, N, Cin), lambda i: (i, 0, 0))
    win_out_spec = pl.BlockSpec((WB, N, C), lambda i: (i, 0, 0))

    def full(shape):
        return pl.BlockSpec(shape, lambda i: tuple(0 for _ in shape))

    in_specs = [win_in_spec, full((num_heads, N, N))]
    args = [xw, lp['rel_bias']]

    if has_mask:
        mask = jnp.asarray(_attention_mask_np(Hp, Wp, ws, shift))   # (nW, N, N)
        if WB <= nW:
            n_mask_blocks = nW // WB
            mask_spec = pl.BlockSpec((WB, N, N),
                                     lambda i: (i % n_mask_blocks, 0, 0))
        else:                                    # WB spans whole images: resident tiled mask
            mask = jnp.tile(mask, (WB // nW, 1, 1))
            mask_spec = pl.BlockSpec((WB, N, N), lambda i: (0, 0, 0))
        in_specs.append(mask_spec)
        args.append(mask)

    if has_conv:
        wc, bc = conv
        in_specs += [full((Cin, C)), full((1, C))]
        args += [wc, bc.reshape(1, C)]

    in_specs += [
        full((1, C)), full((1, C)),
        full((C, 3 * C)), full((1, 3 * C)),
        full((C, C)), full((1, C)),
        full((1, C)), full((1, C)),
        full((C, hidden)), full((1, hidden)),
        full((hidden, C)), full((1, C)),
    ]
    args += [
        lp['n1g'].reshape(1, C), lp['n1b'].reshape(1, C),
        wqkv, bqkv,
        lp['wproj'], lp['bproj'].reshape(1, C),
        lp['n2g'].reshape(1, C), lp['n2b'].reshape(1, C),
        lp['wfc1'], lp['bfc1'].reshape(1, hidden),
        lp['wfc2'], lp['bfc2'].reshape(1, C),
    ]

    kernel = functools.partial(_swin_layer_kernel, nh=num_heads,
                               has_mask=has_mask, has_conv=has_conv)

    out = pl.pallas_call(
        kernel,
        out_shape=jax.ShapeDtypeStruct((TW, N, C), x_nhwc.dtype),
        grid=grid,
        in_specs=in_specs,
        out_specs=win_out_spec,
        compiler_params=pltpu.CompilerParams(
            dimension_semantics=("parallel",),
            vmem_limit_bytes=48 * 1024 * 1024),      # v7x (64 MiB) safe, > default scoped
    )(*args)

    xr = _window_reverse(out.reshape(-1, ws, ws, C), ws, Hp, Wp)
    if shift > 0:
        xr = jnp.roll(xr, shift=(shift, shift), axis=(1, 2))
    if pad_b or pad_r:
        xr = xr[:, :H, :W, :]
    return xr


def swin_block_forward(x_nchw, params):
    x = jnp.transpose(x_nchw, (0, 2, 3, 1))                      # NCHW -> NHWC
    ws = params['window_size']
    layers = params['layers']
    conv = params['conv']
    B, H, W, _ = x.shape
    pad_needed = (H % ws != 0) or (W % ws != 0)
    if conv is not None and (pad_needed or not layers):
        # TODO(synk): with spatial padding the fused conv would see zero-padded
        # pre-conv tokens (reference pads post-conv); fall back to XLA-fused op.
        w, b = conv
        x = jax.nn.silu(x @ w + b)
        conv = None
    for li, lp in enumerate(layers):
        x = swin_layer_forward(x, lp, params['num_heads'], ws,
                               conv=(conv if li == 0 else None))
    return jnp.transpose(x, (0, 3, 1, 2))                        # NHWC -> NCHW


# --------------------------------------------------------------------------
# Parameter init (deterministic, synthetic — no checkpoint loading)
# --------------------------------------------------------------------------
def _linear_params(key, fin, fout):
    kw, kb = jax.random.split(key)
    bound = 1.0 / math.sqrt(fin)
    w = jax.random.uniform(kw, (fin, fout), jnp.float32, -bound, bound)
    b = jax.random.uniform(kb, (fout,), jnp.float32, -bound, bound)
    return w, b


def init_swin_block_params(key, c1, c2, num_heads, num_layers, window_size=8):
    assert c2 % num_heads == 0
    keys = jax.random.split(key, num_layers + 1)
    params = {'num_heads': num_heads, 'window_size': window_size, 'conv': None}

    if c1 != c2:
        kw, kg, kb, km, kv = jax.random.split(keys[0], 5)
        w = jax.random.normal(kw, (c2, c1), jnp.float32) / math.sqrt(c1)   # 1x1 conv, OI
        gamma = 1.0 + 0.1 * jax.random.normal(kg, (c2,), jnp.float32)
        beta = 0.1 * jax.random.normal(kb, (c2,), jnp.float32)
        mean = 0.1 * jax.random.normal(km, (c2,), jnp.float32)
        var = 0.5 + jax.random.uniform(kv, (c2,), jnp.float32)
        scale = gamma * jax.lax.rsqrt(var + 1e-5)
        w_folded = jnp.transpose(w * scale[:, None], (1, 0))               # (c1, c2)
        b_folded = beta - mean * scale
        params['conv'] = (w_folded, b_folded)

    ws = window_size
    N = ws * ws
    layers = []
    for i in range(num_layers):
        k = jax.random.split(keys[1 + i], 9)
        dim, hidden = c2, int(c2 * 4.0)
        wqkv, bqkv = _linear_params(k[0], dim, 3 * dim)
        wproj, bproj = _linear_params(k[1], dim, dim)
        wfc1, bfc1 = _linear_params(k[2], dim, hidden)
        wfc2, bfc2 = _linear_params(k[3], hidden, dim)
        n1g = 1.0 + 0.1 * jax.random.normal(k[4], (dim,), jnp.float32)
        n1b = 0.1 * jax.random.normal(k[5], (dim,), jnp.float32)
        n2g = 1.0 + 0.1 * jax.random.normal(k[6], (dim,), jnp.float32)
        n2b = 0.1 * jax.random.normal(k[7], (dim,), jnp.float32)
        table = 0.02 * jax.random.normal(k[8], ((2 * ws - 1) ** 2, num_heads), jnp.float32)
        idx = _relative_position_index_np(ws).reshape(-1)
        rel_bias = jnp.transpose(table[idx].reshape(N, N, num_heads), (2, 0, 1))
        layers.append({
            'shift_size': 0 if i % 2 == 0 else ws // 2,
            'n1g': n1g, 'n1b': n1b, 'n2g': n2g, 'n2b': n2b,
            'wqkv': wqkv, 'bqkv': bqkv, 'wproj': wproj, 'bproj': bproj,
            'wfc1': wfc1, 'bfc1': bfc1, 'wfc2': wfc2, 'bfc2': bfc2,
            'rel_bias': rel_bias,
        })
    params['layers'] = layers
    return params


# --------------------------------------------------------------------------
# Pure-JAX f32 reference (correctness check only)
# --------------------------------------------------------------------------
def _layer_norm_ref(x, g, b, eps=1e-5):
    mu = jnp.mean(x, axis=-1, keepdims=True)
    var = jnp.mean(jnp.square(x - mu), axis=-1, keepdims=True)
    return (x - mu) * jax.lax.rsqrt(var + eps) * g + b


def swin_layer_ref(x_nhwc, lp, num_heads, ws):
    shift = lp['shift_size']
    B, H, W, C = x_nhwc.shape
    pad_b = (ws - H % ws) % ws
    pad_r = (ws - W % ws) % ws
    xp = jnp.pad(x_nhwc, ((0, 0), (0, pad_b), (0, pad_r), (0, 0))) if (pad_b or pad_r) else x_nhwc
    Hp, Wp = H + pad_b, W + pad_r
    N = ws * ws
    nW = (Hp // ws) * (Wp // ws)
    hd = C // num_heads

    x = xp.reshape(B, Hp * Wp, C)
    shortcut = x
    xn = _layer_norm_ref(x, lp['n1g'], lp['n1b']).reshape(B, Hp, Wp, C)
    if shift > 0:
        xn = jnp.roll(xn, shift=(-shift, -shift), axis=(1, 2))
    xw = _window_partition(xn, ws).reshape(-1, N, C)

    qkv = xw @ lp['wqkv'] + lp['bqkv']
    qkv = qkv.reshape(-1, N, 3, num_heads, hd).transpose(2, 0, 3, 1, 4)
    q, k, v = qkv[0] * (hd ** -0.5), qkv[1], qkv[2]
    attn = jnp.einsum('bhnd,bhmd->bhnm', q, k) + lp['rel_bias'][None]
    if shift > 0:
        mask = jnp.asarray(_attention_mask_np(Hp, Wp, ws, shift))
        attn = attn.reshape(B, nW, num_heads, N, N) + mask[None, :, None]
        attn = attn.reshape(-1, num_heads, N, N)
    attn = jax.nn.softmax(attn, axis=-1)
    out = jnp.einsum('bhnm,bhmd->bhnd', attn, v).transpose(0, 2, 1, 3).reshape(-1, N, C)
    out = out @ lp['wproj'] + lp['bproj']
    sx = _window_reverse(out.reshape(-1, ws, ws, C), ws, Hp, Wp)
    if shift > 0:
        sx = jnp.roll(sx, shift=(shift, shift), axis=(1, 2))
    x = shortcut + sx.reshape(B, Hp * Wp, C)
    xn2 = _layer_norm_ref(x, lp['n2g'], lp['n2b'])
    x = x + (jax.nn.silu(xn2 @ lp['wfc1'] + lp['bfc1']) @ lp['wfc2'] + lp['bfc2'])
    x = x.reshape(B, Hp, Wp, C)
    if pad_b or pad_r:
        x = x[:, :H, :W, :]
    return x


def swin_block_ref(x_nchw, params):
    x = jnp.transpose(x_nchw, (0, 2, 3, 1))
    if params['conv'] is not None:
        w, b = params['conv']
        x = jax.nn.silu(x @ w + b)
    for lp in params['layers']:
        x = swin_layer_ref(x, lp, params['num_heads'], params['window_size'])
    return jnp.transpose(x, (0, 3, 1, 2))


# --------------------------------------------------------------------------
if __name__ == "__main__":
    key = jax.random.PRNGKey(0)
    kx, kp = jax.random.split(key)

    # PyTorch-equivalent: SwinTransformerBlock(c1=4, c2=32, num_heads=2, num_layers=2,
    # window_size=8) applied to x of shape NCHW = (2, 4, 16, 16).
    B, C1, H, W = 2, 4, 16, 16
    C2, NUM_HEADS, NUM_LAYERS, WINDOW = 32, 2, 2, 8

    x = jax.random.normal(kx, (B, C1, H, W), jnp.float32)
    params = init_swin_block_params(kp, C1, C2, NUM_HEADS, NUM_LAYERS, WINDOW)

    fwd = jax.jit(lambda a: swin_block_forward(a, params))
    out = jax.block_until_ready(fwd(x))
    assert out.shape == (B, C2, H, W), out.shape

    ref = swin_block_ref(x, params)      # f32 reference; kernel uses bf16 MXU operands
    err = float(jnp.max(jnp.abs(out - ref)))
    assert jnp.allclose(out, ref, rtol=5e-2, atol=5e-2), f"max abs err {err}"

    print("KERNEL_OK")
</pallas_src>

<mosaic_0001>
module attributes {stable_mosaic.version = 11 : i64} {
  func.func @_swin_layer_kernel(%arg0: i32, %arg1: memref<4x64x4xf32, #tpu.memory_space<vmem>>, %arg2: memref<2x64x64xf32, #tpu.memory_space<vmem>>, %arg3: memref<4x32xf32, #tpu.memory_space<vmem>>, %arg4: memref<1x32xf32, #tpu.memory_space<vmem>>, %arg5: memref<1x32xf32, #tpu.memory_space<vmem>>, %arg6: memref<1x32xf32, #tpu.memory_space<vmem>>, %arg7: memref<32x96xf32, #tpu.memory_space<vmem>>, %arg8: memref<1x96xf32, #tpu.memory_space<vmem>>, %arg9: memref<32x32xf32, #tpu.memory_space<vmem>>, %arg10: memref<1x32xf32, #tpu.memory_space<vmem>>, %arg11: memref<1x32xf32, #tpu.memory_space<vmem>>, %arg12: memref<1x32xf32, #tpu.memory_space<vmem>>, %arg13: memref<32x128xf32, #tpu.memory_space<vmem>>, %arg14: memref<1x128xf32, #tpu.memory_space<vmem>>, %arg15: memref<128x32xf32, #tpu.memory_space<vmem>>, %arg16: memref<1x32xf32, #tpu.memory_space<vmem>>, %arg17: memref<4x64x32xf32, #tpu.memory_space<vmem>>) attributes {dimension_semantics = [#tpu.dimension_semantics<parallel>], iteration_bounds = array<i64: 2>, scalar_prefetch = 0 : i64, scratch_operands = 0 : i64, tpu.core_type = #tpu.core_type<tc>, window_params = [{transform_indices = @transform_0, window_bounds = array<i64: 4, 64, 4>}, {pipeline_mode = #tpu.pipeline_mode<synchronous>, transform_indices = @transform_1, window_bounds = array<i64: 2, 64, 64>}, {pipeline_mode = #tpu.pipeline_mode<synchronous>, transform_indices = @transform_2, window_bounds = array<i64: 4, 32>}, {pipeline_mode = #tpu.pipeline_mode<synchronous>, transform_indices = @transform_3, window_bounds = array<i64: 1, 32>}, {pipeline_mode = #tpu.pipeline_mode<synchronous>, transform_indices = @transform_4, window_bounds = array<i64: 1, 32>}, {pipeline_mode = #tpu.pipeline_mode<synchronous>, transform_indices = @transform_5, window_bounds = array<i64: 1, 32>}, {pipeline_mode = #tpu.pipeline_mode<synchronous>, transform_indices = @transform_6, window_bounds = array<i64: 32, 96>}, {pipeline_mode = #tpu.pipeline_mode<synchronous>, transform_indices = @transform_7, window_bounds = array<i64: 1, 96>}, {pipeline_mode = #tpu.pipeline_mode<synchronous>, transform_indices = @transform_8, window_bounds = array<i64: 32, 32>}, {pipeline_mode = #tpu.pipeline_mode<synchronous>, transform_indices = @transform_9, window_bounds = array<i64: 1, 32>}, {pipeline_mode = #tpu.pipeline_mode<synchronous>, transform_indices = @transform_10, window_bounds = array<i64: 1, 32>}, {pipeline_mode = #tpu.pipeline_mode<synchronous>, transform_indices = @transform_11, window_bounds = array<i64: 1, 32>}, {pipeline_mode = #tpu.pipeline_mode<synchronous>, transform_indices = @transform_12, window_bounds = array<i64: 32, 128>}, {pipeline_mode = #tpu.pipeline_mode<synchronous>, transform_indices = @transform_13, window_bounds = array<i64: 1, 128>}, {pipeline_mode = #tpu.pipeline_mode<synchronous>, transform_indices = @transform_14, window_bounds = array<i64: 128, 32>}, {pipeline_mode = #tpu.pipeline_mode<synchronous>, transform_indices = @transform_15, window_bounds = array<i64: 1, 32>}, {transform_indices = @transform_16, window_bounds = array<i64: 4, 64, 32>}]} {
    %c0 = arith.constant 0 : index
    %c0_0 = arith.constant 0 : index
    %c0_1 = arith.constant 0 : index
    %0 = vector.load %arg1[%c0, %c0_0, %c0_1] : memref<4x64x4xf32, #tpu.memory_space<vmem>>, vector<4x64x4xf32>
    %1 = vector.shape_cast %0 : vector<4x64x4xf32> to vector<256x4xf32>
    %c0_2 = arith.constant 0 : index
    %c0_3 = arith.constant 0 : index
    %2 = vector.load %arg3[%c0_2, %c0_3] : memref<4x32xf32, #tpu.memory_space<vmem>>, vector<4x32xf32>
    %3 = arith.truncf %1 : vector<256x4xf32> to vector<256x4xbf16>
    %4 = arith.truncf %2 : vector<4x32xf32> to vector<4x32xbf16>
    %cst = arith.constant dense<0.000000e+00> : vector<256x32xf32>
    %5 = tpu.matmul %3, %4, %cst {dimension_numbers = #tpu.dot_dimension_numbers<[1], [0], [0], [1], [0, 0, 1, 1], [], []>} : vector<256x4xbf16>, vector<4x32xbf16>, vector<256x32xf32> -> vector<256x32xf32>
    %c0_4 = arith.constant 0 : index
    %c0_5 = arith.constant 0 : index
    %6 = vector.load %arg4[%c0_4, %c0_5] : memref<1x32xf32, #tpu.memory_space<vmem>>, vector<1x32xf32>
    %7 = vector.broadcast %6 : vector<1x32xf32> to vector<256x32xf32>
    %8 = arith.addf %5, %7 : vector<256x32xf32>
    %cst_6 = arith.constant 0.000000e+00 : f32
    %9 = vector.broadcast %cst_6 : f32 to vector<256x32xf32>
    %10 = arith.subf %9, %8 : vector<256x32xf32>
    %11 = math.exp %10 : vector<256x32xf32>
    %cst_7 = arith.constant 1.000000e+00 : f32
    %12 = vector.broadcast %cst_7 : f32 to vector<256x32xf32>
    %13 = arith.addf %12, %11 : vector<256x32xf32>
    %cst_8 = arith.constant 1.000000e+00 : f32
    %14 = vector.broadcast %cst_8 : f32 to vector<256x32xf32>
    %15 = arith.divf %14, %13 : vector<256x32xf32>
    %16 = arith.mulf %8, %15 : vector<256x32xf32>
    %cst_9 = arith.constant dense<0.000000e+00> : vector<256xf32>
    %17 = vector.multi_reduction <add>, %16, %cst_9 [1] : vector<256x32xf32> to vector<256xf32>
    %18 = vector.shape_cast %17 : vector<256xf32> to vector<256x1xf32>
    %cst_10 = arith.constant 3.200000e+01 : f32
    %19 = vector.broadcast %cst_10 : f32 to vector<256x1xf32>
    %20 = arith.divf %18, %19 : vector<256x1xf32>
    %21 = vector.broadcast %20 : vector<256x1xf32> to vector<256x32xf32>
    %22 = arith.subf %16, %21 : vector<256x32xf32>
    %23 = arith.mulf %22, %22 : vector<256x32xf32>
    %cst_11 = arith.constant dense<0.000000e+00> : vector<256xf32>
    %24 = vector.multi_reduction <add>, %23, %cst_11 [1] : vector<256x32xf32> to vector<256xf32>
    %25 = vector.shape_cast %24 : vector<256xf32> to vector<256x1xf32>
    %cst_12 = arith.constant 3.200000e+01 : f32
    %26 = vector.broadcast %cst_12 : f32 to vector<256x1xf32>
    %27 = arith.divf %25, %26 : vector<256x1xf32>
    %cst_13 = arith.constant 9.99999974E-6 : f32
    %28 = vector.broadcast %cst_13 : f32 to vector<256x1xf32>
    %29 = arith.addf %27, %28 : vector<256x1xf32>
    %30 = math.rsqrt %29 : vector<256x1xf32>
    %31 = vector.broadcast %30 : vector<256x1xf32> to vector<256x32xf32>
    %32 = arith.mulf %22, %31 : vector<256x32xf32>
    %c0_14 = arith.constant 0 : index
    %c0_15 = arith.constant 0 : index
    %33 = vector.load %arg5[%c0_14, %c0_15] : memref<1x32xf32, #tpu.memory_space<vmem>>, vector<1x32xf32>
    %34 = vector.broadcast %33 : vector<1x32xf32> to vector<256x32xf32>
    %35 = arith.mulf %32, %34 : vector<256x32xf32>
    %c0_16 = arith.constant 0 : index
    %c0_17 = arith.constant 0 : index
    %36 = vector.load %arg6[%c0_16, %c0_17] : memref<1x32xf32, #tpu.memory_space<vmem>>, vector<1x32xf32>
    %37 = vector.broadcast %36 : vector<1x32xf32> to vector<256x32xf32>
    %38 = arith.addf %35, %37 : vector<256x32xf32>
    %c0_18 = arith.constant 0 : index
    %c0_19 = arith.constant 0 : index
    %39 = vector.load %arg7[%c0_18, %c0_19] : memref<32x96xf32, #tpu.memory_space<vmem>>, vector<32x96xf32>
    %40 = arith.truncf %38 : vector<256x32xf32> to vector<256x32xbf16>
    %41 = arith.truncf %39 : vector<32x96xf32> to vector<32x96xbf16>
    %cst_20 = arith.constant dense<0.000000e+00> : vector<256x96xf32>
    %42 = tpu.matmul %40, %41, %cst_20 {dimension_numbers = #tpu.dot_dimension_numbers<[1], [0], [0], [1], [0, 0, 1, 1], [], []>} : vector<256x32xbf16>, vector<32x96xbf16>, vector<256x96xf32> -> vector<256x96xf32>
    %c0_21 = arith.constant 0 : index
    %c0_22 = arith.constant 0 : index
    %43 = vector.load %arg8[%c0_21, %c0_22] : memref<1x96xf32, #tpu.memory_space<vmem>>, vector<1x96xf32>
    %44 = vector.broadcast %43 : vector<1x96xf32> to vector<256x96xf32>
    %45 = arith.addf %42, %44 : vector<256x96xf32>
    %46 = vector.extract_strided_slice %45 {offsets = [0, 0], sizes = [256, 16], strides = [1, 1]} : vector<256x96xf32> to vector<256x16xf32>
    %47 = vector.shape_cast %46 : vector<256x16xf32> to vector<4x64x16xf32>
    %48 = vector.extract_strided_slice %45 {offsets = [0, 32], sizes = [256, 16], strides = [1, 1]} : vector<256x96xf32> to vector<256x16xf32>
    %49 = vector.shape_cast %48 : vector<256x16xf32> to vector<4x64x16xf32>
    %50 = vector.extract_strided_slice %45 {offsets = [0, 64], sizes = [256, 16], strides = [1, 1]} : vector<256x96xf32> to vector<256x16xf32>
    %51 = vector.shape_cast %50 : vector<256x16xf32> to vector<4x64x16xf32>
    %52 = arith.truncf %47 : vector<4x64x16xf32> to vector<4x64x16xbf16>
    %53 = arith.truncf %49 : vector<4x64x16xf32> to vector<4x64x16xbf16>
    "tpu.trace_start"() <{level = 10 : i32, message = "wnd,wmd->wnm"}> : () -> ()
    %cst_23 = arith.constant dense<0.000000e+00> : vector<4x64x64xf32>
    %54 = tpu.matmul %52, %53, %cst_23 {dimension_numbers = #tpu.dot_dimension_numbers<[2], [2], [1], [1], [0, 0, 0, 1, 1, 1], [0], [0]>} : vector<4x64x16xbf16>, vector<4x64x16xbf16>, vector<4x64x64xf32> -> vector<4x64x64xf32>
    "tpu.trace_stop"() : () -> ()
    %c0_24 = arith.constant 0 : index
    %c0_25 = arith.constant 0 : index
    %c0_26 = arith.constant 0 : index
    %55 = vector.load %arg2[%c0_24, %c0_25, %c0_26] : memref<2x64x64xf32, #tpu.memory_space<vmem>>, vector<1x64x64xf32>
    %56 = vector.shape_cast %55 : vector<1x64x64xf32> to vector<64x64xf32>
    %57 = vector.shape_cast %56 : vector<64x64xf32> to vector<1x64x64xf32>
    %58 = vector.broadcast %57 : vector<1x64x64xf32> to vector<4x64x64xf32>
    %59 = arith.addf %54, %58 : vector<4x64x64xf32>
    %cst_27 = arith.constant dense<0xFF800000> : vector<4x64xf32>
    %60 = vector.multi_reduction <maximumf>, %59, %cst_27 [2] : vector<4x64x64xf32> to vector<4x64xf32>
    %61 = vector.shape_cast %60 : vector<4x64xf32> to vector<4x64x1xf32>
    %62 = vector.broadcast %61 : vector<4x64x1xf32> to vector<4x64x64xf32>
    %63 = arith.subf %59, %62 : vector<4x64x64xf32>
    %64 = math.exp %63 : vector<4x64x64xf32>
    %cst_28 = arith.constant dense<0.000000e+00> : vector<4x64xf32>
    %65 = vector.multi_reduction <add>, %64, %cst_28 [2] : vector<4x64x64xf32> to vector<4x64xf32>
    %66 = vector.shape_cast %65 : vector<4x64xf32> to vector<4x64x1xf32>
    %67 = tpu.reciprocal %66 {approx = true} : vector<4x64x1xf32> -> vector<4x64x1xf32>
    %68 = vector.broadcast %67 : vector<4x64x1xf32> to vector<4x64x64xf32>
    %69 = arith.mulf %64, %68 : vector<4x64x64xf32>
    %70 = arith.truncf %69 : vector<4x64x64xf32> to vector<4x64x64xbf16>
    %71 = arith.truncf %51 : vector<4x64x16xf32> to vector<4x64x16xbf16>
    "tpu.trace_start"() <{level = 10 : i32, message = "wnm,wmd->wnd"}> : () -> ()
    %cst_29 = arith.constant dense<0.000000e+00> : vector<4x64x16xf32>
    %72 = tpu.matmul %70, %71, %cst_29 {dimension_numbers = #tpu.dot_dimension_numbers<[2], [1], [1], [2], [0, 0, 0, 1, 1, 2], [0], [0]>} : vector<4x64x64xbf16>, vector<4x64x16xbf16>, vector<4x64x16xf32> -> vector<4x64x16xf32>
    "tpu.trace_stop"() : () -> ()
    %73 = vector.extract_strided_slice %45 {offsets = [0, 16], sizes = [256, 16], strides = [1, 1]} : vector<256x96xf32> to vector<256x16xf32>
    %74 = vector.shape_cast %73 : vector<256x16xf32> to vector<4x64x16xf32>
    %75 = vector.extract_strided_slice %45 {offsets = [0, 48], sizes = [256, 16], strides = [1, 1]} : vector<256x96xf32> to vector<256x16xf32>
    %76 = vector.shape_cast %75 : vector<256x16xf32> to vector<4x64x16xf32>
    %77 = vector.extract_strided_slice %45 {offsets = [0, 80], sizes = [256, 16], strides = [1, 1]} : vector<256x96xf32> to vector<256x16xf32>
    %78 = vector.shape_cast %77 : vector<256x16xf32> to vector<4x64x16xf32>
    %79 = arith.truncf %74 : vector<4x64x16xf32> to vector<4x64x16xbf16>
    %80 = arith.truncf %76 : vector<4x64x16xf32> to vector<4x64x16xbf16>
    "tpu.trace_start"() <{level = 10 : i32, message = "wnd,wmd->wnm"}> : () -> ()
    %cst_30 = arith.constant dense<0.000000e+00> : vector<4x64x64xf32>
    %81 = tpu.matmul %79, %80, %cst_30 {dimension_numbers = #tpu.dot_dimension_numbers<[2], [2], [1], [1], [0, 0, 0, 1, 1, 1], [0], [0]>} : vector<4x64x16xbf16>, vector<4x64x16xbf16>, vector<4x64x64xf32> -> vector<4x64x64xf32>
    "tpu.trace_stop"() : () -> ()
    %c1 = arith.constant 1 : index
    %c0_31 = arith.constant 0 : index
    %c0_32 = arith.constant 0 : index
    %82 = vector.load %arg2[%c1, %c0_31, %c0_32] : memref<2x64x64xf32, #tpu.memory_space<vmem>>, vector<1x64x64xf32>
    %83 = vector.shape_cast %82 : vector<1x64x64xf32> to vector<64x64xf32>
    %84 = vector.shape_cast %83 : vector<64x64xf32> to vector<1x64x64xf32>
    %85 = vector.broadcast %84 : vector<1x64x64xf32> to vector<4x64x64xf32>
    %86 = arith.addf %81, %85 : vector<4x64x64xf32>
    %cst_33 = arith.constant dense<0xFF800000> : vector<4x64xf32>
    %87 = vector.multi_reduction <maximumf>, %86, %cst_33 [2] : vector<4x64x64xf32> to vector<4x64xf32>
    %88 = vector.shape_cast %87 : vector<4x64xf32> to vector<4x64x1xf32>
    %89 = vector.broadcast %88 : vector<4x64x1xf32> to vector<4x64x64xf32>
    %90 = arith.subf %86, %89 : vector<4x64x64xf32>
    %91 = math.exp %90 : vector<4x64x64xf32>
    %cst_34 = arith.constant dense<0.000000e+00> : vector<4x64xf32>
    %92 = vector.multi_reduction <add>, %91, %cst_34 [2] : vector<4x64x64xf32> to vector<4x64xf32>
    %93 = vector.shape_cast %92 : vector<4x64xf32> to vector<4x64x1xf32>
    %94 = tpu.reciprocal %93 {approx = true} : vector<4x64x1xf32> -> vector<4x64x1xf32>
    %95 = vector.broadcast %94 : vector<4x64x1xf32> to vector<4x64x64xf32>
    %96 = arith.mulf %91, %95 : vector<4x64x64xf32>
    %97 = arith.truncf %96 : vector<4x64x64xf32> to vector<4x64x64xbf16>
    %98 = arith.truncf %78 : vector<4x64x16xf32> to vector<4x64x16xbf16>
    "tpu.trace_start"() <{level = 10 : i32, message = "wnm,wmd->wnd"}> : () -> ()
    %cst_35 = arith.constant dense<0.000000e+00> : vector<4x64x16xf32>
    %99 = tpu.matmul %97, %98, %cst_35 {dimension_numbers = #tpu.dot_dimension_numbers<[2], [1], [1], [2], [0, 0, 0, 1, 1, 2], [0], [0]>} : vector<4x64x64xbf16>, vector<4x64x16xbf16>, vector<4x64x16xf32> -> vector<4x64x16xf32>
    "tpu.trace_stop"() : () -> ()
    %100 = tpu.concatenate %72, %99 in 2 : vector<4x64x16xf32>, vector<4x64x16xf32> -> vector<4x64x32xf32>
    %101 = vector.shape_cast %100 : vector<4x64x32xf32> to vector<256x32xf32>
    %c0_36 = arith.constant 0 : index
    %c0_37 = arith.constant 0 : index
    %102 = vector.load %arg9[%c0_36, %c0_37] : memref<32x32xf32, #tpu.memory_space<vmem>>, vector<32x32xf32>
    %103 = arith.truncf %101 : vector<256x32xf32> to vector<256x32xbf16>
    %104 = arith.truncf %102 : vector<32x32xf32> to vector<32x32xbf16>
    %cst_38 = arith.constant dense<0.000000e+00> : vector<256x32xf32>
    %105 = tpu.matmul %103, %104, %cst_38 {dimension_numbers = #tpu.dot_dimension_numbers<[1], [0], [0], [1], [0, 0, 1, 1], [], []>} : vector<256x32xbf16>, vector<32x32xbf16>, vector<256x32xf32> -> vector<256x32xf32>
    %106 = arith.addf %16, %105 : vector<256x32xf32>
    %c0_39 = arith.constant 0 : index
    %c0_40 = arith.constant 0 : index
    %107 = vector.load %arg10[%c0_39, %c0_40] : memref<1x32xf32, #tpu.memory_space<vmem>>, vector<1x32xf32>
    %108 = vector.broadcast %107 : vector<1x32xf32> to vector<256x32xf32>
    %109 = arith.addf %106, %108 : vector<256x32xf32>
    %cst_41 = arith.constant dense<0.000000e+00> : vector<256xf32>
    %110 = vector.multi_reduction <add>, %109, %cst_41 [1] : vector<256x32xf32> to vector<256xf32>
    %111 = vector.shape_cast %110 : vector<256xf32> to vector<256x1xf32>
    %cst_42 = arith.constant 3.200000e+01 : f32
    %112 = vector.broadcast %cst_42 : f32 to vector<256x1xf32>
    %113 = arith.divf %111, %112 : vector<256x1xf32>
    %114 = vector.broadcast %113 : vector<256x1xf32> to vector<256x32xf32>
    %115 = arith.subf %109, %114 : vector<256x32xf32>
    %116 = arith.mulf %115, %115 : vector<256x32xf32>
    %cst_43 = arith.constant dense<0.000000e+00> : vector<256xf32>
    %117 = vector.multi_reduction <add>, %116, %cst_43 [1] : vector<256x32xf32> to vector<256xf32>
    %118 = vector.shape_cast %117 : vector<256xf32> to vector<256x1xf32>
    %cst_44 = arith.constant 3.200000e+01 : f32
    %119 = vector.broadcast %cst_44 : f32 to vector<256x1xf32>
    %120 = arith.divf %118, %119 : vector<256x1xf32>
    %cst_45 = arith.constant 9.99999974E-6 : f32
    %121 = vector.broadcast %cst_45 : f32 to vector<256x1xf32>
    %122 = arith.addf %120, %121 : vector<256x1xf32>
    %123 = math.rsqrt %122 : vector<256x1xf32>
    %124 = vector.broadcast %123 : vector<256x1xf32> to vector<256x32xf32>
    %125 = arith.mulf %115, %124 : vector<256x32xf32>
    %c0_46 = arith.constant 0 : index
    %c0_47 = arith.constant 0 : index
    %126 = vector.load %arg11[%c0_46, %c0_47] : memref<1x32xf32, #tpu.memory_space<vmem>>, vector<1x32xf32>
    %127 = vector.broadcast %126 : vector<1x32xf32> to vector<256x32xf32>
    %128 = arith.mulf %125, %127 : vector<256x32xf32>
    %c0_48 = arith.constant 0 : index
    %c0_49 = arith.constant 0 : index
    %129 = vector.load %arg12[%c0_48, %c0_49] : memref<1x32xf32, #tpu.memory_space<vmem>>, vector<1x32xf32>
    %130 = vector.broadcast %129 : vector<1x32xf32> to vector<256x32xf32>
    %131 = arith.addf %128, %130 : vector<256x32xf32>
    %c0_50 = arith.constant 0 : index
    %c0_51 = arith.constant 0 : index
    %132 = vector.load %arg13[%c0_50, %c0_51] : memref<32x128xf32, #tpu.memory_space<vmem>>, vector<32x128xf32>
    %133 = arith.truncf %131 : vector<256x32xf32> to vector<256x32xbf16>
    %134 = arith.truncf %132 : vector<32x128xf32> to vector<32x128xbf16>
    %cst_52 = arith.constant dense<0.000000e+00> : vector<256x128xf32>
    %135 = tpu.matmul %133, %134, %cst_52 {dimension_numbers = #tpu.dot_dimension_numbers<[1], [0], [0], [1], [0, 0, 1, 1], [], []>} : vector<256x32xbf16>, vector<32x128xbf16>, vector<256x128xf32> -> vector<256x128xf32>
    %c0_53 = arith.constant 0 : index
    %c0_54 = arith.constant 0 : index
    %136 = vector.load %arg14[%c0_53, %c0_54] : memref<1x128xf32, #tpu.memory_space<vmem>>, vector<1x128xf32>
    %137 = vector.broadcast %136 : vector<1x128xf32> to vector<256x128xf32>
    %138 = arith.addf %135, %137 : vector<256x128xf32>
    %cst_55 = arith.constant 0.000000e+00 : f32
    %139 = vector.broadcast %cst_55 : f32 to vector<256x128xf32>
    %140 = arith.subf %139, %138 : vector<256x128xf32>
    %141 = math.exp %140 : vector<256x128xf32>
    %cst_56 = arith.constant 1.000000e+00 : f32
    %142 = vector.broadcast %cst_56 : f32 to vector<256x128xf32>
    %143 = arith.addf %142, %141 : vector<256x128xf32>
    %cst_57 = arith.constant 1.000000e+00 : f32
    %144 = vector.broadcast %cst_57 : f32 to vector<256x128xf32>
    %145 = arith.divf %144, %143 : vector<256x128xf32>
    %146 = arith.mulf %138, %145 : vector<256x128xf32>
    %c0_58 = arith.constant 0 : index
    %c0_59 = arith.constant 0 : index
    %147 = vector.load %arg15[%c0_58, %c0_59] : memref<128x32xf32, #tpu.memory_space<vmem>>, vector<128x32xf32>
    %148 = arith.truncf %146 : vector<256x128xf32> to vector<256x128xbf16>
    %149 = arith.truncf %147 : vector<128x32xf32> to vector<128x32xbf16>
    %cst_60 = arith.constant dense<0.000000e+00> : vector<256x32xf32>
    %150 = tpu.matmul %148, %149, %cst_60 {dimension_numbers = #tpu.dot_dimension_numbers<[1], [0], [0], [1], [0, 0, 1, 1], [], []>} : vector<256x128xbf16>, vector<128x32xbf16>, vector<256x32xf32> -> vector<256x32xf32>
    %151 = arith.addf %109, %150 : vector<256x32xf32>
    %c0_61 = arith.constant 0 : index
    %c0_62 = arith.constant 0 : index
    %152 = vector.load %arg16[%c0_61, %c0_62] : memref<1x32xf32, #tpu.memory_space<vmem>>, vector<1x32xf32>
    %153 = vector.broadcast %152 : vector<1x32xf32> to vector<256x32xf32>
    %154 = arith.addf %151, %153 : vector<256x32xf32>
    %155 = vector.shape_cast %154 : vector<256x32xf32> to vector<4x64x32xf32>
    %c0_63 = arith.constant 0 : index
    %c0_64 = arith.constant 0 : index
    %c0_65 = arith.constant 0 : index
    %156 = vector.load %arg17[%c0_63, %c0_64, %c0_65] : memref<4x64x32xf32, #tpu.memory_space<vmem>>, vector<4x64x32xf32>
    tpu.vector_store %arg17[%c0_63, %c0_64, %c0_65], %155 {strides = array<i32>} : memref<4x64x32xf32, #tpu.memory_space<vmem>>, vector<4x64x32xf32>,
    return
  }
  func.func @transform_0(%arg0: i32) -> (i32, i32, i32) {
    %c0_i32 = arith.constant 0 : i32
    %c0_i32_0 = arith.constant 0 : i32
    %c0_i32_1 = arith.constant 0 : i32
    return %arg0, %c0_i32, %c0_i32_0 : i32, i32, i32
  }
  func.func @transform_1(%arg0: i32) -> (i32, i32, i32) {
    %c0_i32 = arith.constant 0 : i32
    %c0_i32_0 = arith.constant 0 : i32
    %c0_i32_1 = arith.constant 0 : i32
    %c0_i32_2 = arith.constant 0 : i32
    return %c0_i32, %c0_i32_0, %c0_i32_1 : i32, i32, i32
  }
  func.func @transform_2(%arg0: i32) -> (i32, i32) {
    %c0_i32 = arith.constant 0 : i32
    %c0_i32_0 = arith.constant 0 : i32
    %c0_i32_1 = arith.constant 0 : i32
    return %c0_i32, %c0_i32_0 : i32, i32
  }
  func.func @transform_3(%arg0: i32) -> (i32, i32) {
    %c0_i32 = arith.constant 0 : i32
    %c0_i32_0 = arith.constant 0 : i32
    %c0_i32_1 = arith.constant 0 : i32
    return %c0_i32, %c0_i32_0 : i32, i32
  }
  func.func @transform_4(%arg0: i32) -> (i32, i32) {
    %c0_i32 = arith.constant 0 : i32
    %c0_i32_0 = arith.constant 0 : i32
    %c0_i32_1 = arith.constant 0 : i32
    return %c0_i32, %c0_i32_0 : i32, i32
  }
  func.func @transform_5(%arg0: i32) -> (i32, i32) {
    %c0_i32 = arith.constant 0 : i32
    %c0_i32_0 = arith.constant 0 : i32
    %c0_i32_1 = arith.constant 0 : i32
    return %c0_i32, %c0_i32_0 : i32, i32
  }
  func.func @transform_6(%arg0: i32) -> (i32, i32) {
    %c0_i32 = arith.constant 0 : i32
    %c0_i32_0 = arith.constant 0 : i32
    %c0_i32_1 = arith.constant 0 : i32
    return %c0_i32, %c0_i32_0 : i32, i32
  }
  func.func @transform_7(%arg0: i32) -> (i32, i32) {
    %c0_i32 = arith.constant 0 : i32
    %c0_i32_0 = arith.constant 0 : i32
    %c0_i32_1 = arith.constant 0 : i32
    return %c0_i32, %c0_i32_0 : i32, i32
  }
  func.func @transform_8(%arg0: i32) -> (i32, i32) {
    %c0_i32 = arith.constant 0 : i32
    %c0_i32_0 = arith.constant 0 : i32
    %c0_i32_1 = arith.constant 0 : i32
    return %c0_i32, %c0_i32_0 : i32, i32
  }
  func.func @transform_9(%arg0: i32) -> (i32, i32) {
    %c0_i32 = arith.constant 0 : i32
    %c0_i32_0 = arith.constant 0 : i32
    %c0_i32_1 = arith.constant 0 : i32
    return %c0_i32, %c0_i32_0 : i32, i32
  }
  func.func @transform_10(%arg0: i32) -> (i32, i32) {
    %c0_i32 = arith.constant 0 : i32
    %c0_i32_0 = arith.constant 0 : i32
    %c0_i32_1 = arith.constant 0 : i32
    return %c0_i32, %c0_i32_0 : i32, i32
  }
  func.func @transform_11(%arg0: i32) -> (i32, i32) {
    %c0_i32 = arith.constant 0 : i32
    %c0_i32_0 = arith.constant 0 : i32
    %c0_i32_1 = arith.constant 0 : i32
    return %c0_i32, %c0_i32_0 : i32, i32
  }
  func.func @transform_12(%arg0: i32) -> (i32, i32) {
    %c0_i32 = arith.constant 0 : i32
    %c0_i32_0 = arith.constant 0 : i32
    %c0_i32_1 = arith.constant 0 : i32
    return %c0_i32, %c0_i32_0 : i32, i32
  }
  func.func @transform_13(%arg0: i32) -> (i32, i32) {
    %c0_i32 = arith.constant 0 : i32
    %c0_i32_0 = arith.constant 0 : i32
    %c0_i32_1 = arith.constant 0 : i32
    return %c0_i32, %c0_i32_0 : i32, i32
  }
  func.func @transform_14(%arg0: i32) -> (i32, i32) {
    %c0_i32 = arith.constant 0 : i32
    %c0_i32_0 = arith.constant 0 : i32
    %c0_i32_1 = arith.constant 0 : i32
    return %c0_i32, %c0_i32_0 : i32, i32
  }
  func.func @transform_15(%arg0: i32) -> (i32, i32) {
    %c0_i32 = arith.constant 0 : i32
    %c0_i32_0 = arith.constant 0 : i32
    %c0_i32_1 = arith.constant 0 : i32
    return %c0_i32, %c0_i32_0 : i32, i32
  }
  func.func @transform_16(%arg0: i32) -> (i32, i32, i32) {
    %c0_i32 = arith.constant 0 : i32
    %c0_i32_0 = arith.constant 0 : i32
    %c0_i32_1 = arith.constant 0 : i32
    return %arg0, %c0_i32, %c0_i32_0 : i32, i32, i32
  }
}

module attributes {stable_mosaic.version = 11 : i64} {
  func.func @_swin_layer_kernel(%arg0: i32, %arg1: memref<4x64x32xf32, #tpu.memory_space<vmem>>, %arg2: memref<2x64x64xf32, #tpu.memory_space<vmem>>, %arg3: memref<4x64x64xf32, #tpu.memory_space<vmem>>, %arg4: memref<1x32xf32, #tpu.memory_space<vmem>>, %arg5: memref<1x32xf32, #tpu.memory_space<vmem>>, %arg6: memref<32x96xf32, #tpu.memory_space<vmem>>, %arg7: memref<1x96xf32, #tpu.memory_space<vmem>>, %arg8: memref<32x32xf32, #tpu.memory_space<vmem>>, %arg9: memref<1x32xf32, #tpu.memory_space<vmem>>, %arg10: memref<1x32xf32, #tpu.memory_space<vmem>>, %arg11: memref<1x32xf32, #tpu.memory_space<vmem>>, %arg12: memref<32x128xf32, #tpu.memory_space<vmem>>, %arg13: memref<1x128xf32, #tpu.memory_space<vmem>>, %arg14: memref<128x32xf32, #tpu.memory_space<vmem>>, %arg15: memref<1x32xf32, #tpu.memory_space<vmem>>, %arg16: memref<4x64x32xf32, #tpu.memory_space<vmem>>) attributes {dimension_semantics = [#tpu.dimension_semantics<parallel>], iteration_bounds = array<i64: 2>, scalar_prefetch = 0 : i64, scratch_operands = 0 : i64, tpu.core_type = #tpu.core_type<tc>, window_params = [{transform_indices = @transform_0, window_bounds = array<i64: 4, 64, 32>}, {pipeline_mode = #tpu.pipeline_mode<synchronous>, transform_indices = @transform_1, window_bounds = array<i64: 2, 64, 64>}, {transform_indices = @transform_2, window_bounds = array<i64: 4, 64, 64>}, {pipeline_mode = #tpu.pipeline_mode<synchronous>, transform_indices = @transform_3, window_bounds = array<i64: 1, 32>}, {pipeline_mode = #tpu.pipeline_mode<synchronous>, transform_indices = @transform_4, window_bounds = array<i64: 1, 32>}, {pipeline_mode = #tpu.pipeline_mode<synchronous>, transform_indices = @transform_5, window_bounds = array<i64: 32, 96>}, {pipeline_mode = #tpu.pipeline_mode<synchronous>, transform_indices = @transform_6, window_bounds = array<i64: 1, 96>}, {pipeline_mode = #tpu.pipeline_mode<synchronous>, transform_indices = @transform_7, window_bounds = array<i64: 32, 32>}, {pipeline_mode = #tpu.pipeline_mode<synchronous>, transform_indices = @transform_8, window_bounds = array<i64: 1, 32>}, {pipeline_mode = #tpu.pipeline_mode<synchronous>, transform_indices = @transform_9, window_bounds = array<i64: 1, 32>}, {pipeline_mode = #tpu.pipeline_mode<synchronous>, transform_indices = @transform_10, window_bounds = array<i64: 1, 32>}, {pipeline_mode = #tpu.pipeline_mode<synchronous>, transform_indices = @transform_11, window_bounds = array<i64: 32, 128>}, {pipeline_mode = #tpu.pipeline_mode<synchronous>, transform_indices = @transform_12, window_bounds = array<i64: 1, 128>}, {pipeline_mode = #tpu.pipeline_mode<synchronous>, transform_indices = @transform_13, window_bounds = array<i64: 128, 32>}, {pipeline_mode = #tpu.pipeline_mode<synchronous>, transform_indices = @transform_14, window_bounds = array<i64: 1, 32>}, {transform_indices = @transform_15, window_bounds = array<i64: 4, 64, 32>}]} {
    %c0 = arith.constant 0 : index
    %c0_0 = arith.constant 0 : index
    %c0_1 = arith.constant 0 : index
    %0 = vector.load %arg1[%c0, %c0_0, %c0_1] : memref<4x64x32xf32, #tpu.memory_space<vmem>>, vector<4x64x32xf32>
    %1 = vector.shape_cast %0 : vector<4x64x32xf32> to vector<256x32xf32>
    %cst = arith.constant dense<0.000000e+00> : vector<256xf32>
    %2 = vector.multi_reduction <add>, %1, %cst [1] : vector<256x32xf32> to vector<256xf32>
    %3 = vector.shape_cast %2 : vector<256xf32> to vector<256x1xf32>
    %cst_2 = arith.constant 3.200000e+01 : f32
    %4 = vector.broadcast %cst_2 : f32 to vector<256x1xf32>
    %5 = arith.divf %3, %4 : vector<256x1xf32>
    %6 = vector.broadcast %5 : vector<256x1xf32> to vector<256x32xf32>
    %7 = arith.subf %1, %6 : vector<256x32xf32>
    %8 = arith.mulf %7, %7 : vector<256x32xf32>
    %cst_3 = arith.constant dense<0.000000e+00> : vector<256xf32>
    %9 = vector.multi_reduction <add>, %8, %cst_3 [1] : vector<256x32xf32> to vector<256xf32>
    %10 = vector.shape_cast %9 : vector<256xf32> to vector<256x1xf32>
    %cst_4 = arith.constant 3.200000e+01 : f32
    %11 = vector.broadcast %cst_4 : f32 to vector<256x1xf32>
    %12 = arith.divf %10, %11 : vector<256x1xf32>
    %cst_5 = arith.constant 9.99999974E-6 : f32
    %13 = vector.broadcast %cst_5 : f32 to vector<256x1xf32>
    %14 = arith.addf %12, %13 : vector<256x1xf32>
    %15 = math.rsqrt %14 : vector<256x1xf32>
    %16 = vector.broadcast %15 : vector<256x1xf32> to vector<256x32xf32>
    %17 = arith.mulf %7, %16 : vector<256x32xf32>
    %c0_6 = arith.constant 0 : index
    %c0_7 = arith.constant 0 : index
    %18 = vector.load %arg4[%c0_6, %c0_7] : memref<1x32xf32, #tpu.memory_space<vmem>>, vector<1x32xf32>
    %19 = vector.broadcast %18 : vector<1x32xf32> to vector<256x32xf32>
    %20 = arith.mulf %17, %19 : vector<256x32xf32>
    %c0_8 = arith.constant 0 : index
    %c0_9 = arith.constant 0 : index
    %21 = vector.load %arg5[%c0_8, %c0_9] : memref<1x32xf32, #tpu.memory_space<vmem>>, vector<1x32xf32>
    %22 = vector.broadcast %21 : vector<1x32xf32> to vector<256x32xf32>
    %23 = arith.addf %20, %22 : vector<256x32xf32>
    %c0_10 = arith.constant 0 : index
    %c0_11 = arith.constant 0 : index
    %24 = vector.load %arg6[%c0_10, %c0_11] : memref<32x96xf32, #tpu.memory_space<vmem>>, vector<32x96xf32>
    %25 = arith.truncf %23 : vector<256x32xf32> to vector<256x32xbf16>
    %26 = arith.truncf %24 : vector<32x96xf32> to vector<32x96xbf16>
    %cst_12 = arith.constant dense<0.000000e+00> : vector<256x96xf32>
    %27 = tpu.matmul %25, %26, %cst_12 {dimension_numbers = #tpu.dot_dimension_numbers<[1], [0], [0], [1], [0, 0, 1, 1], [], []>} : vector<256x32xbf16>, vector<32x96xbf16>, vector<256x96xf32> -> vector<256x96xf32>
    %c0_13 = arith.constant 0 : index
    %c0_14 = arith.constant 0 : index
    %28 = vector.load %arg7[%c0_13, %c0_14] : memref<1x96xf32, #tpu.memory_space<vmem>>, vector<1x96xf32>
    %29 = vector.broadcast %28 : vector<1x96xf32> to vector<256x96xf32>
    %30 = arith.addf %27, %29 : vector<256x96xf32>
    %31 = vector.extract_strided_slice %30 {offsets = [0, 0], sizes = [256, 16], strides = [1, 1]} : vector<256x96xf32> to vector<256x16xf32>
    %32 = vector.shape_cast %31 : vector<256x16xf32> to vector<4x64x16xf32>
    %33 = vector.extract_strided_slice %30 {offsets = [0, 32], sizes = [256, 16], strides = [1, 1]} : vector<256x96xf32> to vector<256x16xf32>
    %34 = vector.shape_cast %33 : vector<256x16xf32> to vector<4x64x16xf32>
    %35 = vector.extract_strided_slice %30 {offsets = [0, 64], sizes = [256, 16], strides = [1, 1]} : vector<256x96xf32> to vector<256x16xf32>
    %36 = vector.shape_cast %35 : vector<256x16xf32> to vector<4x64x16xf32>
    %37 = arith.truncf %32 : vector<4x64x16xf32> to vector<4x64x16xbf16>
    %38 = arith.truncf %34 : vector<4x64x16xf32> to vector<4x64x16xbf16>
    "tpu.trace_start"() <{level = 10 : i32, message = "wnd,wmd->wnm"}> : () -> ()
    %cst_15 = arith.constant dense<0.000000e+00> : vector<4x64x64xf32>
    %39 = tpu.matmul %37, %38, %cst_15 {dimension_numbers = #tpu.dot_dimension_numbers<[2], [2], [1], [1], [0, 0, 0, 1, 1, 1], [0], [0]>} : vector<4x64x16xbf16>, vector<4x64x16xbf16>, vector<4x64x64xf32> -> vector<4x64x64xf32>
    "tpu.trace_stop"() : () -> ()
    %c0_16 = arith.constant 0 : index
    %c0_17 = arith.constant 0 : index
    %c0_18 = arith.constant 0 : index
    %40 = vector.load %arg2[%c0_16, %c0_17, %c0_18] : memref<2x64x64xf32, #tpu.memory_space<vmem>>, vector<1x64x64xf32>
    %41 = vector.shape_cast %40 : vector<1x64x64xf32> to vector<64x64xf32>
    %42 = vector.shape_cast %41 : vector<64x64xf32> to vector<1x64x64xf32>
    %43 = vector.broadcast %42 : vector<1x64x64xf32> to vector<4x64x64xf32>
    %44 = arith.addf %39, %43 : vector<4x64x64xf32>
    %c0_19 = arith.constant 0 : index
    %c0_20 = arith.constant 0 : index
    %c0_21 = arith.constant 0 : index
    %45 = vector.load %arg3[%c0_19, %c0_20, %c0_21] : memref<4x64x64xf32, #tpu.memory_space<vmem>>, vector<4x64x64xf32>
    %46 = arith.addf %44, %45 : vector<4x64x64xf32>
    %cst_22 = arith.constant dense<0xFF800000> : vector<4x64xf32>
    %47 = vector.multi_reduction <maximumf>, %46, %cst_22 [2] : vector<4x64x64xf32> to vector<4x64xf32>
    %48 = vector.shape_cast %47 : vector<4x64xf32> to vector<4x64x1xf32>
    %49 = vector.broadcast %48 : vector<4x64x1xf32> to vector<4x64x64xf32>
    %50 = arith.subf %46, %49 : vector<4x64x64xf32>
    %51 = math.exp %50 : vector<4x64x64xf32>
    %cst_23 = arith.constant dense<0.000000e+00> : vector<4x64xf32>
    %52 = vector.multi_reduction <add>, %51, %cst_23 [2] : vector<4x64x64xf32> to vector<4x64xf32>
    %53 = vector.shape_cast %52 : vector<4x64xf32> to vector<4x64x1xf32>
    %54 = tpu.reciprocal %53 {approx = true} : vector<4x64x1xf32> -> vector<4x64x1xf32>
    %55 = vector.broadcast %54 : vector<4x64x1xf32> to vector<4x64x64xf32>
    %56 = arith.mulf %51, %55 : vector<4x64x64xf32>
    %57 = arith.truncf %56 : vector<4x64x64xf32> to vector<4x64x64xbf16>
    %58 = arith.truncf %36 : vector<4x64x16xf32> to vector<4x64x16xbf16>
    "tpu.trace_start"() <{level = 10 : i32, message = "wnm,wmd->wnd"}> : () -> ()
    %cst_24 = arith.constant dense<0.000000e+00> : vector<4x64x16xf32>
    %59 = tpu.matmul %57, %58, %cst_24 {dimension_numbers = #tpu.dot_dimension_numbers<[2], [1], [1], [2], [0, 0, 0, 1, 1, 2], [0], [0]>} : vector<4x64x64xbf16>, vector<4x64x16xbf16>, vector<4x64x16xf32> -> vector<4x64x16xf32>
    "tpu.trace_stop"() : () -> ()
    %60 = vector.extract_strided_slice %30 {offsets = [0, 16], sizes = [256, 16], strides = [1, 1]} : vector<256x96xf32> to vector<256x16xf32>
    %61 = vector.shape_cast %60 : vector<256x16xf32> to vector<4x64x16xf32>
    %62 = vector.extract_strided_slice %30 {offsets = [0, 48], sizes = [256, 16], strides = [1, 1]} : vector<256x96xf32> to vector<256x16xf32>
    %63 = vector.shape_cast %62 : vector<256x16xf32> to vector<4x64x16xf32>
    %64 = vector.extract_strided_slice %30 {offsets = [0, 80], sizes = [256, 16], strides = [1, 1]} : vector<256x96xf32> to vector<256x16xf32>
    %65 = vector.shape_cast %64 : vector<256x16xf32> to vector<4x64x16xf32>
    %66 = arith.truncf %61 : vector<4x64x16xf32> to vector<4x64x16xbf16>
    %67 = arith.truncf %63 : vector<4x64x16xf32> to vector<4x64x16xbf16>
    "tpu.trace_start"() <{level = 10 : i32, message = "wnd,wmd->wnm"}> : () -> ()
    %cst_25 = arith.constant dense<0.000000e+00> : vector<4x64x64xf32>
    %68 = tpu.matmul %66, %67, %cst_25 {dimension_numbers = #tpu.dot_dimension_numbers<[2], [2], [1], [1], [0, 0, 0, 1, 1, 1], [0], [0]>} : vector<4x64x16xbf16>, vector<4x64x16xbf16>, vector<4x64x64xf32> -> vector<4x64x64xf32>
    "tpu.trace_stop"() : () -> ()
    %c1 = arith.constant 1 : index
    %c0_26 = arith.constant 0 : index
    %c0_27 = arith.constant 0 : index
    %69 = vector.load %arg2[%c1, %c0_26, %c0_27] : memref<2x64x64xf32, #tpu.memory_space<vmem>>, vector<1x64x64xf32>
    %70 = vector.shape_cast %69 : vector<1x64x64xf32> to vector<64x64xf32>
    %71 = vector.shape_cast %70 : vector<64x64xf32> to vector<1x64x64xf32>
    %72 = vector.broadcast %71 : vector<1x64x64xf32> to vector<4x64x64xf32>
    %73 = arith.addf %68, %72 : vector<4x64x64xf32>
    %c0_28 = arith.constant 0 : index
    %c0_29 = arith.constant 0 : index
    %c0_30 = arith.constant 0 : index
    %74 = vector.load %arg3[%c0_28, %c0_29, %c0_30] : memref<4x64x64xf32, #tpu.memory_space<vmem>>, vector<4x64x64xf32>
    %75 = arith.addf %73, %74 : vector<4x64x64xf32>
    %cst_31 = arith.constant dense<0xFF800000> : vector<4x64xf32>
    %76 = vector.multi_reduction <maximumf>, %75, %cst_31 [2] : vector<4x64x64xf32> to vector<4x64xf32>
    %77 = vector.shape_cast %76 : vector<4x64xf32> to vector<4x64x1xf32>
    %78 = vector.broadcast %77 : vector<4x64x1xf32> to vector<4x64x64xf32>
    %79 = arith.subf %75, %78 : vector<4x64x64xf32>
    %80 = math.exp %79 : vector<4x64x64xf32>
    %cst_32 = arith.constant dense<0.000000e+00> : vector<4x64xf32>
    %81 = vector.multi_reduction <add>, %80, %cst_32 [2] : vector<4x64x64xf32> to vector<4x64xf32>
    %82 = vector.shape_cast %81 : vector<4x64xf32> to vector<4x64x1xf32>
    %83 = tpu.reciprocal %82 {approx = true} : vector<4x64x1xf32> -> vector<4x64x1xf32>
    %84 = vector.broadcast %83 : vector<4x64x1xf32> to vector<4x64x64xf32>
    %85 = arith.mulf %80, %84 : vector<4x64x64xf32>
    %86 = arith.truncf %85 : vector<4x64x64xf32> to vector<4x64x64xbf16>
    %87 = arith.truncf %65 : vector<4x64x16xf32> to vector<4x64x16xbf16>
    "tpu.trace_start"() <{level = 10 : i32, message = "wnm,wmd->wnd"}> : () -> ()
    %cst_33 = arith.constant dense<0.000000e+00> : vector<4x64x16xf32>
    %88 = tpu.matmul %86, %87, %cst_33 {dimension_numbers = #tpu.dot_dimension_numbers<[2], [1], [1], [2], [0, 0, 0, 1, 1, 2], [0], [0]>} : vector<4x64x64xbf16>, vector<4x64x16xbf16>, vector<4x64x16xf32> -> vector<4x64x16xf32>
    "tpu.trace_stop"() : () -> ()
    %89 = tpu.concatenate %59, %88 in 2 : vector<4x64x16xf32>, vector<4x64x16xf32> -> vector<4x64x32xf32>
    %90 = vector.shape_cast %89 : vector<4x64x32xf32> to vector<256x32xf32>
    %c0_34 = arith.constant 0 : index
    %c0_35 = arith.constant 0 : index
    %91 = vector.load %arg8[%c0_34, %c0_35] : memref<32x32xf32, #tpu.memory_space<vmem>>, vector<32x32xf32>
    %92 = arith.truncf %90 : vector<256x32xf32> to vector<256x32xbf16>
    %93 = arith.truncf %91 : vector<32x32xf32> to vector<32x32xbf16>
    %cst_36 = arith.constant dense<0.000000e+00> : vector<256x32xf32>
    %94 = tpu.matmul %92, %93, %cst_36 {dimension_numbers = #tpu.dot_dimension_numbers<[1], [0], [0], [1], [0, 0, 1, 1], [], []>} : vector<256x32xbf16>, vector<32x32xbf16>, vector<256x32xf32> -> vector<256x32xf32>
    %95 = arith.addf %1, %94 : vector<256x32xf32>
    %c0_37 = arith.constant 0 : index
    %c0_38 = arith.constant 0 : index
    %96 = vector.load %arg9[%c0_37, %c0_38] : memref<1x32xf32, #tpu.memory_space<vmem>>, vector<1x32xf32>
    %97 = vector.broadcast %96 : vector<1x32xf32> to vector<256x32xf32>
    %98 = arith.addf %95, %97 : vector<256x32xf32>
    %cst_39 = arith.constant dense<0.000000e+00> : vector<256xf32>
    %99 = vector.multi_reduction <add>, %98, %cst_39 [1] : vector<256x32xf32> to vector<256xf32>
    %100 = vector.shape_cast %99 : vector<256xf32> to vector<256x1xf32>
    %cst_40 = arith.constant 3.200000e+01 : f32
    %101 = vector.broadcast %cst_40 : f32 to vector<256x1xf32>
    %102 = arith.divf %100, %101 : vector<256x1xf32>
    %103 = vector.broadcast %102 : vector<256x1xf32> to vector<256x32xf32>
    %104 = arith.subf %98, %103 : vector<256x32xf32>
    %105 = arith.mulf %104, %104 : vector<256x32xf32>
    %cst_41 = arith.constant dense<0.000000e+00> : vector<256xf32>
    %106 = vector.multi_reduction <add>, %105, %cst_41 [1] : vector<256x32xf32> to vector<256xf32>
    %107 = vector.shape_cast %106 : vector<256xf32> to vector<256x1xf32>
    %cst_42 = arith.constant 3.200000e+01 : f32
    %108 = vector.broadcast %cst_42 : f32 to vector<256x1xf32>
    %109 = arith.divf %107, %108 : vector<256x1xf32>
    %cst_43 = arith.constant 9.99999974E-6 : f32
    %110 = vector.broadcast %cst_43 : f32 to vector<256x1xf32>
    %111 = arith.addf %109, %110 : vector<256x1xf32>
    %112 = math.rsqrt %111 : vector<256x1xf32>
    %113 = vector.broadcast %112 : vector<256x1xf32> to vector<256x32xf32>
    %114 = arith.mulf %104, %113 : vector<256x32xf32>
    %c0_44 = arith.constant 0 : index
    %c0_45 = arith.constant 0 : index
    %115 = vector.load %arg10[%c0_44, %c0_45] : memref<1x32xf32, #tpu.memory_space<vmem>>, vector<1x32xf32>
    %116 = vector.broadcast %115 : vector<1x32xf32> to vector<256x32xf32>
    %117 = arith.mulf %114, %116 : vector<256x32xf32>
    %c0_46 = arith.constant 0 : index
    %c0_47 = arith.constant 0 : index
    %118 = vector.load %arg11[%c0_46, %c0_47] : memref<1x32xf32, #tpu.memory_space<vmem>>, vector<1x32xf32>
    %119 = vector.broadcast %118 : vector<1x32xf32> to vector<256x32xf32>
    %120 = arith.addf %117, %119 : vector<256x32xf32>
    %c0_48 = arith.constant 0 : index
    %c0_49 = arith.constant 0 : index
    %121 = vector.load %arg12[%c0_48, %c0_49] : memref<32x128xf32, #tpu.memory_space<vmem>>, vector<32x128xf32>
    %122 = arith.truncf %120 : vector<256x32xf32> to vector<256x32xbf16>
    %123 = arith.truncf %121 : vector<32x128xf32> to vector<32x128xbf16>
    %cst_50 = arith.constant dense<0.000000e+00> : vector<256x128xf32>
    %124 = tpu.matmul %122, %123, %cst_50 {dimension_numbers = #tpu.dot_dimension_numbers<[1], [0], [0], [1], [0, 0, 1, 1], [], []>} : vector<256x32xbf16>, vector<32x128xbf16>, vector<256x128xf32> -> vector<256x128xf32>
    %c0_51 = arith.constant 0 : index
    %c0_52 = arith.constant 0 : index
    %125 = vector.load %arg13[%c0_51, %c0_52] : memref<1x128xf32, #tpu.memory_space<vmem>>, vector<1x128xf32>
    %126 = vector.broadcast %125 : vector<1x128xf32> to vector<256x128xf32>
    %127 = arith.addf %124, %126 : vector<256x128xf32>
    %cst_53 = arith.constant 0.000000e+00 : f32
    %128 = vector.broadcast %cst_53 : f32 to vector<256x128xf32>
    %129 = arith.subf %128, %127 : vector<256x128xf32>
    %130 = math.exp %129 : vector<256x128xf32>
    %cst_54 = arith.constant 1.000000e+00 : f32
    %131 = vector.broadcast %cst_54 : f32 to vector<256x128xf32>
    %132 = arith.addf %131, %130 : vector<256x128xf32>
    %cst_55 = arith.constant 1.000000e+00 : f32
    %133 = vector.broadcast %cst_55 : f32 to vector<256x128xf32>
    %134 = arith.divf %133, %132 : vector<256x128xf32>
    %135 = arith.mulf %127, %134 : vector<256x128xf32>
    %c0_56 = arith.constant 0 : index
    %c0_57 = arith.constant 0 : index
    %136 = vector.load %arg14[%c0_56, %c0_57] : memref<128x32xf32, #tpu.memory_space<vmem>>, vector<128x32xf32>
    %137 = arith.truncf %135 : vector<256x128xf32> to vector<256x128xbf16>
    %138 = arith.truncf %136 : vector<128x32xf32> to vector<128x32xbf16>
    %cst_58 = arith.constant dense<0.000000e+00> : vector<256x32xf32>
    %139 = tpu.matmul %137, %138, %cst_58 {dimension_numbers = #tpu.dot_dimension_numbers<[1], [0], [0], [1], [0, 0, 1, 1], [], []>} : vector<256x128xbf16>, vector<128x32xbf16>, vector<256x32xf32> -> vector<256x32xf32>
    %140 = arith.addf %98, %139 : vector<256x32xf32>
    %c0_59 = arith.constant 0 : index
    %c0_60 = arith.constant 0 : index
    %141 = vector.load %arg15[%c0_59, %c0_60] : memref<1x32xf32, #tpu.memory_space<vmem>>, vector<1x32xf32>
    %142 = vector.broadcast %141 : vector<1x32xf32> to vector<256x32xf32>
    %143 = arith.addf %140, %142 : vector<256x32xf32>
    %144 = vector.shape_cast %143 : vector<256x32xf32> to vector<4x64x32xf32>
    %c0_61 = arith.constant 0 : index
    %c0_62 = arith.constant 0 : index
    %c0_63 = arith.constant 0 : index
    %145 = vector.load %arg16[%c0_61, %c0_62, %c0_63] : memref<4x64x32xf32, #tpu.memory_space<vmem>>, vector<4x64x32xf32>
    tpu.vector_store %arg16[%c0_61, %c0_62, %c0_63], %144 {strides = array<i32>} : memref<4x64x32xf32, #tpu.memory_space<vmem>>, vector<4x64x32xf32>,
    return
  }
  func.func @transform_0(%arg0: i32) -> (i32, i32, i32) {
    %c0_i32 = arith.constant 0 : i32
    %c0_i32_0 = arith.constant 0 : i32
    %c0_i32_1 = arith.constant 0 : i32
    return %arg0, %c0_i32, %c0_i32_0 : i32, i32, i32
  }
  func.func @transform_1(%arg0: i32) -> (i32, i32, i32) {
    %c0_i32 = arith.constant 0 : i32
    %c0_i32_0 = arith.constant 0 : i32
    %c0_i32_1 = arith.constant 0 : i32
    %c0_i32_2 = arith.constant 0 : i32
    return %c0_i32, %c0_i32_0, %c0_i32_1 : i32, i32, i32
  }
  func.func @transform_2(%arg0: i32) -> (i32, i32, i32) {
    %c1_i32 = arith.constant 1 : i32
    %c0_i32 = arith.constant 0 : i32
    %0 = arith.cmpi eq, %c1_i32, %c0_i32 : i32
    %c1_i32_0 = arith.constant 1 : i32
    %1 = arith.select %0, %c1_i32_0, %c1_i32 : i32
    %2 = arith.remsi %arg0, %1 : i32
    %c0_i32_1 = arith.constant 0 : i32
    %3 = arith.cmpi ne, %2, %c0_i32_1 : i32
    %c0_i32_2 = arith.constant 0 : i32
    %4 = arith.cmpi slt, %2, %c0_i32_2 : i32
    %c0_i32_3 = arith.constant 0 : i32
    %5 = arith.cmpi slt, %1, %c0_i32_3 : i32
    %6 = arith.xori %4, %5 : i1
    %7 = arith.andi %6, %3 : i1
    %8 = arith.addi %2, %1 : i32
    %9 = arith.select %7, %8, %2 : i32
    %c0_i32_4 = arith.constant 0 : i32
    %c0_i32_5 = arith.constant 0 : i32
    %c0_i32_6 = arith.constant 0 : i32
    return %9, %c0_i32_4, %c0_i32_5 : i32, i32, i32
  }
  func.func @transform_3(%arg0: i32) -> (i32, i32) {
    %c0_i32 = arith.constant 0 : i32
    %c0_i32_0 = arith.constant 0 : i32
    %c0_i32_1 = arith.constant 0 : i32
    return %c0_i32, %c0_i32_0 : i32, i32
  }
  func.func @transform_4(%arg0: i32) -> (i32, i32) {
    %c0_i32 = arith.constant 0 : i32
    %c0_i32_0 = arith.constant 0 : i32
    %c0_i32_1 = arith.constant 0 : i32
    return %c0_i32, %c0_i32_0 : i32, i32
  }
  func.func @transform_5(%arg0: i32) -> (i32, i32) {
    %c0_i32 = arith.constant 0 : i32
    %c0_i32_0 = arith.constant 0 : i32
    %c0_i32_1 = arith.constant 0 : i32
    return %c0_i32, %c0_i32_0 : i32, i32
  }
  func.func @transform_6(%arg0: i32) -> (i32, i32) {
    %c0_i32 = arith.constant 0 : i32
    %c0_i32_0 = arith.constant 0 : i32
    %c0_i32_1 = arith.constant 0 : i32
    return %c0_i32, %c0_i32_0 : i32, i32
  }
  func.func @transform_7(%arg0: i32) -> (i32, i32) {
    %c0_i32 = arith.constant 0 : i32
    %c0_i32_0 = arith.constant 0 : i32
    %c0_i32_1 = arith.constant 0 : i32
    return %c0_i32, %c0_i32_0 : i32, i32
  }
  func.func @transform_8(%arg0: i32) -> (i32, i32) {
    %c0_i32 = arith.constant 0 : i32
    %c0_i32_0 = arith.constant 0 : i32
    %c0_i32_1 = arith.constant 0 : i32
    return %c0_i32, %c0_i32_0 : i32, i32
  }
  func.func @transform_9(%arg0: i32) -> (i32, i32) {
    %c0_i32 = arith.constant 0 : i32
    %c0_i32_0 = arith.constant 0 : i32
    %c0_i32_1 = arith.constant 0 : i32
    return %c0_i32, %c0_i32_0 : i32, i32
  }
  func.func @transform_10(%arg0: i32) -> (i32, i32) {
    %c0_i32 = arith.constant 0 : i32
    %c0_i32_0 = arith.constant 0 : i32
    %c0_i32_1 = arith.constant 0 : i32
    return %c0_i32, %c0_i32_0 : i32, i32
  }
  func.func @transform_11(%arg0: i32) -> (i32, i32) {
    %c0_i32 = arith.constant 0 : i32
    %c0_i32_0 = arith.constant 0 : i32
    %c0_i32_1 = arith.constant 0 : i32
    return %c0_i32, %c0_i32_0 : i32, i32
  }
  func.func @transform_12(%arg0: i32) -> (i32, i32) {
    %c0_i32 = arith.constant 0 : i32
    %c0_i32_0 = arith.constant 0 : i32
    %c0_i32_1 = arith.constant 0 : i32
    return %c0_i32, %c0_i32_0 : i32, i32
  }
  func.func @transform_13(%arg0: i32) -> (i32, i32) {
    %c0_i32 = arith.constant 0 : i32
    %c0_i32_0 = arith.constant 0 : i32
    %c0_i32_1 = arith.constant 0 : i32
    return %c0_i32, %c0_i32_0 : i32, i32
  }
  func.func @transform_14(%arg0: i32) -> (i32, i32) {
    %c0_i32 = arith.constant 0 : i32
    %c0_i32_0 = arith.constant 0 : i32
    %c0_i32_1 = arith.constant 0 : i32
    return %c0_i32, %c0_i32_0 : i32, i32
  }
  func.func @transform_15(%arg0: i32) -> (i32, i32, i32) {
    %c0_i32 = arith.constant 0 : i32
    %c0_i32_0 = arith.constant 0 : i32
    %c0_i32_1 = arith.constant 0 : i32
    return %arg0, %c0_i32, %c0_i32_0 : i32, i32, i32
  }
}

</mosaic_0001>

<llo_original>
// kernel: _lambda_.3
$region0: #{_lambda_.3}
  #allocation0 [shape = 'u32[]', space=smem, size = 0x4, offset = 0x4, fixed_abs, tag = 'smem constant byte address 0x4 - core index']
  #allocation1 [shape = 'u32[144,128]{1,0:T(1,128)}', space=vmem, size = 0x12000, scoped, tag = 'internal scratch']
  %s0 = inlined_call_operand.vmem [shape: f32[8,64,32], index: 0, kind: input, shape index: {}]
  %s1 = inlined_call_operand.vmem [shape: f32[2,64,64], index: 1, kind: input, shape index: {}]
  %s2 = inlined_call_operand.vmem [shape: f32[4,64,64], index: 2, kind: input, shape index: {}]
  %s3 = inlined_call_operand.vmem [shape: f32[1,32], index: 3, kind: input, shape index: {}]
  %s4 = inlined_call_operand.vmem [shape: f32[1,32], index: 4, kind: input, shape index: {}]
  %s5 = inlined_call_operand.vmem [shape: f32[32,96], index: 5, kind: input, shape index: {}]
  %s6 = inlined_call_operand.vmem [shape: f32[1,96], index: 6, kind: input, shape index: {}]
  %s7 = inlined_call_operand.vmem [shape: f32[32,32], index: 7, kind: input, shape index: {}]
  %s8 = inlined_call_operand.vmem [shape: f32[1,32], index: 8, kind: input, shape index: {}]
  %s9 = inlined_call_operand.vmem [shape: f32[1,32], index: 9, kind: input, shape index: {}]
  %s10 = inlined_call_operand.vmem [shape: f32[1,32], index: 10, kind: input, shape index: {}]
  %s11 = inlined_call_operand.vmem [shape: f32[32,128], index: 11, kind: input, shape index: {}]
  %s12 = inlined_call_operand.vmem [shape: f32[1,128], index: 12, kind: input, shape index: {}]
  %s13 = inlined_call_operand.vmem [shape: f32[128,32], index: 13, kind: input, shape index: {}]
  %s14 = inlined_call_operand.vmem [shape: f32[1,32], index: 14, kind: input, shape index: {}]
  %s15 = inlined_call_operand.vmem [shape: f32[8,64,32], index: 15, kind: output, shape index: {}]
  %s16 = sld [smem:[#allocation0]]
  $region93: #{_lambda_.3} parent=0
    _
  %s18 = ssub.s32 1, %s16
  %s19 = scalar_select 0, %s18, %s16
  loop: start=0, step=1, limit=4
  $region2: #{_lambda_.3} parent=0 // loop_pre_header
    _
  $region3: #{_lambda_.3} parent=0 // loop_header
    %s21 = sphi 0, %s25
    %p22 = scmp.ge.s32.totalorder %s21, 4
    %s31 = sphi 0, %s33
    %s34 = sphi 0, %s31
    %s35 = sphi 0, %s34
    %s51 = sphi 0, %s35
    %s55 = sphi 0, %s55
    %s57 = sphi 0, %s55
    %s58 = sphi 0, %s57
    %s72 = sphi 0, %s58
    %s76 = sphi 0, %s76
    %s78 = sphi 0, %s76
    %s79 = sphi 0, %s78
    %s93 = sphi 0, %s79
    %s97 = sphi 0, %s97
    %s99 = sphi 0, %s97
    %s100 = sphi 0, %s99
    %s114 = sphi 0, %s100
    %s118 = sphi 0, %s118
    %s120 = sphi 0, %s118
    %s121 = sphi 0, %s120
    %s135 = sphi 0, %s121
    %s139 = sphi 0, %s139
    %s141 = sphi 0, %s139
    %s142 = sphi 0, %s141
    %s156 = sphi 0, %s142
    %s160 = sphi 0, %s160
    %s162 = sphi 0, %s160
    %s163 = sphi 0, %s162
    %s177 = sphi 0, %s163
    %s181 = sphi 0, %s181
    %s183 = sphi 0, %s181
    %s184 = sphi 0, %s183
    %s198 = sphi 0, %s184
    %s202 = sphi 0, %s202
    %s204 = sphi 0, %s202
    %s205 = sphi 0, %s204
    %s219 = sphi 0, %s205
    %s223 = sphi 0, %s223
    %s225 = sphi 0, %s223
    %s226 = sphi 0, %s225
    %s240 = sphi 0, %s226
    %s244 = sphi 0, %s244
    %s246 = sphi 0, %s244
    %s247 = sphi 0, %s246
    %s261 = sphi 0, %s247
    %s265 = sphi 0, %s265
    %s267 = sphi 0, %s265
    %s268 = sphi 0, %s267
    %s282 = sphi 0, %s268
    %s286 = sphi 0, %s286
    %s288 = sphi 0, %s286
    %s289 = sphi 0, %s288
    %s303 = sphi 0, %s289
    %s307 = sphi 0, %s307
    %s309 = sphi 0, %s307
    %s310 = sphi 0, %s309
    %s324 = sphi 0, %s310
    %s328 = sphi 0, %s328
    %s330 = sphi 0, %s328
    %s331 = sphi 0, %s330
    %s345 = sphi 0, %s331
    %s351 = sphi 0, %s353
    %s354 = sphi 0, %s351
    %s355 = sphi 0, %s354
    %s371 = sphi 0, %s355
  $region4: #{_lambda_.3} parent=0 // loop_header_branch
    %24 = sbr.rel (%p22) target = $region8
  $region5: #{_lambda_.3} parent=0 // loop_body
    %s26 = ssub.s32 %s21, 1
    %s27 = ssub.s32 %s21, 2
    %s28 = sadd.s32 %s21, 1
    %s29 = ssub.s32 %s21, %s28
    %p30 = scmp.eq.s32.totalorder %s29, 0
    %s32 = sadd.s32 %s31, 1
    %s33 = scalar_select %p30, %s31, %s32
    %p36 = pneg %p30
    %p37 = scmp.eq.s32.totalorder %s21, 1
    %p38 = por %p36, %p37
    %p39 = scmp.ne.s32.totalorder %s31, %s34
    %p40 = scmp.eq.s32.totalorder %s21, 0
    %p41 = por %p39, %p40
    %p42 = scmp.ne.s32.totalorder %s31, %s34
    %p43 = scmp.eq.s32.totalorder %s26, 1
    %p44 = por %p42, %p43
    %p45 = scmp.ne.s32.totalorder %s34, %s35
    %p46 = scmp.eq.s32.totalorder %s26, 0
    %p47 = por %p45, %p46
    %p48 = scmp.ne.s32.totalorder %s34, %s35
    %p49 = scmp.eq.s32.totalorder %s27, 1
    %p50 = por %p48, %p49
    %p52 = scmp.ne.s32.totalorder %s35, %s51
    %p53 = scmp.eq.s32.totalorder %s27, 0
    %p54 = por %p52, %p53
    %s56 = sadd.s32 %s55, 1
    %p59 = scmp.eq.s32.totalorder %s21, 1
    %p60 = scmp.ne.s32.totalorder %s55, %s57
    %p61 = scmp.eq.s32.totalorder %s21, 0
    %p62 = por %p60, %p61
    %p63 = scmp.ne.s32.totalorder %s55, %s57
    %p64 = scmp.eq.s32.totalorder %s26, 1
    %p65 = por %p63, %p64
    %p66 = scmp.ne.s32.totalorder %s57, %s58
    %p67 = scmp.eq.s32.totalorder %s26, 0
    %p68 = por %p66, %p67
    %p69 = scmp.ne.s32.totalorder %s57, %s58
    %p70 = scmp.eq.s32.totalorder %s27, 1
    %p71 = por %p69, %p70
    %p73 = scmp.ne.s32.totalorder %s58, %s72
    %p74 = scmp.eq.s32.totalorder %s27, 0
    %p75 = por %p73, %p74
    %s77 = sadd.s32 %s76, 1
    %p80 = scmp.eq.s32.totalorder %s21, 1
    %p81 = scmp.ne.s32.totalorder %s76, %s78
    %p82 = scmp.eq.s32.totalorder %s21, 0
    %p83 = por %p81, %p82
    %p84 = scmp.ne.s32.totalorder %s76, %s78
    %p85 = scmp.eq.s32.totalorder %s26, 1
    %p86 = por %p84, %p85
    %p87 = scmp.ne.s32.totalorder %s78, %s79
    %p88 = scmp.eq.s32.totalorder %s26, 0
    %p89 = por %p87, %p88
    %p90 = scmp.ne.s32.totalorder %s78, %s79
    %p91 = scmp.eq.s32.totalorder %s27, 1
    %p92 = por %p90, %p91
    %p94 = scmp.ne.s32.totalorder %s79, %s93
    %p95 = scmp.eq.s32.totalorder %s27, 0
    %p96 = por %p94, %p95
    %s98 = sadd.s32 %s97, 1
    %p101 = scmp.eq.s32.totalorder %s21, 1
    %p102 = scmp.ne.s32.totalorder %s97, %s99
    %p103 = scmp.eq.s32.totalorder %s21, 0
    %p104 = por %p102, %p103
    %p105 = scmp.ne.s32.totalorder %s97, %s99
    %p106 = scmp.eq.s32.totalorder %s26, 1
    %p107 = por %p105, %p106
    %p108 = scmp.ne.s32.totalorder %s99, %s100
    %p109 = scmp.eq.s32.totalorder %s26, 0
    %p110 = por %p108, %p109
    %p111 = scmp.ne.s32.totalorder %s99, %s100
    %p112 = scmp.eq.s32.totalorder %s27, 1
    %p113 = por %p111, %p112
    %p115 = scmp.ne.s32.totalorder %s100, %s114
    %p116 = scmp.eq.s32.totalorder %s27, 0
    %p117 = por %p115, %p116
    %s119 = sadd.s32 %s118, 1
    %p122 = scmp.eq.s32.totalorder %s21, 1
    %p123 = scmp.ne.s32.totalorder %s118, %s120
    %p124 = scmp.eq.s32.totalorder %s21, 0
    %p125 = por %p123, %p124
    %p126 = scmp.ne.s32.totalorder %s118, %s120
    %p127 = scmp.eq.s32.totalorder %s26, 1
    %p128 = por %p126, %p127
    %p129 = scmp.ne.s32.totalorder %s120, %s121
    %p130 = scmp.eq.s32.totalorder %s26, 0
    %p131 = por %p129, %p130
    %p132 = scmp.ne.s32.totalorder %s120, %s121
    %p133 = scmp.eq.s32.totalorder %s27, 1
    %p134 = por %p132, %p133
    %p136 = scmp.ne.s32.totalorder %s121, %s135
    %p137 = scmp.eq.s32.totalorder %s27, 0
    %p138 = por %p136, %p137
    %s140 = sadd.s32 %s139, 1
    %p143 = scmp.eq.s32.totalorder %s21, 1
    %p144 = scmp.ne.s32.totalorder %s139, %s141
    %p145 = scmp.eq.s32.totalorder %s21, 0
    %p146 = por %p144, %p145
    %p147 = scmp.ne.s32.totalorder %s139, %s141
    %p148 = scmp.eq.s32.totalorder %s26, 1
    %p149 = por %p147, %p148
    %p150 = scmp.ne.s32.totalorder %s141, %s142
    %p151 = scmp.eq.s32.totalorder %s26, 0
    %p152 = por %p150, %p151
    %p153 = scmp.ne.s32.totalorder %s141, %s142
    %p154 = scmp.eq.s32.totalorder %s27, 1
    %p155 = por %p153, %p154
    %p157 = scmp.ne.s32.totalorder %s142, %s156
    %p158 = scmp.eq.s32.totalorder %s27, 0
    %p159 = por %p157, %p158
    %s161 = sadd.s32 %s160, 1
    %p164 = scmp.eq.s32.totalorder %s21, 1
    %p165 = scmp.ne.s32.totalorder %s160, %s162
    %p166 = scmp.eq.s32.totalorder %s21, 0
    %p167 = por %p165, %p166
    %p168 = scmp.ne.s32.totalorder %s160, %s162
    %p169 = scmp.eq.s32.totalorder %s26, 1
    %p170 = por %p168, %p169
    %p171 = scmp.ne.s32.totalorder %s162, %s163
    %p172 = scmp.eq.s32.totalorder %s26, 0
    %p173 = por %p171, %p172
    %p174 = scmp.ne.s32.totalorder %s162, %s163
    %p175 = scmp.eq.s32.totalorder %s27, 1
    %p176 = por %p174, %p175
    %p178 = scmp.ne.s32.totalorder %s163, %s177
    %p179 = scmp.eq.s32.totalorder %s27, 0
    %p180 = por %p178, %p179
    %s182 = sadd.s32 %s181, 1
    %p185 = scmp.eq.s32.totalorder %s21, 1
    %p186 = scmp.ne.s32.totalorder %s181, %s183
    %p187 = scmp.eq.s32.totalorder %s21, 0
    %p188 = por %p186, %p187
    %p189 = scmp.ne.s32.totalorder %s181, %s183
    %p190 = scmp.eq.s32.totalorder %s26, 1
    %p191 = por %p189, %p190
    %p192 = scmp.ne.s32.totalorder %s183, %s184
    %p193 = scmp.eq.s32.totalorder %s26, 0
    %p194 = por %p192, %p193
    %p195 = scmp.ne.s32.totalorder %s183, %s184
    %p196 = scmp.eq.s32.totalorder %s27, 1
    %p197 = por %p195, %p196
    %p199 = scmp.ne.s32.totalorder %s184, %s198
    %p200 = scmp.eq.s32.totalorder %s27, 0
    %p201 = por %p199, %p200
    %s203 = sadd.s32 %s202, 1
    %p206 = scmp.eq.s32.totalorder %s21, 1
    %p207 = scmp.ne.s32.totalorder %s202, %s204
    %p208 = scmp.eq.s32.totalorder %s21, 0
    %p209 = por %p207, %p208
    %p210 = scmp.ne.s32.totalorder %s202, %s204
    %p211 = scmp.eq.s32.totalorder %s26, 1
    %p212 = por %p210, %p211
    %p213 = scmp.ne.s32.totalorder %s204, %s205
    %p214 = scmp.eq.s32.totalorder %s26, 0
    %p215 = por %p213, %p214
    %p216 = scmp.ne.s32.totalorder %s204, %s205
    %p217 = scmp.eq.s32.totalorder %s27, 1
    %p218 = por %p216, %p217
    %p220 = scmp.ne.s32.totalorder %s205, %s219
    %p221 = scmp.eq.s32.totalorder %s27, 0
    %p222 = por %p220, %p221
    %s224 = sadd.s32 %s223, 1
    %p227 = scmp.eq.s32.totalorder %s21, 1
    %p228 = scmp.ne.s32.totalorder %s223, %s225
    %p229 = scmp.eq.s32.totalorder %s21, 0
    %p230 = por %p228, %p229
    %p231 = scmp.ne.s32.totalorder %s223, %s225
    %p232 = scmp.eq.s32.totalorder %s26, 1
    %p233 = por %p231, %p232
    %p234 = scmp.ne.s32.totalorder %s225, %s226
    %p235 = scmp.eq.s32.totalorder %s26, 0
    %p236 = por %p234, %p235
    %p237 = scmp.ne.s32.totalorder %s225, %s226
    %p238 = scmp.eq.s32.totalorder %s27, 1
    %p239 = por %p237, %p238
    %p241 = scmp.ne.s32.totalorder %s226, %s240
    %p242 = scmp.eq.s32.totalorder %s27, 0
    %p243 = por %p241, %p242
    %s245 = sadd.s32 %s244, 1
    %p248 = scmp.eq.s32.totalorder %s21, 1
    %p249 = scmp.ne.s32.totalorder %s244, %s246
    %p250 = scmp.eq.s32.totalorder %s21, 0
    %p251 = por %p249, %p250
    %p252 = scmp.ne.s32.totalorder %s244, %s246
    %p253 = scmp.eq.s32.totalorder %s26, 1
    %p254 = por %p252, %p253
    %p255 = scmp.ne.s32.totalorder %s246, %s247
    %p256 = scmp.eq.s32.totalorder %s26, 0
    %p257 = por %p255, %p256
    %p258 = scmp.ne.s32.totalorder %s246, %s247
    %p259 = scmp.eq.s32.totalorder %s27, 1
    %p260 = por %p258, %p259
    %p262 = scmp.ne.s32.totalorder %s247, %s261
    %p263 = scmp.eq.s32.totalorder %s27, 0
    %p264 = por %p262, %p263
    %s266 = sadd.s32 %s265, 1
    %p269 = scmp.eq.s32.totalorder %s21, 1
    %p270 = scmp.ne.s32.totalorder %s265, %s267
    %p271 = scmp.eq.s32.totalorder %s21, 0
    %p272 = por %p270, %p271
    %p273 = scmp.ne.s32.totalorder %s265, %s267
    %p274 = scmp.eq.s32.totalorder %s26, 1
    %p275 = por %p273, %p274
    %p276 = scmp.ne.s32.totalorder %s267, %s268
    %p277 = scmp.eq.s32.totalorder %s26, 0
    %p278 = por %p276, %p277
    %p279 = scmp.ne.s32.totalorder %s267, %s268
    %p280 = scmp.eq.s32.totalorder %s27, 1
    %p281 = por %p279, %p280
    %p283 = scmp.ne.s32.totalorder %s268, %s282
    %p284 = scmp.eq.s32.totalorder %s27, 0
    %p285 = por %p283, %p284
    %s287 = sadd.s32 %s286, 1
    %p290 = scmp.eq.s32.totalorder %s21, 1
    %p291 = scmp.ne.s32.totalorder %s286, %s288
    %p292 = scmp.eq.s32.totalorder %s21, 0
    %p293 = por %p291, %p292
    %p294 = scmp.ne.s32.totalorder %s286, %s288
    %p295 = scmp.eq.s32.totalorder %s26, 1
    %p296 = por %p294, %p295
    %p297 = scmp.ne.s32.totalorder %s288, %s289
    %p298 = scmp.eq.s32.totalorder %s26, 0
    %p299 = por %p297, %p298
    %p300 = scmp.ne.s32.totalorder %s288, %s289
    %p301 = scmp.eq.s32.totalorder %s27, 1
    %p302 = por %p300, %p301
    %p304 = scmp.ne.s32.totalorder %s289, %s303
    %p305 = scmp.eq.s32.totalorder %s27, 0
    %p306 = por %p304, %p305
    %s308 = sadd.s32 %s307, 1
    %p311 = scmp.eq.s32.totalorder %s21, 1
    %p312 = scmp.ne.s32.totalorder %s307, %s309
    %p313 = scmp.eq.s32.totalorder %s21, 0
    %p314 = por %p312, %p313
    %p315 = scmp.ne.s32.totalorder %s307, %s309
    %p316 = scmp.eq.s32.totalorder %s26, 1
    %p317 = por %p315, %p316
    %p318 = scmp.ne.s32.totalorder %s309, %s310
    %p319 = scmp.eq.s32.totalorder %s26, 0
    %p320 = por %p318, %p319
    %p321 = scmp.ne.s32.totalorder %s309, %s310
    %p322 = scmp.eq.s32.totalorder %s27, 1
    %p323 = por %p321, %p322
    %p325 = scmp.ne.s32.totalorder %s310, %s324
    %p326 = scmp.eq.s32.totalorder %s27, 0
    %p327 = por %p325, %p326
    %s329 = sadd.s32 %s328, 1
    %p332 = scmp.eq.s32.totalorder %s21, 1
    %p333 = scmp.ne.s32.totalorder %s328, %s330
    %p334 = scmp.eq.s32.totalorder %s21, 0
    %p335 = por %p333, %p334
    %p336 = scmp.ne.s32.totalorder %s328, %s330
    %p337 = scmp.eq.s32.totalorder %s26, 1
    %p338 = por %p336, %p337
    %p339 = scmp.ne.s32.totalorder %s330, %s331
    %p340 = scmp.eq.s32.totalorder %s26, 0
    %p341 = por %p339, %p340
    %p342 = scmp.ne.s32.totalorder %s330, %s331
    %p343 = scmp.eq.s32.totalorder %s27, 1
    %p344 = por %p342, %p343
    %p346 = scmp.ne.s32.totalorder %s331, %s345
    %p347 = scmp.eq.s32.totalorder %s27, 0
    %p348 = por %p346, %p347
    %s349 = ssub.s32 %s21, %s28
    %p350 = scmp.eq.s32.totalorder %s349, 0
    %s352 = sadd.s32 %s351, 1
    %s353 = scalar_select %p350, %s351, %s352
    %p356 = pneg %p350
    %p357 = scmp.eq.s32.totalorder %s21, 1
    %p358 = por %p356, %p357
    %p359 = scmp.ne.s32.totalorder %s351, %s354
    %p360 = scmp.eq.s32.totalorder %s21, 0
    %p361 = por %p359, %p360
    %p362 = scmp.ne.s32.totalorder %s351, %s354
    %p363 = scmp.eq.s32.totalorder %s26, 1
    %p364 = por %p362, %p363
    %p365 = scmp.ne.s32.totalorder %s354, %s355
    %p366 = scmp.eq.s32.totalorder %s26, 0
    %p367 = por %p365, %p366
    %p368 = scmp.ne.s32.totalorder %s354, %s355
    %p369 = scmp.eq.s32.totalorder %s27, 1
    %p370 = por %p368, %p369
    %p372 = scmp.ne.s32.totalorder %s355, %s371
    %p373 = scmp.eq.s32.totalorder %s27, 0
    %p374 = por %p372, %p373
    %p375 = scmp.le.s32.totalorder 1, %s21
    %p376 = scmp.lt.s32.totalorder %s21, 3
    %p377 = pnand %p375, %p376
    %p378 = pneg %p377
    // Predicated region
    $region9: #{_lambda_.3} parent=5 // pred_check
      _
    $region10: #{_lambda_.3} parent=5 // pred_check_branch
      %380 = sbr.rel (%p377) target = $region12
    $region11: #{_lambda_.3} parent=5 // pred_region
      %s381 = ssub.s32 %s21, 1
      // Predicated region
      $region13: #{_lambda_.3} parent=11 // pred_check
        %p382 = pneg %p68
      $region14: #{_lambda_.3} parent=11 // pred_check_branch
        %384 = sbr.rel (%p382) target = $region16
      $region15: #{_lambda_.3} parent=11 // pred_region
        _
      $region16: #{_lambda_.3} parent=11 // pred_fallthru
        _
      // Predicated region
      $region17: #{_lambda_.3} parent=11 // pred_check
        %p385 = pneg %p89
      $region18: #{_lambda_.3} parent=11 // pred_check_branch
        %387 = sbr.rel (%p385) target = $region20
      $region19: #{_lambda_.3} parent=11 // pred_region
        _
      $region20: #{_lambda_.3} parent=11 // pred_fallthru
        _
      // Predicated region
      $region21: #{_lambda_.3} parent=11 // pred_check
        %p388 = pneg %p110
      $region22: #{_lambda_.3} parent=11 // pred_check_branch
        %390 = sbr.rel (%p388) target = $region24
      $region23: #{_lambda_.3} parent=11 // pred_region
        _
      $region24: #{_lambda_.3} parent=11 // pred_fallthru
        _
      // Predicated region
      $region25: #{_lambda_.3} parent=11 // pred_check
        %p391 = pneg %p131
      $region26: #{_lambda_.3} parent=11 // pred_check_branch
        %393 = sbr.rel (%p391) target = $region28
      $region27: #{_lambda_.3} parent=11 // pred_region
        _
      $region28: #{_lambda_.3} parent=11 // pred_fallthru
        _
      // Predicated region
      $region29: #{_lambda_.3} parent=11 // pred_check
        %p394 = pneg %p152
      $region30: #{_lambda_.3} parent=11 // pred_check_branch
        %396 = sbr.rel (%p394) target = $region32
      $region31: #{_lambda_.3} parent=11 // pred_region
        _
      $region32: #{_lambda_.3} parent=11 // pred_fallthru
        _
      // Predicated region
      $region33: #{_lambda_.3} parent=11 // pred_check
        %p397 = pneg %p173
      $region34: #{_lambda_.3} parent=11 // pred_check_branch
        %399 = sbr.rel (%p397) target = $region36
      $region35: #{_lambda_.3} parent=11 // pred_region
        _
      $region36: #{_lambda_.3} parent=11 // pred_fallthru
        _
      // Predicated region
      $region37: #{_lambda_.3} parent=11 // pred_check
        %p400 = pneg %p194
      $region38: #{_lambda_.3} parent=11 // pred_check_branch
        %402 = sbr.rel (%p400) target = $region40
      $region39: #{_lambda_.3} parent=11 // pred_region
        _
      $region40: #{_lambda_.3} parent=11 // pred_fallthru
        _
      // Predicated region
      $region41: #{_lambda_.3} parent=11 // pred_check
        %p403 = pneg %p215
      $region42: #{_lambda_.3} parent=11 // pred_check_branch
        %405 = sbr.rel (%p403) target = $region44
      $region43: #{_lambda_.3} parent=11 // pred_region
        _
      $region44: #{_lambda_.3} parent=11 // pred_fallthru
        _
      // Predicated region
      $region45: #{_lambda_.3} parent=11 // pred_check
        %p406 = pneg %p236
      $region46: #{_lambda_.3} parent=11 // pred_check_branch
        %408 = sbr.rel (%p406) target = $region48
      $region47: #{_lambda_.3} parent=11 // pred_region
        _
      $region48: #{_lambda_.3} parent=11 // pred_fallthru
        _
      // Predicated region
      $region49: #{_lambda_.3} parent=11 // pred_check
        %p409 = pneg %p257
      $region50: #{_lambda_.3} parent=11 // pred_check_branch
        %411 = sbr.rel (%p409) target = $region52
      $region51: #{_lambda_.3} parent=11 // pred_region
        _
      $region52: #{_lambda_.3} parent=11 // pred_fallthru
        _
      // Predicated region
      $region53: #{_lambda_.3} parent=11 // pred_check
        %p412 = pneg %p278
      $region54: #{_lambda_.3} parent=11 // pred_check_branch
        %414 = sbr.rel (%p412) target = $region56
      $region55: #{_lambda_.3} parent=11 // pred_region
        _
      $region56: #{_lambda_.3} parent=11 // pred_fallthru
        _
      // Predicated region
      $region57: #{_lambda_.3} parent=11 // pred_check
        %p415 = pneg %p299
      $region58: #{_lambda_.3} parent=11 // pred_check_branch
        %417 = sbr.rel (%p415) target = $region60
      $region59: #{_lambda_.3} parent=11 // pred_region
        _
      $region60: #{_lambda_.3} parent=11 // pred_fallthru
        _
      // Predicated region
      $region61: #{_lambda_.3} parent=11 // pred_check
        %p418 = pneg %p320
      $region62: #{_lambda_.3} parent=11 // pred_check_branch
        %420 = sbr.rel (%p418) target = $region64
      $region63: #{_lambda_.3} parent=11 // pred_region
        _
      $region64: #{_lambda_.3} parent=11 // pred_fallthru
        _
      // Predicated region
      $region65: #{_lambda_.3} parent=11 // pred_check
        %p421 = pneg %p341
      $region66: #{_lambda_.3} parent=11 // pred_check_branch
        %423 = sbr.rel (%p421) target = $region68
      $region67: #{_lambda_.3} parent=11 // pred_region
        _
      $region68: #{_lambda_.3} parent=11 // pred_fallthru
        _
    $region12: #{_lambda_.3} parent=5 // pred_fallthru
      _
    %p424 = scmp.lt.s32.totalorder %s21, 2
    // Predicated region
    $region69: #{_lambda_.3} parent=5 // pred_check
      %p425 = pneg %p424
    $region70: #{_lambda_.3} parent=5 // pred_check_branch
      %427 = sbr.rel (%p425) target = $region72
    $region71: #{_lambda_.3} parent=5 // pred_region
      // Predicated region
      $region73: #{_lambda_.3} parent=71 // pred_check
        %p428 = pneg %p41
      $region74: #{_lambda_.3} parent=71 // pred_check_branch
        %430 = sbr.rel (%p428) target = $region76
      $region75: #{_lambda_.3} parent=71 // pred_region
        %s431 = smul.u32 4, %s21
        %p432 = scmp.lt.s32.totalorder %s431, 7
        %s433 = scalar_select %p432, %s431, 7
        %s434 = smul.addr %s433, 8
        %s435 = smul.addr %s434, 8
        %s436 = scalar_lea.vmem %s0, %s435
        %s437 = smul.u32 4, %s21
      $region76: #{_lambda_.3} parent=71 // pred_fallthru
        _
    $region72: #{_lambda_.3} parent=5 // pred_fallthru
      _
    %p438 = scmp.le.s32.totalorder 1, %s21
    %p439 = scmp.lt.s32.totalorder %s21, 3
    %p440 = pnand %p438, %p439
    %p441 = pneg %p440
    // Predicated region
    $region77: #{_lambda_.3} parent=5 // pred_check
      _
    $region78: #{_lambda_.3} parent=5 // pred_check_branch
      %443 = sbr.rel (%p440) target = $region80
    $region79: #{_lambda_.3} parent=5 // pred_region
      %s444 = ssub.s32 %s21, 1
      %s445 = smul.u32 4, %s26
      %p446 = scmp.lt.s32.totalorder %s445, 7
      %s447 = scalar_select %p446, %s445, 7
      %s448 = smul.addr %s447, 8
      %s449 = smul.addr %s448, 8
      %s450 = scalar_lea.vmem %s0, %s449
      %p451 = pneg %p47
      %p452 = pneg %p44
      %p453 = pneg %p68
      %p454 = pneg %p65
      %p455 = pneg %p89
      %p456 = pneg %p86
      %p457 = pneg %p110
      %p458 = pneg %p107
      %p459 = pneg %p131
      %p460 = pneg %p128
      %p461 = pneg %p152
      %p462 = pneg %p149
      %p463 = pneg %p173
      %p464 = pneg %p170
      %p465 = pneg %p194
      %p466 = pneg %p191
      %p467 = pneg %p215
      %p468 = pneg %p212
      %p469 = pneg %p236
      %p470 = pneg %p233
      %p471 = pneg %p257
      %p472 = pneg %p254
      %p473 = pneg %p278
      %p474 = pneg %p275
      %p475 = pneg %p299
      %p476 = pneg %p296
      %p477 = pneg %p320
      %p478 = pneg %p317
      %p479 = pneg %p341
      %p480 = pneg %p338
      %p481 = pneg %p367
      %p482 = pneg %p364
      %s483 = smul.u32 4, %s26
      %p484 = scmp.lt.s32.totalorder %s483, 7
      %s485 = scalar_select %p484, %s483, 7
      %s486 = smul.addr %s485, 8
      %s487 = smul.addr %s486, 8
      %s488 = scalar_lea.vmem %s15, %s487
      %s489 = smul.u32 4, %s26
      %p490 = scmp.lt.s32.totalorder %s489, 7
      %s491 = scalar_select %p490, %s489, 7
      %s492 = smul.addr %s491, 8
      %s493 = smul.addr %s492, 8
      %s494 = scalar_lea.vmem %s0, %s493
      %s495 = smul.u32 4, %s26
      %s496 = smul.u32 4, %s26
      %p497 = scmp.lt.s32.totalorder %s496, 7
      %s498 = scalar_select %p497, %s496, 7
      %s499 = smul.addr %s498, 8
      %s500 = smul.addr %s499, 8
      %s501 = scalar_lea.vmem %s15, %s500
      %s502 = smul.u32 4, %s26
      %v504 = vld [vmem:[%s494] sm:$0xff]
      %v505 = vld [vmem:[%s494 + $0x8] sm:$0xff]
      %v506 = vld [vmem:[%s494 + $0x10] sm:$0xff]
      %v507 = vld [vmem:[%s494 + $0x18] sm:$0xff]
      %v508 = vld [vmem:[%s494 + $0x20] sm:$0xff]
      %v509 = vld [vmem:[%s494 + $0x28] sm:$0xff]
      %v510 = vld [vmem:[%s494 + $0x30] sm:$0xff]
      %v511 = vld [vmem:[%s494 + $0x38] sm:$0xff]
      %v512 = vld [vmem:[%s494 + $0x40] sm:$0xff]
      %v513 = vld [vmem:[%s494 + $0x48] sm:$0xff]
      %v514 = vld [vmem:[%s494 + $0x50] sm:$0xff]
      %v515 = vld [vmem:[%s494 + $0x58] sm:$0xff]
      %v516 = vld [vmem:[%s494 + $0x60] sm:$0xff]
      %v517 = vld [vmem:[%s494 + $0x68] sm:$0xff]
      %v518 = vld [vmem:[%s494 + $0x70] sm:$0xff]
      %v519 = vld [vmem:[%s494 + $0x78] sm:$0xff]
      %v520 = vld [vmem:[%s494 + $0x80] sm:$0xff]
      %v521 = vld [vmem:[%s494 + $0x88] sm:$0xff]
      %v522 = vld [vmem:[%s494 + $0x90] sm:$0xff]
      %v523 = vld [vmem:[%s494 + $0x98] sm:$0xff]
      %v524 = vld [vmem:[%s494 + $0xa0] sm:$0xff]
      %v525 = vld [vmem:[%s494 + $0xa8] sm:$0xff]
      %v526 = vld [vmem:[%s494 + $0xb0] sm:$0xff]
      %v527 = vld [vmem:[%s494 + $0xb8] sm:$0xff]
      %v528 = vld [vmem:[%s494 + $0xc0] sm:$0xff]
      %v529 = vld [vmem:[%s494 + $0xc8] sm:$0xff]
      %v530 = vld [vmem:[%s494 + $0xd0] sm:$0xff]
      %v531 = vld [vmem:[%s494 + $0xd8] sm:$0xff]
      %v532 = vld [vmem:[%s494 + $0xe0] sm:$0xff]
      %v533 = vld [vmem:[%s494 + $0xe8] sm:$0xff]
      %v534 = vld [vmem:[%s494 + $0xf0] sm:$0xff]
      %v535 = vld [vmem:[%s494 + $0xf8] sm:$0xff]
      %vm536 = vcmask 261120
      %v537 = vsel %vm536, %v504, 0.0
      %538 = vadd.xlane.f32.xlu0 %v537
      %v539 = vpop.xlane.xlu0 %538
      %v540 = vsel %vm536, %v505, 0.0
      %541 = vadd.xlane.f32.xlu0 %v540
      %v542 = vpop.xlane.xlu0 %541
      %v543 = vsel %vm536, %v506, 0.0
      %544 = vadd.xlane.f32.xlu0 %v543
      %v545 = vpop.xlane.xlu0 %544
      %v546 = vsel %vm536, %v507, 0.0
      %547 = vadd.xlane.f32.xlu0 %v546
      %v548 = vpop.xlane.xlu0 %547
      %v549 = vsel %vm536, %v508, 0.0
      %550 = vadd.xlane.f32.xlu0 %v549
      %v551 = vpop.xlane.xlu0 %550
      %v552 = vsel %vm536, %v509, 0.0
      %553 = vadd.xlane.f32.xlu0 %v552
      %v554 = vpop.xlane.xlu0 %553
      %v555 = vsel %vm536, %v510, 0.0
      %556 = vadd.xlane.f32.xlu0 %v555
      %v557 = vpop.xlane.xlu0 %556
      %v558 = vsel %vm536, %v511, 0.0
      %559 = vadd.xlane.f32.xlu0 %v558
      %v560 = vpop.xlane.xlu0 %559
      %v561 = vsel %vm536, %v512, 0.0
      %562 = vadd.xlane.f32.xlu0 %v561
      %v563 = vpop.xlane.xlu0 %562
      %v564 = vsel %vm536, %v513, 0.0
      %565 = vadd.xlane.f32.xlu0 %v564
      %v566 = vpop.xlane.xlu0 %565
      %v567 = vsel %vm536, %v514, 0.0
      %568 = vadd.xlane.f32.xlu0 %v567
      %v569 = vpop.xlane.xlu0 %568
      %v570 = vsel %vm536, %v515, 0.0
      %571 = vadd.xlane.f32.xlu0 %v570
      %v572 = vpop.xlane.xlu0 %571
      %v573 = vsel %vm536, %v516, 0.0
      %574 = vadd.xlane.f32.xlu0 %v573
      %v575 = vpop.xlane.xlu0 %574
      %v576 = vsel %vm536, %v517, 0.0
      %577 = vadd.xlane.f32.xlu0 %v576
      %v578 = vpop.xlane.xlu0 %577
      %v579 = vsel %vm536, %v518, 0.0
      %580 = vadd.xlane.f32.xlu0 %v579
      %v581 = vpop.xlane.xlu0 %580
      %v582 = vsel %vm536, %v519, 0.0
      %583 = vadd.xlane.f32.xlu0 %v582
      %v584 = vpop.xlane.xlu0 %583
      %v585 = vsel %vm536, %v520, 0.0
      %586 = vadd.xlane.f32.xlu0 %v585
      %v587 = vpop.xlane.xlu0 %586
      %v588 = vsel %vm536, %v521, 0.0
      %589 = vadd.xlane.f32.xlu0 %v588
      %v590 = vpop.xlane.xlu0 %589
      %v591 = vsel %vm536, %v522, 0.0
      %592 = vadd.xlane.f32.xlu0 %v591
      %v593 = vpop.xlane.xlu0 %592
      %v594 = vsel %vm536, %v523, 0.0
      %595 = vadd.xlane.f32.xlu0 %v594
      %v596 = vpop.xlane.xlu0 %595
      %v597 = vsel %vm536, %v524, 0.0
      %598 = vadd.xlane.f32.xlu0 %v597
      %v599 = vpop.xlane.xlu0 %598
      %v600 = vsel %vm536, %v525, 0.0
      %601 = vadd.xlane.f32.xlu0 %v600
      %v602 = vpop.xlane.xlu0 %601
      %v603 = vsel %vm536, %v526, 0.0
      %604 = vadd.xlane.f32.xlu0 %v603
      %v605 = vpop.xlane.xlu0 %604
      %v606 = vsel %vm536, %v527, 0.0
      %607 = vadd.xlane.f32.xlu0 %v606
      %v608 = vpop.xlane.xlu0 %607
      %v609 = vsel %vm536, %v528, 0.0
      %610 = vadd.xlane.f32.xlu0 %v609
      %v611 = vpop.xlane.xlu0 %610
      %v612 = vsel %vm536, %v529, 0.0
      %613 = vadd.xlane.f32.xlu0 %v612
      %v614 = vpop.xlane.xlu0 %613
      %v615 = vsel %vm536, %v530, 0.0
      %616 = vadd.xlane.f32.xlu0 %v615
      %v617 = vpop.xlane.xlu0 %616
      %v618 = vsel %vm536, %v531, 0.0
      %619 = vadd.xlane.f32.xlu0 %v618
      %v620 = vpop.xlane.xlu0 %619
      %v621 = vsel %vm536, %v532, 0.0
      %622 = vadd.xlane.f32.xlu0 %v621
      %v623 = vpop.xlane.xlu0 %622
      %v624 = vsel %vm536, %v533, 0.0
      %625 = vadd.xlane.f32.xlu0 %v624
      %v626 = vpop.xlane.xlu0 %625
      %v627 = vsel %vm536, %v534, 0.0
      %628 = vadd.xlane.f32.xlu0 %v627
      %v629 = vpop.xlane.xlu0 %628
      %v630 = vsel %vm536, %v535, 0.0
      %631 = vadd.xlane.f32.xlu0 %v630
      %v632 = vpop.xlane.xlu0 %631
      %v633 = vrcp.pop 32.0
      %v634 = vmul.f32 %v539, %v633
      %v635 = vmul.f32 %v542, %v633
      %v636 = vmul.f32 %v545, %v633
      %v637 = vmul.f32 %v548, %v633
      %v638 = vmul.f32 %v551, %v633
      %v639 = vmul.f32 %v554, %v633
      %v640 = vmul.f32 %v557, %v633
      %v641 = vmul.f32 %v560, %v633
      %v642 = vmul.f32 %v563, %v633
      %v643 = vmul.f32 %v566, %v633
      %v644 = vmul.f32 %v569, %v633
      %v645 = vmul.f32 %v572, %v633
      %v646 = vmul.f32 %v575, %v633
      %v647 = vmul.f32 %v578, %v633
      %v648 = vmul.f32 %v581, %v633
      %v649 = vmul.f32 %v584, %v633
      %v650 = vmul.f32 %v587, %v633
      %v651 = vmul.f32 %v590, %v633
      %v652 = vmul.f32 %v593, %v633
      %v653 = vmul.f32 %v596, %v633
      %v654 = vmul.f32 %v599, %v633
      %v655 = vmul.f32 %v602, %v633
      %v656 = vmul.f32 %v605, %v633
      %v657 = vmul.f32 %v608, %v633
      %v658 = vmul.f32 %v611, %v633
      %v659 = vmul.f32 %v614, %v633
      %v660 = vmul.f32 %v617, %v633
      %v661 = vmul.f32 %v620, %v633
      %v662 = vmul.f32 %v623, %v633
      %v663 = vmul.f32 %v626, %v633
      %v664 = vmul.f32 %v629, %v633
      %v665 = vmul.f32 %v632, %v633
      %v666 = vsub.f32 %v504, %v634
      %v667 = vsub.f32 %v505, %v635
      %v668 = vsub.f32 %v506, %v636
      %v669 = vsub.f32 %v507, %v637
      %v670 = vsub.f32 %v508, %v638
      %v671 = vsub.f32 %v509, %v639
      %v672 = vsub.f32 %v510, %v640
      %v673 = vsub.f32 %v511, %v641
      %v674 = vsub.f32 %v512, %v642
      %v675 = vsub.f32 %v513, %v643
      %v676 = vsub.f32 %v514, %v644
      %v677 = vsub.f32 %v515, %v645
      %v678 = vsub.f32 %v516, %v646
      %v679 = vsub.f32 %v517, %v647
      %v680 = vsub.f32 %v518, %v648
      %v681 = vsub.f32 %v519, %v649
      %v682 = vsub.f32 %v520, %v650
      %v683 = vsub.f32 %v521, %v651
      %v684 = vsub.f32 %v522, %v652
      %v685 = vsub.f32 %v523, %v653
      %v686 = vsub.f32 %v524, %v654
      %v687 = vsub.f32 %v525, %v655
      %v688 = vsub.f32 %v526, %v656
      %v689 = vsub.f32 %v527, %v657
      %v690 = vsub.f32 %v528, %v658
      %v691 = vsub.f32 %v529, %v659
      %v692 = vsub.f32 %v530, %v660
      %v693 = vsub.f32 %v531, %v661
      %v694 = vsub.f32 %v532, %v662
      %v695 = vsub.f32 %v533, %v663
      %v696 = vsub.f32 %v534, %v664
      %v697 = vsub.f32 %v535, %v665
      %v698 = vmul.f32 %v666, %v666
      %v699 = vmul.f32 %v667, %v667
      %v700 = vmul.f32 %v668, %v668
      %v701 = vmul.f32 %v669, %v669
      %v702 = vmul.f32 %v670, %v670
      %v703 = vmul.f32 %v671, %v671
      %v704 = vmul.f32 %v672, %v672
      %v705 = vmul.f32 %v673, %v673
      %v706 = vmul.f32 %v674, %v674
      %v707 = vmul.f32 %v675, %v675
      %v708 = vmul.f32 %v676, %v676
      %v709 = vmul.f32 %v677, %v677
      %v710 = vmul.f32 %v678, %v678
      %v711 = vmul.f32 %v679, %v679
      %v712 = vmul.f32 %v680, %v680
      %v713 = vmul.f32 %v681, %v681
      %v714 = vmul.f32 %v682, %v682
      %v715 = vmul.f32 %v683, %v683
      %v716 = vmul.f32 %v684, %v684
      %v717 = vmul.f32 %v685, %v685
      %v718 = vmul.f32 %v686, %v686
      %v719 = vmul.f32 %v687, %v687
      %v720 = vmul.f32 %v688, %v688
      %v721 = vmul.f32 %v689, %v689
      %v722 = vmul.f32 %v690, %v690
      %v723 = vmul.f32 %v691, %v691
      %v724 = vmul.f32 %v692, %v692
      %v725 = vmul.f32 %v693, %v693
      %v726 = vmul.f32 %v694, %v694
      %v727 = vmul.f32 %v695, %v695
      %v728 = vmul.f32 %v696, %v696
      %v729 = vmul.f32 %v697, %v697
      %v730 = vsel %vm536, %v698, 0.0
      %731 = vadd.xlane.f32.xlu0 %v730
      %v732 = vpop.xlane.xlu0 %731
      %v733 = vsel %vm536, %v699, 0.0
      %734 = vadd.xlane.f32.xlu0 %v733
      %v735 = vpop.xlane.xlu0 %734
      %v736 = vsel %vm536, %v700, 0.0
      %737 = vadd.xlane.f32.xlu0 %v736
      %v738 = vpop.xlane.xlu0 %737
      %v739 = vsel %vm536, %v701, 0.0
      %740 = vadd.xlane.f32.xlu0 %v739
      %v741 = vpop.xlane.xlu0 %740
      %v742 = vsel %vm536, %v702, 0.0
      %743 = vadd.xlane.f32.xlu0 %v742
      %v744 = vpop.xlane.xlu0 %743
      %v745 = vsel %vm536, %v703, 0.0
      %746 = vadd.xlane.f32.xlu0 %v745
      %v747 = vpop.xlane.xlu0 %746
      %v748 = vsel %vm536, %v704, 0.0
      %749 = vadd.xlane.f32.xlu0 %v748
      %v750 = vpop.xlane.xlu0 %749
      %v751 = vsel %vm536, %v705, 0.0
      %752 = vadd.xlane.f32.xlu0 %v751
      %v753 = vpop.xlane.xlu0 %752
      %v754 = vsel %vm536, %v706, 0.0
      %755 = vadd.xlane.f32.xlu0 %v754
      %v756 = vpop.xlane.xlu0 %755
      %v757 = vsel %vm536, %v707, 0.0
      %758 = vadd.xlane.f32.xlu0 %v757
      %v759 = vpop.xlane.xlu0 %758
      %v760 = vsel %vm536, %v708, 0.0
      %761 = vadd.xlane.f32.xlu0 %v760
      %v762 = vpop.xlane.xlu0 %761
      %v763 = vsel %vm536, %v709, 0.0
      %764 = vadd.xlane.f32.xlu0 %v763
      %v765 = vpop.xlane.xlu0 %764
      %v766 = vsel %vm536, %v710, 0.0
      %767 = vadd.xlane.f32.xlu0 %v766
      %v768 = vpop.xlane.xlu0 %767
      %v769 = vsel %vm536, %v711, 0.0
      %770 = vadd.xlane.f32.xlu0 %v769
      %v771 = vpop.xlane.xlu0 %770
      %v772 = vsel %vm536, %v712, 0.0
      %773 = vadd.xlane.f32.xlu0 %v772
      %v774 = vpop.xlane.xlu0 %773
      %v775 = vsel %vm536, %v713, 0.0
      %776 = vadd.xlane.f32.xlu0 %v775
      %v777 = vpop.xlane.xlu0 %776
      %v778 = vsel %vm536, %v714, 0.0
      %779 = vadd.xlane.f32.xlu0 %v778
      %v780 = vpop.xlane.xlu0 %779
      %v781 = vsel %vm536, %v715, 0.0
      %782 = vadd.xlane.f32.xlu0 %v781
      %v783 = vpop.xlane.xlu0 %782
      %v784 = vsel %vm536, %v716, 0.0
      %785 = vadd.xlane.f32.xlu0 %v784
      %v786 = vpop.xlane.xlu0 %785
      %v787 = vsel %vm536, %v717, 0.0
      %788 = vadd.xlane.f32.xlu0 %v787
      %v789 = vpop.xlane.xlu0 %788
      %v790 = vsel %vm536, %v718, 0.0
      %791 = vadd.xlane.f32.xlu0 %v790
      %v792 = vpop.xlane.xlu0 %791
      %v793 = vsel %vm536, %v719, 0.0
      %794 = vadd.xlane.f32.xlu0 %v793
      %v795 = vpop.xlane.xlu0 %794
      %v796 = vsel %vm536, %v720, 0.0
      %797 = vadd.xlane.f32.xlu0 %v796
      %v798 = vpop.xlane.xlu0 %797
      %v799 = vsel %vm536, %v721, 0.0
      %800 = vadd.xlane.f32.xlu0 %v799
      %v801 = vpop.xlane.xlu0 %800
      %v802 = vsel %vm536, %v722, 0.0
      %803 = vadd.xlane.f32.xlu0 %v802
      %v804 = vpop.xlane.xlu0 %803
      %v805 = vsel %vm536, %v723, 0.0
      %806 = vadd.xlane.f32.xlu0 %v805
      %v807 = vpop.xlane.xlu0 %806
      %v808 = vsel %vm536, %v724, 0.0
      %809 = vadd.xlane.f32.xlu0 %v808
      %v810 = vpop.xlane.xlu0 %809
      %v811 = vsel %vm536, %v725, 0.0
      %812 = vadd.xlane.f32.xlu0 %v811
      %v813 = vpop.xlane.xlu0 %812
      %v814 = vsel %vm536, %v726, 0.0
      %815 = vadd.xlane.f32.xlu0 %v814
      %v816 = vpop.xlane.xlu0 %815
      %v817 = vsel %vm536, %v727, 0.0
      %818 = vadd.xlane.f32.xlu0 %v817
      %v819 = vpop.xlane.xlu0 %818
      %v820 = vsel %vm536, %v728, 0.0
      %821 = vadd.xlane.f32.xlu0 %v820
      %v822 = vpop.xlane.xlu0 %821
      %v823 = vsel %vm536, %v729, 0.0
      %824 = vadd.xlane.f32.xlu0 %v823
      %v825 = vpop.xlane.xlu0 %824
      %v826 = vmul.f32 %v732, %v633
      %v827 = vmul.f32 %v735, %v633
      %v828 = vmul.f32 %v738, %v633
      %v829 = vmul.f32 %v741, %v633
      %v830 = vmul.f32 %v744, %v633
      %v831 = vmul.f32 %v747, %v633
      %v832 = vmul.f32 %v750, %v633
      %v833 = vmul.f32 %v753, %v633
      %v834 = vmul.f32 %v756, %v633
      %v835 = vmul.f32 %v759, %v633
      %v836 = vmul.f32 %v762, %v633
      %v837 = vmul.f32 %v765, %v633
      %v838 = vmul.f32 %v768, %v633
      %v839 = vmul.f32 %v771, %v633
      %v840 = vmul.f32 %v774, %v633
      %v841 = vmul.f32 %v777, %v633
      %v842 = vmul.f32 %v780, %v633
      %v843 = vmul.f32 %v783, %v633
      %v844 = vmul.f32 %v786, %v633
      %v845 = vmul.f32 %v789, %v633
      %v846 = vmul.f32 %v792, %v633
      %v847 = vmul.f32 %v795, %v633
      %v848 = vmul.f32 %v798, %v633
      %v849 = vmul.f32 %v801, %v633
      %v850 = vmul.f32 %v804, %v633
      %v851 = vmul.f32 %v807, %v633
      %v852 = vmul.f32 %v810, %v633
      %v853 = vmul.f32 %v813, %v633
      %v854 = vmul.f32 %v816, %v633
      %v855 = vmul.f32 %v819, %v633
      %v856 = vmul.f32 %v822, %v633
      %v857 = vmul.f32 %v825, %v633
      %v858 = vadd.f32 %v826, 1e-05
      %v859 = vadd.f32 %v827, 1e-05
      %v860 = vadd.f32 %v828, 1e-05
      %v861 = vadd.f32 %v829, 1e-05
      %v862 = vadd.f32 %v830, 1e-05
      %v863 = vadd.f32 %v831, 1e-05
      %v864 = vadd.f32 %v832, 1e-05
      %v865 = vadd.f32 %v833, 1e-05
      %v866 = vadd.f32 %v834, 1e-05
      %v867 = vadd.f32 %v835, 1e-05
      %v868 = vadd.f32 %v836, 1e-05
      %v869 = vadd.f32 %v837, 1e-05
      %v870 = vadd.f32 %v838, 1e-05
      %v871 = vadd.f32 %v839, 1e-05
      %v872 = vadd.f32 %v840, 1e-05
      %v873 = vadd.f32 %v841, 1e-05
      %v874 = vadd.f32 %v842, 1e-05
      %v875 = vadd.f32 %v843, 1e-05
      %v876 = vadd.f32 %v844, 1e-05
      %v877 = vadd.f32 %v845, 1e-05
      %v878 = vadd.f32 %v846, 1e-05
      %v879 = vadd.f32 %v847, 1e-05
      %v880 = vadd.f32 %v848, 1e-05
      %v881 = vadd.f32 %v849, 1e-05
      %v882 = vadd.f32 %v850, 1e-05
      %v883 = vadd.f32 %v851, 1e-05
      %v884 = vadd.f32 %v852, 1e-05
      %v885 = vadd.f32 %v853, 1e-05
      %v886 = vadd.f32 %v854, 1e-05
      %v887 = vadd.f32 %v855, 1e-05
      %v888 = vadd.f32 %v856, 1e-05
      %v889 = vadd.f32 %v857, 1e-05
      %v890 = vrsqrt.pop %v858
      %v891 = vrsqrt.pop %v859
      %v892 = vrsqrt.pop %v860
      %v893 = vrsqrt.pop %v861
      %v894 = vrsqrt.pop %v862
      %v895 = vrsqrt.pop %v863
      %v896 = vrsqrt.pop %v864
      %v897 = vrsqrt.pop %v865
      %v898 = vrsqrt.pop %v866
      %v899 = vrsqrt.pop %v867
      %v900 = vrsqrt.pop %v868
      %v901 = vrsqrt.pop %v869
      %v902 = vrsqrt.pop %v870
      %v903 = vrsqrt.pop %v871
      %v904 = vrsqrt.pop %v872
      %v905 = vrsqrt.pop %v873
      %v906 = vrsqrt.pop %v874
      %v907 = vrsqrt.pop %v875
      %v908 = vrsqrt.pop %v876
      %v909 = vrsqrt.pop %v877
      %v910 = vrsqrt.pop %v878
      %v911 = vrsqrt.pop %v879
      %v912 = vrsqrt.pop %v880
      %v913 = vrsqrt.pop %v881
      %v914 = vrsqrt.pop %v882
      %v915 = vrsqrt.pop %v883
      %v916 = vrsqrt.pop %v884
      %v917 = vrsqrt.pop %v885
      %v918 = vrsqrt.pop %v886
      %v919 = vrsqrt.pop %v887
      %v920 = vrsqrt.pop %v888
      %v921 = vrsqrt.pop %v889
      %v922 = vmul.f32 %v666, %v890
      %v923 = vmul.f32 %v667, %v891
      %v924 = vmul.f32 %v668, %v892
      %v925 = vmul.f32 %v669, %v893
      %v926 = vmul.f32 %v670, %v894
      %v927 = vmul.f32 %v671, %v895
      %v928 = vmul.f32 %v672, %v896
      %v929 = vmul.f32 %v673, %v897
      %v930 = vmul.f32 %v674, %v898
      %v931 = vmul.f32 %v675, %v899
      %v932 = vmul.f32 %v676, %v900
      %v933 = vmul.f32 %v677, %v901
      %v934 = vmul.f32 %v678, %v902
      %v935 = vmul.f32 %v679, %v903
      %v936 = vmul.f32 %v680, %v904
      %v937 = vmul.f32 %v681, %v905
      %v938 = vmul.f32 %v682, %v906
      %v939 = vmul.f32 %v683, %v907
      %v940 = vmul.f32 %v684, %v908
      %v941 = vmul.f32 %v685, %v909
      %v942 = vmul.f32 %v686, %v910
      %v943 = vmul.f32 %v687, %v911
      %v944 = vmul.f32 %v688, %v912
      %v945 = vmul.f32 %v689, %v913
      %v946 = vmul.f32 %v690, %v914
      %v947 = vmul.f32 %v691, %v915
      %v948 = vmul.f32 %v692, %v916
      %v949 = vmul.f32 %v693, %v917
      %v950 = vmul.f32 %v694, %v918
      %v951 = vmul.f32 %v695, %v919
      %v952 = vmul.f32 %v696, %v920
      %v953 = vmul.f32 %v697, %v921
      %v954 = vld [vmem:[%s3] sm:$0x1]
      %v956 = vlaneseq
      %v957 = vshrl.u32 %v956, 7
      %v958 = vsub.s32 0, %v957
      %v959 = vrot.slane %v954, %v958
      %v961 = vmul.f32 %v922, %v959
      %v962 = vmul.f32 %v923, %v959
      %v963 = vmul.f32 %v924, %v959
      %v964 = vmul.f32 %v925, %v959
      %v965 = vmul.f32 %v926, %v959
      %v966 = vmul.f32 %v927, %v959
      %v967 = vmul.f32 %v928, %v959
      %v968 = vmul.f32 %v929, %v959
      %v969 = vmul.f32 %v930, %v959
      %v970 = vmul.f32 %v931, %v959
      %v971 = vmul.f32 %v932, %v959
      %v972 = vmul.f32 %v933, %v959
      %v973 = vmul.f32 %v934, %v959
      %v974 = vmul.f32 %v935, %v959
      %v975 = vmul.f32 %v936, %v959
      %v976 = vmul.f32 %v937, %v959
      %v977 = vmul.f32 %v938, %v959
      %v978 = vmul.f32 %v939, %v959
      %v979 = vmul.f32 %v940, %v959
      %v980 = vmul.f32 %v941, %v959
      %v981 = vmul.f32 %v942, %v959
      %v982 = vmul.f32 %v943, %v959
      %v983 = vmul.f32 %v944, %v959
      %v984 = vmul.f32 %v945, %v959
      %v985 = vmul.f32 %v946, %v959
      %v986 = vmul.f32 %v947, %v959
      %v987 = vmul.f32 %v948, %v959
      %v988 = vmul.f32 %v949, %v959
      %v989 = vmul.f32 %v950, %v959
      %v990 = vmul.f32 %v951, %v959
      %v991 = vmul.f32 %v952, %v959
      %v992 = vmul.f32 %v953, %v959
      %v993 = vld [vmem:[%s4] sm:$0x1]
      %v995 = vlaneseq
      %v996 = vshrl.u32 %v995, 7
      %v997 = vsub.s32 0, %v996
      %v998 = vrot.slane %v993, %v997
      %v1000 = vadd.f32 %v961, %v998
      %v1001 = vadd.f32 %v962, %v998
      %v1002 = vadd.f32 %v963, %v998
      %v1003 = vadd.f32 %v964, %v998
      %v1004 = vadd.f32 %v965, %v998
      %v1005 = vadd.f32 %v966, %v998
      %v1006 = vadd.f32 %v967, %v998
      %v1007 = vadd.f32 %v968, %v998
      %v1008 = vadd.f32 %v969, %v998
      %v1009 = vadd.f32 %v970, %v998
      %v1010 = vadd.f32 %v971, %v998
      %v1011 = vadd.f32 %v972, %v998
      %v1012 = vadd.f32 %v973, %v998
      %v1013 = vadd.f32 %v974, %v998
      %v1014 = vadd.f32 %v975, %v998
      %v1015 = vadd.f32 %v976, %v998
      %v1016 = vadd.f32 %v977, %v998
      %v1017 = vadd.f32 %v978, %v998
      %v1018 = vadd.f32 %v979, %v998
      %v1019 = vadd.f32 %v980, %v998
      %v1020 = vadd.f32 %v981, %v998
      %v1021 = vadd.f32 %v982, %v998
      %v1022 = vadd.f32 %v983, %v998
      %v1023 = vadd.f32 %v984, %v998
      %v1024 = vadd.f32 %v985, %v998
      %v1025 = vadd.f32 %v986, %v998
      %v1026 = vadd.f32 %v987, %v998
      %v1027 = vadd.f32 %v988, %v998
      %v1028 = vadd.f32 %v989, %v998
      %v1029 = vadd.f32 %v990, %v998
      %v1030 = vadd.f32 %v991, %v998
      %v1031 = vadd.f32 %v992, %v998
      %v1032 = vld [vmem:[%s5] sm:$0xff]
      %v1033 = vld [vmem:[%s5 + $0x8] sm:$0xff]
      %v1034 = vld [vmem:[%s5 + $0x10] sm:$0xff]
      %v1035 = vld [vmem:[%s5 + $0x18] sm:$0xff]
      %v1036 = vpack.c.bf16 %v1001, %v1000
      %v1037 = vpack.c.bf16 %v1003, %v1002
      %v1038 = vpack.c.bf16 %v1005, %v1004
      %v1039 = vpack.c.bf16 %v1007, %v1006
      %v1040 = vpack.c.bf16 %v1009, %v1008
      %v1041 = vpack.c.bf16 %v1011, %v1010
      %v1042 = vpack.c.bf16 %v1013, %v1012
      %v1043 = vpack.c.bf16 %v1015, %v1014
      %v1044 = vpack.c.bf16 %v1017, %v1016
      %v1045 = vpack.c.bf16 %v1019, %v1018
      %v1046 = vpack.c.bf16 %v1021, %v1020
      %v1047 = vpack.c.bf16 %v1023, %v1022
      %v1048 = vpack.c.bf16 %v1025, %v1024
      %v1049 = vpack.c.bf16 %v1027, %v1026
      %v1050 = vpack.c.bf16 %v1029, %v1028
      %v1051 = vpack.c.bf16 %v1031, %v1030
      %v1052 = vpack.c.bf16 %v1033, %v1032
      %v1053 = vpack.c.bf16 %v1035, %v1034
      %v1054 = vld [vmem:[%s6] sm:$0x1]
      %v1056 = vlaneseq
      %v1057 = vshrl.u32 %v1056, 7
      %v1058 = vsub.s32 0, %v1057
      %v1059 = vrot.slane %v1054, %v1058
      %v1062 = vsel %vm536, %v1036, 0
      %v1065 = vsel %vm536, %v1037, 0
      %v1068 = vsel %vm536, %v1038, 0
      %v1071 = vsel %vm536, %v1039, 0
      %v1074 = vsel %vm536, %v1040, 0
      %v1077 = vsel %vm536, %v1041, 0
      %v1080 = vsel %vm536, %v1042, 0
      %v1083 = vsel %vm536, %v1043, 0
      %v1086 = vsel %vm536, %v1044, 0
      %v1089 = vsel %vm536, %v1045, 0
      %v1092 = vsel %vm536, %v1046, 0
      %v1095 = vsel %vm536, %v1047, 0
      %v1098 = vsel %vm536, %v1048, 0
      %v1101 = vsel %vm536, %v1049, 0
      %v1104 = vsel %vm536, %v1050, 0
      %v1107 = vsel %vm536, %v1051, 0
      %1109 = vmatprep.subr.bf16.mxu0 0
      %1110 = vmatpush1.bf16.msra.mxu0 %v1052
      %1111 = vmatprep.subr.bf16.mxu0 0
      %1112 = vmatpush1.bf16.msra.mxu0 %v1053
      %1113 = vmatprep.subr.bf16.mxu0 0
      %1114 = vmatpush1.bf16.msra.mxu0 0
      %1115 = vmatprep.subr.bf16.mxu0 0
      %1116 = vmatpush1.bf16.msra.mxu0 0
      %1117 = vmatprep.subr.bf16.mxu0 0
      %1118 = vmatpush1.bf16.msra.mxu0 0
      %1119 = vmatprep.subr.bf16.mxu0 0
      %1120 = vmatpush1.bf16.msra.mxu0 0
      %1121 = vmatprep.subr.bf16.mxu0 0
      %1122 = vmatpush1.bf16.msra.mxu0 0
      %1123 = vmatprep.subr.bf16.mxu0 0
      %1124 = vmatpush1.bf16.msra.mxu0 0
      %1125 = vmatprep.subr.bf16.mxu0 0
      %1126 = vmatpush1.bf16.msra.mxu0 0
      %1127 = vmatprep.subr.bf16.mxu0 0
      %1128 = vmatpush1.bf16.msra.mxu0 0
      %1129 = vmatprep.subr.bf16.mxu0 0
      %1130 = vmatpush1.bf16.msra.mxu0 0
      %1131 = vmatprep.subr.bf16.mxu0 0
      %1132 = vmatpush1.bf16.msra.mxu0 0
      %1133 = vmatprep.subr.bf16.mxu0 0
      %1134 = vmatpush1.bf16.msra.mxu0 0
      %1135 = vmatprep.subr.bf16.mxu0 0
      %1136 = vmatpush1.bf16.msra.mxu0 0
      %1137 = vmatprep.subr.bf16.mxu0 0
      %1138 = vmatpush1.bf16.msra.mxu0 0
      %1139 = vmatprep.subr.bf16.mxu0 0
      %1140 = vmatpush1.bf16.msra.mxu0 0
      %1141 = vmatprep.mubr.bf16.mxu0 0
      %1142 = vmatmul.mubr.bf16.gmra.mrb[0].mxu0 %v1062
      %v1143 = vpop.f32.mrb[0].mxu0
      %v1144 = vadd.f32 %v1059, %v1143
      %v1145 = vpop.f32.mrb[0].mxu0
      %v1146 = vpop.f32.mrb[0].mxu0
      %v1147 = vadd.f32 %v1059, %v1146
      %v1148 = vpop.f32.mrb[0].mxu0
      %1149 = vmatprep.mubr.bf16.mxu0 0
      %1150 = vmatmul.mubr.bf16.gmra.mrb[0].mxu0 %v1065
      %v1151 = vpop.f32.mrb[0].mxu0
      %v1152 = vadd.f32 %v1059, %v1151
      %v1153 = vpop.f32.mrb[0].mxu0
      %v1154 = vpop.f32.mrb[0].mxu0
      %v1155 = vadd.f32 %v1059, %v1154
      %v1156 = vpop.f32.mrb[0].mxu0
      %1157 = vmatprep.mubr.bf16.mxu0 0
      %1158 = vmatmul.mubr.bf16.gmra.mrb[0].mxu0 %v1068
      %v1159 = vpop.f32.mrb[0].mxu0
      %v1160 = vadd.f32 %v1059, %v1159
      %v1161 = vpop.f32.mrb[0].mxu0
      %v1162 = vpop.f32.mrb[0].mxu0
      %v1163 = vadd.f32 %v1059, %v1162
      %v1164 = vpop.f32.mrb[0].mxu0
      %1165 = vmatprep.mubr.bf16.mxu0 0
      %1166 = vmatmul.mubr.bf16.gmra.mrb[0].mxu0 %v1071
      %v1167 = vpop.f32.mrb[0].mxu0
      %v1168 = vadd.f32 %v1059, %v1167
      %v1169 = vpop.f32.mrb[0].mxu0
      %v1170 = vpop.f32.mrb[0].mxu0
      %v1171 = vadd.f32 %v1059, %v1170
      %v1172 = vpop.f32.mrb[0].mxu0
      %1173 = vmatprep.mubr.bf16.mxu0 0
      %1174 = vmatmul.mubr.bf16.gmra.mrb[0].mxu0 %v1074
      %v1175 = vpop.f32.mrb[0].mxu0
      %v1176 = vadd.f32 %v1059, %v1175
      %v1177 = vpop.f32.mrb[0].mxu0
      %v1178 = vpop.f32.mrb[0].mxu0
      %v1179 = vadd.f32 %v1059, %v1178
      %v1180 = vpop.f32.mrb[0].mxu0
      %1181 = vmatprep.mubr.bf16.mxu0 0
      %1182 = vmatmul.mubr.bf16.gmra.mrb[0].mxu0 %v1077
      %v1183 = vpop.f32.mrb[0].mxu0
      %v1184 = vadd.f32 %v1059, %v1183
      %v1185 = vpop.f32.mrb[0].mxu0
      %v1186 = vpop.f32.mrb[0].mxu0
      %v1187 = vadd.f32 %v1059, %v1186
      %v1188 = vpop.f32.mrb[0].mxu0
      %1189 = vmatprep.mubr.bf16.mxu0 0
      %1190 = vmatmul.mubr.bf16.gmra.mrb[0].mxu0 %v1080
      %v1191 = vpop.f32.mrb[0].mxu0
      %v1192 = vadd.f32 %v1059, %v1191
      %v1193 = vpop.f32.mrb[0].mxu0
      %v1194 = vpop.f32.mrb[0].mxu0
      %v1195 = vadd.f32 %v1059, %v1194
      %v1196 = vpop.f32.mrb[0].mxu0
      %1197 = vmatprep.mubr.bf16.mxu0 0
      %1198 = vmatmul.mubr.bf16.gmra.mrb[0].mxu0 %v1083
      %v1199 = vpop.f32.mrb[0].mxu0
      %v1200 = vadd.f32 %v1059, %v1199
      %v1201 = vpop.f32.mrb[0].mxu0
      %v1202 = vpop.f32.mrb[0].mxu0
      %v1203 = vadd.f32 %v1059, %v1202
      %v1204 = vpop.f32.mrb[0].mxu0
      %1205 = vmatprep.mubr.bf16.mxu0 0
      %1206 = vmatmul.mubr.bf16.gmra.mrb[0].mxu0 %v1086
      %v1207 = vpop.f32.mrb[0].mxu0
      %v1208 = vadd.f32 %v1059, %v1207
      %v1209 = vpop.f32.mrb[0].mxu0
      %v1210 = vpop.f32.mrb[0].mxu0
      %v1211 = vadd.f32 %v1059, %v1210
      %v1212 = vpop.f32.mrb[0].mxu0
      %1213 = vmatprep.mubr.bf16.mxu0 0
      %1214 = vmatmul.mubr.bf16.gmra.mrb[0].mxu0 %v1089
      %v1215 = vpop.f32.mrb[0].mxu0
      %v1216 = vadd.f32 %v1059, %v1215
      %v1217 = vpop.f32.mrb[0].mxu0
      %v1218 = vpop.f32.mrb[0].mxu0
      %v1219 = vadd.f32 %v1059, %v1218
      %v1220 = vpop.f32.mrb[0].mxu0
      %1221 = vmatprep.mubr.bf16.mxu0 0
      %1222 = vmatmul.mubr.bf16.gmra.mrb[0].mxu0 %v1092
      %v1223 = vpop.f32.mrb[0].mxu0
      %v1224 = vadd.f32 %v1059, %v1223
      %v1225 = vpop.f32.mrb[0].mxu0
      %v1226 = vpop.f32.mrb[0].mxu0
      %v1227 = vadd.f32 %v1059, %v1226
      %v1228 = vpop.f32.mrb[0].mxu0
      %1229 = vmatprep.mubr.bf16.mxu0 0
      %1230 = vmatmul.mubr.bf16.gmra.mrb[0].mxu0 %v1095
      %v1231 = vpop.f32.mrb[0].mxu0
      %v1232 = vadd.f32 %v1059, %v1231
      %v1233 = vpop.f32.mrb[0].mxu0
      %v1234 = vpop.f32.mrb[0].mxu0
      %v1235 = vadd.f32 %v1059, %v1234
      %v1236 = vpop.f32.mrb[0].mxu0
      %1237 = vmatprep.mubr.bf16.mxu0 0
      %1238 = vmatmul.mubr.bf16.gmra.mrb[0].mxu0 %v1098
      %v1239 = vpop.f32.mrb[0].mxu0
      %v1240 = vadd.f32 %v1059, %v1239
      %v1241 = vpop.f32.mrb[0].mxu0
      %v1242 = vpop.f32.mrb[0].mxu0
      %v1243 = vadd.f32 %v1059, %v1242
      %v1244 = vpop.f32.mrb[0].mxu0
      %1245 = vmatprep.mubr.bf16.mxu0 0
      %1246 = vmatmul.mubr.bf16.gmra.mrb[0].mxu0 %v1101
      %v1247 = vpop.f32.mrb[0].mxu0
      %v1248 = vadd.f32 %v1059, %v1247
      %v1249 = vpop.f32.mrb[0].mxu0
      %v1250 = vpop.f32.mrb[0].mxu0
      %v1251 = vadd.f32 %v1059, %v1250
      %v1252 = vpop.f32.mrb[0].mxu0
      %1253 = vmatprep.mubr.bf16.mxu0 0
      %1254 = vmatmul.mubr.bf16.gmra.mrb[0].mxu0 %v1104
      %v1255 = vpop.f32.mrb[0].mxu0
      %v1256 = vadd.f32 %v1059, %v1255
      %v1257 = vpop.f32.mrb[0].mxu0
      %v1258 = vpop.f32.mrb[0].mxu0
      %v1259 = vadd.f32 %v1059, %v1258
      %v1260 = vpop.f32.mrb[0].mxu0
      %1261 = vmatprep.mubr.bf16.mxu0 0
      %1262 = vmatmul.mubr.bf16.gmra.mrb[0].mxu0 %v1107
      %v1263 = vpop.f32.mrb[0].mxu0
      %v1264 = vadd.f32 %v1059, %v1263
      %v1265 = vpop.f32.mrb[0].mxu0
      %v1266 = vpop.f32.mrb[0].mxu0
      %v1267 = vadd.f32 %v1059, %v1266
      %v1268 = vpop.f32.mrb[0].mxu0
      %1269 = vdwg.mxu0
      %v1270 = vpack.c.bf16 %v1147, %v1144
      %v1271 = vpack.c.bf16 %v1155, %v1152
      %v1272 = vpack.c.bf16 %v1163, %v1160
      %v1273 = vpack.c.bf16 %v1171, %v1168
      %v1274 = vpack.c.bf16 %v1179, %v1176
      %v1275 = vpack.c.bf16 %v1187, %v1184
      %v1276 = vpack.c.bf16 %v1195, %v1192
      %v1277 = vpack.c.bf16 %v1203, %v1200
      %v1278 = vpack.c.bf16 %v1211, %v1208
      %v1279 = vpack.c.bf16 %v1219, %v1216
      %v1280 = vpack.c.bf16 %v1227, %v1224
      %v1281 = vpack.c.bf16 %v1235, %v1232
      %v1282 = vpack.c.bf16 %v1243, %v1240
      %v1283 = vpack.c.bf16 %v1251, %v1248
      %v1284 = vpack.c.bf16 %v1259, %v1256
      %v1285 = vpack.c.bf16 %v1267, %v1264
      %v1286 = vld [vmem:[%s1] sm:$0xff]
      %v1287 = vld [vmem:[%s1 + $0x8] sm:$0xff]
      %v1288 = vld [vmem:[%s1 + $0x10] sm:$0xff]
      %v1289 = vld [vmem:[%s1 + $0x18] sm:$0xff]
      %v1290 = vld [vmem:[%s1 + $0x20] sm:$0xff]
      %v1291 = vld [vmem:[%s1 + $0x28] sm:$0xff]
      %v1292 = vld [vmem:[%s1 + $0x30] sm:$0xff]
      %v1293 = vld [vmem:[%s1 + $0x38] sm:$0xff]
      %1298 = vrot.lane.b32.xlu0 %v1270, 96
      %v1299 = vpop.permute.xlu0 %1298
      %1300 = vrot.lane.b32.xlu0 %v1271, 96
      %v1301 = vpop.permute.xlu0 %1300
      %1302 = vrot.lane.b32.xlu0 %v1272, 96
      %v1303 = vpop.permute.xlu0 %1302
      %1304 = vrot.lane.b32.xlu0 %v1273, 96
      %v1305 = vpop.permute.xlu0 %1304
      %vm1306 = vcmask 130048
      %v1308 = vsel %vm1306, %v1270, 0
      %v1311 = vsel %vm1306, %v1271, 0
      %v1314 = vsel %vm1306, %v1272, 0
      %v1317 = vsel %vm1306, %v1273, 0
      %v1320 = vsel %vm1306, %v1299, 0
      %v1323 = vsel %vm1306, %v1301, 0
      %v1326 = vsel %vm1306, %v1303, 0
      %v1329 = vsel %vm1306, %v1305, 0
      %1331 = vmatprep.subr.bf16.mxu0 0
      %1332 = vmatpush1.bf16.xpose.msra.mxu0 %v1320
      %1333 = vmatprep.subr.bf16.mxu0 0
      %1334 = vmatpush1.bf16.xpose.msra.mxu0 %v1323
      %1335 = vmatprep.subr.bf16.mxu0 0
      %1336 = vmatpush1.bf16.xpose.msra.mxu0 %v1326
      %1337 = vmatprep.subr.bf16.mxu0 0
      %1338 = vmatpush1.bf16.xpose.msra.mxu0 %v1329
      %1339 = vmatprep.subr.bf16.mxu0 0
      %1340 = vmatpush1.bf16.xpose.msra.mxu0 0
      %1341 = vmatprep.subr.bf16.mxu0 0
      %1342 = vmatpush1.bf16.xpose.msra.mxu0 0
      %1343 = vmatprep.subr.bf16.mxu0 0
      %1344 = vmatpush1.bf16.xpose.msra.mxu0 0
      %1345 = vmatprep.subr.bf16.mxu0 0
      %1346 = vmatpush1.bf16.xpose.msra.mxu0 0
      %1347 = vmatprep.subr.bf16.mxu0 0
      %1348 = vmatpush1.bf16.xpose.msra.mxu0 0
      %1349 = vmatprep.subr.bf16.mxu0 0
      %1350 = vmatpush1.bf16.xpose.msra.mxu0 0
      %1351 = vmatprep.subr.bf16.mxu0 0
      %1352 = vmatpush1.bf16.xpose.msra.mxu0 0
      %1353 = vmatprep.subr.bf16.mxu0 0
      %1354 = vmatpush1.bf16.xpose.msra.mxu0 0
      %1355 = vmatprep.subr.bf16.mxu0 0
      %1356 = vmatpush1.bf16.xpose.msra.mxu0 0
      %1357 = vmatprep.subr.bf16.mxu0 0
      %1358 = vmatpush1.bf16.xpose.msra.mxu0 0
      %1359 = vmatprep.subr.bf16.mxu0 0
      %1360 = vmatpush1.bf16.xpose.msra.mxu0 0
      %1361 = vmatprep.subr.bf16.mxu0 0
      %1362 = vmatpush1.bf16.xpose.msra.mxu0 0
      %1363 = vmatprep.mubr.bf16.mxu0 0
      %1364 = vmatmul.mubr.bf16.gmra.mrb[0].mxu0 %v1308
      %v1365 = vpop.f32.mrb[0].mxu0
      %v1366 = vadd.f32 %v1286, %v1365
      %v1367 = vpop.f32.mrb[0].mxu0
      %v1368 = vpop.f32.mrb[0].mxu0
      %v1369 = vadd.f32 %v1287, %v1368
      %v1370 = vpop.f32.mrb[0].mxu0
      %1371 = vmatprep.mubr.bf16.mxu0 0
      %1372 = vmatmul.mubr.bf16.gmra.mrb[0].mxu0 %v1311
      %v1373 = vpop.f32.mrb[0].mxu0
      %v1374 = vadd.f32 %v1288, %v1373
      %v1375 = vpop.f32.mrb[0].mxu0
      %v1376 = vpop.f32.mrb[0].mxu0
      %v1377 = vadd.f32 %v1289, %v1376
      %v1378 = vpop.f32.mrb[0].mxu0
      %1379 = vmatprep.mubr.bf16.mxu0 0
      %1380 = vmatmul.mubr.bf16.gmra.mrb[0].mxu0 %v1314
      %v1381 = vpop.f32.mrb[0].mxu0
      %v1382 = vadd.f32 %v1290, %v1381
      %v1383 = vpop.f32.mrb[0].mxu0
      %v1384 = vpop.f32.mrb[0].mxu0
      %v1385 = vadd.f32 %v1291, %v1384
      %v1386 = vpop.f32.mrb[0].mxu0
      %1387 = vmatprep.mubr.bf16.mxu0 0
      %1388 = vmatmul.mubr.bf16.gmra.mrb[0].mxu0 %v1317
      %v1389 = vpop.f32.mrb[0].mxu0
      %v1390 = vadd.f32 %v1292, %v1389
      %v1391 = vpop.f32.mrb[0].mxu0
      %v1392 = vpop.f32.mrb[0].mxu0
      %v1393 = vadd.f32 %v1293, %v1392
      %v1394 = vpop.f32.mrb[0].mxu0
      %1395 = vdwg.mxu0
      %1400 = vrot.lane.b32.xlu0 %v1274, 96
      %v1401 = vpop.permute.xlu0 %1400
      %1402 = vrot.lane.b32.xlu0 %v1275, 96
      %v1403 = vpop.permute.xlu0 %1402
      %1404 = vrot.lane.b32.xlu0 %v1276, 96
      %v1405 = vpop.permute.xlu0 %1404
      %1406 = vrot.lane.b32.xlu0 %v1277, 96
      %v1407 = vpop.permute.xlu0 %1406
      %v1409 = vsel %vm1306, %v1274, 0
      %v1412 = vsel %vm1306, %v1275, 0
      %v1415 = vsel %vm1306, %v1276, 0
      %v1418 = vsel %vm1306, %v1277, 0
      %v1421 = vsel %vm1306, %v1401, 0
      %v1424 = vsel %vm1306, %v1403, 0
      %v1427 = vsel %vm1306, %v1405, 0
      %v1430 = vsel %vm1306, %v1407, 0
      %1432 = vmatprep.subr.bf16.mxu0 0
      %1433 = vmatpush1.bf16.xpose.msra.mxu0 %v1421
      %1434 = vmatprep.subr.bf16.mxu0 0
      %1435 = vmatpush1.bf16.xpose.msra.mxu0 %v1424
      %1436 = vmatprep.subr.bf16.mxu0 0
      %1437 = vmatpush1.bf16.xpose.msra.mxu0 %v1427
      %1438 = vmatprep.subr.bf16.mxu0 0
      %1439 = vmatpush1.bf16.xpose.msra.mxu0 %v1430
      %1440 = vmatprep.subr.bf16.mxu0 0
      %1441 = vmatpush1.bf16.xpose.msra.mxu0 0
      %1442 = vmatprep.subr.bf16.mxu0 0
      %1443 = vmatpush1.bf16.xpose.msra.mxu0 0
      %1444 = vmatprep.subr.bf16.mxu0 0
      %1445 = vmatpush1.bf16.xpose.msra.mxu0 0
      %1446 = vmatprep.subr.bf16.mxu0 0
      %1447 = vmatpush1.bf16.xpose.msra.mxu0 0
      %1448 = vmatprep.subr.bf16.mxu0 0
      %1449 = vmatpush1.bf16.xpose.msra.mxu0 0
      %1450 = vmatprep.subr.bf16.mxu0 0
      %1451 = vmatpush1.bf16.xpose.msra.mxu0 0
      %1452 = vmatprep.subr.bf16.mxu0 0
      %1453 = vmatpush1.bf16.xpose.msra.mxu0 0
      %1454 = vmatprep.subr.bf16.mxu0 0
      %1455 = vmatpush1.bf16.xpose.msra.mxu0 0
      %1456 = vmatprep.subr.bf16.mxu0 0
      %1457 = vmatpush1.bf16.xpose.msra.mxu0 0
      %1458 = vmatprep.subr.bf16.mxu0 0
      %1459 = vmatpush1.bf16.xpose.msra.mxu0 0
      %1460 = vmatprep.subr.bf16.mxu0 0
      %1461 = vmatpush1.bf16.xpose.msra.mxu0 0
      %1462 = vmatprep.subr.bf16.mxu0 0
      %1463 = vmatpush1.bf16.xpose.msra.mxu0 0
      %1464 = vmatprep.mubr.bf16.mxu0 0
      %1465 = vmatmul.mubr.bf16.gmra.mrb[0].mxu0 %v1409
      %v1466 = vpop.f32.mrb[0].mxu0
      %v1467 = vadd.f32 %v1286, %v1466
      %v1468 = vpop.f32.mrb[0].mxu0
      %v1469 = vpop.f32.mrb[0].mxu0
      %v1470 = vadd.f32 %v1287, %v1469
      %v1471 = vpop.f32.mrb[0].mxu0
      %1472 = vmatprep.mubr.bf16.mxu0 0
      %1473 = vmatmul.mubr.bf16.gmra.mrb[0].mxu0 %v1412
      %v1474 = vpop.f32.mrb[0].mxu0
      %v1475 = vadd.f32 %v1288, %v1474
      %v1476 = vpop.f32.mrb[0].mxu0
      %v1477 = vpop.f32.mrb[0].mxu0
      %v1478 = vadd.f32 %v1289, %v1477
      %v1479 = vpop.f32.mrb[0].mxu0
      %1480 = vmatprep.mubr.bf16.mxu0 0
      %1481 = vmatmul.mubr.bf16.gmra.mrb[0].mxu0 %v1415
      %v1482 = vpop.f32.mrb[0].mxu0
      %v1483 = vadd.f32 %v1290, %v1482
      %v1484 = vpop.f32.mrb[0].mxu0
      %v1485 = vpop.f32.mrb[0].mxu0
      %v1486 = vadd.f32 %v1291, %v1485
      %v1487 = vpop.f32.mrb[0].mxu0
      %1488 = vmatprep.mubr.bf16.mxu0 0
      %1489 = vmatmul.mubr.bf16.gmra.mrb[0].mxu0 %v1418
      %v1490 = vpop.f32.mrb[0].mxu0
      %v1491 = vadd.f32 %v1292, %v1490
      %v1492 = vpop.f32.mrb[0].mxu0
      %v1493 = vpop.f32.mrb[0].mxu0
      %v1494 = vadd.f32 %v1293, %v1493
      %v1495 = vpop.f32.mrb[0].mxu0
      %1496 = vdwg.mxu0
      %1501 = vrot.lane.b32.xlu0 %v1278, 96
      %v1502 = vpop.permute.xlu0 %1501
      %1503 = vrot.lane.b32.xlu0 %v1279, 96
      %v1504 = vpop.permute.xlu0 %1503
      %1505 = vrot.lane.b32.xlu0 %v1280, 96
      %v1506 = vpop.permute.xlu0 %1505
      %1507 = vrot.lane.b32.xlu0 %v1281, 96
      %v1508 = vpop.permute.xlu0 %1507
      %v1510 = vsel %vm1306, %v1278, 0
      %v1513 = vsel %vm1306, %v1279, 0
      %v1516 = vsel %vm1306, %v1280, 0
      %v1519 = vsel %vm1306, %v1281, 0
      %v1522 = vsel %vm1306, %v1502, 0
      %v1525 = vsel %vm1306, %v1504, 0
      %v1528 = vsel %vm1306, %v1506, 0
      %v1531 = vsel %vm1306, %v1508, 0
      %1533 = vmatprep.subr.bf16.mxu0 0
      %1534 = vmatpush1.bf16.xpose.msra.mxu0 %v1522
      %1535 = vmatprep.subr.bf16.mxu0 0
      %1536 = vmatpush1.bf16.xpose.msra.mxu0 %v1525
      %1537 = vmatprep.subr.bf16.mxu0 0
      %1538 = vmatpush1.bf16.xpose.msra.mxu0 %v1528
      %1539 = vmatprep.subr.bf16.mxu0 0
      %1540 = vmatpush1.bf16.xpose.msra.mxu0 %v1531
      %1541 = vmatprep.subr.bf16.mxu0 0
      %1542 = vmatpush1.bf16.xpose.msra.mxu0 0
      %1543 = vmatprep.subr.bf16.mxu0 0
      %1544 = vmatpush1.bf16.xpose.msra.mxu0 0
      %1545 = vmatprep.subr.bf16.mxu0 0
      %1546 = vmatpush1.bf16.xpose.msra.mxu0 0
      %1547 = vmatprep.subr.bf16.mxu0 0
      %1548 = vmatpush1.bf16.xpose.msra.mxu0 0
      %1549 = vmatprep.subr.bf16.mxu0 0
      %1550 = vmatpush1.bf16.xpose.msra.mxu0 0
      %1551 = vmatprep.subr.bf16.mxu0 0
      %1552 = vmatpush1.bf16.xpose.msra.mxu0 0
      %1553 = vmatprep.subr.bf16.mxu0 0
      %1554 = vmatpush1.bf16.xpose.msra.mxu0 0
      %1555 = vmatprep.subr.bf16.mxu0 0
      %1556 = vmatpush1.bf16.xpose.msra.mxu0 0
      %1557 = vmatprep.subr.bf16.mxu0 0
      %1558 = vmatpush1.bf16.xpose.msra.mxu0 0
      %1559 = vmatprep.subr.bf16.mxu0 0
      %1560 = vmatpush1.bf16.xpose.msra.mxu0 0
      %1561 = vmatprep.subr.bf16.mxu0 0
      %1562 = vmatpush1.bf16.xpose.msra.mxu0 0
      %1563 = vmatprep.subr.bf16.mxu0 0
      %1564 = vmatpush1.bf16.xpose.msra.mxu0 0
      %1565 = vmatprep.mubr.bf16.mxu0 0
      %1566 = vmatmul.mubr.bf16.gmra.mrb[0].mxu0 %v1510
      %v1567 = vpop.f32.mrb[0].mxu0
      %v1568 = vadd.f32 %v1286, %v1567
      %v1569 = vpop.f32.mrb[0].mxu0
      %v1570 = vpop.f32.mrb[0].mxu0
      %v1571 = vadd.f32 %v1287, %v1570
      %v1572 = vpop.f32.mrb[0].mxu0
      %1573 = vmatprep.mubr.bf16.mxu0 0
      %1574 = vmatmul.mubr.bf16.gmra.mrb[0].mxu0 %v1513
      %v1575 = vpop.f32.mrb[0].mxu0
      %v1576 = vadd.f32 %v1288, %v1575
      %v1577 = vpop.f32.mrb[0].mxu0
      %v1578 = vpop.f32.mrb[0].mxu0
      %v1579 = vadd.f32 %v1289, %v1578
      %v1580 = vpop.f32.mrb[0].mxu0
      %1581 = vmatprep.mubr.bf16.mxu0 0
      %1582 = vmatmul.mubr.bf16.gmra.mrb[0].mxu0 %v1516
      %v1583 = vpop.f32.mrb[0].mxu0
      %v1584 = vadd.f32 %v1290, %v1583
      %v1585 = vpop.f32.mrb[0].mxu0
      %v1586 = vpop.f32.mrb[0].mxu0
      %v1587 = vadd.f32 %v1291, %v1586
      %v1588 = vpop.f32.mrb[0].mxu0
      %1589 = vmatprep.mubr.bf16.mxu0 0
      %1590 = vmatmul.mubr.bf16.gmra.mrb[0].mxu0 %v1519
      %v1591 = vpop.f32.mrb[0].mxu0
      %v1592 = vadd.f32 %v1292, %v1591
      %v1593 = vpop.f32.mrb[0].mxu0
      %v1594 = vpop.f32.mrb[0].mxu0
      %v1595 = vadd.f32 %v1293, %v1594
      %v1596 = vpop.f32.mrb[0].mxu0
      %1597 = vdwg.mxu0
      %1602 = vrot.lane.b32.xlu0 %v1282, 96
      %v1603 = vpop.permute.xlu0 %1602
      %1604 = vrot.lane.b32.xlu0 %v1283, 96
      %v1605 = vpop.permute.xlu0 %1604
      %1606 = vrot.lane.b32.xlu0 %v1284, 96
      %v1607 = vpop.permute.xlu0 %1606
      %1608 = vrot.lane.b32.xlu0 %v1285, 96
      %v1609 = vpop.permute.xlu0 %1608
      %v1611 = vsel %vm1306, %v1282, 0
      %v1614 = vsel %vm1306, %v1283, 0
      %v1617 = vsel %vm1306, %v1284, 0
      %v1620 = vsel %vm1306, %v1285, 0
      %v1623 = vsel %vm1306, %v1603, 0
      %v1626 = vsel %vm1306, %v1605, 0
      %v1629 = vsel %vm1306, %v1607, 0
      %v1632 = vsel %vm1306, %v1609, 0
      %1634 = vmatprep.subr.bf16.mxu0 0
      %1635 = vmatpush1.bf16.xpose.msra.mxu0 %v1623
      %1636 = vmatprep.subr.bf16.mxu0 0
      %1637 = vmatpush1.bf16.xpose.msra.mxu0 %v1626
      %1638 = vmatprep.subr.bf16.mxu0 0
      %1639 = vmatpush1.bf16.xpose.msra.mxu0 %v1629
      %1640 = vmatprep.subr.bf16.mxu0 0
      %1641 = vmatpush1.bf16.xpose.msra.mxu0 %v1632
      %1642 = vmatprep.subr.bf16.mxu0 0
      %1643 = vmatpush1.bf16.xpose.msra.mxu0 0
      %1644 = vmatprep.subr.bf16.mxu0 0
      %1645 = vmatpush1.bf16.xpose.msra.mxu0 0
      %1646 = vmatprep.subr.bf16.mxu0 0
      %1647 = vmatpush1.bf16.xpose.msra.mxu0 0
      %1648 = vmatprep.subr.bf16.mxu0 0
      %1649 = vmatpush1.bf16.xpose.msra.mxu0 0
      %1650 = vmatprep.subr.bf16.mxu0 0
      %1651 = vmatpush1.bf16.xpose.msra.mxu0 0
      %1652 = vmatprep.subr.bf16.mxu0 0
      %1653 = vmatpush1.bf16.xpose.msra.mxu0 0
      %1654 = vmatprep.subr.bf16.mxu0 0
      %1655 = vmatpush1.bf16.xpose.msra.mxu0 0
      %1656 = vmatprep.subr.bf16.mxu0 0
      %1657 = vmatpush1.bf16.xpose.msra.mxu0 0
      %1658 = vmatprep.subr.bf16.mxu0 0
      %1659 = vmatpush1.bf16.xpose.msra.mxu0 0
      %1660 = vmatprep.subr.bf16.mxu0 0
      %1661 = vmatpush1.bf16.xpose.msra.mxu0 0
      %1662 = vmatprep.subr.bf16.mxu0 0
      %1663 = vmatpush1.bf16.xpose.msra.mxu0 0
      %1664 = vmatprep.subr.bf16.mxu0 0
      %1665 = vmatpush1.bf16.xpose.msra.mxu0 0
      %1666 = vmatprep.mubr.bf16.mxu0 0
      %1667 = vmatmul.mubr.bf16.gmra.mrb[0].mxu0 %v1611
      %v1668 = vpop.f32.mrb[0].mxu0
      %v1669 = vadd.f32 %v1286, %v1668
      %v1670 = vpop.f32.mrb[0].mxu0
      %v1671 = vpop.f32.mrb[0].mxu0
      %v1672 = vadd.f32 %v1287, %v1671
      %v1673 = vpop.f32.mrb[0].mxu0
      %1674 = vmatprep.mubr.bf16.mxu0 0
      %1675 = vmatmul.mubr.bf16.gmra.mrb[0].mxu0 %v1614
      %v1676 = vpop.f32.mrb[0].mxu0
      %v1677 = vadd.f32 %v1288, %v1676
      %v1678 = vpop.f32.mrb[0].mxu0
      %v1679 = vpop.f32.mrb[0].mxu0
      %v1680 = vadd.f32 %v1289, %v1679
      %v1681 = vpop.f32.mrb[0].mxu0
      %1682 = vmatprep.mubr.bf16.mxu0 0
      %1683 = vmatmul.mubr.bf16.gmra.mrb[0].mxu0 %v1617
      %v1684 = vpop.f32.mrb[0].mxu0
      %v1685 = vadd.f32 %v1290, %v1684
      %v1686 = vpop.f32.mrb[0].mxu0
      %v1687 = vpop.f32.mrb[0].mxu0
      %v1688 = vadd.f32 %v1291, %v1687
      %v1689 = vpop.f32.mrb[0].mxu0
      %1690 = vmatprep.mubr.bf16.mxu0 0
      %1691 = vmatmul.mubr.bf16.gmra.mrb[0].mxu0 %v1620
      %v1692 = vpop.f32.mrb[0].mxu0
      %v1693 = vadd.f32 %v1292, %v1692
      %v1694 = vpop.f32.mrb[0].mxu0
      %v1695 = vpop.f32.mrb[0].mxu0
      %v1696 = vadd.f32 %v1293, %v1695
      %v1697 = vpop.f32.mrb[0].mxu0
      %1698 = vdwg.mxu0
      %v1699 = vld [vmem:[%s2] sm:$0xff]
      %v1700 = vld [vmem:[%s2 + $0x8] sm:$0xff]
      %v1701 = vld [vmem:[%s2 + $0x10] sm:$0xff]
      %v1702 = vld [vmem:[%s2 + $0x18] sm:$0xff]
      %v1703 = vld [vmem:[%s2 + $0x20] sm:$0xff]
      %v1704 = vld [vmem:[%s2 + $0x28] sm:$0xff]
      %v1705 = vld [vmem:[%s2 + $0x30] sm:$0xff]
      %v1706 = vld [vmem:[%s2 + $0x38] sm:$0xff]
      %v1707 = vld [vmem:[%s2 + $0x40] sm:$0xff]
      %v1708 = vld [vmem:[%s2 + $0x48] sm:$0xff]
      %v1709 = vld [vmem:[%s2 + $0x50] sm:$0xff]
      %v1710 = vld [vmem:[%s2 + $0x58] sm:$0xff]
      %v1711 = vld [vmem:[%s2 + $0x60] sm:$0xff]
      %v1712 = vld [vmem:[%s2 + $0x68] sm:$0xff]
      %v1713 = vld [vmem:[%s2 + $0x70] sm:$0xff]
      %v1714 = vld [vmem:[%s2 + $0x78] sm:$0xff]
      %v1715 = vld [vmem:[%s2 + $0x80] sm:$0xff]
      %v1716 = vld [vmem:[%s2 + $0x88] sm:$0xff]
      %v1717 = vld [vmem:[%s2 + $0x90] sm:$0xff]
      %v1718 = vld [vmem:[%s2 + $0x98] sm:$0xff]
      %v1719 = vld [vmem:[%s2 + $0xa0] sm:$0xff]
      %v1720 = vld [vmem:[%s2 + $0xa8] sm:$0xff]
      %v1721 = vld [vmem:[%s2 + $0xb0] sm:$0xff]
      %v1722 = vld [vmem:[%s2 + $0xb8] sm:$0xff]
      %v1723 = vld [vmem:[%s2 + $0xc0] sm:$0xff]
      %v1724 = vld [vmem:[%s2 + $0xc8] sm:$0xff]
      %v1725 = vld [vmem:[%s2 + $0xd0] sm:$0xff]
      %v1726 = vld [vmem:[%s2 + $0xd8] sm:$0xff]
      %v1727 = vld [vmem:[%s2 + $0xe0] sm:$0xff]
      %v1728 = vld [vmem:[%s2 + $0xe8] sm:$0xff]
      %v1729 = vld [vmem:[%s2 + $0xf0] sm:$0xff]
      %v1730 = vld [vmem:[%s2 + $0xf8] sm:$0xff]
      %v1731 = vadd.f32 %v1366, %v1699
      %v1732 = vadd.f32 %v1369, %v1700
      %v1733 = vadd.f32 %v1374, %v1701
      %v1734 = vadd.f32 %v1377, %v1702
      %v1735 = vadd.f32 %v1382, %v1703
      %v1736 = vadd.f32 %v1385, %v1704
      %v1737 = vadd.f32 %v1390, %v1705
      %v1738 = vadd.f32 %v1393, %v1706
      %v1739 = vadd.f32 %v1467, %v1707
      %v1740 = vadd.f32 %v1470, %v1708
      %v1741 = vadd.f32 %v1475, %v1709
      %v1742 = vadd.f32 %v1478, %v1710
      %v1743 = vadd.f32 %v1483, %v1711
      %v1744 = vadd.f32 %v1486, %v1712
      %v1745 = vadd.f32 %v1491, %v1713
      %v1746 = vadd.f32 %v1494, %v1714
      %v1747 = vadd.f32 %v1568, %v1715
      %v1748 = vadd.f32 %v1571, %v1716
      %v1749 = vadd.f32 %v1576, %v1717
      %v1750 = vadd.f32 %v1579, %v1718
      %v1751 = vadd.f32 %v1584, %v1719
      %v1752 = vadd.f32 %v1587, %v1720
      %v1753 = vadd.f32 %v1592, %v1721
      %v1754 = vadd.f32 %v1595, %v1722
      %v1755 = vadd.f32 %v1669, %v1723
      %v1756 = vadd.f32 %v1672, %v1724
      %v1757 = vadd.f32 %v1677, %v1725
      %v1758 = vadd.f32 %v1680, %v1726
      %v1759 = vadd.f32 %v1685, %v1727
      %v1760 = vadd.f32 %v1688, %v1728
      %v1761 = vadd.f32 %v1693, %v1729
      %v1762 = vadd.f32 %v1696, %v1730
      %vm1763 = vcmask 523264
      %v1764 = vsel %vm1763, %v1731, -inf
      %1765 = vmax.xlane.f32.xlu0 %v1764
      %v1766 = vpop.xlane.xlu0 %1765
      %v1767 = vsel %vm1763, %v1732, -inf
      %1768 = vmax.xlane.f32.xlu0 %v1767
      %v1769 = vpop.xlane.xlu0 %1768
      %v1770 = vsel %vm1763, %v1733, -inf
      %1771 = vmax.xlane.f32.xlu0 %v1770
      %v1772 = vpop.xlane.xlu0 %1771
      %v1773 = vsel %vm1763, %v1734, -inf
      %1774 = vmax.xlane.f32.xlu0 %v1773
      %v1775 = vpop.xlane.xlu0 %1774
      %v1776 = vsel %vm1763, %v1735, -inf
      %1777 = vmax.xlane.f32.xlu0 %v1776
      %v1778 = vpop.xlane.xlu0 %1777
      %v1779 = vsel %vm1763, %v1736, -inf
      %1780 = vmax.xlane.f32.xlu0 %v1779
      %v1781 = vpop.xlane.xlu0 %1780
      %v1782 = vsel %vm1763, %v1737, -inf
      %1783 = vmax.xlane.f32.xlu0 %v1782
      %v1784 = vpop.xlane.xlu0 %1783
      %v1785 = vsel %vm1763, %v1738, -inf
      %1786 = vmax.xlane.f32.xlu0 %v1785
      %v1787 = vpop.xlane.xlu0 %1786
      %v1788 = vsel %vm1763, %v1739, -inf
      %1789 = vmax.xlane.f32.xlu0 %v1788
      %v1790 = vpop.xlane.xlu0 %1789
      %v1791 = vsel %vm1763, %v1740, -inf
      %1792 = vmax.xlane.f32.xlu0 %v1791
      %v1793 = vpop.xlane.xlu0 %1792
      %v1794 = vsel %vm1763, %v1741, -inf
      %1795 = vmax.xlane.f32.xlu0 %v1794
      %v1796 = vpop.xlane.xlu0 %1795
      %v1797 = vsel %vm1763, %v1742, -inf
      %1798 = vmax.xlane.f32.xlu0 %v1797
      %v1799 = vpop.xlane.xlu0 %1798
      %v1800 = vsel %vm1763, %v1743, -inf
      %1801 = vmax.xlane.f32.xlu0 %v1800
      %v1802 = vpop.xlane.xlu0 %1801
      %v1803 = vsel %vm1763, %v1744, -inf
      %1804 = vmax.xlane.f32.xlu0 %v1803
      %v1805 = vpop.xlane.xlu0 %1804
      %v1806 = vsel %vm1763, %v1745, -inf
      %1807 = vmax.xlane.f32.xlu0 %v1806
      %v1808 = vpop.xlane.xlu0 %1807
      %v1809 = vsel %vm1763, %v1746, -inf
      %1810 = vmax.xlane.f32.xlu0 %v1809
      %v1811 = vpop.xlane.xlu0 %1810
      %v1812 = vsel %vm1763, %v1747, -inf
      %1813 = vmax.xlane.f32.xlu0 %v1812
      %v1814 = vpop.xlane.xlu0 %1813
      %v1815 = vsel %vm1763, %v1748, -inf
      %1816 = vmax.xlane.f32.xlu0 %v1815
      %v1817 = vpop.xlane.xlu0 %1816
      %v1818 = vsel %vm1763, %v1749, -inf
      %1819 = vmax.xlane.f32.xlu0 %v1818
      %v1820 = vpop.xlane.xlu0 %1819
      %v1821 = vsel %vm1763, %v1750, -inf
      %1822 = vmax.xlane.f32.xlu0 %v1821
      %v1823 = vpop.xlane.xlu0 %1822
      %v1824 = vsel %vm1763, %v1751, -inf
      %1825 = vmax.xlane.f32.xlu0 %v1824
      %v1826 = vpop.xlane.xlu0 %1825
      %v1827 = vsel %vm1763, %v1752, -inf
      %1828 = vmax.xlane.f32.xlu0 %v1827
      %v1829 = vpop.xlane.xlu0 %1828
      %v1830 = vsel %vm1763, %v1753, -inf
      %1831 = vmax.xlane.f32.xlu0 %v1830
      %v1832 = vpop.xlane.xlu0 %1831
      %v1833 = vsel %vm1763, %v1754, -inf
      %1834 = vmax.xlane.f32.xlu0 %v1833
      %v1835 = vpop.xlane.xlu0 %1834
      %v1836 = vsel %vm1763, %v1755, -inf
      %1837 = vmax.xlane.f32.xlu0 %v1836
      %v1838 = vpop.xlane.xlu0 %1837
      %v1839 = vsel %vm1763, %v1756, -inf
      %1840 = vmax.xlane.f32.xlu0 %v1839
      %v1841 = vpop.xlane.xlu0 %1840
      %v1842 = vsel %vm1763, %v1757, -inf
      %1843 = vmax.xlane.f32.xlu0 %v1842
      %v1844 = vpop.xlane.xlu0 %1843
      %v1845 = vsel %vm1763, %v1758, -inf
      %1846 = vmax.xlane.f32.xlu0 %v1845
      %v1847 = vpop.xlane.xlu0 %1846
      %v1848 = vsel %vm1763, %v1759, -inf
      %1849 = vmax.xlane.f32.xlu0 %v1848
      %v1850 = vpop.xlane.xlu0 %1849
      %v1851 = vsel %vm1763, %v1760, -inf
      %1852 = vmax.xlane.f32.xlu0 %v1851
      %v1853 = vpop.xlane.xlu0 %1852
      %v1854 = vsel %vm1763, %v1761, -inf
      %1855 = vmax.xlane.f32.xlu0 %v1854
      %v1856 = vpop.xlane.xlu0 %1855
      %v1857 = vsel %vm1763, %v1762, -inf
      %1858 = vmax.xlane.f32.xlu0 %v1857
      %v1859 = vpop.xlane.xlu0 %1858
      %v1860 = vsub.f32 %v1731, %v1766
      %v1861 = vsub.f32 %v1732, %v1769
      %v1862 = vsub.f32 %v1733, %v1772
      %v1863 = vsub.f32 %v1734, %v1775
      %v1864 = vsub.f32 %v1735, %v1778
      %v1865 = vsub.f32 %v1736, %v1781
      %v1866 = vsub.f32 %v1737, %v1784
      %v1867 = vsub.f32 %v1738, %v1787
      %v1868 = vsub.f32 %v1739, %v1790
      %v1869 = vsub.f32 %v1740, %v1793
      %v1870 = vsub.f32 %v1741, %v1796
      %v1871 = vsub.f32 %v1742, %v1799
      %v1872 = vsub.f32 %v1743, %v1802
      %v1873 = vsub.f32 %v1744, %v1805
      %v1874 = vsub.f32 %v1745, %v1808
      %v1875 = vsub.f32 %v1746, %v1811
      %v1876 = vsub.f32 %v1747, %v1814
      %v1877 = vsub.f32 %v1748, %v1817
      %v1878 = vsub.f32 %v1749, %v1820
      %v1879 = vsub.f32 %v1750, %v1823
      %v1880 = vsub.f32 %v1751, %v1826
      %v1881 = vsub.f32 %v1752, %v1829
      %v1882 = vsub.f32 %v1753, %v1832
      %v1883 = vsub.f32 %v1754, %v1835
      %v1884 = vsub.f32 %v1755, %v1838
      %v1885 = vsub.f32 %v1756, %v1841
      %v1886 = vsub.f32 %v1757, %v1844
      %v1887 = vsub.f32 %v1758, %v1847
      %v1888 = vsub.f32 %v1759, %v1850
      %v1889 = vsub.f32 %v1760, %v1853
      %v1890 = vsub.f32 %v1761, %v1856
      %v1891 = vsub.f32 %v1762, %v1859
      %v1892 = vmul.f32 %v1860, 1.442695
      %v1893 = vpow.pop %v1892
      %v1894 = vmul.f32 %v1861, 1.442695
      %v1895 = vpow.pop %v1894
      %v1896 = vmul.f32 %v1862, 1.442695
      %v1897 = vpow.pop %v1896
      %v1898 = vmul.f32 %v1863, 1.442695
      %v1899 = vpow.pop %v1898
      %v1900 = vmul.f32 %v1864, 1.442695
      %v1901 = vpow.pop %v1900
      %v1902 = vmul.f32 %v1865, 1.442695
      %v1903 = vpow.pop %v1902
      %v1904 = vmul.f32 %v1866, 1.442695
      %v1905 = vpow.pop %v1904
      %v1906 = vmul.f32 %v1867, 1.442695
      %v1907 = vpow.pop %v1906
      %v1908 = vmul.f32 %v1868, 1.442695
      %v1909 = vpow.pop %v1908
      %v1910 = vmul.f32 %v1869, 1.442695
      %v1911 = vpow.pop %v1910
      %v1912 = vmul.f32 %v1870, 1.442695
      %v1913 = vpow.pop %v1912
      %v1914 = vmul.f32 %v1871, 1.442695
      %v1915 = vpow.pop %v1914
      %v1916 = vmul.f32 %v1872, 1.442695
      %v1917 = vpow.pop %v1916
      %v1918 = vmul.f32 %v1873, 1.442695
      %v1919 = vpow.pop %v1918
      %v1920 = vmul.f32 %v1874, 1.442695
      %v1921 = vpow.pop %v1920
      %v1922 = vmul.f32 %v1875, 1.442695
      %v1923 = vpow.pop %v1922
      %v1924 = vmul.f32 %v1876, 1.442695
      %v1925 = vpow.pop %v1924
      %v1926 = vmul.f32 %v1877, 1.442695
      %v1927 = vpow.pop %v1926
      %v1928 = vmul.f32 %v1878, 1.442695
      %v1929 = vpow.pop %v1928
      %v1930 = vmul.f32 %v1879, 1.442695
      %v1931 = vpow.pop %v1930
      %v1932 = vmul.f32 %v1880, 1.442695
      %v1933 = vpow.pop %v1932
      %v1934 = vmul.f32 %v1881, 1.442695
      %v1935 = vpow.pop %v1934
      %v1936 = vmul.f32 %v1882, 1.442695
      %v1937 = vpow.pop %v1936
      %v1938 = vmul.f32 %v1883, 1.442695
      %v1939 = vpow.pop %v1938
      %v1940 = vmul.f32 %v1884, 1.442695
      %v1941 = vpow.pop %v1940
      %v1942 = vmul.f32 %v1885, 1.442695
      %v1943 = vpow.pop %v1942
      %v1944 = vmul.f32 %v1886, 1.442695
      %v1945 = vpow.pop %v1944
      %v1946 = vmul.f32 %v1887, 1.442695
      %v1947 = vpow.pop %v1946
      %v1948 = vmul.f32 %v1888, 1.442695
      %v1949 = vpow.pop %v1948
      %v1950 = vmul.f32 %v1889, 1.442695
      %v1951 = vpow.pop %v1950
      %v1952 = vmul.f32 %v1890, 1.442695
      %v1953 = vpow.pop %v1952
      %v1954 = vmul.f32 %v1891, 1.442695
      %v1955 = vpow.pop %v1954
      %v1956 = vsel %vm1763, %v1893, 0.0
      %1957 = vadd.xlane.f32.xlu0 %v1956
      %v1958 = vpop.xlane.xlu0 %1957
      %v1959 = vsel %vm1763, %v1895, 0.0
      %1960 = vadd.xlane.f32.xlu0 %v1959
      %v1961 = vpop.xlane.xlu0 %1960
      %v1962 = vsel %vm1763, %v1897, 0.0
      %1963 = vadd.xlane.f32.xlu0 %v1962
      %v1964 = vpop.xlane.xlu0 %1963
      %v1965 = vsel %vm1763, %v1899, 0.0
      %1966 = vadd.xlane.f32.xlu0 %v1965
      %v1967 = vpop.xlane.xlu0 %1966
      %v1968 = vsel %vm1763, %v1901, 0.0
      %1969 = vadd.xlane.f32.xlu0 %v1968
      %v1970 = vpop.xlane.xlu0 %1969
      %v1971 = vsel %vm1763, %v1903, 0.0
      %1972 = vadd.xlane.f32.xlu0 %v1971
      %v1973 = vpop.xlane.xlu0 %1972
      %v1974 = vsel %vm1763, %v1905, 0.0
      %1975 = vadd.xlane.f32.xlu0 %v1974
      %v1976 = vpop.xlane.xlu0 %1975
      %v1977 = vsel %vm1763, %v1907, 0.0
      %1978 = vadd.xlane.f32.xlu0 %v1977
      %v1979 = vpop.xlane.xlu0 %1978
      %v1980 = vsel %vm1763, %v1909, 0.0
      %1981 = vadd.xlane.f32.xlu0 %v1980
      %v1982 = vpop.xlane.xlu0 %1981
      %v1983 = vsel %vm1763, %v1911, 0.0
      %1984 = vadd.xlane.f32.xlu0 %v1983
      %v1985 = vpop.xlane.xlu0 %1984
      %v1986 = vsel %vm1763, %v1913, 0.0
      %1987 = vadd.xlane.f32.xlu0 %v1986
      %v1988 = vpop.xlane.xlu0 %1987
      %v1989 = vsel %vm1763, %v1915, 0.0
      %1990 = vadd.xlane.f32.xlu0 %v1989
      %v1991 = vpop.xlane.xlu0 %1990
      %v1992 = vsel %vm1763, %v1917, 0.0
      %1993 = vadd.xlane.f32.xlu0 %v1992
      %v1994 = vpop.xlane.xlu0 %1993
      %v1995 = vsel %vm1763, %v1919, 0.0
      %1996 = vadd.xlane.f32.xlu0 %v1995
      %v1997 = vpop.xlane.xlu0 %1996
      %v1998 = vsel %vm1763, %v1921, 0.0
      %1999 = vadd.xlane.f32.xlu0 %v1998
      %v2000 = vpop.xlane.xlu0 %1999
      %v2001 = vsel %vm1763, %v1923, 0.0
      %2002 = vadd.xlane.f32.xlu0 %v2001
      %v2003 = vpop.xlane.xlu0 %2002
      %v2004 = vsel %vm1763, %v1925, 0.0
      %2005 = vadd.xlane.f32.xlu0 %v2004
      %v2006 = vpop.xlane.xlu0 %2005
      %v2007 = vsel %vm1763, %v1927, 0.0
      %2008 = vadd.xlane.f32.xlu0 %v2007
      %v2009 = vpop.xlane.xlu0 %2008
      %v2010 = vsel %vm1763, %v1929, 0.0
      %2011 = vadd.xlane.f32.xlu0 %v2010
      %v2012 = vpop.xlane.xlu0 %2011
      %v2013 = vsel %vm1763, %v1931, 0.0
      %2014 = vadd.xlane.f32.xlu0 %v2013
      %v2015 = vpop.xlane.xlu0 %2014
      %v2016 = vsel %vm1763, %v1933, 0.0
      %2017 = vadd.xlane.f32.xlu0 %v2016
      %v2018 = vpop.xlane.xlu0 %2017
      %v2019 = vsel %vm1763, %v1935, 0.0
      %2020 = vadd.xlane.f32.xlu0 %v2019
      %v2021 = vpop.xlane.xlu0 %2020
      %v2022 = vsel %vm1763, %v1937, 0.0
      %2023 = vadd.xlane.f32.xlu0 %v2022
      %v2024 = vpop.xlane.xlu0 %2023
      %v2025 = vsel %vm1763, %v1939, 0.0
      %2026 = vadd.xlane.f32.xlu0 %v2025
      %v2027 = vpop.xlane.xlu0 %2026
      %v2028 = vsel %vm1763, %v1941, 0.0
      %2029 = vadd.xlane.f32.xlu0 %v2028
      %v2030 = vpop.xlane.xlu0 %2029
      %v2031 = vsel %vm1763, %v1943, 0.0
      %2032 = vadd.xlane.f32.xlu0 %v2031
      %v2033 = vpop.xlane.xlu0 %2032
      %v2034 = vsel %vm1763, %v1945, 0.0
      %2035 = vadd.xlane.f32.xlu0 %v2034
      %v2036 = vpop.xlane.xlu0 %2035
      %v2037 = vsel %vm1763, %v1947, 0.0
      %2038 = vadd.xlane.f32.xlu0 %v2037
      %v2039 = vpop.xlane.xlu0 %2038
      %v2040 = vsel %vm1763, %v1949, 0.0
      %2041 = vadd.xlane.f32.xlu0 %v2040
      %v2042 = vpop.xlane.xlu0 %2041
      %v2043 = vsel %vm1763, %v1951, 0.0
      %2044 = vadd.xlane.f32.xlu0 %v2043
      %v2045 = vpop.xlane.xlu0 %2044
      %v2046 = vsel %vm1763, %v1953, 0.0
      %2047 = vadd.xlane.f32.xlu0 %v2046
      %v2048 = vpop.xlane.xlu0 %2047
      %v2049 = vsel %vm1763, %v1955, 0.0
      %2050 = vadd.xlane.f32.xlu0 %v2049
      %v2051 = vpop.xlane.xlu0 %2050
      %v2052 = vrcp.pop %v1958
      %v2053 = vrcp.pop %v1961
      %v2054 = vrcp.pop %v1964
      %v2055 = vrcp.pop %v1967
      %v2056 = vrcp.pop %v1970
      %v2057 = vrcp.pop %v1973
      %v2058 = vrcp.pop %v1976
      %v2059 = vrcp.pop %v1979
      %v2060 = vrcp.pop %v1982
      %v2061 = vrcp.pop %v1985
      %v2062 = vrcp.pop %v1988
      %v2063 = vrcp.pop %v1991
      %v2064 = vrcp.pop %v1994
      %v2065 = vrcp.pop %v1997
      %v2066 = vrcp.pop %v2000
      %v2067 = vrcp.pop %v2003
      %v2068 = vrcp.pop %v2006
      %v2069 = vrcp.pop %v2009
      %v2070 = vrcp.pop %v2012
      %v2071 = vrcp.pop %v2015
      %v2072 = vrcp.pop %v2018
      %v2073 = vrcp.pop %v2021
      %v2074 = vrcp.pop %v2024
      %v2075 = vrcp.pop %v2027
      %v2076 = vrcp.pop %v2030
      %v2077 = vrcp.pop %v2033
      %v2078 = vrcp.pop %v2036
      %v2079 = vrcp.pop %v2039
      %v2080 = vrcp.pop %v2042
      %v2081 = vrcp.pop %v2045
      %v2082 = vrcp.pop %v2048
      %v2083 = vrcp.pop %v2051
      %v2084 = vmul.f32 %v1893, %v2052
      %v2085 = vmul.f32 %v1895, %v2053
      %v2086 = vmul.f32 %v1897, %v2054
      %v2087 = vmul.f32 %v1899, %v2055
      %v2088 = vmul.f32 %v1901, %v2056
      %v2089 = vmul.f32 %v1903, %v2057
      %v2090 = vmul.f32 %v1905, %v2058
      %v2091 = vmul.f32 %v1907, %v2059
      %v2092 = vmul.f32 %v1909, %v2060
      %v2093 = vmul.f32 %v1911, %v2061
      %v2094 = vmul.f32 %v1913, %v2062
      %v2095 = vmul.f32 %v1915, %v2063
      %v2096 = vmul.f32 %v1917, %v2064
      %v2097 = vmul.f32 %v1919, %v2065
      %v2098 = vmul.f32 %v1921, %v2066
      %v2099 = vmul.f32 %v1923, %v2067
      %v2100 = vmul.f32 %v1925, %v2068
      %v2101 = vmul.f32 %v1927, %v2069
      %v2102 = vmul.f32 %v1929, %v2070
      %v2103 = vmul.f32 %v1931, %v2071
      %v2104 = vmul.f32 %v1933, %v2072
      %v2105 = vmul.f32 %v1935, %v2073
      %v2106 = vmul.f32 %v1937, %v2074
      %v2107 = vmul.f32 %v1939, %v2075
      %v2108 = vmul.f32 %v1941, %v2076
      %v2109 = vmul.f32 %v1943, %v2077
      %v2110 = vmul.f32 %v1945, %v2078
      %v2111 = vmul.f32 %v1947, %v2079
      %v2112 = vmul.f32 %v1949, %v2080
      %v2113 = vmul.f32 %v1951, %v2081
      %v2114 = vmul.f32 %v1953, %v2082
      %v2115 = vmul.f32 %v1955, %v2083
      %v2116 = vpack.c.bf16 %v2085, %v2084
      %v2117 = vpack.c.bf16 %v2087, %v2086
      %v2118 = vpack.c.bf16 %v2089, %v2088
      %v2119 = vpack.c.bf16 %v2091, %v2090
      %v2120 = vpack.c.bf16 %v2093, %v2092
      %v2121 = vpack.c.bf16 %v2095, %v2094
      %v2122 = vpack.c.bf16 %v2097, %v2096
      %v2123 = vpack.c.bf16 %v2099, %v2098
      %v2124 = vpack.c.bf16 %v2101, %v2100
      %v2125 = vpack.c.bf16 %v2103, %v2102
      %v2126 = vpack.c.bf16 %v2105, %v2104
      %v2127 = vpack.c.bf16 %v2107, %v2106
      %v2128 = vpack.c.bf16 %v2109, %v2108
      %v2129 = vpack.c.bf16 %v2111, %v2110
      %v2130 = vpack.c.bf16 %v2113, %v2112
      %v2131 = vpack.c.bf16 %v2115, %v2114
      %2132 = vrot.lane.b32.xlu0 %v1270, 64
      %v2133 = vpop.permute.xlu0 %2132
      %2134 = vrot.lane.b32.xlu0 %v1271, 64
      %v2135 = vpop.permute.xlu0 %2134
      %2136 = vrot.lane.b32.xlu0 %v1272, 64
      %v2137 = vpop.permute.xlu0 %2136
      %2138 = vrot.lane.b32.xlu0 %v1273, 64
      %v2139 = vpop.permute.xlu0 %2138
      %v2145 = vsel %vm1763, %v2116, 0
      %v2148 = vsel %vm1763, %v2117, 0
      %v2151 = vsel %vm1763, %v2118, 0
      %v2154 = vsel %vm1763, %v2119, 0
      %2156 = vmatprep.subr.bf16.mxu0 0
      %2157 = vmatpush1.bf16.msra.mxu0 %v2133
      %2158 = vmatprep.subr.bf16.mxu0 0
      %2159 = vmatpush1.bf16.msra.mxu0 %v2135
      %2160 = vmatprep.subr.bf16.mxu0 0
      %2161 = vmatpush1.bf16.msra.mxu0 %v2137
      %2162 = vmatprep.subr.bf16.mxu0 0
      %2163 = vmatpush1.bf16.msra.mxu0 %v2139
      %2164 = vmatprep.subr.bf16.mxu0 0
      %2165 = vmatpush1.bf16.msra.mxu0 0
      %2166 = vmatprep.subr.bf16.mxu0 0
      %2167 = vmatpush1.bf16.msra.mxu0 0
      %2168 = vmatprep.subr.bf16.mxu0 0
      %2169 = vmatpush1.bf16.msra.mxu0 0
      %2170 = vmatprep.subr.bf16.mxu0 0
      %2171 = vmatpush1.bf16.msra.mxu0 0
      %2172 = vmatprep.subr.bf16.mxu0 0
      %2173 = vmatpush1.bf16.msra.mxu0 0
      %2174 = vmatprep.subr.bf16.mxu0 0
      %2175 = vmatpush1.bf16.msra.mxu0 0
      %2176 = vmatprep.subr.bf16.mxu0 0
      %2177 = vmatpush1.bf16.msra.mxu0 0
      %2178 = vmatprep.subr.bf16.mxu0 0
      %2179 = vmatpush1.bf16.msra.mxu0 0
      %2180 = vmatprep.subr.bf16.mxu0 0
      %2181 = vmatpush1.bf16.msra.mxu0 0
      %2182 = vmatprep.subr.bf16.mxu0 0
      %2183 = vmatpush1.bf16.msra.mxu0 0
      %2184 = vmatprep.subr.bf16.mxu0 0
      %2185 = vmatpush1.bf16.msra.mxu0 0
      %2186 = vmatprep.subr.bf16.mxu0 0
      %2187 = vmatpush1.bf16.msra.mxu0 0
      %2188 = vmatprep.mubr.bf16.mxu0 0
      %2189 = vmatmul.mubr.bf16.gmra.mrb[0].mxu0 %v2145
      %v2190 = vpop.f32.mrb[0].mxu0
      %v2191 = vadd.f32 0.0, %v2190
      %v2192 = vpop.f32.mrb[0].mxu0
      %v2193 = vpop.f32.mrb[0].mxu0
      %v2194 = vadd.f32 0.0, %v2193
      %v2195 = vpop.f32.mrb[0].mxu0
      %2196 = vmatprep.mubr.bf16.mxu0 0
      %2197 = vmatmul.mubr.bf16.gmra.mrb[0].mxu0 %v2148
      %v2198 = vpop.f32.mrb[0].mxu0
      %v2199 = vadd.f32 0.0, %v2198
      %v2200 = vpop.f32.mrb[0].mxu0
      %v2201 = vpop.f32.mrb[0].mxu0
      %v2202 = vadd.f32 0.0, %v2201
      %v2203 = vpop.f32.mrb[0].mxu0
      %2204 = vmatprep.mubr.bf16.mxu0 0
      %2205 = vmatmul.mubr.bf16.gmra.mrb[0].mxu0 %v2151
      %v2206 = vpop.f32.mrb[0].mxu0
      %v2207 = vadd.f32 0.0, %v2206
      %v2208 = vpop.f32.mrb[0].mxu0
      %v2209 = vpop.f32.mrb[0].mxu0
      %v2210 = vadd.f32 0.0, %v2209
      %v2211 = vpop.f32.mrb[0].mxu0
      %2212 = vmatprep.mubr.bf16.mxu0 0
      %2213 = vmatmul.mubr.bf16.gmra.mrb[0].mxu0 %v2154
      %v2214 = vpop.f32.mrb[0].mxu0
      %v2215 = vadd.f32 0.0, %v2214
      %v2216 = vpop.f32.mrb[0].mxu0
      %v2217 = vpop.f32.mrb[0].mxu0
      %v2218 = vadd.f32 0.0, %v2217
      %v2219 = vpop.f32.mrb[0].mxu0
      %2220 = vdwg.mxu0
      %2221 = vrot.lane.b32.xlu0 %v1274, 64
      %v2222 = vpop.permute.xlu0 %2221
      %2223 = vrot.lane.b32.xlu0 %v1275, 64
      %v2224 = vpop.permute.xlu0 %2223
      %2225 = vrot.lane.b32.xlu0 %v1276, 64
      %v2226 = vpop.permute.xlu0 %2225
      %2227 = vrot.lane.b32.xlu0 %v1277, 64
      %v2228 = vpop.permute.xlu0 %2227
      %v2234 = vsel %vm1763, %v2120, 0
      %v2237 = vsel %vm1763, %v2121, 0
      %v2240 = vsel %vm1763, %v2122, 0
      %v2243 = vsel %vm1763, %v2123, 0
      %2245 = vmatprep.subr.bf16.mxu0 0
      %2246 = vmatpush1.bf16.msra.mxu0 %v2222
      %2247 = vmatprep.subr.bf16.mxu0 0
      %2248 = vmatpush1.bf16.msra.mxu0 %v2224
      %2249 = vmatprep.subr.bf16.mxu0 0
      %2250 = vmatpush1.bf16.msra.mxu0 %v2226
      %2251 = vmatprep.subr.bf16.mxu0 0
      %2252 = vmatpush1.bf16.msra.mxu0 %v2228
      %2253 = vmatprep.subr.bf16.mxu0 0
      %2254 = vmatpush1.bf16.msra.mxu0 0
      %2255 = vmatprep.subr.bf16.mxu0 0
      %2256 = vmatpush1.bf16.msra.mxu0 0
      %2257 = vmatprep.subr.bf16.mxu0 0
      %2258 = vmatpush1.bf16.msra.mxu0 0
      %2259 = vmatprep.subr.bf16.mxu0 0
      %2260 = vmatpush1.bf16.msra.mxu0 0
      %2261 = vmatprep.subr.bf16.mxu0 0
      %2262 = vmatpush1.bf16.msra.mxu0 0
      %2263 = vmatprep.subr.bf16.mxu0 0
      %2264 = vmatpush1.bf16.msra.mxu0 0
      %2265 = vmatprep.subr.bf16.mxu0 0
      %2266 = vmatpush1.bf16.msra.mxu0 0
      %2267 = vmatprep.subr.bf16.mxu0 0
      %2268 = vmatpush1.bf16.msra.mxu0 0
      %2269 = vmatprep.subr.bf16.mxu0 0
      %2270 = vmatpush1.bf16.msra.mxu0 0
      %2271 = vmatprep.subr.bf16.mxu0 0
      %2272 = vmatpush1.bf16.msra.mxu0 0
      %2273 = vmatprep.subr.bf16.mxu0 0
      %2274 = vmatpush1.bf16.msra.mxu0 0
      %2275 = vmatprep.subr.bf16.mxu0 0
      %2276 = vmatpush1.bf16.msra.mxu0 0
      %2277 = vmatprep.mubr.bf16.mxu0 0
      %2278 = vmatmul.mubr.bf16.gmra.mrb[0].mxu0 %v2234
      %v2279 = vpop.f32.mrb[0].mxu0
      %v2280 = vadd.f32 0.0, %v2279
      %v2281 = vpop.f32.mrb[0].mxu0
      %v2282 = vpop.f32.mrb[0].mxu0
      %v2283 = vadd.f32 0.0, %v2282
      %v2284 = vpop.f32.mrb[0].mxu0
      %2285 = vmatprep.mubr.bf16.mxu0 0
      %2286 = vmatmul.mubr.bf16.gmra.mrb[0].mxu0 %v2237
      %v2287 = vpop.f32.mrb[0].mxu0
      %v2288 = vadd.f32 0.0, %v2287
      %v2289 = vpop.f32.mrb[0].mxu0
      %v2290 = vpop.f32.mrb[0].mxu0
      %v2291 = vadd.f32 0.0, %v2290
      %v2292 = vpop.f32.mrb[0].mxu0
      %2293 = vmatprep.mubr.bf16.mxu0 0
      %2294 = vmatmul.mubr.bf16.gmra.mrb[0].mxu0 %v2240
      %v2295 = vpop.f32.mrb[0].mxu0
      %v2296 = vadd.f32 0.0, %v2295
      %v2297 = vpop.f32.mrb[0].mxu0
      %v2298 = vpop.f32.mrb[0].mxu0
      %v2299 = vadd.f32 0.0, %v2298
      %v2300 = vpop.f32.mrb[0].mxu0
      %2301 = vmatprep.mubr.bf16.mxu0 0
      %2302 = vmatmul.mubr.bf16.gmra.mrb[0].mxu0 %v2243
      %v2303 = vpop.f32.mrb[0].mxu0
      %v2304 = vadd.f32 0.0, %v2303
      %v2305 = vpop.f32.mrb[0].mxu0
      %v2306 = vpop.f32.mrb[0].mxu0
      %v2307 = vadd.f32 0.0, %v2306
      %v2308 = vpop.f32.mrb[0].mxu0
      %2309 = vdwg.mxu0
      %2310 = vrot.lane.b32.xlu0 %v1278, 64
      %v2311 = vpop.permute.xlu0 %2310
      %2312 = vrot.lane.b32.xlu0 %v1279, 64
      %v2313 = vpop.permute.xlu0 %2312
      %2314 = vrot.lane.b32.xlu0 %v1280, 64
      %v2315 = vpop.permute.xlu0 %2314
      %2316 = vrot.lane.b32.xlu0 %v1281, 64
      %v2317 = vpop.permute.xlu0 %2316
      %v2323 = vsel %vm1763, %v2124, 0
      %v2326 = vsel %vm1763, %v2125, 0
      %v2329 = vsel %vm1763, %v2126, 0
      %v2332 = vsel %vm1763, %v2127, 0
      %2334 = vmatprep.subr.bf16.mxu0 0
      %2335 = vmatpush1.bf16.msra.mxu0 %v2311
      %2336 = vmatprep.subr.bf16.mxu0 0
      %2337 = vmatpush1.bf16.msra.mxu0 %v2313
      %2338 = vmatprep.subr.bf16.mxu0 0
      %2339 = vmatpush1.bf16.msra.mxu0 %v2315
      %2340 = vmatprep.subr.bf16.mxu0 0
      %2341 = vmatpush1.bf16.msra.mxu0 %v2317
      %2342 = vmatprep.subr.bf16.mxu0 0
      %2343 = vmatpush1.bf16.msra.mxu0 0
      %2344 = vmatprep.subr.bf16.mxu0 0
      %2345 = vmatpush1.bf16.msra.mxu0 0
      %2346 = vmatprep.subr.bf16.mxu0 0
      %2347 = vmatpush1.bf16.msra.mxu0 0
      %2348 = vmatprep.subr.bf16.mxu0 0
      %2349 = vmatpush1.bf16.msra.mxu0 0
      %2350 = vmatprep.subr.bf16.mxu0 0
      %2351 = vmatpush1.bf16.msra.mxu0 0
      %2352 = vmatprep.subr.bf16.mxu0 0
      %2353 = vmatpush1.bf16.msra.mxu0 0
      %2354 = vmatprep.subr.bf16.mxu0 0
      %2355 = vmatpush1.bf16.msra.mxu0 0
      %2356 = vmatprep.subr.bf16.mxu0 0
      %2357 = vmatpush1.bf16.msra.mxu0 0
      %2358 = vmatprep.subr.bf16.mxu0 0
      %2359 = vmatpush1.bf16.msra.mxu0 0
      %2360 = vmatprep.subr.bf16.mxu0 0
      %2361 = vmatpush1.bf16.msra.mxu0 0
      %2362 = vmatprep.subr.bf16.mxu0 0
      %2363 = vmatpush1.bf16.msra.mxu0 0
      %2364 = vmatprep.subr.bf16.mxu0 0
      %2365 = vmatpush1.bf16.msra.mxu0 0
      %2366 = vmatprep.mubr.bf16.mxu0 0
      %2367 = vmatmul.mubr.bf16.gmra.mrb[0].mxu0 %v2323
      %v2368 = vpop.f32.mrb[0].mxu0
      %v2369 = vadd.f32 0.0, %v2368
      %v2370 = vpop.f32.mrb[0].mxu0
      %v2371 = vpop.f32.mrb[0].mxu0
      %v2372 = vadd.f32 0.0, %v2371
      %v2373 = vpop.f32.mrb[0].mxu0
      %2374 = vmatprep.mubr.bf16.mxu0 0
      %2375 = vmatmul.mubr.bf16.gmra.mrb[0].mxu0 %v2326
      %v2376 = vpop.f32.mrb[0].mxu0
      %v2377 = vadd.f32 0.0, %v2376
      %v2378 = vpop.f32.mrb[0].mxu0
      %v2379 = vpop.f32.mrb[0].mxu0
      %v2380 = vadd.f32 0.0, %v2379
      %v2381 = vpop.f32.mrb[0].mxu0
      %2382 = vmatprep.mubr.bf16.mxu0 0
      %2383 = vmatmul.mubr.bf16.gmra.mrb[0].mxu0 %v2329
      %v2384 = vpop.f32.mrb[0].mxu0
      %v2385 = vadd.f32 0.0, %v2384
      %v2386 = vpop.f32.mrb[0].mxu0
      %v2387 = vpop.f32.mrb[0].mxu0
      %v2388 = vadd.f32 0.0, %v2387
      %v2389 = vpop.f32.mrb[0].mxu0
      %2390 = vmatprep.mubr.bf16.mxu0 0
      %2391 = vmatmul.mubr.bf16.gmra.mrb[0].mxu0 %v2332
      %v2392 = vpop.f32.mrb[0].mxu0
      %v2393 = vadd.f32 0.0, %v2392
      %v2394 = vpop.f32.mrb[0].mxu0
      %v2395 = vpop.f32.mrb[0].mxu0
      %v2396 = vadd.f32 0.0, %v2395
      %v2397 = vpop.f32.mrb[0].mxu0
      %2398 = vdwg.mxu0
      %2399 = vrot.lane.b32.xlu0 %v1282, 64
      %v2400 = vpop.permute.xlu0 %2399
      %2401 = vrot.lane.b32.xlu0 %v1283, 64
      %v2402 = vpop.permute.xlu0 %2401
      %2403 = vrot.lane.b32.xlu0 %v1284, 64
      %v2404 = vpop.permute.xlu0 %2403
      %2405 = vrot.lane.b32.xlu0 %v1285, 64
      %v2406 = vpop.permute.xlu0 %2405
      %v2412 = vsel %vm1763, %v2128, 0
      %v2415 = vsel %vm1763, %v2129, 0
      %v2418 = vsel %vm1763, %v2130, 0
      %v2421 = vsel %vm1763, %v2131, 0
      %2423 = vmatprep.subr.bf16.mxu0 0
      %2424 = vmatpush1.bf16.msra.mxu0 %v2400
      %2425 = vmatprep.subr.bf16.mxu0 0
      %2426 = vmatpush1.bf16.msra.mxu0 %v2402
      %2427 = vmatprep.subr.bf16.mxu0 0
      %2428 = vmatpush1.bf16.msra.mxu0 %v2404
      %2429 = vmatprep.subr.bf16.mxu0 0
      %2430 = vmatpush1.bf16.msra.mxu0 %v2406
      %2431 = vmatprep.subr.bf16.mxu0 0
      %2432 = vmatpush1.bf16.msra.mxu0 0
      %2433 = vmatprep.subr.bf16.mxu0 0
      %2434 = vmatpush1.bf16.msra.mxu0 0
      %2435 = vmatprep.subr.bf16.mxu0 0
      %2436 = vmatpush1.bf16.msra.mxu0 0
      %2437 = vmatprep.subr.bf16.mxu0 0
      %2438 = vmatpush1.bf16.msra.mxu0 0
      %2439 = vmatprep.subr.bf16.mxu0 0
      %2440 = vmatpush1.bf16.msra.mxu0 0
      %2441 = vmatprep.subr.bf16.mxu0 0
      %2442 = vmatpush1.bf16.msra.mxu0 0
      %2443 = vmatprep.subr.bf16.mxu0 0
      %2444 = vmatpush1.bf16.msra.mxu0 0
      %2445 = vmatprep.subr.bf16.mxu0 0
      %2446 = vmatpush1.bf16.msra.mxu0 0
      %2447 = vmatprep.subr.bf16.mxu0 0
      %2448 = vmatpush1.bf16.msra.mxu0 0
      %2449 = vmatprep.subr.bf16.mxu0 0
      %2450 = vmatpush1.bf16.msra.mxu0 0
      %2451 = vmatprep.subr.bf16.mxu0 0
      %2452 = vmatpush1.bf16.msra.mxu0 0
      %2453 = vmatprep.subr.bf16.mxu0 0
      %2454 = vmatpush1.bf16.msra.mxu0 0
      %2455 = vmatprep.mubr.bf16.mxu0 0
      %2456 = vmatmul.mubr.bf16.gmra.mrb[0].mxu0 %v2412
      %v2457 = vpop.f32.mrb[0].mxu0
      %v2458 = vadd.f32 0.0, %v2457
      %v2459 = vpop.f32.mrb[0].mxu0
      %v2460 = vpop.f32.mrb[0].mxu0
      %v2461 = vadd.f32 0.0, %v2460
      %v2462 = vpop.f32.mrb[0].mxu0
      %2463 = vmatprep.mubr.bf16.mxu0 0
      %2464 = vmatmul.mubr.bf16.gmra.mrb[0].mxu0 %v2415
      %v2465 = vpop.f32.mrb[0].mxu0
      %v2466 = vadd.f32 0.0, %v2465
      %v2467 = vpop.f32.mrb[0].mxu0
      %v2468 = vpop.f32.mrb[0].mxu0
      %v2469 = vadd.f32 0.0, %v2468
      %v2470 = vpop.f32.mrb[0].mxu0
      %2471 = vmatprep.mubr.bf16.mxu0 0
      %2472 = vmatmul.mubr.bf16.gmra.mrb[0].mxu0 %v2418
      %v2473 = vpop.f32.mrb[0].mxu0
      %v2474 = vadd.f32 0.0, %v2473
      %v2475 = vpop.f32.mrb[0].mxu0
      %v2476 = vpop.f32.mrb[0].mxu0
      %v2477 = vadd.f32 0.0, %v2476
      %v2478 = vpop.f32.mrb[0].mxu0
      %2479 = vmatprep.mubr.bf16.mxu0 0
      %2480 = vmatmul.mubr.bf16.gmra.mrb[0].mxu0 %v2421
      %v2481 = vpop.f32.mrb[0].mxu0
      %v2482 = vadd.f32 0.0, %v2481
      %v2483 = vpop.f32.mrb[0].mxu0
      %v2484 = vpop.f32.mrb[0].mxu0
      %v2485 = vadd.f32 0.0, %v2484
      %v2486 = vpop.f32.mrb[0].mxu0
      %2487 = vdwg.mxu0
      %s2488 = scalar_lea.vmem %s1, 64
      %v2489 = vld [vmem:[%s2488] sm:$0xff]
      %v2490 = vld [vmem:[%s2488 + $0x8] sm:$0xff]
      %v2491 = vld [vmem:[%s2488 + $0x10] sm:$0xff]
      %v2492 = vld [vmem:[%s2488 + $0x18] sm:$0xff]
      %v2493 = vld [vmem:[%s2488 + $0x20] sm:$0xff]
      %v2494 = vld [vmem:[%s2488 + $0x28] sm:$0xff]
      %v2495 = vld [vmem:[%s2488 + $0x30] sm:$0xff]
      %v2496 = vld [vmem:[%s2488 + $0x38] sm:$0xff]
      %2497 = vrot.lane.b32.xlu0 %v1270, 112
      %v2498 = vpop.permute.xlu0 %2497
      %2499 = vrot.lane.b32.xlu0 %v1271, 112
      %v2500 = vpop.permute.xlu0 %2499
      %2501 = vrot.lane.b32.xlu0 %v1272, 112
      %v2502 = vpop.permute.xlu0 %2501
      %2503 = vrot.lane.b32.xlu0 %v1273, 112
      %v2504 = vpop.permute.xlu0 %2503
      %2505 = vrot.lane.b32.xlu0 %v1270, 80
      %v2506 = vpop.permute.xlu0 %2505
      %2507 = vrot.lane.b32.xlu0 %v1271, 80
      %v2508 = vpop.permute.xlu0 %2507
      %2509 = vrot.lane.b32.xlu0 %v1272, 80
      %v2510 = vpop.permute.xlu0 %2509
      %2511 = vrot.lane.b32.xlu0 %v1273, 80
      %v2512 = vpop.permute.xlu0 %2511
      %v2514 = vsel %vm1306, %v2498, 0
      %v2517 = vsel %vm1306, %v2500, 0
      %v2520 = vsel %vm1306, %v2502, 0
      %v2523 = vsel %vm1306, %v2504, 0
      %v2526 = vsel %vm1306, %v2506, 0
      %v2529 = vsel %vm1306, %v2508, 0
      %v2532 = vsel %vm1306, %v2510, 0
      %v2535 = vsel %vm1306, %v2512, 0
      %2537 = vmatprep.subr.bf16.mxu0 0
      %2538 = vmatpush1.bf16.xpose.msra.mxu0 %v2526
      %2539 = vmatprep.subr.bf16.mxu0 0
      %2540 = vmatpush1.bf16.xpose.msra.mxu0 %v2529
      %2541 = vmatprep.subr.bf16.mxu0 0
      %2542 = vmatpush1.bf16.xpose.msra.mxu0 %v2532
      %2543 = vmatprep.subr.bf16.mxu0 0
      %2544 = vmatpush1.bf16.xpose.msra.mxu0 %v2535
      %2545 = vmatprep.subr.bf16.mxu0 0
      %2546 = vmatpush1.bf16.xpose.msra.mxu0 0
      %2547 = vmatprep.subr.bf16.mxu0 0
      %2548 = vmatpush1.bf16.xpose.msra.mxu0 0
      %2549 = vmatprep.subr.bf16.mxu0 0
      %2550 = vmatpush1.bf16.xpose.msra.mxu0 0
      %2551 = vmatprep.subr.bf16.mxu0 0
      %2552 = vmatpush1.bf16.xpose.msra.mxu0 0
      %2553 = vmatprep.subr.bf16.mxu0 0
      %2554 = vmatpush1.bf16.xpose.msra.mxu0 0
      %2555 = vmatprep.subr.bf16.mxu0 0
      %2556 = vmatpush1.bf16.xpose.msra.mxu0 0
      %2557 = vmatprep.subr.bf16.mxu0 0
      %2558 = vmatpush1.bf16.xpose.msra.mxu0 0
      %2559 = vmatprep.subr.bf16.mxu0 0
      %2560 = vmatpush1.bf16.xpose.msra.mxu0 0
      %2561 = vmatprep.subr.bf16.mxu0 0
      %2562 = vmatpush1.bf16.xpose.msra.mxu0 0
      %2563 = vmatprep.subr.bf16.mxu0 0
      %2564 = vmatpush1.bf16.xpose.msra.mxu0 0
      %2565 = vmatprep.subr.bf16.mxu0 0
      %2566 = vmatpush1.bf16.xpose.msra.mxu0 0
      %2567 = vmatprep.subr.bf16.mxu0 0
      %2568 = vmatpush1.bf16.xpose.msra.mxu0 0
      %2569 = vmatprep.mubr.bf16.mxu0 0
      %2570 = vmatmul.mubr.bf16.gmra.mrb[0].mxu0 %v2514
      %v2571 = vpop.f32.mrb[0].mxu0
      %v2572 = vadd.f32 %v2489, %v2571
      %v2573 = vpop.f32.mrb[0].mxu0
      %v2574 = vpop.f32.mrb[0].mxu0
      %v2575 = vadd.f32 %v2490, %v2574
      %v2576 = vpop.f32.mrb[0].mxu0
      %2577 = vmatprep.mubr.bf16.mxu0 0
      %2578 = vmatmul.mubr.bf16.gmra.mrb[0].mxu0 %v2517
      %v2579 = vpop.f32.mrb[0].mxu0
      %v2580 = vadd.f32 %v2491, %v2579
      %v2581 = vpop.f32.mrb[0].mxu0
      %v2582 = vpop.f32.mrb[0].mxu0
      %v2583 = vadd.f32 %v2492, %v2582
      %v2584 = vpop.f32.mrb[0].mxu0
      %2585 = vmatprep.mubr.bf16.mxu0 0
      %2586 = vmatmul.mubr.bf16.gmra.mrb[0].mxu0 %v2520
      %v2587 = vpop.f32.mrb[0].mxu0
      %v2588 = vadd.f32 %v2493, %v2587
      %v2589 = vpop.f32.mrb[0].mxu0
      %v2590 = vpop.f32.mrb[0].mxu0
      %v2591 = vadd.f32 %v2494, %v2590
      %v2592 = vpop.f32.mrb[0].mxu0
      %2593 = vmatprep.mubr.bf16.mxu0 0
      %2594 = vmatmul.mubr.bf16.gmra.mrb[0].mxu0 %v2523
      %v2595 = vpop.f32.mrb[0].mxu0
      %v2596 = vadd.f32 %v2495, %v2595
      %v2597 = vpop.f32.mrb[0].mxu0
      %v2598 = vpop.f32.mrb[0].mxu0
      %v2599 = vadd.f32 %v2496, %v2598
      %v2600 = vpop.f32.mrb[0].mxu0
      %2601 = vdwg.mxu0
      %2602 = vrot.lane.b32.xlu0 %v1274, 112
      %v2603 = vpop.permute.xlu0 %2602
      %2604 = vrot.lane.b32.xlu0 %v1275, 112
      %v2605 = vpop.permute.xlu0 %2604
      %2606 = vrot.lane.b32.xlu0 %v1276, 112
      %v2607 = vpop.permute.xlu0 %2606
      %2608 = vrot.lane.b32.xlu0 %v1277, 112
      %v2609 = vpop.permute.xlu0 %2608
      %2610 = vrot.lane.b32.xlu0 %v1274, 80
      %v2611 = vpop.permute.xlu0 %2610
      %2612 = vrot.lane.b32.xlu0 %v1275, 80
      %v2613 = vpop.permute.xlu0 %2612
      %2614 = vrot.lane.b32.xlu0 %v1276, 80
      %v2615 = vpop.permute.xlu0 %2614
      %2616 = vrot.lane.b32.xlu0 %v1277, 80
      %v2617 = vpop.permute.xlu0 %2616
      %v2619 = vsel %vm1306, %v2603, 0
      %v2622 = vsel %vm1306, %v2605, 0
      %v2625 = vsel %vm1306, %v2607, 0
      %v2628 = vsel %vm1306, %v2609, 0
      %v2631 = vsel %vm1306, %v2611, 0
      %v2634 = vsel %vm1306, %v2613, 0
      %v2637 = vsel %vm1306, %v2615, 0
      %v2640 = vsel %vm1306, %v2617, 0
      %2642 = vmatprep.subr.bf16.mxu0 0
      %2643 = vmatpush1.bf16.xpose.msra.mxu0 %v2631
      %2644 = vmatprep.subr.bf16.mxu0 0
      %2645 = vmatpush1.bf16.xpose.msra.mxu0 %v2634
      %2646 = vmatprep.subr.bf16.mxu0 0
      %2647 = vmatpush1.bf16.xpose.msra.mxu0 %v2637
      %2648 = vmatprep.subr.bf16.mxu0 0
      %2649 = vmatpush1.bf16.xpose.msra.mxu0 %v2640
      %2650 = vmatprep.subr.bf16.mxu0 0
      %2651 = vmatpush1.bf16.xpose.msra.mxu0 0
      %2652 = vmatprep.subr.bf16.mxu0 0
      %2653 = vmatpush1.bf16.xpose.msra.mxu0 0
      %2654 = vmatprep.subr.bf16.mxu0 0
      %2655 = vmatpush1.bf16.xpose.msra.mxu0 0
      %2656 = vmatprep.subr.bf16.mxu0 0
      %2657 = vmatpush1.bf16.xpose.msra.mxu0 0
      %2658 = vmatprep.subr.bf16.mxu0 0
      %2659 = vmatpush1.bf16.xpose.msra.mxu0 0
      %2660 = vmatprep.subr.bf16.mxu0 0
      %2661 = vmatpush1.bf16.xpose.msra.mxu0 0
      %2662 = vmatprep.subr.bf16.mxu0 0
      %2663 = vmatpush1.bf16.xpose.msra.mxu0 0
      %2664 = vmatprep.subr.bf16.mxu0 0
      %2665 = vmatpush1.bf16.xpose.msra.mxu0 0
      %2666 = vmatprep.subr.bf16.mxu0 0
      %2667 = vmatpush1.bf16.xpose.msra.mxu0 0
      %2668 = vmatprep.subr.bf16.mxu0 0
      %2669 = vmatpush1.bf16.xpose.msra.mxu0 0
      %2670 = vmatprep.subr.bf16.mxu0 0
      %2671 = vmatpush1.bf16.xpose.msra.mxu0 0
      %2672 = vmatprep.subr.bf16.mxu0 0
      %2673 = vmatpush1.bf16.xpose.msra.mxu0 0
      %2674 = vmatprep.mubr.bf16.mxu0 0
      %2675 = vmatmul.mubr.bf16.gmra.mrb[0].mxu0 %v2619
      %v2676 = vpop.f32.mrb[0].mxu0
      %v2677 = vadd.f32 %v2489, %v2676
      %v2678 = vpop.f32.mrb[0].mxu0
      %v2679 = vpop.f32.mrb[0].mxu0
      %v2680 = vadd.f32 %v2490, %v2679
      %v2681 = vpop.f32.mrb[0].mxu0
      %2682 = vmatprep.mubr.bf16.mxu0 0
      %2683 = vmatmul.mubr.bf16.gmra.mrb[0].mxu0 %v2622
      %v2684 = vpop.f32.mrb[0].mxu0
      %v2685 = vadd.f32 %v2491, %v2684
      %v2686 = vpop.f32.mrb[0].mxu0
      %v2687 = vpop.f32.mrb[0].mxu0
      %v2688 = vadd.f32 %v2492, %v2687
      %v2689 = vpop.f32.mrb[0].mxu0
      %2690 = vmatprep.mubr.bf16.mxu0 0
      %2691 = vmatmul.mubr.bf16.gmra.mrb[0].mxu0 %v2625
      %v2692 = vpop.f32.mrb[0].mxu0
      %v2693 = vadd.f32 %v2493, %v2692
      %v2694 = vpop.f32.mrb[0].mxu0
      %v2695 = vpop.f32.mrb[0].mxu0
      %v2696 = vadd.f32 %v2494, %v2695
      %v2697 = vpop.f32.mrb[0].mxu0
      %2698 = vmatprep.mubr.bf16.mxu0 0
      %2699 = vmatmul.mubr.bf16.gmra.mrb[0].mxu0 %v2628
      %v2700 = vpop.f32.mrb[0].mxu0
      %v2701 = vadd.f32 %v2495, %v2700
      %v2702 = vpop.f32.mrb[0].mxu0
      %v2703 = vpop.f32.mrb[0].mxu0
      %v2704 = vadd.f32 %v2496, %v2703
      %v2705 = vpop.f32.mrb[0].mxu0
      %2706 = vdwg.mxu0
      %2707 = vrot.lane.b32.xlu0 %v1278, 112
      %v2708 = vpop.permute.xlu0 %2707
      %2709 = vrot.lane.b32.xlu0 %v1279, 112
      %v2710 = vpop.permute.xlu0 %2709
      %2711 = vrot.lane.b32.xlu0 %v1280, 112
      %v2712 = vpop.permute.xlu0 %2711
      %2713 = vrot.lane.b32.xlu0 %v1281, 112
      %v2714 = vpop.permute.xlu0 %2713
      %2715 = vrot.lane.b32.xlu0 %v1278, 80
      %v2716 = vpop.permute.xlu0 %2715
      %2717 = vrot.lane.b32.xlu0 %v1279, 80
      %v2718 = vpop.permute.xlu0 %2717
      %2719 = vrot.lane.b32.xlu0 %v1280, 80
      %v2720 = vpop.permute.xlu0 %2719
      %2721 = vrot.lane.b32.xlu0 %v1281, 80
      %v2722 = vpop.permute.xlu0 %2721
      %v2724 = vsel %vm1306, %v2708, 0
      %v2727 = vsel %vm1306, %v2710, 0
      %v2730 = vsel %vm1306, %v2712, 0
      %v2733 = vsel %vm1306, %v2714, 0
      %v2736 = vsel %vm1306, %v2716, 0
      %v2739 = vsel %vm1306, %v2718, 0
      %v2742 = vsel %vm1306, %v2720, 0
      %v2745 = vsel %vm1306, %v2722, 0
      %2747 = vmatprep.subr.bf16.mxu0 0
      %2748 = vmatpush1.bf16.xpose.msra.mxu0 %v2736
      %2749 = vmatprep.subr.bf16.mxu0 0
      %2750 = vmatpush1.bf16.xpose.msra.mxu0 %v2739
      %2751 = vmatprep.subr.bf16.mxu0 0
      %2752 = vmatpush1.bf16.xpose.msra.mxu0 %v2742
      %2753 = vmatprep.subr.bf16.mxu0 0
      %2754 = vmatpush1.bf16.xpose.msra.mxu0 %v2745
      %2755 = vmatprep.subr.bf16.mxu0 0
      %2756 = vmatpush1.bf16.xpose.msra.mxu0 0
      %2757 = vmatprep.subr.bf16.mxu0 0
      %2758 = vmatpush1.bf16.xpose.msra.mxu0 0
      %2759 = vmatprep.subr.bf16.mxu0 0
      %2760 = vmatpush1.bf16.xpose.msra.mxu0 0
      %2761 = vmatprep.subr.bf16.mxu0 0
      %2762 = vmatpush1.bf16.xpose.msra.mxu0 0
      %2763 = vmatprep.subr.bf16.mxu0 0
      %2764 = vmatpush1.bf16.xpose.msra.mxu0 0
      %2765 = vmatprep.subr.bf16.mxu0 0
      %2766 = vmatpush1.bf16.xpose.msra.mxu0 0
      %2767 = vmatprep.subr.bf16.mxu0 0
      %2768 = vmatpush1.bf16.xpose.msra.mxu0 0
      %2769 = vmatprep.subr.bf16.mxu0 0
      %2770 = vmatpush1.bf16.xpose.msra.mxu0 0
      %2771 = vmatprep.subr.bf16.mxu0 0
      %2772 = vmatpush1.bf16.xpose.msra.mxu0 0
      %2773 = vmatprep.subr.bf16.mxu0 0
      %2774 = vmatpush1.bf16.xpose.msra.mxu0 0
      %2775 = vmatprep.subr.bf16.mxu0 0
      %2776 = vmatpush1.bf16.xpose.msra.mxu0 0
      %2777 = vmatprep.subr.bf16.mxu0 0
      %2778 = vmatpush1.bf16.xpose.msra.mxu0 0
      %2779 = vmatprep.mubr.bf16.mxu0 0
      %2780 = vmatmul.mubr.bf16.gmra.mrb[0].mxu0 %v2724
      %v2781 = vpop.f32.mrb[0].mxu0
      %v2782 = vadd.f32 %v2489, %v2781
      %v2783 = vpop.f32.mrb[0].mxu0
      %v2784 = vpop.f32.mrb[0].mxu0
      %v2785 = vadd.f32 %v2490, %v2784
      %v2786 = vpop.f32.mrb[0].mxu0
      %2787 = vmatprep.mubr.bf16.mxu0 0
      %2788 = vmatmul.mubr.bf16.gmra.mrb[0].mxu0 %v2727
      %v2789 = vpop.f32.mrb[0].mxu0
      %v2790 = vadd.f32 %v2491, %v2789
      %v2791 = vpop.f32.mrb[0].mxu0
      %v2792 = vpop.f32.mrb[0].mxu0
      %v2793 = vadd.f32 %v2492, %v2792
      %v2794 = vpop.f32.mrb[0].mxu0
      %2795 = vmatprep.mubr.bf16.mxu0 0
      %2796 = vmatmul.mubr.bf16.gmra.mrb[0].mxu0 %v2730
      %v2797 = vpop.f32.mrb[0].mxu0
      %v2798 = vadd.f32 %v2493, %v2797
      %v2799 = vpop.f32.mrb[0].mxu0
      %v2800 = vpop.f32.mrb[0].mxu0
      %v2801 = vadd.f32 %v2494, %v2800
      %v2802 = vpop.f32.mrb[0].mxu0
      %2803 = vmatprep.mubr.bf16.mxu0 0
      %2804 = vmatmul.mubr.bf16.gmra.mrb[0].mxu0 %v2733
      %v2805 = vpop.f32.mrb[0].mxu0
      %v2806 = vadd.f32 %v2495, %v2805
      %v2807 = vpop.f32.mrb[0].mxu0
      %v2808 = vpop.f32.mrb[0].mxu0
      %v2809 = vadd.f32 %v2496, %v2808
      %v2810 = vpop.f32.mrb[0].mxu0
      %2811 = vdwg.mxu0
      %2812 = vrot.lane.b32.xlu0 %v1282, 112
      %v2813 = vpop.permute.xlu0 %2812
      %2814 = vrot.lane.b32.xlu0 %v1283, 112
      %v2815 = vpop.permute.xlu0 %2814
      %2816 = vrot.lane.b32.xlu0 %v1284, 112
      %v2817 = vpop.permute.xlu0 %2816
      %2818 = vrot.lane.b32.xlu0 %v1285, 112
      %v2819 = vpop.permute.xlu0 %2818
      %2820 = vrot.lane.b32.xlu0 %v1282, 80
      %v2821 = vpop.permute.xlu0 %2820
      %2822 = vrot.lane.b32.xlu0 %v1283, 80
      %v2823 = vpop.permute.xlu0 %2822
      %2824 = vrot.lane.b32.xlu0 %v1284, 80
      %v2825 = vpop.permute.xlu0 %2824
      %2826 = vrot.lane.b32.xlu0 %v1285, 80
      %v2827 = vpop.permute.xlu0 %2826
      %v2829 = vsel %vm1306, %v2813, 0
      %v2832 = vsel %vm1306, %v2815, 0
      %v2835 = vsel %vm1306, %v2817, 0
      %v2838 = vsel %vm1306, %v2819, 0
      %v2841 = vsel %vm1306, %v2821, 0
      %v2844 = vsel %vm1306, %v2823, 0
      %v2847 = vsel %vm1306, %v2825, 0
      %v2850 = vsel %vm1306, %v2827, 0
      %2852 = vmatprep.subr.bf16.mxu0 0
      %2853 = vmatpush1.bf16.xpose.msra.mxu0 %v2841
      %2854 = vmatprep.subr.bf16.mxu0 0
      %2855 = vmatpush1.bf16.xpose.msra.mxu0 %v2844
      %2856 = vmatprep.subr.bf16.mxu0 0
      %2857 = vmatpush1.bf16.xpose.msra.mxu0 %v2847
      %2858 = vmatprep.subr.bf16.mxu0 0
      %2859 = vmatpush1.bf16.xpose.msra.mxu0 %v2850
      %2860 = vmatprep.subr.bf16.mxu0 0
      %2861 = vmatpush1.bf16.xpose.msra.mxu0 0
      %2862 = vmatprep.subr.bf16.mxu0 0
      %2863 = vmatpush1.bf16.xpose.msra.mxu0 0
      %2864 = vmatprep.subr.bf16.mxu0 0
      %2865 = vmatpush1.bf16.xpose.msra.mxu0 0
      %2866 = vmatprep.subr.bf16.mxu0 0
      %2867 = vmatpush1.bf16.xpose.msra.mxu0 0
      %2868 = vmatprep.subr.bf16.mxu0 0
      %2869 = vmatpush1.bf16.xpose.msra.mxu0 0
      %2870 = vmatprep.subr.bf16.mxu0 0
      %2871 = vmatpush1.bf16.xpose.msra.mxu0 0
      %2872 = vmatprep.subr.bf16.mxu0 0
      %2873 = vmatpush1.bf16.xpose.msra.mxu0 0
      %2874 = vmatprep.subr.bf16.mxu0 0
      %2875 = vmatpush1.bf16.xpose.msra.mxu0 0
      %2876 = vmatprep.subr.bf16.mxu0 0
      %2877 = vmatpush1.bf16.xpose.msra.mxu0 0
      %2878 = vmatprep.subr.bf16.mxu0 0
      %2879 = vmatpush1.bf16.xpose.msra.mxu0 0
      %2880 = vmatprep.subr.bf16.mxu0 0
      %2881 = vmatpush1.bf16.xpose.msra.mxu0 0
      %2882 = vmatprep.subr.bf16.mxu0 0
      %2883 = vmatpush1.bf16.xpose.msra.mxu0 0
      %2884 = vmatprep.mubr.bf16.mxu0 0
      %2885 = vmatmul.mubr.bf16.gmra.mrb[0].mxu0 %v2829
      %v2886 = vpop.f32.mrb[0].mxu0
      %v2887 = vadd.f32 %v2489, %v2886
      %v2888 = vpop.f32.mrb[0].mxu0
      %v2889 = vpop.f32.mrb[0].mxu0
      %v2890 = vadd.f32 %v2490, %v2889
      %v2891 = vpop.f32.mrb[0].mxu0
      %2892 = vmatprep.mubr.bf16.mxu0 0
      %2893 = vmatmul.mubr.bf16.gmra.mrb[0].mxu0 %v2832
      %v2894 = vpop.f32.mrb[0].mxu0
      %v2895 = vadd.f32 %v2491, %v2894
      %v2896 = vpop.f32.mrb[0].mxu0
      %v2897 = vpop.f32.mrb[0].mxu0
      %v2898 = vadd.f32 %v2492, %v2897
      %v2899 = vpop.f32.mrb[0].mxu0
      %2900 = vmatprep.mubr.bf16.mxu0 0
      %2901 = vmatmul.mubr.bf16.gmra.mrb[0].mxu0 %v2835
      %v2902 = vpop.f32.mrb[0].mxu0
      %v2903 = vadd.f32 %v2493, %v2902
      %v2904 = vpop.f32.mrb[0].mxu0
      %v2905 = vpop.f32.mrb[0].mxu0
      %v2906 = vadd.f32 %v2494, %v2905
      %v2907 = vpop.f32.mrb[0].mxu0
      %2908 = vmatprep.mubr.bf16.mxu0 0
      %2909 = vmatmul.mubr.bf16.gmra.mrb[0].mxu0 %v2838
      %v2910 = vpop.f32.mrb[0].mxu0
      %v2911 = vadd.f32 %v2495, %v2910
      %v2912 = vpop.f32.mrb[0].mxu0
      %v2913 = vpop.f32.mrb[0].mxu0
      %v2914 = vadd.f32 %v2496, %v2913
      %v2915 = vpop.f32.mrb[0].mxu0
      %2916 = vdwg.mxu0
      %v2917 = vld [vmem:[%s2] sm:$0xff]
      %v2918 = vld [vmem:[%s2 + $0x8] sm:$0xff]
      %v2919 = vld [vmem:[%s2 + $0x10] sm:$0xff]
      %v2920 = vld [vmem:[%s2 + $0x18] sm:$0xff]
      %v2921 = vld [vmem:[%s2 + $0x20] sm:$0xff]
      %v2922 = vld [vmem:[%s2 + $0x28] sm:$0xff]
      %v2923 = vld [vmem:[%s2 + $0x30] sm:$0xff]
      %v2924 = vld [vmem:[%s2 + $0x38] sm:$0xff]
      %v2925 = vld [vmem:[%s2 + $0x40] sm:$0xff]
      %v2926 = vld [vmem:[%s2 + $0x48] sm:$0xff]
      %v2927 = vld [vmem:[%s2 + $0x50] sm:$0xff]
      %v2928 = vld [vmem:[%s2 + $0x58] sm:$0xff]
      %v2929 = vld [vmem:[%s2 + $0x60] sm:$0xff]
      %v2930 = vld [vmem:[%s2 + $0x68] sm:$0xff]
      %v2931 = vld [vmem:[%s2 + $0x70] sm:$0xff]
      %v2932 = vld [vmem:[%s2 + $0x78] sm:$0xff]
      %v2933 = vld [vmem:[%s2 + $0x80] sm:$0xff]
      %v2934 = vld [vmem:[%s2 + $0x88] sm:$0xff]
      %v2935 = vld [vmem:[%s2 + $0x90] sm:$0xff]
      %v2936 = vld [vmem:[%s2 + $0x98] sm:$0xff]
      %v2937 = vld [vmem:[%s2 + $0xa0] sm:$0xff]
      %v2938 = vld [vmem:[%s2 + $0xa8] sm:$0xff]
      %v2939 = vld [vmem:[%s2 + $0xb0] sm:$0xff]
      %v2940 = vld [vmem:[%s2 + $0xb8] sm:$0xff]
      %v2941 = vld [vmem:[%s2 + $0xc0] sm:$0xff]
      %v2942 = vld [vmem:[%s2 + $0xc8] sm:$0xff]
      %v2943 = vld [vmem:[%s2 + $0xd0] sm:$0xff]
      %v2944 = vld [vmem:[%s2 + $0xd8] sm:$0xff]
      %v2945 = vld [vmem:[%s2 + $0xe0] sm:$0xff]
      %v2946 = vld [vmem:[%s2 + $0xe8] sm:$0xff]
      %v2947 = vld [vmem:[%s2 + $0xf0] sm:$0xff]
      %v2948 = vld [vmem:[%s2 + $0xf8] sm:$0xff]
      %v2949 = vadd.f32 %v2572, %v2917
      %v2950 = vadd.f32 %v2575, %v2918
      %v2951 = vadd.f32 %v2580, %v2919
      %v2952 = vadd.f32 %v2583, %v2920
      %v2953 = vadd.f32 %v2588, %v2921
      %v2954 = vadd.f32 %v2591, %v2922
      %v2955 = vadd.f32 %v2596, %v2923
      %v2956 = vadd.f32 %v2599, %v2924
      %v2957 = vadd.f32 %v2677, %v2925
      %v2958 = vadd.f32 %v2680, %v2926
      %v2959 = vadd.f32 %v2685, %v2927
      %v2960 = vadd.f32 %v2688, %v2928
      %v2961 = vadd.f32 %v2693, %v2929
      %v2962 = vadd.f32 %v2696, %v2930
      %v2963 = vadd.f32 %v2701, %v2931
      %v2964 = vadd.f32 %v2704, %v2932
      %v2965 = vadd.f32 %v2782, %v2933
      %v2966 = vadd.f32 %v2785, %v2934
      %v2967 = vadd.f32 %v2790, %v2935
      %v2968 = vadd.f32 %v2793, %v2936
      %v2969 = vadd.f32 %v2798, %v2937
      %v2970 = vadd.f32 %v2801, %v2938
      %v2971 = vadd.f32 %v2806, %v2939
      %v2972 = vadd.f32 %v2809, %v2940
      %v2973 = vadd.f32 %v2887, %v2941
      %v2974 = vadd.f32 %v2890, %v2942
      %v2975 = vadd.f32 %v2895, %v2943
      %v2976 = vadd.f32 %v2898, %v2944
      %v2977 = vadd.f32 %v2903, %v2945
      %v2978 = vadd.f32 %v2906, %v2946
      %v2979 = vadd.f32 %v2911, %v2947
      %v2980 = vadd.f32 %v2914, %v2948
      %v2981 = vsel %vm1763, %v2949, -inf
      %2982 = vmax.xlane.f32.xlu0 %v2981
      %v2983 = vpop.xlane.xlu0 %2982
      %v2984 = vsel %vm1763, %v2950, -inf
      %2985 = vmax.xlane.f32.xlu0 %v2984
      %v2986 = vpop.xlane.xlu0 %2985
      %v2987 = vsel %vm1763, %v2951, -inf
      %2988 = vmax.xlane.f32.xlu0 %v2987
      %v2989 = vpop.xlane.xlu0 %2988
      %v2990 = vsel %vm1763, %v2952, -inf
      %2991 = vmax.xlane.f32.xlu0 %v2990
      %v2992 = vpop.xlane.xlu0 %2991
      %v2993 = vsel %vm1763, %v2953, -inf
      %2994 = vmax.xlane.f32.xlu0 %v2993
      %v2995 = vpop.xlane.xlu0 %2994
      %v2996 = vsel %vm1763, %v2954, -inf
      %2997 = vmax.xlane.f32.xlu0 %v2996
      %v2998 = vpop.xlane.xlu0 %2997
      %v2999 = vsel %vm1763, %v2955, -inf
      %3000 = vmax.xlane.f32.xlu0 %v2999
      %v3001 = vpop.xlane.xlu0 %3000
      %v3002 = vsel %vm1763, %v2956, -inf
      %3003 = vmax.xlane.f32.xlu0 %v3002
      %v3004 = vpop.xlane.xlu0 %3003
      %v3005 = vsel %vm1763, %v2957, -inf
      %3006 = vmax.xlane.f32.xlu0 %v3005
      %v3007 = vpop.xlane.xlu0 %3006
      %v3008 = vsel %vm1763, %v2958, -inf
      %3009 = vmax.xlane.f32.xlu0 %v3008
      %v3010 = vpop.xlane.xlu0 %3009
      %v3011 = vsel %vm1763, %v2959, -inf
      %3012 = vmax.xlane.f32.xlu0 %v3011
      %v3013 = vpop.xlane.xlu0 %3012
      %v3014 = vsel %vm1763, %v2960, -inf
      %3015 = vmax.xlane.f32.xlu0 %v3014
      %v3016 = vpop.xlane.xlu0 %3015
      %v3017 = vsel %vm1763, %v2961, -inf
      %3018 = vmax.xlane.f32.xlu0 %v3017
      %v3019 = vpop.xlane.xlu0 %3018
      %v3020 = vsel %vm1763, %v2962, -inf
      %3021 = vmax.xlane.f32.xlu0 %v3020
      %v3022 = vpop.xlane.xlu0 %3021
      %v3023 = vsel %vm1763, %v2963, -inf
      %3024 = vmax.xlane.f32.xlu0 %v3023
      %v3025 = vpop.xlane.xlu0 %3024
      %v3026 = vsel %vm1763, %v2964, -inf
      %3027 = vmax.xlane.f32.xlu0 %v3026
      %v3028 = vpop.xlane.xlu0 %3027
      %v3029 = vsel %vm1763, %v2965, -inf
      %3030 = vmax.xlane.f32.xlu0 %v3029
      %v3031 = vpop.xlane.xlu0 %3030
      %v3032 = vsel %vm1763, %v2966, -inf
      %3033 = vmax.xlane.f32.xlu0 %v3032
      %v3034 = vpop.xlane.xlu0 %3033
      %v3035 = vsel %vm1763, %v2967, -inf
      %3036 = vmax.xlane.f32.xlu0 %v3035
      %v3037 = vpop.xlane.xlu0 %3036
      %v3038 = vsel %vm1763, %v2968, -inf
      %3039 = vmax.xlane.f32.xlu0 %v3038
      %v3040 = vpop.xlane.xlu0 %3039
      %v3041 = vsel %vm1763, %v2969, -inf
      %3042 = vmax.xlane.f32.xlu0 %v3041
      %v3043 = vpop.xlane.xlu0 %3042
      %v3044 = vsel %vm1763, %v2970, -inf
      %3045 = vmax.xlane.f32.xlu0 %v3044
      %v3046 = vpop.xlane.xlu0 %3045
      %v3047 = vsel %vm1763, %v2971, -inf
      %3048 = vmax.xlane.f32.xlu0 %v3047
      %v3049 = vpop.xlane.xlu0 %3048
      %v3050 = vsel %vm1763, %v2972, -inf
      %3051 = vmax.xlane.f32.xlu0 %v3050
      %v3052 = vpop.xlane.xlu0 %3051
      %v3053 = vsel %vm1763, %v2973, -inf
      %3054 = vmax.xlane.f32.xlu0 %v3053
      %v3055 = vpop.xlane.xlu0 %3054
      %v3056 = vsel %vm1763, %v2974, -inf
      %3057 = vmax.xlane.f32.xlu0 %v3056
      %v3058 = vpop.xlane.xlu0 %3057
      %v3059 = vsel %vm1763, %v2975, -inf
      %3060 = vmax.xlane.f32.xlu0 %v3059
      %v3061 = vpop.xlane.xlu0 %3060
      %v3062 = vsel %vm1763, %v2976, -inf
      %3063 = vmax.xlane.f32.xlu0 %v3062
      %v3064 = vpop.xlane.xlu0 %3063
      %v3065 = vsel %vm1763, %v2977, -inf
      %3066 = vmax.xlane.f32.xlu0 %v3065
      %v3067 = vpop.xlane.xlu0 %3066
      %v3068 = vsel %vm1763, %v2978, -inf
      %3069 = vmax.xlane.f32.xlu0 %v3068
      %v3070 = vpop.xlane.xlu0 %3069
      %v3071 = vsel %vm1763, %v2979, -inf
      %3072 = vmax.xlane.f32.xlu0 %v3071
      %v3073 = vpop.xlane.xlu0 %3072
      %v3074 = vsel %vm1763, %v2980, -inf
      %3075 = vmax.xlane.f32.xlu0 %v3074
      %v3076 = vpop.xlane.xlu0 %3075
      %v3077 = vsub.f32 %v2949, %v2983
      %v3078 = vsub.f32 %v2950, %v2986
      %v3079 = vsub.f32 %v2951, %v2989
      %v3080 = vsub.f32 %v2952, %v2992
      %v3081 = vsub.f32 %v2953, %v2995
      %v3082 = vsub.f32 %v2954, %v2998
      %v3083 = vsub.f32 %v2955, %v3001
      %v3084 = vsub.f32 %v2956, %v3004
      %v3085 = vsub.f32 %v2957, %v3007
      %v3086 = vsub.f32 %v2958, %v3010
      %v3087 = vsub.f32 %v2959, %v3013
      %v3088 = vsub.f32 %v2960, %v3016
      %v3089 = vsub.f32 %v2961, %v3019
      %v3090 = vsub.f32 %v2962, %v3022
      %v3091 = vsub.f32 %v2963, %v3025
      %v3092 = vsub.f32 %v2964, %v3028
      %v3093 = vsub.f32 %v2965, %v3031
      %v3094 = vsub.f32 %v2966, %v3034
      %v3095 = vsub.f32 %v2967, %v3037
      %v3096 = vsub.f32 %v2968, %v3040
      %v3097 = vsub.f32 %v2969, %v3043
      %v3098 = vsub.f32 %v2970, %v3046
      %v3099 = vsub.f32 %v2971, %v3049
      %v3100 = vsub.f32 %v2972, %v3052
      %v3101 = vsub.f32 %v2973, %v3055
      %v3102 = vsub.f32 %v2974, %v3058
      %v3103 = vsub.f32 %v2975, %v3061
      %v3104 = vsub.f32 %v2976, %v3064
      %v3105 = vsub.f32 %v2977, %v3067
      %v3106 = vsub.f32 %v2978, %v3070
      %v3107 = vsub.f32 %v2979, %v3073
      %v3108 = vsub.f32 %v2980, %v3076
      %v3109 = vmul.f32 %v3077, 1.442695
      %v3110 = vpow.pop %v3109
      %v3111 = vmul.f32 %v3078, 1.442695
      %v3112 = vpow.pop %v3111
      %v3113 = vmul.f32 %v3079, 1.442695
      %v3114 = vpow.pop %v3113
      %v3115 = vmul.f32 %v3080, 1.442695
      %v3116 = vpow.pop %v3115
      %v3117 = vmul.f32 %v3081, 1.442695
      %v3118 = vpow.pop %v3117
      %v3119 = vmul.f32 %v3082, 1.442695
      %v3120 = vpow.pop %v3119
      %v3121 = vmul.f32 %v3083, 1.442695
      %v3122 = vpow.pop %v3121
      %v3123 = vmul.f32 %v3084, 1.442695
      %v3124 = vpow.pop %v3123
      %v3125 = vmul.f32 %v3085, 1.442695
      %v3126 = vpow.pop %v3125
      %v3127 = vmul.f32 %v3086, 1.442695
      %v3128 = vpow.pop %v3127
      %v3129 = vmul.f32 %v3087, 1.442695
      %v3130 = vpow.pop %v3129
      %v3131 = vmul.f32 %v3088, 1.442695
      %v3132 = vpow.pop %v3131
      %v3133 = vmul.f32 %v3089, 1.442695
      %v3134 = vpow.pop %v3133
      %v3135 = vmul.f32 %v3090, 1.442695
      %v3136 = vpow.pop %v3135
      %v3137 = vmul.f32 %v3091, 1.442695
      %v3138 = vpow.pop %v3137
      %v3139 = vmul.f32 %v3092, 1.442695
      %v3140 = vpow.pop %v3139
      %v3141 = vmul.f32 %v3093, 1.442695
      %v3142 = vpow.pop %v3141
      %v3143 = vmul.f32 %v3094, 1.442695
      %v3144 = vpow.pop %v3143
      %v3145 = vmul.f32 %v3095, 1.442695
      %v3146 = vpow.pop %v3145
      %v3147 = vmul.f32 %v3096, 1.442695
      %v3148 = vpow.pop %v3147
      %v3149 = vmul.f32 %v3097, 1.442695
      %v3150 = vpow.pop %v3149
      %v3151 = vmul.f32 %v3098, 1.442695
      %v3152 = vpow.pop %v3151
      %v3153 = vmul.f32 %v3099, 1.442695
      %v3154 = vpow.pop %v3153
      %v3155 = vmul.f32 %v3100, 1.442695
      %v3156 = vpow.pop %v3155
      %v3157 = vmul.f32 %v3101, 1.442695
      %v3158 = vpow.pop %v3157
      %v3159 = vmul.f32 %v3102, 1.442695
      %v3160 = vpow.pop %v3159
      %v3161 = vmul.f32 %v3103, 1.442695
      %v3162 = vpow.pop %v3161
      %v3163 = vmul.f32 %v3104, 1.442695
      %v3164 = vpow.pop %v3163
      %v3165 = vmul.f32 %v3105, 1.442695
      %v3166 = vpow.pop %v3165
      %v3167 = vmul.f32 %v3106, 1.442695
      %v3168 = vpow.pop %v3167
      %v3169 = vmul.f32 %v3107, 1.442695
      %v3170 = vpow.pop %v3169
      %v3171 = vmul.f32 %v3108, 1.442695
      %v3172 = vpow.pop %v3171
      %v3173 = vsel %vm1763, %v3110, 0.0
      %3174 = vadd.xlane.f32.xlu0 %v3173
      %v3175 = vpop.xlane.xlu0 %3174
      %v3176 = vsel %vm1763, %v3112, 0.0
      %3177 = vadd.xlane.f32.xlu0 %v3176
      %v3178 = vpop.xlane.xlu0 %3177
      %v3179 = vsel %vm1763, %v3114, 0.0
      %3180 = vadd.xlane.f32.xlu0 %v3179
      %v3181 = vpop.xlane.xlu0 %3180
      %v3182 = vsel %vm1763, %v3116, 0.0
      %3183 = vadd.xlane.f32.xlu0 %v3182
      %v3184 = vpop.xlane.xlu0 %3183
      %v3185 = vsel %vm1763, %v3118, 0.0
      %3186 = vadd.xlane.f32.xlu0 %v3185
      %v3187 = vpop.xlane.xlu0 %3186
      %v3188 = vsel %vm1763, %v3120, 0.0
      %3189 = vadd.xlane.f32.xlu0 %v3188
      %v3190 = vpop.xlane.xlu0 %3189
      %v3191 = vsel %vm1763, %v3122, 0.0
      %3192 = vadd.xlane.f32.xlu0 %v3191
      %v3193 = vpop.xlane.xlu0 %3192
      %v3194 = vsel %vm1763, %v3124, 0.0
      %3195 = vadd.xlane.f32.xlu0 %v3194
      %v3196 = vpop.xlane.xlu0 %3195
      %v3197 = vsel %vm1763, %v3126, 0.0
      %3198 = vadd.xlane.f32.xlu0 %v3197
      %v3199 = vpop.xlane.xlu0 %3198
      %v3200 = vsel %vm1763, %v3128, 0.0
      %3201 = vadd.xlane.f32.xlu0 %v3200
      %v3202 = vpop.xlane.xlu0 %3201
      %v3203 = vsel %vm1763, %v3130, 0.0
      %3204 = vadd.xlane.f32.xlu0 %v3203
      %v3205 = vpop.xlane.xlu0 %3204
      %v3206 = vsel %vm1763, %v3132, 0.0
      %3207 = vadd.xlane.f32.xlu0 %v3206
      %v3208 = vpop.xlane.xlu0 %3207
      %v3209 = vsel %vm1763, %v3134, 0.0
      %3210 = vadd.xlane.f32.xlu0 %v3209
      %v3211 = vpop.xlane.xlu0 %3210
      %v3212 = vsel %vm1763, %v3136, 0.0
      %3213 = vadd.xlane.f32.xlu0 %v3212
      %v3214 = vpop.xlane.xlu0 %3213
      %v3215 = vsel %vm1763, %v3138, 0.0
      %3216 = vadd.xlane.f32.xlu0 %v3215
      %v3217 = vpop.xlane.xlu0 %3216
      %v3218 = vsel %vm1763, %v3140, 0.0
      %3219 = vadd.xlane.f32.xlu0 %v3218
      %v3220 = vpop.xlane.xlu0 %3219
      %v3221 = vsel %vm1763, %v3142, 0.0
      %3222 = vadd.xlane.f32.xlu0 %v3221
      %v3223 = vpop.xlane.xlu0 %3222
      %v3224 = vsel %vm1763, %v3144, 0.0
      %3225 = vadd.xlane.f32.xlu0 %v3224
      %v3226 = vpop.xlane.xlu0 %3225
      %v3227 = vsel %vm1763, %v3146, 0.0
      %3228 = vadd.xlane.f32.xlu0 %v3227
      %v3229 = vpop.xlane.xlu0 %3228
      %v3230 = vsel %vm1763, %v3148, 0.0
      %3231 = vadd.xlane.f32.xlu0 %v3230
      %v3232 = vpop.xlane.xlu0 %3231
      %v3233 = vsel %vm1763, %v3150, 0.0
      %3234 = vadd.xlane.f32.xlu0 %v3233
      %v3235 = vpop.xlane.xlu0 %3234
      %v3236 = vsel %vm1763, %v3152, 0.0
      %3237 = vadd.xlane.f32.xlu0 %v3236
      %v3238 = vpop.xlane.xlu0 %3237
      %v3239 = vsel %vm1763, %v3154, 0.0
      %3240 = vadd.xlane.f32.xlu0 %v3239
      %v3241 = vpop.xlane.xlu0 %3240
      %v3242 = vsel %vm1763, %v3156, 0.0
      %3243 = vadd.xlane.f32.xlu0 %v3242
      %v3244 = vpop.xlane.xlu0 %3243
      %v3245 = vsel %vm1763, %v3158, 0.0
      %3246 = vadd.xlane.f32.xlu0 %v3245
      %v3247 = vpop.xlane.xlu0 %3246
      %v3248 = vsel %vm1763, %v3160, 0.0
      %3249 = vadd.xlane.f32.xlu0 %v3248
      %v3250 = vpop.xlane.xlu0 %3249
      %v3251 = vsel %vm1763, %v3162, 0.0
      %3252 = vadd.xlane.f32.xlu0 %v3251
      %v3253 = vpop.xlane.xlu0 %3252
      %v3254 = vsel %vm1763, %v3164, 0.0
      %3255 = vadd.xlane.f32.xlu0 %v3254
      %v3256 = vpop.xlane.xlu0 %3255
      %v3257 = vsel %vm1763, %v3166, 0.0
      %3258 = vadd.xlane.f32.xlu0 %v3257
      %v3259 = vpop.xlane.xlu0 %3258
      %v3260 = vsel %vm1763, %v3168, 0.0
      %3261 = vadd.xlane.f32.xlu0 %v3260
      %v3262 = vpop.xlane.xlu0 %3261
      %v3263 = vsel %vm1763, %v3170, 0.0
      %3264 = vadd.xlane.f32.xlu0 %v3263
      %v3265 = vpop.xlane.xlu0 %3264
      %v3266 = vsel %vm1763, %v3172, 0.0
      %3267 = vadd.xlane.f32.xlu0 %v3266
      %v3268 = vpop.xlane.xlu0 %3267
      %v3269 = vrcp.pop %v3175
      %v3270 = vrcp.pop %v3178
      %v3271 = vrcp.pop %v3181
      %v3272 = vrcp.pop %v3184
      %v3273 = vrcp.pop %v3187
      %v3274 = vrcp.pop %v3190
      %v3275 = vrcp.pop %v3193
      %v3276 = vrcp.pop %v3196
      %v3277 = vrcp.pop %v3199
      %v3278 = vrcp.pop %v3202
      %v3279 = vrcp.pop %v3205
      %v3280 = vrcp.pop %v3208
      %v3281 = vrcp.pop %v3211
      %v3282 = vrcp.pop %v3214
      %v3283 = vrcp.pop %v3217
      %v3284 = vrcp.pop %v3220
      %v3285 = vrcp.pop %v3223
      %v3286 = vrcp.pop %v3226
      %v3287 = vrcp.pop %v3229
      %v3288 = vrcp.pop %v3232
      %v3289 = vrcp.pop %v3235
      %v3290 = vrcp.pop %v3238
      %v3291 = vrcp.pop %v3241
      %v3292 = vrcp.pop %v3244
      %v3293 = vrcp.pop %v3247
      %v3294 = vrcp.pop %v3250
      %v3295 = vrcp.pop %v3253
      %v3296 = vrcp.pop %v3256
      %v3297 = vrcp.pop %v3259
      %v3298 = vrcp.pop %v3262
      %v3299 = vrcp.pop %v3265
      %v3300 = vrcp.pop %v3268
      %v3301 = vmul.f32 %v3110, %v3269
      %v3302 = vmul.f32 %v3112, %v3270
      %v3303 = vmul.f32 %v3114, %v3271
      %v3304 = vmul.f32 %v3116, %v3272
      %v3305 = vmul.f32 %v3118, %v3273
      %v3306 = vmul.f32 %v3120, %v3274
      %v3307 = vmul.f32 %v3122, %v3275
      %v3308 = vmul.f32 %v3124, %v3276
      %v3309 = vmul.f32 %v3126, %v3277
      %v3310 = vmul.f32 %v3128, %v3278
      %v3311 = vmul.f32 %v3130, %v3279
      %v3312 = vmul.f32 %v3132, %v3280
      %v3313 = vmul.f32 %v3134, %v3281
      %v3314 = vmul.f32 %v3136, %v3282
      %v3315 = vmul.f32 %v3138, %v3283
      %v3316 = vmul.f32 %v3140, %v3284
      %v3317 = vmul.f32 %v3142, %v3285
      %v3318 = vmul.f32 %v3144, %v3286
      %v3319 = vmul.f32 %v3146, %v3287
      %v3320 = vmul.f32 %v3148, %v3288
      %v3321 = vmul.f32 %v3150, %v3289
      %v3322 = vmul.f32 %v3152, %v3290
      %v3323 = vmul.f32 %v3154, %v3291
      %v3324 = vmul.f32 %v3156, %v3292
      %v3325 = vmul.f32 %v3158, %v3293
      %v3326 = vmul.f32 %v3160, %v3294
      %v3327 = vmul.f32 %v3162, %v3295
      %v3328 = vmul.f32 %v3164, %v3296
      %v3329 = vmul.f32 %v3166, %v3297
      %v3330 = vmul.f32 %v3168, %v3298
      %v3331 = vmul.f32 %v3170, %v3299
      %v3332 = vmul.f32 %v3172, %v3300
      %v3333 = vpack.c.bf16 %v3302, %v3301
      %v3334 = vpack.c.bf16 %v3304, %v3303
      %v3335 = vpack.c.bf16 %v3306, %v3305
      %v3336 = vpack.c.bf16 %v3308, %v3307
      %v3337 = vpack.c.bf16 %v3310, %v3309
      %v3338 = vpack.c.bf16 %v3312, %v3311
      %v3339 = vpack.c.bf16 %v3314, %v3313
      %v3340 = vpack.c.bf16 %v3316, %v3315
      %v3341 = vpack.c.bf16 %v3318, %v3317
      %v3342 = vpack.c.bf16 %v3320, %v3319
      %v3343 = vpack.c.bf16 %v3322, %v3321
      %v3344 = vpack.c.bf16 %v3324, %v3323
      %v3345 = vpack.c.bf16 %v3326, %v3325
      %v3346 = vpack.c.bf16 %v3328, %v3327
      %v3347 = vpack.c.bf16 %v3330, %v3329
      %v3348 = vpack.c.bf16 %v3332, %v3331
      %3349 = vrot.lane.b32.xlu0 %v1270, 48
      %v3350 = vpop.permute.xlu0 %3349
      %3351 = vrot.lane.b32.xlu0 %v1271, 48
      %v3352 = vpop.permute.xlu0 %3351
      %3353 = vrot.lane.b32.xlu0 %v1272, 48
      %v3354 = vpop.permute.xlu0 %3353
      %3355 = vrot.lane.b32.xlu0 %v1273, 48
      %v3356 = vpop.permute.xlu0 %3355
      %v3362 = vsel %vm1763, %v3333, 0
      %v3365 = vsel %vm1763, %v3334, 0
      %v3368 = vsel %vm1763, %v3335, 0
      %v3371 = vsel %vm1763, %v3336, 0
      %3373 = vmatprep.subr.bf16.mxu0 0
      %3374 = vmatpush1.bf16.msra.mxu0 %v3350
      %3375 = vmatprep.subr.bf16.mxu0 0
      %3376 = vmatpush1.bf16.msra.mxu0 %v3352
      %3377 = vmatprep.subr.bf16.mxu0 0
      %3378 = vmatpush1.bf16.msra.mxu0 %v3354
      %3379 = vmatprep.subr.bf16.mxu0 0
      %3380 = vmatpush1.bf16.msra.mxu0 %v3356
      %3381 = vmatprep.subr.bf16.mxu0 0
      %3382 = vmatpush1.bf16.msra.mxu0 0
      %3383 = vmatprep.subr.bf16.mxu0 0
      %3384 = vmatpush1.bf16.msra.mxu0 0
      %3385 = vmatprep.subr.bf16.mxu0 0
      %3386 = vmatpush1.bf16.msra.mxu0 0
      %3387 = vmatprep.subr.bf16.mxu0 0
      %3388 = vmatpush1.bf16.msra.mxu0 0
      %3389 = vmatprep.subr.bf16.mxu0 0
      %3390 = vmatpush1.bf16.msra.mxu0 0
      %3391 = vmatprep.subr.bf16.mxu0 0
      %3392 = vmatpush1.bf16.msra.mxu0 0
      %3393 = vmatprep.subr.bf16.mxu0 0
      %3394 = vmatpush1.bf16.msra.mxu0 0
      %3395 = vmatprep.subr.bf16.mxu0 0
      %3396 = vmatpush1.bf16.msra.mxu0 0
      %3397 = vmatprep.subr.bf16.mxu0 0
      %3398 = vmatpush1.bf16.msra.mxu0 0
      %3399 = vmatprep.subr.bf16.mxu0 0
      %3400 = vmatpush1.bf16.msra.mxu0 0
      %3401 = vmatprep.subr.bf16.mxu0 0
      %3402 = vmatpush1.bf16.msra.mxu0 0
      %3403 = vmatprep.subr.bf16.mxu0 0
      %3404 = vmatpush1.bf16.msra.mxu0 0
      %3405 = vmatprep.mubr.bf16.mxu0 0
      %3406 = vmatmul.mubr.bf16.gmra.mrb[0].mxu0 %v3362
      %v3407 = vpop.f32.mrb[0].mxu0
      %v3408 = vadd.f32 0.0, %v3407
      %v3409 = vpop.f32.mrb[0].mxu0
      %v3410 = vpop.f32.mrb[0].mxu0
      %v3411 = vadd.f32 0.0, %v3410
      %v3412 = vpop.f32.mrb[0].mxu0
      %3413 = vmatprep.mubr.bf16.mxu0 0
      %3414 = vmatmul.mubr.bf16.gmra.mrb[0].mxu0 %v3365
      %v3415 = vpop.f32.mrb[0].mxu0
      %v3416 = vadd.f32 0.0, %v3415
      %v3417 = vpop.f32.mrb[0].mxu0
      %v3418 = vpop.f32.mrb[0].mxu0
      %v3419 = vadd.f32 0.0, %v3418
      %v3420 = vpop.f32.mrb[0].mxu0
      %3421 = vmatprep.mubr.bf16.mxu0 0
      %3422 = vmatmul.mubr.bf16.gmra.mrb[0].mxu0 %v3368
      %v3423 = vpop.f32.mrb[0].mxu0
      %v3424 = vadd.f32 0.0, %v3423
      %v3425 = vpop.f32.mrb[0].mxu0
      %v3426 = vpop.f32.mrb[0].mxu0
      %v3427 = vadd.f32 0.0, %v3426
      %v3428 = vpop.f32.mrb[0].mxu0
      %3429 = vmatprep.mubr.bf16.mxu0 0
      %3430 = vmatmul.mubr.bf16.gmra.mrb[0].mxu0 %v3371
      %v3431 = vpop.f32.mrb[0].mxu0
      %v3432 = vadd.f32 0.0, %v3431
      %v3433 = vpop.f32.mrb[0].mxu0
      %v3434 = vpop.f32.mrb[0].mxu0
      %v3435 = vadd.f32 0.0, %v3434
      %v3436 = vpop.f32.mrb[0].mxu0
      %3437 = vdwg.mxu0
      %3438 = vrot.lane.b32.xlu0 %v1274, 48
      %v3439 = vpop.permute.xlu0 %3438
      %3440 = vrot.lane.b32.xlu0 %v1275, 48
      %v3441 = vpop.permute.xlu0 %3440
      %3442 = vrot.lane.b32.xlu0 %v1276, 48
      %v3443 = vpop.permute.xlu0 %3442
      %3444 = vrot.lane.b32.xlu0 %v1277, 48
      %v3445 = vpop.permute.xlu0 %3444
      %v3451 = vsel %vm1763, %v3337, 0
      %v3454 = vsel %vm1763, %v3338, 0
      %v3457 = vsel %vm1763, %v3339, 0
      %v3460 = vsel %vm1763, %v3340, 0
      %3462 = vmatprep.subr.bf16.mxu0 0
      %3463 = vmatpush1.bf16.msra.mxu0 %v3439
      %3464 = vmatprep.subr.bf16.mxu0 0
      %3465 = vmatpush1.bf16.msra.mxu0 %v3441
      %3466 = vmatprep.subr.bf16.mxu0 0
      %3467 = vmatpush1.bf16.msra.mxu0 %v3443
      %3468 = vmatprep.subr.bf16.mxu0 0
      %3469 = vmatpush1.bf16.msra.mxu0 %v3445
      %3470 = vmatprep.subr.bf16.mxu0 0
      %3471 = vmatpush1.bf16.msra.mxu0 0
      %3472 = vmatprep.subr.bf16.mxu0 0
      %3473 = vmatpush1.bf16.msra.mxu0 0
      %3474 = vmatprep.subr.bf16.mxu0 0
      %3475 = vmatpush1.bf16.msra.mxu0 0
      %3476 = vmatprep.subr.bf16.mxu0 0
      %3477 = vmatpush1.bf16.msra.mxu0 0
      %3478 = vmatprep.subr.bf16.mxu0 0
      %3479 = vmatpush1.bf16.msra.mxu0 0
      %3480 = vmatprep.subr.bf16.mxu0 0
      %3481 = vmatpush1.bf16.msra.mxu0 0
      %3482 = vmatprep.subr.bf16.mxu0 0
      %3483 = vmatpush1.bf16.msra.mxu0 0
      %3484 = vmatprep.subr.bf16.mxu0 0
      %3485 = vmatpush1.bf16.msra.mxu0 0
      %3486 = vmatprep.subr.bf16.mxu0 0
      %3487 = vmatpush1.bf16.msra.mxu0 0
      %3488 = vmatprep.subr.bf16.mxu0 0
      %3489 = vmatpush1.bf16.msra.mxu0 0
      %3490 = vmatprep.subr.bf16.mxu0 0
      %3491 = vmatpush1.bf16.msra.mxu0 0
      %3492 = vmatprep.subr.bf16.mxu0 0
      %3493 = vmatpush1.bf16.msra.mxu0 0
      %3494 = vmatprep.mubr.bf16.mxu0 0
      %3495 = vmatmul.mubr.bf16.gmra.mrb[0].mxu0 %v3451
      %v3496 = vpop.f32.mrb[0].mxu0
      %v3497 = vadd.f32 0.0, %v3496
      %v3498 = vpop.f32.mrb[0].mxu0
      %v3499 = vpop.f32.mrb[0].mxu0
      %v3500 = vadd.f32 0.0, %v3499
      %v3501 = vpop.f32.mrb[0].mxu0
      %3502 = vmatprep.mubr.bf16.mxu0 0
      %3503 = vmatmul.mubr.bf16.gmra.mrb[0].mxu0 %v3454
      %v3504 = vpop.f32.mrb[0].mxu0
      %v3505 = vadd.f32 0.0, %v3504
      %v3506 = vpop.f32.mrb[0].mxu0
      %v3507 = vpop.f32.mrb[0].mxu0
      %v3508 = vadd.f32 0.0, %v3507
      %v3509 = vpop.f32.mrb[0].mxu0
      %3510 = vmatprep.mubr.bf16.mxu0 0
      %3511 = vmatmul.mubr.bf16.gmra.mrb[0].mxu0 %v3457
      %v3512 = vpop.f32.mrb[0].mxu0
      %v3513 = vadd.f32 0.0, %v3512
      %v3514 = vpop.f32.mrb[0].mxu0
      %v3515 = vpop.f32.mrb[0].mxu0
      %v3516 = vadd.f32 0.0, %v3515
      %v3517 = vpop.f32.mrb[0].mxu0
      %3518 = vmatprep.mubr.bf16.mxu0 0
      %3519 = vmatmul.mubr.bf16.gmra.mrb[0].mxu0 %v3460
      %v3520 = vpop.f32.mrb[0].mxu0
      %v3521 = vadd.f32 0.0, %v3520
      %v3522 = vpop.f32.mrb[0].mxu0
      %v3523 = vpop.f32.mrb[0].mxu0
      %v3524 = vadd.f32 0.0, %v3523
      %v3525 = vpop.f32.mrb[0].mxu0
      %3526 = vdwg.mxu0
      %3527 = vrot.lane.b32.xlu0 %v1278, 48
      %v3528 = vpop.permute.xlu0 %3527
      %3529 = vrot.lane.b32.xlu0 %v1279, 48
      %v3530 = vpop.permute.xlu0 %3529
      %3531 = vrot.lane.b32.xlu0 %v1280, 48
      %v3532 = vpop.permute.xlu0 %3531
      %3533 = vrot.lane.b32.xlu0 %v1281, 48
      %v3534 = vpop.permute.xlu0 %3533
      %v3540 = vsel %vm1763, %v3341, 0
      %v3543 = vsel %vm1763, %v3342, 0
      %v3546 = vsel %vm1763, %v3343, 0
      %v3549 = vsel %vm1763, %v3344, 0
      %3551 = vmatprep.subr.bf16.mxu0 0
      %3552 = vmatpush1.bf16.msra.mxu0 %v3528
      %3553 = vmatprep.subr.bf16.mxu0 0
      %3554 = vmatpush1.bf16.msra.mxu0 %v3530
      %3555 = vmatprep.subr.bf16.mxu0 0
      %3556 = vmatpush1.bf16.msra.mxu0 %v3532
      %3557 = vmatprep.subr.bf16.mxu0 0
      %3558 = vmatpush1.bf16.msra.mxu0 %v3534
      %3559 = vmatprep.subr.bf16.mxu0 0
      %3560 = vmatpush1.bf16.msra.mxu0 0
      %3561 = vmatprep.subr.bf16.mxu0 0
      %3562 = vmatpush1.bf16.msra.mxu0 0
      %3563 = vmatprep.subr.bf16.mxu0 0
      %3564 = vmatpush1.bf16.msra.mxu0 0
      %3565 = vmatprep.subr.bf16.mxu0 0
      %3566 = vmatpush1.bf16.msra.mxu0 0
      %3567 = vmatprep.subr.bf16.mxu0 0
      %3568 = vmatpush1.bf16.msra.mxu0 0
      %3569 = vmatprep.subr.bf16.mxu0 0
      %3570 = vmatpush1.bf16.msra.mxu0 0
      %3571 = vmatprep.subr.bf16.mxu0 0
      %3572 = vmatpush1.bf16.msra.mxu0 0
      %3573 = vmatprep.subr.bf16.mxu0 0
      %3574 = vmatpush1.bf16.msra.mxu0 0
      %3575 = vmatprep.subr.bf16.mxu0 0
      %3576 = vmatpush1.bf16.msra.mxu0 0
      %3577 = vmatprep.subr.bf16.mxu0 0
      %3578 = vmatpush1.bf16.msra.mxu0 0
      %3579 = vmatprep.subr.bf16.mxu0 0
      %3580 = vmatpush1.bf16.msra.mxu0 0
      %3581 = vmatprep.subr.bf16.mxu0 0
      %3582 = vmatpush1.bf16.msra.mxu0 0
      %3583 = vmatprep.mubr.bf16.mxu0 0
      %3584 = vmatmul.mubr.bf16.gmra.mrb[0].mxu0 %v3540
      %v3585 = vpop.f32.mrb[0].mxu0
      %v3586 = vadd.f32 0.0, %v3585
      %v3587 = vpop.f32.mrb[0].mxu0
      %v3588 = vpop.f32.mrb[0].mxu0
      %v3589 = vadd.f32 0.0, %v3588
      %v3590 = vpop.f32.mrb[0].mxu0
      %3591 = vmatprep.mubr.bf16.mxu0 0
      %3592 = vmatmul.mubr.bf16.gmra.mrb[0].mxu0 %v3543
      %v3593 = vpop.f32.mrb[0].mxu0
      %v3594 = vadd.f32 0.0, %v3593
      %v3595 = vpop.f32.mrb[0].mxu0
      %v3596 = vpop.f32.mrb[0].mxu0
      %v3597 = vadd.f32 0.0, %v3596
      %v3598 = vpop.f32.mrb[0].mxu0
      %3599 = vmatprep.mubr.bf16.mxu0 0
      %3600 = vmatmul.mubr.bf16.gmra.mrb[0].mxu0 %v3546
      %v3601 = vpop.f32.mrb[0].mxu0
      %v3602 = vadd.f32 0.0, %v3601
      %v3603 = vpop.f32.mrb[0].mxu0
      %v3604 = vpop.f32.mrb[0].mxu0
      %v3605 = vadd.f32 0.0, %v3604
      %v3606 = vpop.f32.mrb[0].mxu0
      %3607 = vmatprep.mubr.bf16.mxu0 0
      %3608 = vmatmul.mubr.bf16.gmra.mrb[0].mxu0 %v3549
      %v3609 = vpop.f32.mrb[0].mxu0
      %v3610 = vadd.f32 0.0, %v3609
      %v3611 = vpop.f32.mrb[0].mxu0
      %v3612 = vpop.f32.mrb[0].mxu0
      %v3613 = vadd.f32 0.0, %v3612
      %v3614 = vpop.f32.mrb[0].mxu0
      %3615 = vdwg.mxu0
      %3616 = vrot.lane.b32.xlu0 %v1282, 48
      %v3617 = vpop.permute.xlu0 %3616
      %3618 = vrot.lane.b32.xlu0 %v1283, 48
      %v3619 = vpop.permute.xlu0 %3618
      %3620 = vrot.lane.b32.xlu0 %v1284, 48
      %v3621 = vpop.permute.xlu0 %3620
      %3622 = vrot.lane.b32.xlu0 %v1285, 48
      %v3623 = vpop.permute.xlu0 %3622
      %v3629 = vsel %vm1763, %v3345, 0
      %v3632 = vsel %vm1763, %v3346, 0
      %v3635 = vsel %vm1763, %v3347, 0
      %v3638 = vsel %vm1763, %v3348, 0
      %3640 = vmatprep.subr.bf16.mxu0 0
      %3641 = vmatpush1.bf16.msra.mxu0 %v3617
      %3642 = vmatprep.subr.bf16.mxu0 0
      %3643 = vmatpush1.bf16.msra.mxu0 %v3619
      %3644 = vmatprep.subr.bf16.mxu0 0
      %3645 = vmatpush1.bf16.msra.mxu0 %v3621
      %3646 = vmatprep.subr.bf16.mxu0 0
      %3647 = vmatpush1.bf16.msra.mxu0 %v3623
      %3648 = vmatprep.subr.bf16.mxu0 0
      %3649 = vmatpush1.bf16.msra.mxu0 0
      %3650 = vmatprep.subr.bf16.mxu0 0
      %3651 = vmatpush1.bf16.msra.mxu0 0
      %3652 = vmatprep.subr.bf16.mxu0 0
      %3653 = vmatpush1.bf16.msra.mxu0 0
      %3654 = vmatprep.subr.bf16.mxu0 0
      %3655 = vmatpush1.bf16.msra.mxu0 0
      %3656 = vmatprep.subr.bf16.mxu0 0
      %3657 = vmatpush1.bf16.msra.mxu0 0
      %3658 = vmatprep.subr.bf16.mxu0 0
      %3659 = vmatpush1.bf16.msra.mxu0 0
      %3660 = vmatprep.subr.bf16.mxu0 0
      %3661 = vmatpush1.bf16.msra.mxu0 0
      %3662 = vmatprep.subr.bf16.mxu0 0
      %3663 = vmatpush1.bf16.msra.mxu0 0
      %3664 = vmatprep.subr.bf16.mxu0 0
      %3665 = vmatpush1.bf16.msra.mxu0 0
      %3666 = vmatprep.subr.bf16.mxu0 0
      %3667 = vmatpush1.bf16.msra.mxu0 0
      %3668 = vmatprep.subr.bf16.mxu0 0
      %3669 = vmatpush1.bf16.msra.mxu0 0
      %3670 = vmatprep.subr.bf16.mxu0 0
      %3671 = vmatpush1.bf16.msra.mxu0 0
      %3672 = vmatprep.mubr.bf16.mxu0 0
      %3673 = vmatmul.mubr.bf16.gmra.mrb[0].mxu0 %v3629
      %v3674 = vpop.f32.mrb[0].mxu0
      %v3675 = vadd.f32 0.0, %v3674
      %v3676 = vpop.f32.mrb[0].mxu0
      %v3677 = vpop.f32.mrb[0].mxu0
      %v3678 = vadd.f32 0.0, %v3677
      %v3679 = vpop.f32.mrb[0].mxu0
      %3680 = vmatprep.mubr.bf16.mxu0 0
      %3681 = vmatmul.mubr.bf16.gmra.mrb[0].mxu0 %v3632
      %v3682 = vpop.f32.mrb[0].mxu0
      %v3683 = vadd.f32 0.0, %v3682
      %v3684 = vpop.f32.mrb[0].mxu0
      %v3685 = vpop.f32.mrb[0].mxu0
      %v3686 = vadd.f32 0.0, %v3685
      %v3687 = vpop.f32.mrb[0].mxu0
      %3688 = vmatprep.mubr.bf16.mxu0 0
      %3689 = vmatmul.mubr.bf16.gmra.mrb[0].mxu0 %v3635
      %v3690 = vpop.f32.mrb[0].mxu0
      %v3691 = vadd.f32 0.0, %v3690
      %v3692 = vpop.f32.mrb[0].mxu0
      %v3693 = vpop.f32.mrb[0].mxu0
      %v3694 = vadd.f32 0.0, %v3693
      %v3695 = vpop.f32.mrb[0].mxu0
      %3696 = vmatprep.mubr.bf16.mxu0 0
      %3697 = vmatmul.mubr.bf16.gmra.mrb[0].mxu0 %v3638
      %v3698 = vpop.f32.mrb[0].mxu0
      %v3699 = vadd.f32 0.0, %v3698
      %v3700 = vpop.f32.mrb[0].mxu0
      %v3701 = vpop.f32.mrb[0].mxu0
      %v3702 = vadd.f32 0.0, %v3701
      %v3703 = vpop.f32.mrb[0].mxu0
      %3704 = vdwg.mxu0
      %3737 = vrot.lane.b32.xlu0 %v3408, 16
      %v3738 = vpop.permute.xlu0 %3737
      %3739 = vrot.lane.b32.xlu0 %v3411, 16
      %v3740 = vpop.permute.xlu0 %3739
      %3741 = vrot.lane.b32.xlu0 %v3416, 16
      %v3742 = vpop.permute.xlu0 %3741
      %3743 = vrot.lane.b32.xlu0 %v3419, 16
      %v3744 = vpop.permute.xlu0 %3743
      %3745 = vrot.lane.b32.xlu0 %v3424, 16
      %v3746 = vpop.permute.xlu0 %3745
      %3747 = vrot.lane.b32.xlu0 %v3427, 16
      %v3748 = vpop.permute.xlu0 %3747
      %3749 = vrot.lane.b32.xlu0 %v3432, 16
      %v3750 = vpop.permute.xlu0 %3749
      %3751 = vrot.lane.b32.xlu0 %v3435, 16
      %v3752 = vpop.permute.xlu0 %3751
      %3753 = vrot.lane.b32.xlu0 %v3497, 16
      %v3754 = vpop.permute.xlu0 %3753
      %3755 = vrot.lane.b32.xlu0 %v3500, 16
      %v3756 = vpop.permute.xlu0 %3755
      %3757 = vrot.lane.b32.xlu0 %v3505, 16
      %v3758 = vpop.permute.xlu0 %3757
      %3759 = vrot.lane.b32.xlu0 %v3508, 16
      %v3760 = vpop.permute.xlu0 %3759
      %3761 = vrot.lane.b32.xlu0 %v3513, 16
      %v3762 = vpop.permute.xlu0 %3761
      %3763 = vrot.lane.b32.xlu0 %v3516, 16
      %v3764 = vpop.permute.xlu0 %3763
      %3765 = vrot.lane.b32.xlu0 %v3521, 16
      %v3766 = vpop.permute.xlu0 %3765
      %3767 = vrot.lane.b32.xlu0 %v3524, 16
      %v3768 = vpop.permute.xlu0 %3767
      %3769 = vrot.lane.b32.xlu0 %v3586, 16
      %v3770 = vpop.permute.xlu0 %3769
      %3771 = vrot.lane.b32.xlu0 %v3589, 16
      %v3772 = vpop.permute.xlu0 %3771
      %3773 = vrot.lane.b32.xlu0 %v3594, 16
      %v3774 = vpop.permute.xlu0 %3773
      %3775 = vrot.lane.b32.xlu0 %v3597, 16
      %v3776 = vpop.permute.xlu0 %3775
      %3777 = vrot.lane.b32.xlu0 %v3602, 16
      %v3778 = vpop.permute.xlu0 %3777
      %3779 = vrot.lane.b32.xlu0 %v3605, 16
      %v3780 = vpop.permute.xlu0 %3779
      %3781 = vrot.lane.b32.xlu0 %v3610, 16
      %v3782 = vpop.permute.xlu0 %3781
      %3783 = vrot.lane.b32.xlu0 %v3613, 16
      %v3784 = vpop.permute.xlu0 %3783
      %3785 = vrot.lane.b32.xlu0 %v3675, 16
      %v3786 = vpop.permute.xlu0 %3785
      %3787 = vrot.lane.b32.xlu0 %v3678, 16
      %v3788 = vpop.permute.xlu0 %3787
      %3789 = vrot.lane.b32.xlu0 %v3683, 16
      %v3790 = vpop.permute.xlu0 %3789
      %3791 = vrot.lane.b32.xlu0 %v3686, 16
      %v3792 = vpop.permute.xlu0 %3791
      %3793 = vrot.lane.b32.xlu0 %v3691, 16
      %v3794 = vpop.permute.xlu0 %3793
      %3795 = vrot.lane.b32.xlu0 %v3694, 16
      %v3796 = vpop.permute.xlu0 %3795
      %3797 = vrot.lane.b32.xlu0 %v3699, 16
      %v3798 = vpop.permute.xlu0 %3797
      %3799 = vrot.lane.b32.xlu0 %v3702, 16
      %v3800 = vpop.permute.xlu0 %3799
      %v3833 = vsel %vm1306, %v2191, %v3738
      %v3834 = vsel %vm1306, %v2194, %v3740
      %v3835 = vsel %vm1306, %v2199, %v3742
      %v3836 = vsel %vm1306, %v2202, %v3744
      %v3837 = vsel %vm1306, %v2207, %v3746
      %v3838 = vsel %vm1306, %v2210, %v3748
      %v3839 = vsel %vm1306, %v2215, %v3750
      %v3840 = vsel %vm1306, %v2218, %v3752
      %v3841 = vsel %vm1306, %v2280, %v3754
      %v3842 = vsel %vm1306, %v2283, %v3756
      %v3843 = vsel %vm1306, %v2288, %v3758
      %v3844 = vsel %vm1306, %v2291, %v3760
      %v3845 = vsel %vm1306, %v2296, %v3762
      %v3846 = vsel %vm1306, %v2299, %v3764
      %v3847 = vsel %vm1306, %v2304, %v3766
      %v3848 = vsel %vm1306, %v2307, %v3768
      %v3849 = vsel %vm1306, %v2369, %v3770
      %v3850 = vsel %vm1306, %v2372, %v3772
      %v3851 = vsel %vm1306, %v2377, %v3774
      %v3852 = vsel %vm1306, %v2380, %v3776
      %v3853 = vsel %vm1306, %v2385, %v3778
      %v3854 = vsel %vm1306, %v2388, %v3780
      %v3855 = vsel %vm1306, %v2393, %v3782
      %v3856 = vsel %vm1306, %v2396, %v3784
      %v3857 = vsel %vm1306, %v2458, %v3786
      %v3858 = vsel %vm1306, %v2461, %v3788
      %v3859 = vsel %vm1306, %v2466, %v3790
      %v3860 = vsel %vm1306, %v2469, %v3792
      %v3861 = vsel %vm1306, %v2474, %v3794
      %v3862 = vsel %vm1306, %v2477, %v3796
      %v3863 = vsel %vm1306, %v2482, %v3798
      %v3864 = vsel %vm1306, %v2485, %v3800
      %v3865 = vld [vmem:[%s7] sm:$0xff]
      %v3866 = vld [vmem:[%s7 + $0x8] sm:$0xff]
      %v3867 = vld [vmem:[%s7 + $0x10] sm:$0xff]
      %v3868 = vld [vmem:[%s7 + $0x18] sm:$0xff]
      %v3869 = vpack.c.bf16 %v3834, %v3833
      %v3870 = vpack.c.bf16 %v3836, %v3835
      %v3871 = vpack.c.bf16 %v3838, %v3837
      %v3872 = vpack.c.bf16 %v3840, %v3839
      %v3873 = vpack.c.bf16 %v3842, %v3841
      %v3874 = vpack.c.bf16 %v3844, %v3843
      %v3875 = vpack.c.bf16 %v3846, %v3845
      %v3876 = vpack.c.bf16 %v3848, %v3847
      %v3877 = vpack.c.bf16 %v3850, %v3849
      %v3878 = vpack.c.bf16 %v3852, %v3851
      %v3879 = vpack.c.bf16 %v3854, %v3853
      %v3880 = vpack.c.bf16 %v3856, %v3855
      %v3881 = vpack.c.bf16 %v3858, %v3857
      %v3882 = vpack.c.bf16 %v3860, %v3859
      %v3883 = vpack.c.bf16 %v3862, %v3861
      %v3884 = vpack.c.bf16 %v3864, %v3863
      %v3885 = vpack.c.bf16 %v3866, %v3865
      %v3886 = vpack.c.bf16 %v3868, %v3867
      %v3888 = vsel %vm536, %v3869, 0
      %v3891 = vsel %vm536, %v3870, 0
      %v3894 = vsel %vm536, %v3871, 0
      %v3897 = vsel %vm536, %v3872, 0
      %v3900 = vsel %vm536, %v3873, 0
      %v3903 = vsel %vm536, %v3874, 0
      %v3906 = vsel %vm536, %v3875, 0
      %v3909 = vsel %vm536, %v3876, 0
      %v3912 = vsel %vm536, %v3877, 0
      %v3915 = vsel %vm536, %v3878, 0
      %v3918 = vsel %vm536, %v3879, 0
      %v3921 = vsel %vm536, %v3880, 0
      %v3924 = vsel %vm536, %v3881, 0
      %v3927 = vsel %vm536, %v3882, 0
      %v3930 = vsel %vm536, %v3883, 0
      %v3933 = vsel %vm536, %v3884, 0
      %3935 = vmatprep.subr.bf16.mxu0 0
      %3936 = vmatpush1.bf16.msra.mxu0 %v3885
      %3937 = vmatprep.subr.bf16.mxu0 0
      %3938 = vmatpush1.bf16.msra.mxu0 %v3886
      %3939 = vmatprep.subr.bf16.mxu0 0
      %3940 = vmatpush1.bf16.msra.mxu0 0
      %3941 = vmatprep.subr.bf16.mxu0 0
      %3942 = vmatpush1.bf16.msra.mxu0 0
      %3943 = vmatprep.subr.bf16.mxu0 0
      %3944 = vmatpush1.bf16.msra.mxu0 0
      %3945 = vmatprep.subr.bf16.mxu0 0
      %3946 = vmatpush1.bf16.msra.mxu0 0
      %3947 = vmatprep.subr.bf16.mxu0 0
      %3948 = vmatpush1.bf16.msra.mxu0 0
      %3949 = vmatprep.subr.bf16.mxu0 0
      %3950 = vmatpush1.bf16.msra.mxu0 0
      %3951 = vmatprep.subr.bf16.mxu0 0
      %3952 = vmatpush1.bf16.msra.mxu0 0
      %3953 = vmatprep.subr.bf16.mxu0 0
      %3954 = vmatpush1.bf16.msra.mxu0 0
      %3955 = vmatprep.subr.bf16.mxu0 0
      %3956 = vmatpush1.bf16.msra.mxu0 0
      %3957 = vmatprep.subr.bf16.mxu0 0
      %3958 = vmatpush1.bf16.msra.mxu0 0
      %3959 = vmatprep.subr.bf16.mxu0 0
      %3960 = vmatpush1.bf16.msra.mxu0 0
      %3961 = vmatprep.subr.bf16.mxu0 0
      %3962 = vmatpush1.bf16.msra.mxu0 0
      %3963 = vmatprep.subr.bf16.mxu0 0
      %3964 = vmatpush1.bf16.msra.mxu0 0
      %3965 = vmatprep.subr.bf16.mxu0 0
      %3966 = vmatpush1.bf16.msra.mxu0 0
      %3967 = vmatprep.mubr.bf16.mxu0 0
      %3968 = vmatmul.mubr.bf16.gmra.mrb[0].mxu0 %v3888
      %v3969 = vpop.f32.mrb[0].mxu0
      %v3970 = vadd.f32 0.0, %v3969
      %v3971 = vpop.f32.mrb[0].mxu0
      %v3972 = vpop.f32.mrb[0].mxu0
      %v3973 = vadd.f32 0.0, %v3972
      %v3974 = vpop.f32.mrb[0].mxu0
      %3975 = vmatprep.mubr.bf16.mxu0 0
      %3976 = vmatmul.mubr.bf16.gmra.mrb[0].mxu0 %v3891
      %v3977 = vpop.f32.mrb[0].mxu0
      %v3978 = vadd.f32 0.0, %v3977
      %v3979 = vpop.f32.mrb[0].mxu0
      %v3980 = vpop.f32.mrb[0].mxu0
      %v3981 = vadd.f32 0.0, %v3980
      %v3982 = vpop.f32.mrb[0].mxu0
      %3983 = vmatprep.mubr.bf16.mxu0 0
      %3984 = vmatmul.mubr.bf16.gmra.mrb[0].mxu0 %v3894
      %v3985 = vpop.f32.mrb[0].mxu0
      %v3986 = vadd.f32 0.0, %v3985
      %v3987 = vpop.f32.mrb[0].mxu0
      %v3988 = vpop.f32.mrb[0].mxu0
      %v3989 = vadd.f32 0.0, %v3988
      %v3990 = vpop.f32.mrb[0].mxu0
      %3991 = vmatprep.mubr.bf16.mxu0 0
      %3992 = vmatmul.mubr.bf16.gmra.mrb[0].mxu0 %v3897
      %v3993 = vpop.f32.mrb[0].mxu0
      %v3994 = vadd.f32 0.0, %v3993
      %v3995 = vpop.f32.mrb[0].mxu0
      %v3996 = vpop.f32.mrb[0].mxu0
      %v3997 = vadd.f32 0.0, %v3996
      %v3998 = vpop.f32.mrb[0].mxu0
      %3999 = vmatprep.mubr.bf16.mxu0 0
      %4000 = vmatmul.mubr.bf16.gmra.mrb[0].mxu0 %v3900
      %v4001 = vpop.f32.mrb[0].mxu0
      %v4002 = vadd.f32 0.0, %v4001
      %v4003 = vpop.f32.mrb[0].mxu0
      %v4004 = vpop.f32.mrb[0].mxu0
      %v4005 = vadd.f32 0.0, %v4004
      %v4006 = vpop.f32.mrb[0].mxu0
      %4007 = vmatprep.mubr.bf16.mxu0 0
      %4008 = vmatmul.mubr.bf16.gmra.mrb[0].mxu0 %v3903
      %v4009 = vpop.f32.mrb[0].mxu0
      %v4010 = vadd.f32 0.0, %v4009
      %v4011 = vpop.f32.mrb[0].mxu0
      %v4012 = vpop.f32.mrb[0].mxu0
      %v4013 = vadd.f32 0.0, %v4012
      %v4014 = vpop.f32.mrb[0].mxu0
      %4015 = vmatprep.mubr.bf16.mxu0 0
      %4016 = vmatmul.mubr.bf16.gmra.mrb[0].mxu0 %v3906
      %v4017 = vpop.f32.mrb[0].mxu0
      %v4018 = vadd.f32 0.0, %v4017
      %v4019 = vpop.f32.mrb[0].mxu0
      %v4020 = vpop.f32.mrb[0].mxu0
      %v4021 = vadd.f32 0.0, %v4020
      %v4022 = vpop.f32.mrb[0].mxu0
      %4023 = vmatprep.mubr.bf16.mxu0 0
      %4024 = vmatmul.mubr.bf16.gmra.mrb[0].mxu0 %v3909
      %v4025 = vpop.f32.mrb[0].mxu0
      %v4026 = vadd.f32 0.0, %v4025
      %v4027 = vpop.f32.mrb[0].mxu0
      %v4028 = vpop.f32.mrb[0].mxu0
      %v4029 = vadd.f32 0.0, %v4028
      %v4030 = vpop.f32.mrb[0].mxu0
      %4031 = vmatprep.mubr.bf16.mxu0 0
      %4032 = vmatmul.mubr.bf16.gmra.mrb[0].mxu0 %v3912
      %v4033 = vpop.f32.mrb[0].mxu0
      %v4034 = vadd.f32 0.0, %v4033
      %v4035 = vpop.f32.mrb[0].mxu0
      %v4036 = vpop.f32.mrb[0].mxu0
      %v4037 = vadd.f32 0.0, %v4036
      %v4038 = vpop.f32.mrb[0].mxu0
      %4039 = vmatprep.mubr.bf16.mxu0 0
      %4040 = vmatmul.mubr.bf16.gmra.mrb[0].mxu0 %v3915
      %v4041 = vpop.f32.mrb[0].mxu0
      %v4042 = vadd.f32 0.0, %v4041
      %v4043 = vpop.f32.mrb[0].mxu0
      %v4044 = vpop.f32.mrb[0].mxu0
      %v4045 = vadd.f32 0.0, %v4044
      %v4046 = vpop.f32.mrb[0].mxu0
      %4047 = vmatprep.mubr.bf16.mxu0 0
      %4048 = vmatmul.mubr.bf16.gmra.mrb[0].mxu0 %v3918
      %v4049 = vpop.f32.mrb[0].mxu0
      %v4050 = vadd.f32 0.0, %v4049
      %v4051 = vpop.f32.mrb[0].mxu0
      %v4052 = vpop.f32.mrb[0].mxu0
      %v4053 = vadd.f32 0.0, %v4052
      %v4054 = vpop.f32.mrb[0].mxu0
      %4055 = vmatprep.mubr.bf16.mxu0 0
      %4056 = vmatmul.mubr.bf16.gmra.mrb[0].mxu0 %v3921
      %v4057 = vpop.f32.mrb[0].mxu0
      %v4058 = vadd.f32 0.0, %v4057
      %v4059 = vpop.f32.mrb[0].mxu0
      %v4060 = vpop.f32.mrb[0].mxu0
      %v4061 = vadd.f32 0.0, %v4060
      %v4062 = vpop.f32.mrb[0].mxu0
      %4063 = vmatprep.mubr.bf16.mxu0 0
      %4064 = vmatmul.mubr.bf16.gmra.mrb[0].mxu0 %v3924
      %v4065 = vpop.f32.mrb[0].mxu0
      %v4066 = vadd.f32 0.0, %v4065
      %v4067 = vpop.f32.mrb[0].mxu0
      %v4068 = vpop.f32.mrb[0].mxu0
      %v4069 = vadd.f32 0.0, %v4068
      %v4070 = vpop.f32.mrb[0].mxu0
      %4071 = vmatprep.mubr.bf16.mxu0 0
      %4072 = vmatmul.mubr.bf16.gmra.mrb[0].mxu0 %v3927
      %v4073 = vpop.f32.mrb[0].mxu0
      %v4074 = vadd.f32 0.0, %v4073
      %v4075 = vpop.f32.mrb[0].mxu0
      %v4076 = vpop.f32.mrb[0].mxu0
      %v4077 = vadd.f32 0.0, %v4076
      %v4078 = vpop.f32.mrb[0].mxu0
      %4079 = vmatprep.mubr.bf16.mxu0 0
      %4080 = vmatmul.mubr.bf16.gmra.mrb[0].mxu0 %v3930
      %v4081 = vpop.f32.mrb[0].mxu0
      %v4082 = vadd.f32 0.0, %v4081
      %v4083 = vpop.f32.mrb[0].mxu0
      %v4084 = vpop.f32.mrb[0].mxu0
      %v4085 = vadd.f32 0.0, %v4084
      %v4086 = vpop.f32.mrb[0].mxu0
      %4087 = vmatprep.mubr.bf16.mxu0 0
      %4088 = vmatmul.mubr.bf16.gmra.mrb[0].mxu0 %v3933
      %v4089 = vpop.f32.mrb[0].mxu0
      %v4090 = vadd.f32 0.0, %v4089
      %v4091 = vpop.f32.mrb[0].mxu0
      %v4092 = vpop.f32.mrb[0].mxu0
      %v4093 = vadd.f32 0.0, %v4092
      %v4094 = vpop.f32.mrb[0].mxu0
      %4095 = vdwg.mxu0
      %v4096 = vadd.f32 %v504, %v3970
      %v4097 = vadd.f32 %v505, %v3973
      %v4098 = vadd.f32 %v506, %v3978
      %v4099 = vadd.f32 %v507, %v3981
      %v4100 = vadd.f32 %v508, %v3986
      %v4101 = vadd.f32 %v509, %v3989
      %v4102 = vadd.f32 %v510, %v3994
      %v4103 = vadd.f32 %v511, %v3997
      %v4104 = vadd.f32 %v512, %v4002
      %v4105 = vadd.f32 %v513, %v4005
      %v4106 = vadd.f32 %v514, %v4010
      %v4107 = vadd.f32 %v515, %v4013
      %v4108 = vadd.f32 %v516, %v4018
      %v4109 = vadd.f32 %v517, %v4021
      %v4110 = vadd.f32 %v518, %v4026
      %v4111 = vadd.f32 %v519, %v4029
      %v4112 = vadd.f32 %v520, %v4034
      %v4113 = vadd.f32 %v521, %v4037
      %v4114 = vadd.f32 %v522, %v4042
      %v4115 = vadd.f32 %v523, %v4045
      %v4116 = vadd.f32 %v524, %v4050
      %v4117 = vadd.f32 %v525, %v4053
      %v4118 = vadd.f32 %v526, %v4058
      %v4119 = vadd.f32 %v527, %v4061
      %v4120 = vadd.f32 %v528, %v4066
      %v4121 = vadd.f32 %v529, %v4069
      %v4122 = vadd.f32 %v530, %v4074
      %v4123 = vadd.f32 %v531, %v4077
      %v4124 = vadd.f32 %v532, %v4082
      %v4125 = vadd.f32 %v533, %v4085
      %v4126 = vadd.f32 %v534, %v4090
      %v4127 = vadd.f32 %v535, %v4093
      %v4128 = vld [vmem:[%s8] sm:$0x1]
      %v4130 = vlaneseq
      %v4131 = vshrl.u32 %v4130, 7
      %v4132 = vsub.s32 0, %v4131
      %v4133 = vrot.slane %v4128, %v4132
      %v4135 = vadd.f32 %v4096, %v4133
      %v4136 = vadd.f32 %v4097, %v4133
      %v4137 = vadd.f32 %v4098, %v4133
      %v4138 = vadd.f32 %v4099, %v4133
      %v4139 = vadd.f32 %v4100, %v4133
      %v4140 = vadd.f32 %v4101, %v4133
      %v4141 = vadd.f32 %v4102, %v4133
      %v4142 = vadd.f32 %v4103, %v4133
      %v4143 = vadd.f32 %v4104, %v4133
      %v4144 = vadd.f32 %v4105, %v4133
      %v4145 = vadd.f32 %v4106, %v4133
      %v4146 = vadd.f32 %v4107, %v4133
      %v4147 = vadd.f32 %v4108, %v4133
      %v4148 = vadd.f32 %v4109, %v4133
      %v4149 = vadd.f32 %v4110, %v4133
      %v4150 = vadd.f32 %v4111, %v4133
      %v4151 = vadd.f32 %v4112, %v4133
      %v4152 = vadd.f32 %v4113, %v4133
      %v4153 = vadd.f32 %v4114, %v4133
      %v4154 = vadd.f32 %v4115, %v4133
      %v4155 = vadd.f32 %v4116, %v4133
      %v4156 = vadd.f32 %v4117, %v4133
      %v4157 = vadd.f32 %v4118, %v4133
      %v4158 = vadd.f32 %v4119, %v4133
      %v4159 = vadd.f32 %v4120, %v4133
      %v4160 = vadd.f32 %v4121, %v4133
      %v4161 = vadd.f32 %v4122, %v4133
      %v4162 = vadd.f32 %v4123, %v4133
      %v4163 = vadd.f32 %v4124, %v4133
      %v4164 = vadd.f32 %v4125, %v4133
      %v4165 = vadd.f32 %v4126, %v4133
      %v4166 = vadd.f32 %v4127, %v4133
      %v4167 = vsel %vm536, %v4135, 0.0
      %4168 = vadd.xlane.f32.xlu0 %v4167
      %v4169 = vpop.xlane.xlu0 %4168
      %v4170 = vsel %vm536, %v4136, 0.0
      %4171 = vadd.xlane.f32.xlu0 %v4170
      %v4172 = vpop.xlane.xlu0 %4171
      %v4173 = vsel %vm536, %v4137, 0.0
      %4174 = vadd.xlane.f32.xlu0 %v4173
      %v4175 = vpop.xlane.xlu0 %4174
      %v4176 = vsel %vm536, %v4138, 0.0
      %4177 = vadd.xlane.f32.xlu0 %v4176
      %v4178 = vpop.xlane.xlu0 %4177
      %v4179 = vsel %vm536, %v4139, 0.0
      %4180 = vadd.xlane.f32.xlu0 %v4179
      %v4181 = vpop.xlane.xlu0 %4180
      %v4182 = vsel %vm536, %v4140, 0.0
      %4183 = vadd.xlane.f32.xlu0 %v4182
      %v4184 = vpop.xlane.xlu0 %4183
      %v4185 = vsel %vm536, %v4141, 0.0
      %4186 = vadd.xlane.f32.xlu0 %v4185
      %v4187 = vpop.xlane.xlu0 %4186
      %v4188 = vsel %vm536, %v4142, 0.0
      %4189 = vadd.xlane.f32.xlu0 %v4188
      %v4190 = vpop.xlane.xlu0 %4189
      %v4191 = vsel %vm536, %v4143, 0.0
      %4192 = vadd.xlane.f32.xlu0 %v4191
      %v4193 = vpop.xlane.xlu0 %4192
      %v4194 = vsel %vm536, %v4144, 0.0
      %4195 = vadd.xlane.f32.xlu0 %v4194
      %v4196 = vpop.xlane.xlu0 %4195
      %v4197 = vsel %vm536, %v4145, 0.0
      %4198 = vadd.xlane.f32.xlu0 %v4197
      %v4199 = vpop.xlane.xlu0 %4198
      %v4200 = vsel %vm536, %v4146, 0.0
      %4201 = vadd.xlane.f32.xlu0 %v4200
      %v4202 = vpop.xlane.xlu0 %4201
      %v4203 = vsel %vm536, %v4147, 0.0
      %4204 = vadd.xlane.f32.xlu0 %v4203
      %v4205 = vpop.xlane.xlu0 %4204
      %v4206 = vsel %vm536, %v4148, 0.0
      %4207 = vadd.xlane.f32.xlu0 %v4206
      %v4208 = vpop.xlane.xlu0 %4207
      %v4209 = vsel %vm536, %v4149, 0.0
      %4210 = vadd.xlane.f32.xlu0 %v4209
      %v4211 = vpop.xlane.xlu0 %4210
      %v4212 = vsel %vm536, %v4150, 0.0
      %4213 = vadd.xlane.f32.xlu0 %v4212
      %v4214 = vpop.xlane.xlu0 %4213
      %v4215 = vsel %vm536, %v4151, 0.0
      %4216 = vadd.xlane.f32.xlu0 %v4215
      %v4217 = vpop.xlane.xlu0 %4216
      %v4218 = vsel %vm536, %v4152, 0.0
      %4219 = vadd.xlane.f32.xlu0 %v4218
      %v4220 = vpop.xlane.xlu0 %4219
      %v4221 = vsel %vm536, %v4153, 0.0
      %4222 = vadd.xlane.f32.xlu0 %v4221
      %v4223 = vpop.xlane.xlu0 %4222
      %v4224 = vsel %vm536, %v4154, 0.0
      %4225 = vadd.xlane.f32.xlu0 %v4224
      %v4226 = vpop.xlane.xlu0 %4225
      %v4227 = vsel %vm536, %v4155, 0.0
      %4228 = vadd.xlane.f32.xlu0 %v4227
      %v4229 = vpop.xlane.xlu0 %4228
      %v4230 = vsel %vm536, %v4156, 0.0
      %4231 = vadd.xlane.f32.xlu0 %v4230
      %v4232 = vpop.xlane.xlu0 %4231
      %v4233 = vsel %vm536, %v4157, 0.0
      %4234 = vadd.xlane.f32.xlu0 %v4233
      %v4235 = vpop.xlane.xlu0 %4234
      %v4236 = vsel %vm536, %v4158, 0.0
      %4237 = vadd.xlane.f32.xlu0 %v4236
      %v4238 = vpop.xlane.xlu0 %4237
      %v4239 = vsel %vm536, %v4159, 0.0
      %4240 = vadd.xlane.f32.xlu0 %v4239
      %v4241 = vpop.xlane.xlu0 %4240
      %v4242 = vsel %vm536, %v4160, 0.0
      %4243 = vadd.xlane.f32.xlu0 %v4242
      %v4244 = vpop.xlane.xlu0 %4243
      %v4245 = vsel %vm536, %v4161, 0.0
      %4246 = vadd.xlane.f32.xlu0 %v4245
      %v4247 = vpop.xlane.xlu0 %4246
      %v4248 = vsel %vm536, %v4162, 0.0
      %4249 = vadd.xlane.f32.xlu0 %v4248
      %v4250 = vpop.xlane.xlu0 %4249
      %v4251 = vsel %vm536, %v4163, 0.0
      %4252 = vadd.xlane.f32.xlu0 %v4251
      %v4253 = vpop.xlane.xlu0 %4252
      %v4254 = vsel %vm536, %v4164, 0.0
      %4255 = vadd.xlane.f32.xlu0 %v4254
      %v4256 = vpop.xlane.xlu0 %4255
      %v4257 = vsel %vm536, %v4165, 0.0
      %4258 = vadd.xlane.f32.xlu0 %v4257
      %v4259 = vpop.xlane.xlu0 %4258
      %v4260 = vsel %vm536, %v4166, 0.0
      %4261 = vadd.xlane.f32.xlu0 %v4260
      %v4262 = vpop.xlane.xlu0 %4261
      %v4263 = vmul.f32 %v4169, %v633
      %v4264 = vmul.f32 %v4172, %v633
      %v4265 = vmul.f32 %v4175, %v633
      %v4266 = vmul.f32 %v4178, %v633
      %v4267 = vmul.f32 %v4181, %v633
      %v4268 = vmul.f32 %v4184, %v633
      %v4269 = vmul.f32 %v4187, %v633
      %v4270 = vmul.f32 %v4190, %v633
      %v4271 = vmul.f32 %v4193, %v633
      %v4272 = vmul.f32 %v4196, %v633
      %v4273 = vmul.f32 %v4199, %v633
      %v4274 = vmul.f32 %v4202, %v633
      %v4275 = vmul.f32 %v4205, %v633
      %v4276 = vmul.f32 %v4208, %v633
      %v4277 = vmul.f32 %v4211, %v633
      %v4278 = vmul.f32 %v4214, %v633
      %v4279 = vmul.f32 %v4217, %v633
      %v4280 = vmul.f32 %v4220, %v633
      %v4281 = vmul.f32 %v4223, %v633
      %v4282 = vmul.f32 %v4226, %v633
      %v4283 = vmul.f32 %v4229, %v633
      %v4284 = vmul.f32 %v4232, %v633
      %v4285 = vmul.f32 %v4235, %v633
      %v4286 = vmul.f32 %v4238, %v633
      %v4287 = vmul.f32 %v4241, %v633
      %v4288 = vmul.f32 %v4244, %v633
      %v4289 = vmul.f32 %v4247, %v633
      %v4290 = vmul.f32 %v4250, %v633
      %v4291 = vmul.f32 %v4253, %v633
      %v4292 = vmul.f32 %v4256, %v633
      %v4293 = vmul.f32 %v4259, %v633
      %v4294 = vmul.f32 %v4262, %v633
      %v4295 = vsub.f32 %v4135, %v4263
      %v4296 = vsub.f32 %v4136, %v4264
      %v4297 = vsub.f32 %v4137, %v4265
      %v4298 = vsub.f32 %v4138, %v4266
      %v4299 = vsub.f32 %v4139, %v4267
      %v4300 = vsub.f32 %v4140, %v4268
      %v4301 = vsub.f32 %v4141, %v4269
      %v4302 = vsub.f32 %v4142, %v4270
      %v4303 = vsub.f32 %v4143, %v4271
      %v4304 = vsub.f32 %v4144, %v4272
      %v4305 = vsub.f32 %v4145, %v4273
      %v4306 = vsub.f32 %v4146, %v4274
      %v4307 = vsub.f32 %v4147, %v4275
      %v4308 = vsub.f32 %v4148, %v4276
      %v4309 = vsub.f32 %v4149, %v4277
      %v4310 = vsub.f32 %v4150, %v4278
      %v4311 = vsub.f32 %v4151, %v4279
      %v4312 = vsub.f32 %v4152, %v4280
      %v4313 = vsub.f32 %v4153, %v4281
      %v4314 = vsub.f32 %v4154, %v4282
      %v4315 = vsub.f32 %v4155, %v4283
      %v4316 = vsub.f32 %v4156, %v4284
      %v4317 = vsub.f32 %v4157, %v4285
      %v4318 = vsub.f32 %v4158, %v4286
      %v4319 = vsub.f32 %v4159, %v4287
      %v4320 = vsub.f32 %v4160, %v4288
      %v4321 = vsub.f32 %v4161, %v4289
      %v4322 = vsub.f32 %v4162, %v4290
      %v4323 = vsub.f32 %v4163, %v4291
      %v4324 = vsub.f32 %v4164, %v4292
      %v4325 = vsub.f32 %v4165, %v4293
      %v4326 = vsub.f32 %v4166, %v4294
      %v4327 = vmul.f32 %v4295, %v4295
      %v4328 = vmul.f32 %v4296, %v4296
      %v4329 = vmul.f32 %v4297, %v4297
      %v4330 = vmul.f32 %v4298, %v4298
      %v4331 = vmul.f32 %v4299, %v4299
      %v4332 = vmul.f32 %v4300, %v4300
      %v4333 = vmul.f32 %v4301, %v4301
      %v4334 = vmul.f32 %v4302, %v4302
      %v4335 = vmul.f32 %v4303, %v4303
      %v4336 = vmul.f32 %v4304, %v4304
      %v4337 = vmul.f32 %v4305, %v4305
      %v4338 = vmul.f32 %v4306, %v4306
      %v4339 = vmul.f32 %v4307, %v4307
      %v4340 = vmul.f32 %v4308, %v4308
      %v4341 = vmul.f32 %v4309, %v4309
      %v4342 = vmul.f32 %v4310, %v4310
      %v4343 = vmul.f32 %v4311, %v4311
      %v4344 = vmul.f32 %v4312, %v4312
      %v4345 = vmul.f32 %v4313, %v4313
      %v4346 = vmul.f32 %v4314, %v4314
      %v4347 = vmul.f32 %v4315, %v4315
      %v4348 = vmul.f32 %v4316, %v4316
      %v4349 = vmul.f32 %v4317, %v4317
      %v4350 = vmul.f32 %v4318, %v4318
      %v4351 = vmul.f32 %v4319, %v4319
      %v4352 = vmul.f32 %v4320, %v4320
      %v4353 = vmul.f32 %v4321, %v4321
      %v4354 = vmul.f32 %v4322, %v4322
      %v4355 = vmul.f32 %v4323, %v4323
      %v4356 = vmul.f32 %v4324, %v4324
      %v4357 = vmul.f32 %v4325, %v4325
      %v4358 = vmul.f32 %v4326, %v4326
      %v4359 = vsel %vm536, %v4327, 0.0
      %4360 = vadd.xlane.f32.xlu0 %v4359
      %v4361 = vpop.xlane.xlu0 %4360
      %v4362 = vsel %vm536, %v4328, 0.0
      %4363 = vadd.xlane.f32.xlu0 %v4362
      %v4364 = vpop.xlane.xlu0 %4363
      %v4365 = vsel %vm536, %v4329, 0.0
      %4366 = vadd.xlane.f32.xlu0 %v4365
      %v4367 = vpop.xlane.xlu0 %4366
      %v4368 = vsel %vm536, %v4330, 0.0
      %4369 = vadd.xlane.f32.xlu0 %v4368
      %v4370 = vpop.xlane.xlu0 %4369
      %v4371 = vsel %vm536, %v4331, 0.0
      %4372 = vadd.xlane.f32.xlu0 %v4371
      %v4373 = vpop.xlane.xlu0 %4372
      %v4374 = vsel %vm536, %v4332, 0.0
      %4375 = vadd.xlane.f32.xlu0 %v4374
      %v4376 = vpop.xlane.xlu0 %4375
      %v4377 = vsel %vm536, %v4333, 0.0
      %4378 = vadd.xlane.f32.xlu0 %v4377
      %v4379 = vpop.xlane.xlu0 %4378
      %v4380 = vsel %vm536, %v4334, 0.0
      %4381 = vadd.xlane.f32.xlu0 %v4380
      %v4382 = vpop.xlane.xlu0 %4381
      %v4383 = vsel %vm536, %v4335, 0.0
      %4384 = vadd.xlane.f32.xlu0 %v4383
      %v4385 = vpop.xlane.xlu0 %4384
      %v4386 = vsel %vm536, %v4336, 0.0
      %4387 = vadd.xlane.f32.xlu0 %v4386
      %v4388 = vpop.xlane.xlu0 %4387
      %v4389 = vsel %vm536, %v4337, 0.0
      %4390 = vadd.xlane.f32.xlu0 %v4389
      %v4391 = vpop.xlane.xlu0 %4390
      %v4392 = vsel %vm536, %v4338, 0.0
      %4393 = vadd.xlane.f32.xlu0 %v4392
      %v4394 = vpop.xlane.xlu0 %4393
      %v4395 = vsel %vm536, %v4339, 0.0
      %4396 = vadd.xlane.f32.xlu0 %v4395
      %v4397 = vpop.xlane.xlu0 %4396
      %v4398 = vsel %vm536, %v4340, 0.0
      %4399 = vadd.xlane.f32.xlu0 %v4398
      %v4400 = vpop.xlane.xlu0 %4399
      %v4401 = vsel %vm536, %v4341, 0.0
      %4402 = vadd.xlane.f32.xlu0 %v4401
      %v4403 = vpop.xlane.xlu0 %4402
      %v4404 = vsel %vm536, %v4342, 0.0
      %4405 = vadd.xlane.f32.xlu0 %v4404
      %v4406 = vpop.xlane.xlu0 %4405
      %v4407 = vsel %vm536, %v4343, 0.0
      %4408 = vadd.xlane.f32.xlu0 %v4407
      %v4409 = vpop.xlane.xlu0 %4408
      %v4410 = vsel %vm536, %v4344, 0.0
      %4411 = vadd.xlane.f32.xlu0 %v4410
      %v4412 = vpop.xlane.xlu0 %4411
      %v4413 = vsel %vm536, %v4345, 0.0
      %4414 = vadd.xlane.f32.xlu0 %v4413
      %v4415 = vpop.xlane.xlu0 %4414
      %v4416 = vsel %vm536, %v4346, 0.0
      %4417 = vadd.xlane.f32.xlu0 %v4416
      %v4418 = vpop.xlane.xlu0 %4417
      %v4419 = vsel %vm536, %v4347, 0.0
      %4420 = vadd.xlane.f32.xlu0 %v4419
      %v4421 = vpop.xlane.xlu0 %4420
      %v4422 = vsel %vm536, %v4348, 0.0
      %4423 = vadd.xlane.f32.xlu0 %v4422
      %v4424 = vpop.xlane.xlu0 %4423
      %v4425 = vsel %vm536, %v4349, 0.0
      %4426 = vadd.xlane.f32.xlu0 %v4425
      %v4427 = vpop.xlane.xlu0 %4426
      %v4428 = vsel %vm536, %v4350, 0.0
      %4429 = vadd.xlane.f32.xlu0 %v4428
      %v4430 = vpop.xlane.xlu0 %4429
      %v4431 = vsel %vm536, %v4351, 0.0
      %4432 = vadd.xlane.f32.xlu0 %v4431
      %v4433 = vpop.xlane.xlu0 %4432
      %v4434 = vsel %vm536, %v4352, 0.0
      %4435 = vadd.xlane.f32.xlu0 %v4434
      %v4436 = vpop.xlane.xlu0 %4435
      %v4437 = vsel %vm536, %v4353, 0.0
      %4438 = vadd.xlane.f32.xlu0 %v4437
      %v4439 = vpop.xlane.xlu0 %4438
      %v4440 = vsel %vm536, %v4354, 0.0
      %4441 = vadd.xlane.f32.xlu0 %v4440
      %v4442 = vpop.xlane.xlu0 %4441
      %v4443 = vsel %vm536, %v4355, 0.0
      %4444 = vadd.xlane.f32.xlu0 %v4443
      %v4445 = vpop.xlane.xlu0 %4444
      %v4446 = vsel %vm536, %v4356, 0.0
      %4447 = vadd.xlane.f32.xlu0 %v4446
      %v4448 = vpop.xlane.xlu0 %4447
      %v4449 = vsel %vm536, %v4357, 0.0
      %4450 = vadd.xlane.f32.xlu0 %v4449
      %v4451 = vpop.xlane.xlu0 %4450
      %v4452 = vsel %vm536, %v4358, 0.0
      %4453 = vadd.xlane.f32.xlu0 %v4452
      %v4454 = vpop.xlane.xlu0 %4453
      %v4455 = vmul.f32 %v4361, %v633
      %v4456 = vmul.f32 %v4364, %v633
      %v4457 = vmul.f32 %v4367, %v633
      %v4458 = vmul.f32 %v4370, %v633
      %v4459 = vmul.f32 %v4373, %v633
      %v4460 = vmul.f32 %v4376, %v633
      %v4461 = vmul.f32 %v4379, %v633
      %v4462 = vmul.f32 %v4382, %v633
      %v4463 = vmul.f32 %v4385, %v633
      %v4464 = vmul.f32 %v4388, %v633
      %v4465 = vmul.f32 %v4391, %v633
      %v4466 = vmul.f32 %v4394, %v633
      %v4467 = vmul.f32 %v4397, %v633
      %v4468 = vmul.f32 %v4400, %v633
      %v4469 = vmul.f32 %v4403, %v633
      %v4470 = vmul.f32 %v4406, %v633
      %v4471 = vmul.f32 %v4409, %v633
      %v4472 = vmul.f32 %v4412, %v633
      %v4473 = vmul.f32 %v4415, %v633
      %v4474 = vmul.f32 %v4418, %v633
      %v4475 = vmul.f32 %v4421, %v633
      %v4476 = vmul.f32 %v4424, %v633
      %v4477 = vmul.f32 %v4427, %v633
      %v4478 = vmul.f32 %v4430, %v633
      %v4479 = vmul.f32 %v4433, %v633
      %v4480 = vmul.f32 %v4436, %v633
      %v4481 = vmul.f32 %v4439, %v633
      %v4482 = vmul.f32 %v4442, %v633
      %v4483 = vmul.f32 %v4445, %v633
      %v4484 = vmul.f32 %v4448, %v633
      %v4485 = vmul.f32 %v4451, %v633
      %v4486 = vmul.f32 %v4454, %v633
      %v4487 = vadd.f32 %v4455, 1e-05
      %v4488 = vadd.f32 %v4456, 1e-05
      %v4489 = vadd.f32 %v4457, 1e-05
      %v4490 = vadd.f32 %v4458, 1e-05
      %v4491 = vadd.f32 %v4459, 1e-05
      %v4492 = vadd.f32 %v4460, 1e-05
      %v4493 = vadd.f32 %v4461, 1e-05
      %v4494 = vadd.f32 %v4462, 1e-05
      %v4495 = vadd.f32 %v4463, 1e-05
      %v4496 = vadd.f32 %v4464, 1e-05
      %v4497 = vadd.f32 %v4465, 1e-05
      %v4498 = vadd.f32 %v4466, 1e-05
      %v4499 = vadd.f32 %v4467, 1e-05
      %v4500 = vadd.f32 %v4468, 1e-05
      %v4501 = vadd.f32 %v4469, 1e-05
      %v4502 = vadd.f32 %v4470, 1e-05
      %v4503 = vadd.f32 %v4471, 1e-05
      %v4504 = vadd.f32 %v4472, 1e-05
      %v4505 = vadd.f32 %v4473, 1e-05
      %v4506 = vadd.f32 %v4474, 1e-05
      %v4507 = vadd.f32 %v4475, 1e-05
      %v4508 = vadd.f32 %v4476, 1e-05
      %v4509 = vadd.f32 %v4477, 1e-05
      %v4510 = vadd.f32 %v4478, 1e-05
      %v4511 = vadd.f32 %v4479, 1e-05
      %v4512 = vadd.f32 %v4480, 1e-05
      %v4513 = vadd.f32 %v4481, 1e-05
      %v4514 = vadd.f32 %v4482, 1e-05
      %v4515 = vadd.f32 %v4483, 1e-05
      %v4516 = vadd.f32 %v4484, 1e-05
      %v4517 = vadd.f32 %v4485, 1e-05
      %v4518 = vadd.f32 %v4486, 1e-05
      %v4519 = vrsqrt.pop %v4487
      %v4520 = vrsqrt.pop %v4488
      %v4521 = vrsqrt.pop %v4489
      %v4522 = vrsqrt.pop %v4490
      %v4523 = vrsqrt.pop %v4491
      %v4524 = vrsqrt.pop %v4492
      %v4525 = vrsqrt.pop %v4493
      %v4526 = vrsqrt.pop %v4494
      %v4527 = vrsqrt.pop %v4495
      %v4528 = vrsqrt.pop %v4496
      %v4529 = vrsqrt.pop %v4497
      %v4530 = vrsqrt.pop %v4498
      %v4531 = vrsqrt.pop %v4499
      %v4532 = vrsqrt.pop %v4500
      %v4533 = vrsqrt.pop %v4501
      %v4534 = vrsqrt.pop %v4502
      %v4535 = vrsqrt.pop %v4503
      %v4536 = vrsqrt.pop %v4504
      %v4537 = vrsqrt.pop %v4505
      %v4538 = vrsqrt.pop %v4506
      %v4539 = vrsqrt.pop %v4507
      %v4540 = vrsqrt.pop %v4508
      %v4541 = vrsqrt.pop %v4509
      %v4542 = vrsqrt.pop %v4510
      %v4543 = vrsqrt.pop %v4511
      %v4544 = vrsqrt.pop %v4512
      %v4545 = vrsqrt.pop %v4513
      %v4546 = vrsqrt.pop %v4514
      %v4547 = vrsqrt.pop %v4515
      %v4548 = vrsqrt.pop %v4516
      %v4549 = vrsqrt.pop %v4517
      %v4550 = vrsqrt.pop %v4518
      %v4551 = vmul.f32 %v4295, %v4519
      %v4552 = vmul.f32 %v4296, %v4520
      %v4553 = vmul.f32 %v4297, %v4521
      %v4554 = vmul.f32 %v4298, %v4522
      %v4555 = vmul.f32 %v4299, %v4523
      %v4556 = vmul.f32 %v4300, %v4524
      %v4557 = vmul.f32 %v4301, %v4525
      %v4558 = vmul.f32 %v4302, %v4526
      %v4559 = vmul.f32 %v4303, %v4527
      %v4560 = vmul.f32 %v4304, %v4528
      %v4561 = vmul.f32 %v4305, %v4529
      %v4562 = vmul.f32 %v4306, %v4530
      %v4563 = vmul.f32 %v4307, %v4531
      %v4564 = vmul.f32 %v4308, %v4532
      %v4565 = vmul.f32 %v4309, %v4533
      %v4566 = vmul.f32 %v4310, %v4534
      %v4567 = vmul.f32 %v4311, %v4535
      %v4568 = vmul.f32 %v4312, %v4536
      %v4569 = vmul.f32 %v4313, %v4537
      %v4570 = vmul.f32 %v4314, %v4538
      %v4571 = vmul.f32 %v4315, %v4539
      %v4572 = vmul.f32 %v4316, %v4540
      %v4573 = vmul.f32 %v4317, %v4541
      %v4574 = vmul.f32 %v4318, %v4542
      %v4575 = vmul.f32 %v4319, %v4543
      %v4576 = vmul.f32 %v4320, %v4544
      %v4577 = vmul.f32 %v4321, %v4545
      %v4578 = vmul.f32 %v4322, %v4546
      %v4579 = vmul.f32 %v4323, %v4547
      %v4580 = vmul.f32 %v4324, %v4548
      %v4581 = vmul.f32 %v4325, %v4549
      %v4582 = vmul.f32 %v4326, %v4550
      %v4583 = vld [vmem:[%s9] sm:$0x1]
      %v4585 = vlaneseq
      %v4586 = vshrl.u32 %v4585, 7
      %v4587 = vsub.s32 0, %v4586
      %v4588 = vrot.slane %v4583, %v4587
      %v4590 = vmul.f32 %v4551, %v4588
      %v4591 = vmul.f32 %v4552, %v4588
      %v4592 = vmul.f32 %v4553, %v4588
      %v4593 = vmul.f32 %v4554, %v4588
      %v4594 = vmul.f32 %v4555, %v4588
      %v4595 = vmul.f32 %v4556, %v4588
      %v4596 = vmul.f32 %v4557, %v4588
      %v4597 = vmul.f32 %v4558, %v4588
      %v4598 = vmul.f32 %v4559, %v4588
      %v4599 = vmul.f32 %v4560, %v4588
      %v4600 = vmul.f32 %v4561, %v4588
      %v4601 = vmul.f32 %v4562, %v4588
      %v4602 = vmul.f32 %v4563, %v4588
      %v4603 = vmul.f32 %v4564, %v4588
      %v4604 = vmul.f32 %v4565, %v4588
      %v4605 = vmul.f32 %v4566, %v4588
      %v4606 = vmul.f32 %v4567, %v4588
      %v4607 = vmul.f32 %v4568, %v4588
      %v4608 = vmul.f32 %v4569, %v4588
      %v4609 = vmul.f32 %v4570, %v4588
      %v4610 = vmul.f32 %v4571, %v4588
      %v4611 = vmul.f32 %v4572, %v4588
      %v4612 = vmul.f32 %v4573, %v4588
      %v4613 = vmul.f32 %v4574, %v4588
      %v4614 = vmul.f32 %v4575, %v4588
      %v4615 = vmul.f32 %v4576, %v4588
      %v4616 = vmul.f32 %v4577, %v4588
      %v4617 = vmul.f32 %v4578, %v4588
      %v4618 = vmul.f32 %v4579, %v4588
      %v4619 = vmul.f32 %v4580, %v4588
      %v4620 = vmul.f32 %v4581, %v4588
      %v4621 = vmul.f32 %v4582, %v4588
      %v4622 = vld [vmem:[%s10] sm:$0x1]
      %v4624 = vlaneseq
      %v4625 = vshrl.u32 %v4624, 7
      %v4626 = vsub.s32 0, %v4625
      %v4627 = vrot.slane %v4622, %v4626
      %v4629 = vadd.f32 %v4590, %v4627
      %v4630 = vadd.f32 %v4591, %v4627
      %v4631 = vadd.f32 %v4592, %v4627
      %v4632 = vadd.f32 %v4593, %v4627
      %v4633 = vadd.f32 %v4594, %v4627
      %v4634 = vadd.f32 %v4595, %v4627
      %v4635 = vadd.f32 %v4596, %v4627
      %v4636 = vadd.f32 %v4597, %v4627
      %v4637 = vadd.f32 %v4598, %v4627
      %v4638 = vadd.f32 %v4599, %v4627
      %v4639 = vadd.f32 %v4600, %v4627
      %v4640 = vadd.f32 %v4601, %v4627
      %v4641 = vadd.f32 %v4602, %v4627
      %v4642 = vadd.f32 %v4603, %v4627
      %v4643 = vadd.f32 %v4604, %v4627
      %v4644 = vadd.f32 %v4605, %v4627
      %v4645 = vadd.f32 %v4606, %v4627
      %v4646 = vadd.f32 %v4607, %v4627
      %v4647 = vadd.f32 %v4608, %v4627
      %v4648 = vadd.f32 %v4609, %v4627
      %v4649 = vadd.f32 %v4610, %v4627
      %v4650 = vadd.f32 %v4611, %v4627
      %v4651 = vadd.f32 %v4612, %v4627
      %v4652 = vadd.f32 %v4613, %v4627
      %v4653 = vadd.f32 %v4614, %v4627
      %v4654 = vadd.f32 %v4615, %v4627
      %v4655 = vadd.f32 %v4616, %v4627
      %v4656 = vadd.f32 %v4617, %v4627
      %v4657 = vadd.f32 %v4618, %v4627
      %v4658 = vadd.f32 %v4619, %v4627
      %v4659 = vadd.f32 %v4620, %v4627
      %v4660 = vadd.f32 %v4621, %v4627
      %v4661 = vld [vmem:[%s11] sm:$0xff]
      %v4662 = vld [vmem:[%s11 + $0x8] sm:$0xff]
      %v4663 = vld [vmem:[%s11 + $0x10] sm:$0xff]
      %v4664 = vld [vmem:[%s11 + $0x18] sm:$0xff]
      %v4665 = vpack.c.bf16 %v4630, %v4629
      %v4666 = vpack.c.bf16 %v4632, %v4631
      %v4667 = vpack.c.bf16 %v4634, %v4633
      %v4668 = vpack.c.bf16 %v4636, %v4635
      %v4669 = vpack.c.bf16 %v4638, %v4637
      %v4670 = vpack.c.bf16 %v4640, %v4639
      %v4671 = vpack.c.bf16 %v4642, %v4641
      %v4672 = vpack.c.bf16 %v4644, %v4643
      %v4673 = vpack.c.bf16 %v4646, %v4645
      %v4674 = vpack.c.bf16 %v4648, %v4647
      %v4675 = vpack.c.bf16 %v4650, %v4649
      %v4676 = vpack.c.bf16 %v4652, %v4651
      %v4677 = vpack.c.bf16 %v4654, %v4653
      %v4678 = vpack.c.bf16 %v4656, %v4655
      %v4679 = vpack.c.bf16 %v4658, %v4657
      %v4680 = vpack.c.bf16 %v4660, %v4659
      %v4681 = vpack.c.bf16 %v4662, %v4661
      %v4682 = vpack.c.bf16 %v4664, %v4663
      %v4683 = vld [vmem:[%s12] sm:$0x1]
      %v4685 = vlaneseq
      %v4686 = vshrl.u32 %v4685, 7
      %v4687 = vsub.s32 0, %v4686
      %v4688 = vrot.slane %v4683, %v4687
      %v4691 = vsel %vm536, %v4665, 0
      %v4694 = vsel %vm536, %v4666, 0
      %v4697 = vsel %vm536, %v4667, 0
      %v4700 = vsel %vm536, %v4668, 0
      %v4703 = vsel %vm536, %v4669, 0
      %v4706 = vsel %vm536, %v4670, 0
      %v4709 = vsel %vm536, %v4671, 0
      %v4712 = vsel %vm536, %v4672, 0
      %v4715 = vsel %vm536, %v4673, 0
      %v4718 = vsel %vm536, %v4674, 0
      %v4721 = vsel %vm536, %v4675, 0
      %v4724 = vsel %vm536, %v4676, 0
      %v4727 = vsel %vm536, %v4677, 0
      %v4730 = vsel %vm536, %v4678, 0
      %v4733 = vsel %vm536, %v4679, 0
      %v4736 = vsel %vm536, %v4680, 0
      %4738 = vmatprep.subr.bf16.mxu0 0
      %4739 = vmatpush1.bf16.msra.mxu0 %v4681
      %4740 = vmatprep.subr.bf16.mxu0 0
      %4741 = vmatpush1.bf16.msra.mxu0 %v4682
      %4742 = vmatprep.subr.bf16.mxu0 0
      %4743 = vmatpush1.bf16.msra.mxu0 0
      %4744 = vmatprep.subr.bf16.mxu0 0
      %4745 = vmatpush1.bf16.msra.mxu0 0
      %4746 = vmatprep.subr.bf16.mxu0 0
      %4747 = vmatpush1.bf16.msra.mxu0 0
      %4748 = vmatprep.subr.bf16.mxu0 0
      %4749 = vmatpush1.bf16.msra.mxu0 0
      %4750 = vmatprep.subr.bf16.mxu0 0
      %4751 = vmatpush1.bf16.msra.mxu0 0
      %4752 = vmatprep.subr.bf16.mxu0 0
      %4753 = vmatpush1.bf16.msra.mxu0 0
      %4754 = vmatprep.subr.bf16.mxu0 0
      %4755 = vmatpush1.bf16.msra.mxu0 0
      %4756 = vmatprep.subr.bf16.mxu0 0
      %4757 = vmatpush1.bf16.msra.mxu0 0
      %4758 = vmatprep.subr.bf16.mxu0 0
      %4759 = vmatpush1.bf16.msra.mxu0 0
      %4760 = vmatprep.subr.bf16.mxu0 0
      %4761 = vmatpush1.bf16.msra.mxu0 0
      %4762 = vmatprep.subr.bf16.mxu0 0
      %4763 = vmatpush1.bf16.msra.mxu0 0
      %4764 = vmatprep.subr.bf16.mxu0 0
      %4765 = vmatpush1.bf16.msra.mxu0 0
      %4766 = vmatprep.subr.bf16.mxu0 0
      %4767 = vmatpush1.bf16.msra.mxu0 0
      %4768 = vmatprep.subr.bf16.mxu0 0
      %4769 = vmatpush1.bf16.msra.mxu0 0
      %4770 = vmatprep.mubr.bf16.mxu0 0
      %4771 = vmatmul.mubr.bf16.gmra.mrb[0].mxu0 %v4691
      %v4772 = vpop.f32.mrb[0].mxu0
      %v4773 = vadd.f32 %v4688, %v4772
      %v4774 = vpop.f32.mrb[0].mxu0
      %v4775 = vpop.f32.mrb[0].mxu0
      %v4776 = vadd.f32 %v4688, %v4775
      %v4777 = vpop.f32.mrb[0].mxu0
      %4778 = vmatprep.mubr.bf16.mxu0 0
      %4779 = vmatmul.mubr.bf16.gmra.mrb[0].mxu0 %v4694
      %v4780 = vpop.f32.mrb[0].mxu0
      %v4781 = vadd.f32 %v4688, %v4780
      %v4782 = vpop.f32.mrb[0].mxu0
      %v4783 = vpop.f32.mrb[0].mxu0
      %v4784 = vadd.f32 %v4688, %v4783
      %v4785 = vpop.f32.mrb[0].mxu0
      %4786 = vmatprep.mubr.bf16.mxu0 0
      %4787 = vmatmul.mubr.bf16.gmra.mrb[0].mxu0 %v4697
      %v4788 = vpop.f32.mrb[0].mxu0
      %v4789 = vadd.f32 %v4688, %v4788
      %v4790 = vpop.f32.mrb[0].mxu0
      %v4791 = vpop.f32.mrb[0].mxu0
      %v4792 = vadd.f32 %v4688, %v4791
      %v4793 = vpop.f32.mrb[0].mxu0
      %4794 = vmatprep.mubr.bf16.mxu0 0
      %4795 = vmatmul.mubr.bf16.gmra.mrb[0].mxu0 %v4700
      %v4796 = vpop.f32.mrb[0].mxu0
      %v4797 = vadd.f32 %v4688, %v4796
      %v4798 = vpop.f32.mrb[0].mxu0
      %v4799 = vpop.f32.mrb[0].mxu0
      %v4800 = vadd.f32 %v4688, %v4799
      %v4801 = vpop.f32.mrb[0].mxu0
      %4802 = vmatprep.mubr.bf16.mxu0 0
      %4803 = vmatmul.mubr.bf16.gmra.mrb[0].mxu0 %v4703
      %v4804 = vpop.f32.mrb[0].mxu0
      %v4805 = vadd.f32 %v4688, %v4804
      %v4806 = vpop.f32.mrb[0].mxu0
      %v4807 = vpop.f32.mrb[0].mxu0
      %v4808 = vadd.f32 %v4688, %v4807
      %v4809 = vpop.f32.mrb[0].mxu0
      %4810 = vmatprep.mubr.bf16.mxu0 0
      %4811 = vmatmul.mubr.bf16.gmra.mrb[0].mxu0 %v4706
      %v4812 = vpop.f32.mrb[0].mxu0
      %v4813 = vadd.f32 %v4688, %v4812
      %v4814 = vpop.f32.mrb[0].mxu0
      %v4815 = vpop.f32.mrb[0].mxu0
      %v4816 = vadd.f32 %v4688, %v4815
      %v4817 = vpop.f32.mrb[0].mxu0
      %4818 = vmatprep.mubr.bf16.mxu0 0
      %4819 = vmatmul.mubr.bf16.gmra.mrb[0].mxu0 %v4709
      %v4820 = vpop.f32.mrb[0].mxu0
      %v4821 = vadd.f32 %v4688, %v4820
      %v4822 = vpop.f32.mrb[0].mxu0
      %v4823 = vpop.f32.mrb[0].mxu0
      %v4824 = vadd.f32 %v4688, %v4823
      %v4825 = vpop.f32.mrb[0].mxu0
      %4826 = vmatprep.mubr.bf16.mxu0 0
      %4827 = vmatmul.mubr.bf16.gmra.mrb[0].mxu0 %v4712
      %v4828 = vpop.f32.mrb[0].mxu0
      %v4829 = vadd.f32 %v4688, %v4828
      %v4830 = vpop.f32.mrb[0].mxu0
      %v4831 = vpop.f32.mrb[0].mxu0
      %v4832 = vadd.f32 %v4688, %v4831
      %v4833 = vpop.f32.mrb[0].mxu0
      %4834 = vmatprep.mubr.bf16.mxu0 0
      %4835 = vmatmul.mubr.bf16.gmra.mrb[0].mxu0 %v4715
      %v4836 = vpop.f32.mrb[0].mxu0
      %v4837 = vadd.f32 %v4688, %v4836
      %v4838 = vpop.f32.mrb[0].mxu0
      %v4839 = vpop.f32.mrb[0].mxu0
      %v4840 = vadd.f32 %v4688, %v4839
      %v4841 = vpop.f32.mrb[0].mxu0
      %4842 = vmatprep.mubr.bf16.mxu0 0
      %4843 = vmatmul.mubr.bf16.gmra.mrb[0].mxu0 %v4718
      %v4844 = vpop.f32.mrb[0].mxu0
      %v4845 = vadd.f32 %v4688, %v4844
      %v4846 = vpop.f32.mrb[0].mxu0
      %v4847 = vpop.f32.mrb[0].mxu0
      %v4848 = vadd.f32 %v4688, %v4847
      %v4849 = vpop.f32.mrb[0].mxu0
      %4850 = vmatprep.mubr.bf16.mxu0 0
      %4851 = vmatmul.mubr.bf16.gmra.mrb[0].mxu0 %v4721
      %v4852 = vpop.f32.mrb[0].mxu0
      %v4853 = vadd.f32 %v4688, %v4852
      %v4854 = vpop.f32.mrb[0].mxu0
      %v4855 = vpop.f32.mrb[0].mxu0
      %v4856 = vadd.f32 %v4688, %v4855
      %v4857 = vpop.f32.mrb[0].mxu0
      %4858 = vmatprep.mubr.bf16.mxu0 0
      %4859 = vmatmul.mubr.bf16.gmra.mrb[0].mxu0 %v4724
      %v4860 = vpop.f32.mrb[0].mxu0
      %v4861 = vadd.f32 %v4688, %v4860
      %v4862 = vpop.f32.mrb[0].mxu0
      %v4863 = vpop.f32.mrb[0].mxu0
      %v4864 = vadd.f32 %v4688, %v4863
      %v4865 = vpop.f32.mrb[0].mxu0
      %4866 = vmatprep.mubr.bf16.mxu0 0
      %4867 = vmatmul.mubr.bf16.gmra.mrb[0].mxu0 %v4727
      %v4868 = vpop.f32.mrb[0].mxu0
      %v4869 = vadd.f32 %v4688, %v4868
      %v4870 = vpop.f32.mrb[0].mxu0
      %v4871 = vpop.f32.mrb[0].mxu0
      %v4872 = vadd.f32 %v4688, %v4871
      %v4873 = vpop.f32.mrb[0].mxu0
      %4874 = vmatprep.mubr.bf16.mxu0 0
      %4875 = vmatmul.mubr.bf16.gmra.mrb[0].mxu0 %v4730
      %v4876 = vpop.f32.mrb[0].mxu0
      %v4877 = vadd.f32 %v4688, %v4876
      %v4878 = vpop.f32.mrb[0].mxu0
      %v4879 = vpop.f32.mrb[0].mxu0
      %v4880 = vadd.f32 %v4688, %v4879
      %v4881 = vpop.f32.mrb[0].mxu0
      %4882 = vmatprep.mubr.bf16.mxu0 0
      %4883 = vmatmul.mubr.bf16.gmra.mrb[0].mxu0 %v4733
      %v4884 = vpop.f32.mrb[0].mxu0
      %v4885 = vadd.f32 %v4688, %v4884
      %v4886 = vpop.f32.mrb[0].mxu0
      %v4887 = vpop.f32.mrb[0].mxu0
      %v4888 = vadd.f32 %v4688, %v4887
      %v4889 = vpop.f32.mrb[0].mxu0
      %4890 = vmatprep.mubr.bf16.mxu0 0
      %4891 = vmatmul.mubr.bf16.gmra.mrb[0].mxu0 %v4736
      %v4892 = vpop.f32.mrb[0].mxu0
      %v4893 = vadd.f32 %v4688, %v4892
      %v4894 = vpop.f32.mrb[0].mxu0
      %v4895 = vpop.f32.mrb[0].mxu0
      %v4896 = vadd.f32 %v4688, %v4895
      %v4897 = vpop.f32.mrb[0].mxu0
      %4898 = vdwg.mxu0
      %v4899 = vsub.f32 0.0, %v4773
      %v4900 = vsub.f32 0.0, %v4776
      %v4901 = vsub.f32 0.0, %v4781
      %v4902 = vsub.f32 0.0, %v4784
      %v4903 = vsub.f32 0.0, %v4789
      %v4904 = vsub.f32 0.0, %v4792
      %v4905 = vsub.f32 0.0, %v4797
      %v4906 = vsub.f32 0.0, %v4800
      %v4907 = vsub.f32 0.0, %v4805
      %v4908 = vsub.f32 0.0, %v4808
      %v4909 = vsub.f32 0.0, %v4813
      %v4910 = vsub.f32 0.0, %v4816
      %v4911 = vsub.f32 0.0, %v4821
      %v4912 = vsub.f32 0.0, %v4824
      %v4913 = vsub.f32 0.0, %v4829
      %v4914 = vsub.f32 0.0, %v4832
      %v4915 = vsub.f32 0.0, %v4837
      %v4916 = vsub.f32 0.0, %v4840
      %v4917 = vsub.f32 0.0, %v4845
      %v4918 = vsub.f32 0.0, %v4848
      %v4919 = vsub.f32 0.0, %v4853
      %v4920 = vsub.f32 0.0, %v4856
      %v4921 = vsub.f32 0.0, %v4861
      %v4922 = vsub.f32 0.0, %v4864
      %v4923 = vsub.f32 0.0, %v4869
      %v4924 = vsub.f32 0.0, %v4872
      %v4925 = vsub.f32 0.0, %v4877
      %v4926 = vsub.f32 0.0, %v4880
      %v4927 = vsub.f32 0.0, %v4885
      %v4928 = vsub.f32 0.0, %v4888
      %v4929 = vsub.f32 0.0, %v4893
      %v4930 = vsub.f32 0.0, %v4896
      %v4931 = vmul.f32 %v4899, 1.442695
      %v4932 = vpow.pop %v4931
      %v4933 = vmul.f32 %v4900, 1.442695
      %v4934 = vpow.pop %v4933
      %v4935 = vmul.f32 %v4901, 1.442695
      %v4936 = vpow.pop %v4935
      %v4937 = vmul.f32 %v4902, 1.442695
      %v4938 = vpow.pop %v4937
      %v4939 = vmul.f32 %v4903, 1.442695
      %v4940 = vpow.pop %v4939
      %v4941 = vmul.f32 %v4904, 1.442695
      %v4942 = vpow.pop %v4941
      %v4943 = vmul.f32 %v4905, 1.442695
      %v4944 = vpow.pop %v4943
      %v4945 = vmul.f32 %v4906, 1.442695
      %v4946 = vpow.pop %v4945
      %v4947 = vmul.f32 %v4907, 1.442695
      %v4948 = vpow.pop %v4947
      %v4949 = vmul.f32 %v4908, 1.442695
      %v4950 = vpow.pop %v4949
      %v4951 = vmul.f32 %v4909, 1.442695
      %v4952 = vpow.pop %v4951
      %v4953 = vmul.f32 %v4910, 1.442695
      %v4954 = vpow.pop %v4953
      %v4955 = vmul.f32 %v4911, 1.442695
      %v4956 = vpow.pop %v4955
      %v4957 = vmul.f32 %v4912, 1.442695
      %v4958 = vpow.pop %v4957
      %v4959 = vmul.f32 %v4913, 1.442695
      %v4960 = vpow.pop %v4959
      %v4961 = vmul.f32 %v4914, 1.442695
      %v4962 = vpow.pop %v4961
      %v4963 = vmul.f32 %v4915, 1.442695
      %v4964 = vpow.pop %v4963
      %v4965 = vmul.f32 %v4916, 1.442695
      %v4966 = vpow.pop %v4965
      %v4967 = vmul.f32 %v4917, 1.442695
      %v4968 = vpow.pop %v4967
      %v4969 = vmul.f32 %v4918, 1.442695
      %v4970 = vpow.pop %v4969
      %v4971 = vmul.f32 %v4919, 1.442695
      %v4972 = vpow.pop %v4971
      %v4973 = vmul.f32 %v4920, 1.442695
      %v4974 = vpow.pop %v4973
      %v4975 = vmul.f32 %v4921, 1.442695
      %v4976 = vpow.pop %v4975
      %v4977 = vmul.f32 %v4922, 1.442695
      %v4978 = vpow.pop %v4977
      %v4979 = vmul.f32 %v4923, 1.442695
      %v4980 = vpow.pop %v4979
      %v4981 = vmul.f32 %v4924, 1.442695
      %v4982 = vpow.pop %v4981
      %v4983 = vmul.f32 %v4925, 1.442695
      %v4984 = vpow.pop %v4983
      %v4985 = vmul.f32 %v4926, 1.442695
      %v4986 = vpow.pop %v4985
      %v4987 = vmul.f32 %v4927, 1.442695
      %v4988 = vpow.pop %v4987
      %v4989 = vmul.f32 %v4928, 1.442695
      %v4990 = vpow.pop %v4989
      %v4991 = vmul.f32 %v4929, 1.442695
      %v4992 = vpow.pop %v4991
      %v4993 = vmul.f32 %v4930, 1.442695
      %v4994 = vpow.pop %v4993
      %v4995 = vadd.f32 %v4932, 1.0
      %v4996 = vadd.f32 %v4934, 1.0
      %v4997 = vadd.f32 %v4936, 1.0
      %v4998 = vadd.f32 %v4938, 1.0
      %v4999 = vadd.f32 %v4940, 1.0
      %v5000 = vadd.f32 %v4942, 1.0
      %v5001 = vadd.f32 %v4944, 1.0
      %v5002 = vadd.f32 %v4946, 1.0
      %v5003 = vadd.f32 %v4948, 1.0
      %v5004 = vadd.f32 %v4950, 1.0
      %v5005 = vadd.f32 %v4952, 1.0
      %v5006 = vadd.f32 %v4954, 1.0
      %v5007 = vadd.f32 %v4956, 1.0
      %v5008 = vadd.f32 %v4958, 1.0
      %v5009 = vadd.f32 %v4960, 1.0
      %v5010 = vadd.f32 %v4962, 1.0
      %v5011 = vadd.f32 %v4964, 1.0
      %v5012 = vadd.f32 %v4966, 1.0
      %v5013 = vadd.f32 %v4968, 1.0
      %v5014 = vadd.f32 %v4970, 1.0
      %v5015 = vadd.f32 %v4972, 1.0
      %v5016 = vadd.f32 %v4974, 1.0
      %v5017 = vadd.f32 %v4976, 1.0
      %v5018 = vadd.f32 %v4978, 1.0
      %v5019 = vadd.f32 %v4980, 1.0
      %v5020 = vadd.f32 %v4982, 1.0
      %v5021 = vadd.f32 %v4984, 1.0
      %v5022 = vadd.f32 %v4986, 1.0
      %v5023 = vadd.f32 %v4988, 1.0
      %v5024 = vadd.f32 %v4990, 1.0
      %v5025 = vadd.f32 %v4992, 1.0
      %v5026 = vadd.f32 %v4994, 1.0
      %v5027 = vrcp.pop %v4995
      %v5028 = vmul.f32 1.0, %v5027
      %v5029 = vrcp.pop %v4996
      %v5030 = vmul.f32 1.0, %v5029
      %v5031 = vrcp.pop %v4997
      %v5032 = vmul.f32 1.0, %v5031
      %v5033 = vrcp.pop %v4998
      %v5034 = vmul.f32 1.0, %v5033
      %v5035 = vrcp.pop %v4999
      %v5036 = vmul.f32 1.0, %v5035
      %v5037 = vrcp.pop %v5000
      %v5038 = vmul.f32 1.0, %v5037
      %v5039 = vrcp.pop %v5001
      %v5040 = vmul.f32 1.0, %v5039
      %v5041 = vrcp.pop %v5002
      %v5042 = vmul.f32 1.0, %v5041
      %v5043 = vrcp.pop %v5003
      %v5044 = vmul.f32 1.0, %v5043
      %v5045 = vrcp.pop %v5004
      %v5046 = vmul.f32 1.0, %v5045
      %v5047 = vrcp.pop %v5005
      %v5048 = vmul.f32 1.0, %v5047
      %v5049 = vrcp.pop %v5006
      %v5050 = vmul.f32 1.0, %v5049
      %v5051 = vrcp.pop %v5007
      %v5052 = vmul.f32 1.0, %v5051
      %v5053 = vrcp.pop %v5008
      %v5054 = vmul.f32 1.0, %v5053
      %v5055 = vrcp.pop %v5009
      %v5056 = vmul.f32 1.0, %v5055
      %v5057 = vrcp.pop %v5010
      %v5058 = vmul.f32 1.0, %v5057
      %v5059 = vrcp.pop %v5011
      %v5060 = vmul.f32 1.0, %v5059
      %v5061 = vrcp.pop %v5012
      %v5062 = vmul.f32 1.0, %v5061
      %v5063 = vrcp.pop %v5013
      %v5064 = vmul.f32 1.0, %v5063
      %v5065 = vrcp.pop %v5014
      %v5066 = vmul.f32 1.0, %v5065
      %v5067 = vrcp.pop %v5015
      %v5068 = vmul.f32 1.0, %v5067
      %v5069 = vrcp.pop %v5016
      %v5070 = vmul.f32 1.0, %v5069
      %v5071 = vrcp.pop %v5017
      %v5072 = vmul.f32 1.0, %v5071
      %v5073 = vrcp.pop %v5018
      %v5074 = vmul.f32 1.0, %v5073
      %v5075 = vrcp.pop %v5019
      %v5076 = vmul.f32 1.0, %v5075
      %v5077 = vrcp.pop %v5020
      %v5078 = vmul.f32 1.0, %v5077
      %v5079 = vrcp.pop %v5021
      %v5080 = vmul.f32 1.0, %v5079
      %v5081 = vrcp.pop %v5022
      %v5082 = vmul.f32 1.0, %v5081
      %v5083 = vrcp.pop %v5023
      %v5084 = vmul.f32 1.0, %v5083
      %v5085 = vrcp.pop %v5024
      %v5086 = vmul.f32 1.0, %v5085
      %v5087 = vrcp.pop %v5025
      %v5088 = vmul.f32 1.0, %v5087
      %v5089 = vrcp.pop %v5026
      %v5090 = vmul.f32 1.0, %v5089
      %v5091 = vmul.f32 %v4773, %v5028
      %v5092 = vmul.f32 %v4776, %v5030
      %v5093 = vmul.f32 %v4781, %v5032
      %v5094 = vmul.f32 %v4784, %v5034
      %v5095 = vmul.f32 %v4789, %v5036
      %v5096 = vmul.f32 %v4792, %v5038
      %v5097 = vmul.f32 %v4797, %v5040
      %v5098 = vmul.f32 %v4800, %v5042
      %v5099 = vmul.f32 %v4805, %v5044
      %v5100 = vmul.f32 %v4808, %v5046
      %v5101 = vmul.f32 %v4813, %v5048
      %v5102 = vmul.f32 %v4816, %v5050
      %v5103 = vmul.f32 %v4821, %v5052
      %v5104 = vmul.f32 %v4824, %v5054
      %v5105 = vmul.f32 %v4829, %v5056
      %v5106 = vmul.f32 %v4832, %v5058
      %v5107 = vmul.f32 %v4837, %v5060
      %v5108 = vmul.f32 %v4840, %v5062
      %v5109 = vmul.f32 %v4845, %v5064
      %v5110 = vmul.f32 %v4848, %v5066
      %v5111 = vmul.f32 %v4853, %v5068
      %v5112 = vmul.f32 %v4856, %v5070
      %v5113 = vmul.f32 %v4861, %v5072
      %v5114 = vmul.f32 %v4864, %v5074
      %v5115 = vmul.f32 %v4869, %v5076
      %v5116 = vmul.f32 %v4872, %v5078
      %v5117 = vmul.f32 %v4877, %v5080
      %v5118 = vmul.f32 %v4880, %v5082
      %v5119 = vmul.f32 %v4885, %v5084
      %v5120 = vmul.f32 %v4888, %v5086
      %v5121 = vmul.f32 %v4893, %v5088
      %v5122 = vmul.f32 %v4896, %v5090
      %v5123 = vld [vmem:[%s13] sm:$0xff]
      %v5124 = vld [vmem:[%s13 + $0x8] sm:$0xff]
      %v5125 = vld [vmem:[%s13 + $0x10] sm:$0xff]
      %v5126 = vld [vmem:[%s13 + $0x18] sm:$0xff]
      %v5127 = vld [vmem:[%s13 + $0x20] sm:$0xff]
      %v5128 = vld [vmem:[%s13 + $0x28] sm:$0xff]
      %v5129 = vld [vmem:[%s13 + $0x30] sm:$0xff]
      %v5130 = vld [vmem:[%s13 + $0x38] sm:$0xff]
      %v5131 = vld [vmem:[%s13 + $0x40] sm:$0xff]
      %v5132 = vld [vmem:[%s13 + $0x48] sm:$0xff]
      %v5133 = vld [vmem:[%s13 + $0x50] sm:$0xff]
      %v5134 = vld [vmem:[%s13 + $0x58] sm:$0xff]
      %v5135 = vld [vmem:[%s13 + $0x60] sm:$0xff]
      %v5136 = vld [vmem:[%s13 + $0x68] sm:$0xff]
      %v5137 = vld [vmem:[%s13 + $0x70] sm:$0xff]
      %v5138 = vld [vmem:[%s13 + $0x78] sm:$0xff]
      %v5139 = vpack.c.bf16 %v5092, %v5091
      %v5140 = vpack.c.bf16 %v5094, %v5093
      %v5141 = vpack.c.bf16 %v5096, %v5095
      %v5142 = vpack.c.bf16 %v5098, %v5097
      %v5143 = vpack.c.bf16 %v5100, %v5099
      %v5144 = vpack.c.bf16 %v5102, %v5101
      %v5145 = vpack.c.bf16 %v5104, %v5103
      %v5146 = vpack.c.bf16 %v5106, %v5105
      %v5147 = vpack.c.bf16 %v5108, %v5107
      %v5148 = vpack.c.bf16 %v5110, %v5109
      %v5149 = vpack.c.bf16 %v5112, %v5111
      %v5150 = vpack.c.bf16 %v5114, %v5113
      %v5151 = vpack.c.bf16 %v5116, %v5115
      %v5152 = vpack.c.bf16 %v5118, %v5117
      %v5153 = vpack.c.bf16 %v5120, %v5119
      %v5154 = vpack.c.bf16 %v5122, %v5121
      %v5155 = vpack.c.bf16 %v5124, %v5123
      %v5156 = vpack.c.bf16 %v5126, %v5125
      %v5157 = vpack.c.bf16 %v5128, %v5127
      %v5158 = vpack.c.bf16 %v5130, %v5129
      %v5159 = vpack.c.bf16 %v5132, %v5131
      %v5160 = vpack.c.bf16 %v5134, %v5133
      %v5161 = vpack.c.bf16 %v5136, %v5135
      %v5162 = vpack.c.bf16 %v5138, %v5137
      %5163 = vmatprep.subr.bf16.mxu0 0
      %5164 = vmatpush1.bf16.msra.mxu0 %v5155
      %5165 = vmatprep.subr.bf16.mxu0 0
      %5166 = vmatpush1.bf16.msra.mxu0 %v5156
      %5167 = vmatprep.subr.bf16.mxu0 0
      %5168 = vmatpush1.bf16.msra.mxu0 %v5157
      %5169 = vmatprep.subr.bf16.mxu0 0
      %5170 = vmatpush1.bf16.msra.mxu0 %v5158
      %5171 = vmatprep.subr.bf16.mxu0 0
      %5172 = vmatpush1.bf16.msra.mxu0 %v5159
      %5173 = vmatprep.subr.bf16.mxu0 0
      %5174 = vmatpush1.bf16.msra.mxu0 %v5160
      %5175 = vmatprep.subr.bf16.mxu0 0
      %5176 = vmatpush1.bf16.msra.mxu0 %v5161
      %5177 = vmatprep.subr.bf16.mxu0 0
      %5178 = vmatpush1.bf16.msra.mxu0 %v5162
      %5179 = vmatprep.subr.bf16.mxu0 0
      %5180 = vmatpush1.bf16.msra.mxu0 0
      %5181 = vmatprep.subr.bf16.mxu0 0
      %5182 = vmatpush1.bf16.msra.mxu0 0
      %5183 = vmatprep.subr.bf16.mxu0 0
      %5184 = vmatpush1.bf16.msra.mxu0 0
      %5185 = vmatprep.subr.bf16.mxu0 0
      %5186 = vmatpush1.bf16.msra.mxu0 0
      %5187 = vmatprep.subr.bf16.mxu0 0
      %5188 = vmatpush1.bf16.msra.mxu0 0
      %5189 = vmatprep.subr.bf16.mxu0 0
      %5190 = vmatpush1.bf16.msra.mxu0 0
      %5191 = vmatprep.subr.bf16.mxu0 0
      %5192 = vmatpush1.bf16.msra.mxu0 0
      %5193 = vmatprep.subr.bf16.mxu0 0
      %5194 = vmatpush1.bf16.msra.mxu0 0
      %5195 = vmatprep.mubr.bf16.mxu0 0
      %5196 = vmatmul.mubr.bf16.gmra.mrb[0].mxu0 %v5139
      %v5197 = vpop.f32.mrb[0].mxu0
      %v5198 = vadd.f32 0.0, %v5197
      %v5199 = vpop.f32.mrb[0].mxu0
      %v5200 = vpop.f32.mrb[0].mxu0
      %v5201 = vadd.f32 0.0, %v5200
      %v5202 = vpop.f32.mrb[0].mxu0
      %5203 = vmatprep.mubr.bf16.mxu0 0
      %5204 = vmatmul.mubr.bf16.gmra.mrb[0].mxu0 %v5140
      %v5205 = vpop.f32.mrb[0].mxu0
      %v5206 = vadd.f32 0.0, %v5205
      %v5207 = vpop.f32.mrb[0].mxu0
      %v5208 = vpop.f32.mrb[0].mxu0
      %v5209 = vadd.f32 0.0, %v5208
      %v5210 = vpop.f32.mrb[0].mxu0
      %5211 = vmatprep.mubr.bf16.mxu0 0
      %5212 = vmatmul.mubr.bf16.gmra.mrb[0].mxu0 %v5141
      %v5213 = vpop.f32.mrb[0].mxu0
      %v5214 = vadd.f32 0.0, %v5213
      %v5215 = vpop.f32.mrb[0].mxu0
      %v5216 = vpop.f32.mrb[0].mxu0
      %v5217 = vadd.f32 0.0, %v5216
      %v5218 = vpop.f32.mrb[0].mxu0
      %5219 = vmatprep.mubr.bf16.mxu0 0
      %5220 = vmatmul.mubr.bf16.gmra.mrb[0].mxu0 %v5142
      %v5221 = vpop.f32.mrb[0].mxu0
      %v5222 = vadd.f32 0.0, %v5221
      %v5223 = vpop.f32.mrb[0].mxu0
      %v5224 = vpop.f32.mrb[0].mxu0
      %v5225 = vadd.f32 0.0, %v5224
      %v5226 = vpop.f32.mrb[0].mxu0
      %5227 = vmatprep.mubr.bf16.mxu0 0
      %5228 = vmatmul.mubr.bf16.gmra.mrb[0].mxu0 %v5143
      %v5229 = vpop.f32.mrb[0].mxu0
      %v5230 = vadd.f32 0.0, %v5229
      %v5231 = vpop.f32.mrb[0].mxu0
      %v5232 = vpop.f32.mrb[0].mxu0
      %v5233 = vadd.f32 0.0, %v5232
      %v5234 = vpop.f32.mrb[0].mxu0
      %5235 = vmatprep.mubr.bf16.mxu0 0
      %5236 = vmatmul.mubr.bf16.gmra.mrb[0].mxu0 %v5144
      %v5237 = vpop.f32.mrb[0].mxu0
      %v5238 = vadd.f32 0.0, %v5237
      %v5239 = vpop.f32.mrb[0].mxu0
      %v5240 = vpop.f32.mrb[0].mxu0
      %v5241 = vadd.f32 0.0, %v5240
      %v5242 = vpop.f32.mrb[0].mxu0
      %5243 = vmatprep.mubr.bf16.mxu0 0
      %5244 = vmatmul.mubr.bf16.gmra.mrb[0].mxu0 %v5145
      %v5245 = vpop.f32.mrb[0].mxu0
      %v5246 = vadd.f32 0.0, %v5245
      %v5247 = vpop.f32.mrb[0].mxu0
      %v5248 = vpop.f32.mrb[0].mxu0
      %v5249 = vadd.f32 0.0, %v5248
      %v5250 = vpop.f32.mrb[0].mxu0
      %5251 = vmatprep.mubr.bf16.mxu0 0
      %5252 = vmatmul.mubr.bf16.gmra.mrb[0].mxu0 %v5146
      %v5253 = vpop.f32.mrb[0].mxu0
      %v5254 = vadd.f32 0.0, %v5253
      %v5255 = vpop.f32.mrb[0].mxu0
      %v5256 = vpop.f32.mrb[0].mxu0
      %v5257 = vadd.f32 0.0, %v5256
      %v5258 = vpop.f32.mrb[0].mxu0
      %5259 = vmatprep.mubr.bf16.mxu0 0
      %5260 = vmatmul.mubr.bf16.gmra.mrb[0].mxu0 %v5147
      %v5261 = vpop.f32.mrb[0].mxu0
      %v5262 = vadd.f32 0.0, %v5261
      %v5263 = vpop.f32.mrb[0].mxu0
      %v5264 = vpop.f32.mrb[0].mxu0
      %v5265 = vadd.f32 0.0, %v5264
      %v5266 = vpop.f32.mrb[0].mxu0
      %5267 = vmatprep.mubr.bf16.mxu0 0
      %5268 = vmatmul.mubr.bf16.gmra.mrb[0].mxu0 %v5148
      %v5269 = vpop.f32.mrb[0].mxu0
      %v5270 = vadd.f32 0.0, %v5269
      %v5271 = vpop.f32.mrb[0].mxu0
      %v5272 = vpop.f32.mrb[0].mxu0
      %v5273 = vadd.f32 0.0, %v5272
      %v5274 = vpop.f32.mrb[0].mxu0
      %5275 = vmatprep.mubr.bf16.mxu0 0
      %5276 = vmatmul.mubr.bf16.gmra.mrb[0].mxu0 %v5149
      %v5277 = vpop.f32.mrb[0].mxu0
      %v5278 = vadd.f32 0.0, %v5277
      %v5279 = vpop.f32.mrb[0].mxu0
      %v5280 = vpop.f32.mrb[0].mxu0
      %v5281 = vadd.f32 0.0, %v5280
      %v5282 = vpop.f32.mrb[0].mxu0
      %5283 = vmatprep.mubr.bf16.mxu0 0
      %5284 = vmatmul.mubr.bf16.gmra.mrb[0].mxu0 %v5150
      %v5285 = vpop.f32.mrb[0].mxu0
      %v5286 = vadd.f32 0.0, %v5285
      %v5287 = vpop.f32.mrb[0].mxu0
      %v5288 = vpop.f32.mrb[0].mxu0
      %v5289 = vadd.f32 0.0, %v5288
      %v5290 = vpop.f32.mrb[0].mxu0
      %5291 = vmatprep.mubr.bf16.mxu0 0
      %5292 = vmatmul.mubr.bf16.gmra.mrb[0].mxu0 %v5151
      %v5293 = vpop.f32.mrb[0].mxu0
      %v5294 = vadd.f32 0.0, %v5293
      %v5295 = vpop.f32.mrb[0].mxu0
      %v5296 = vpop.f32.mrb[0].mxu0
      %v5297 = vadd.f32 0.0, %v5296
      %v5298 = vpop.f32.mrb[0].mxu0
      %5299 = vmatprep.mubr.bf16.mxu0 0
      %5300 = vmatmul.mubr.bf16.gmra.mrb[0].mxu0 %v5152
      %v5301 = vpop.f32.mrb[0].mxu0
      %v5302 = vadd.f32 0.0, %v5301
      %v5303 = vpop.f32.mrb[0].mxu0
      %v5304 = vpop.f32.mrb[0].mxu0
      %v5305 = vadd.f32 0.0, %v5304
      %v5306 = vpop.f32.mrb[0].mxu0
      %5307 = vmatprep.mubr.bf16.mxu0 0
      %5308 = vmatmul.mubr.bf16.gmra.mrb[0].mxu0 %v5153
      %v5309 = vpop.f32.mrb[0].mxu0
      %v5310 = vadd.f32 0.0, %v5309
      %v5311 = vpop.f32.mrb[0].mxu0
      %v5312 = vpop.f32.mrb[0].mxu0
      %v5313 = vadd.f32 0.0, %v5312
      %v5314 = vpop.f32.mrb[0].mxu0
      %5315 = vmatprep.mubr.bf16.mxu0 0
      %5316 = vmatmul.mubr.bf16.gmra.mrb[0].mxu0 %v5154
      %v5317 = vpop.f32.mrb[0].mxu0
      %v5318 = vadd.f32 0.0, %v5317
      %v5319 = vpop.f32.mrb[0].mxu0
      %v5320 = vpop.f32.mrb[0].mxu0
      %v5321 = vadd.f32 0.0, %v5320
      %v5322 = vpop.f32.mrb[0].mxu0
      %5323 = vdwg.mxu0
      %v5324 = vadd.f32 %v4135, %v5198
      %v5325 = vadd.f32 %v4136, %v5201
      %v5326 = vadd.f32 %v4137, %v5206
      %v5327 = vadd.f32 %v4138, %v5209
      %v5328 = vadd.f32 %v4139, %v5214
      %v5329 = vadd.f32 %v4140, %v5217
      %v5330 = vadd.f32 %v4141, %v5222
      %v5331 = vadd.f32 %v4142, %v5225
      %v5332 = vadd.f32 %v4143, %v5230
      %v5333 = vadd.f32 %v4144, %v5233
      %v5334 = vadd.f32 %v4145, %v5238
      %v5335 = vadd.f32 %v4146, %v5241
      %v5336 = vadd.f32 %v4147, %v5246
      %v5337 = vadd.f32 %v4148, %v5249
      %v5338 = vadd.f32 %v4149, %v5254
      %v5339 = vadd.f32 %v4150, %v5257
      %v5340 = vadd.f32 %v4151, %v5262
      %v5341 = vadd.f32 %v4152, %v5265
      %v5342 = vadd.f32 %v4153, %v5270
      %v5343 = vadd.f32 %v4154, %v5273
      %v5344 = vadd.f32 %v4155, %v5278
      %v5345 = vadd.f32 %v4156, %v5281
      %v5346 = vadd.f32 %v4157, %v5286
      %v5347 = vadd.f32 %v4158, %v5289
      %v5348 = vadd.f32 %v4159, %v5294
      %v5349 = vadd.f32 %v4160, %v5297
      %v5350 = vadd.f32 %v4161, %v5302
      %v5351 = vadd.f32 %v4162, %v5305
      %v5352 = vadd.f32 %v4163, %v5310
      %v5353 = vadd.f32 %v4164, %v5313
      %v5354 = vadd.f32 %v4165, %v5318
      %v5355 = vadd.f32 %v4166, %v5321
      %v5356 = vld [vmem:[%s14] sm:$0x1]
      %v5358 = vlaneseq
      %v5359 = vshrl.u32 %v5358, 7
      %v5360 = vsub.s32 0, %v5359
      %v5361 = vrot.slane %v5356, %v5360
      %v5363 = vadd.f32 %v5324, %v5361
      %v5364 = vadd.f32 %v5325, %v5361
      %v5365 = vadd.f32 %v5326, %v5361
      %v5366 = vadd.f32 %v5327, %v5361
      %v5367 = vadd.f32 %v5328, %v5361
      %v5368 = vadd.f32 %v5329, %v5361
      %v5369 = vadd.f32 %v5330, %v5361
      %v5370 = vadd.f32 %v5331, %v5361
      %v5371 = vadd.f32 %v5332, %v5361
      %v5372 = vadd.f32 %v5333, %v5361
      %v5373 = vadd.f32 %v5334, %v5361
      %v5374 = vadd.f32 %v5335, %v5361
      %v5375 = vadd.f32 %v5336, %v5361
      %v5376 = vadd.f32 %v5337, %v5361
      %v5377 = vadd.f32 %v5338, %v5361
      %v5378 = vadd.f32 %v5339, %v5361
      %v5379 = vadd.f32 %v5340, %v5361
      %v5380 = vadd.f32 %v5341, %v5361
      %v5381 = vadd.f32 %v5342, %v5361
      %v5382 = vadd.f32 %v5343, %v5361
      %v5383 = vadd.f32 %v5344, %v5361
      %v5384 = vadd.f32 %v5345, %v5361
      %v5385 = vadd.f32 %v5346, %v5361
      %v5386 = vadd.f32 %v5347, %v5361
      %v5387 = vadd.f32 %v5348, %v5361
      %v5388 = vadd.f32 %v5349, %v5361
      %v5389 = vadd.f32 %v5350, %v5361
      %v5390 = vadd.f32 %v5351, %v5361
      %v5391 = vadd.f32 %v5352, %v5361
      %v5392 = vadd.f32 %v5353, %v5361
      %v5393 = vadd.f32 %v5354, %v5361
      %v5394 = vadd.f32 %v5355, %v5361
      %5395 = vst.msk [vmem:[%s501] sm:$0xff] %vm536, %v5363
      %5396 = vst.msk [vmem:[%s501 + $0x8] sm:$0xff] %vm536, %v5364
      %5397 = vst.msk [vmem:[%s501 + $0x10] sm:$0xff] %vm536, %v5365
      %5398 = vst.msk [vmem:[%s501 + $0x18] sm:$0xff] %vm536, %v5366
      %5399 = vst.msk [vmem:[%s501 + $0x20] sm:$0xff] %vm536, %v5367
      %5400 = vst.msk [vmem:[%s501 + $0x28] sm:$0xff] %vm536, %v5368
      %5401 = vst.msk [vmem:[%s501 + $0x30] sm:$0xff] %vm536, %v5369
      %5402 = vst.msk [vmem:[%s501 + $0x38] sm:$0xff] %vm536, %v5370
      %5403 = vst.msk [vmem:[%s501 + $0x40] sm:$0xff] %vm536, %v5371
      %5404 = vst.msk [vmem:[%s501 + $0x48] sm:$0xff] %vm536, %v5372
      %5405 = vst.msk [vmem:[%s501 + $0x50] sm:$0xff] %vm536, %v5373
      %5406 = vst.msk [vmem:[%s501 + $0x58] sm:$0xff] %vm536, %v5374
      %5407 = vst.msk [vmem:[%s501 + $0x60] sm:$0xff] %vm536, %v5375
      %5408 = vst.msk [vmem:[%s501 + $0x68] sm:$0xff] %vm536, %v5376
      %5409 = vst.msk [vmem:[%s501 + $0x70] sm:$0xff] %vm536, %v5377
      %5410 = vst.msk [vmem:[%s501 + $0x78] sm:$0xff] %vm536, %v5378
      %5411 = vst.msk [vmem:[%s501 + $0x80] sm:$0xff] %vm536, %v5379
      %5412 = vst.msk [vmem:[%s501 + $0x88] sm:$0xff] %vm536, %v5380
      %5413 = vst.msk [vmem:[%s501 + $0x90] sm:$0xff] %vm536, %v5381
      %5414 = vst.msk [vmem:[%s501 + $0x98] sm:$0xff] %vm536, %v5382
      %5415 = vst.msk [vmem:[%s501 + $0xa0] sm:$0xff] %vm536, %v5383
      %5416 = vst.msk [vmem:[%s501 + $0xa8] sm:$0xff] %vm536, %v5384
      %5417 = vst.msk [vmem:[%s501 + $0xb0] sm:$0xff] %vm536, %v5385
      %5418 = vst.msk [vmem:[%s501 + $0xb8] sm:$0xff] %vm536, %v5386
      %5419 = vst.msk [vmem:[%s501 + $0xc0] sm:$0xff] %vm536, %v5387
      %5420 = vst.msk [vmem:[%s501 + $0xc8] sm:$0xff] %vm536, %v5388
      %5421 = vst.msk [vmem:[%s501 + $0xd0] sm:$0xff] %vm536, %v5389
      %5422 = vst.msk [vmem:[%s501 + $0xd8] sm:$0xff] %vm536, %v5390
      %5423 = vst.msk [vmem:[%s501 + $0xe0] sm:$0xff] %vm536, %v5391
      %5424 = vst.msk [vmem:[%s501 + $0xe8] sm:$0xff] %vm536, %v5392
      %5425 = vst.msk [vmem:[%s501 + $0xf0] sm:$0xff] %vm536, %v5393
      %5426 = vst.msk [vmem:[%s501 + $0xf8] sm:$0xff] %vm536, %v5394
      %s5427 = smul.u32 4, %s26
      %p5428 = scmp.lt.s32.totalorder %s5427, 7
      %s5429 = scalar_select %p5428, %s5427, 7
      %s5430 = smul.addr %s5429, 8
      %s5431 = smul.addr %s5430, 8
      %s5432 = scalar_lea.vmem %s15, %s5431
      // Predicated region
      $region81: #{_lambda_.3} parent=79 // pred_check
        %p5433 = pneg %p364
      $region82: #{_lambda_.3} parent=79 // pred_check_branch
        %5435 = sbr.rel (%p5433) target = $region84
      $region83: #{_lambda_.3} parent=79 // pred_region
        %s5436 = smul.u32 4, %s26
      $region84: #{_lambda_.3} parent=79 // pred_fallthru
        _
    $region80: #{_lambda_.3} parent=5 // pred_fallthru
      _
    %p5437 = scmp.le.s32.totalorder 2, %s21
    // Predicated region
    $region85: #{_lambda_.3} parent=5 // pred_check
      %p5438 = pneg %p5437
    $region86: #{_lambda_.3} parent=5 // pred_check_branch
      %5440 = sbr.rel (%p5438) target = $region88
    $region87: #{_lambda_.3} parent=5 // pred_region
      %s5441 = ssub.s32 %s21, 2
      // Predicated region
      $region89: #{_lambda_.3} parent=87 // pred_check
        %p5442 = pneg %p370
      $region90: #{_lambda_.3} parent=87 // pred_check_branch
        %5444 = sbr.rel (%p5442) target = $region92
      $region91: #{_lambda_.3} parent=87 // pred_region
        %s5445 = smul.u32 4, %s27
        %p5446 = scmp.lt.s32.totalorder %s5445, 7
        %s5447 = scalar_select %p5446, %s5445, 7
        %s5448 = smul.addr %s5447, 8
        %s5449 = smul.addr %s5448, 8
        %s5450 = scalar_lea.vmem %s15, %s5449
      $region92: #{_lambda_.3} parent=87 // pred_fallthru
        _
    $region88: #{_lambda_.3} parent=5 // pred_fallthru
      _
  $region6: #{_lambda_.3} parent=0 // loop_footer
    %s25 = sadd.s32 1, %s21
  $region7: #{_lambda_.3} parent=0 // loop_footer_branch
    %20 = sbr.rel target = $region3
  $region8: #{_lambda_.3} parent=0 // loop_exit
    _

// kernel: _lambda_.2
$region0: #{_lambda_.2}
  #allocation0 [shape = 'u32[]', space=smem, size = 0x4, offset = 0x4, fixed_abs, tag = 'smem constant byte address 0x4 - core index']
  #allocation1 [shape = 'u32[144,128]{1,0:T(1,128)}', space=vmem, size = 0x12000, scoped, tag = 'internal scratch']
  %s0 = inlined_call_operand.vmem [shape: f32[8,64,4], index: 0, kind: input, shape index: {}]
  %s1 = inlined_call_operand.vmem [shape: f32[2,64,64], index: 1, kind: input, shape index: {}]
  %s2 = inlined_call_operand.vmem [shape: f32[4,32], index: 2, kind: input, shape index: {}]
  %s3 = inlined_call_operand.vmem [shape: f32[1,32], index: 3, kind: input, shape index: {}]
  %s4 = inlined_call_operand.vmem [shape: f32[1,32], index: 4, kind: input, shape index: {}]
  %s5 = inlined_call_operand.vmem [shape: f32[1,32], index: 5, kind: input, shape index: {}]
  %s6 = inlined_call_operand.vmem [shape: f32[32,96], index: 6, kind: input, shape index: {}]
  %s7 = inlined_call_operand.vmem [shape: f32[1,96], index: 7, kind: input, shape index: {}]
  %s8 = inlined_call_operand.vmem [shape: f32[32,32], index: 8, kind: input, shape index: {}]
  %s9 = inlined_call_operand.vmem [shape: f32[1,32], index: 9, kind: input, shape index: {}]
  %s10 = inlined_call_operand.vmem [shape: f32[1,32], index: 10, kind: input, shape index: {}]
  %s11 = inlined_call_operand.vmem [shape: f32[1,32], index: 11, kind: input, shape index: {}]
  %s12 = inlined_call_operand.vmem [shape: f32[32,128], index: 12, kind: input, shape index: {}]
  %s13 = inlined_call_operand.vmem [shape: f32[1,128], index: 13, kind: input, shape index: {}]
  %s14 = inlined_call_operand.vmem [shape: f32[128,32], index: 14, kind: input, shape index: {}]
  %s15 = inlined_call_operand.vmem [shape: f32[1,32], index: 15, kind: input, shape index: {}]
  %s16 = inlined_call_operand.vmem [shape: f32[8,64,32], index: 16, kind: output, shape index: {}]
  %s17 = sld [smem:[#allocation0]]
  $region97: #{_lambda_.2} parent=0
    _
  %s19 = ssub.s32 1, %s17
  %s20 = scalar_select 0, %s19, %s17
  loop: start=0, step=1, limit=4
  $region2: #{_lambda_.2} parent=0 // loop_pre_header
    _
  $region3: #{_lambda_.2} parent=0 // loop_header
    %s22 = sphi 0, %s26
    %p23 = scmp.ge.s32.totalorder %s22, 4
    %s32 = sphi 0, %s34
    %s35 = sphi 0, %s32
    %s36 = sphi 0, %s35
    %s52 = sphi 0, %s36
    %s56 = sphi 0, %s56
    %s58 = sphi 0, %s56
    %s59 = sphi 0, %s58
    %s73 = sphi 0, %s59
    %s77 = sphi 0, %s77
    %s79 = sphi 0, %s77
    %s80 = sphi 0, %s79
    %s94 = sphi 0, %s80
    %s98 = sphi 0, %s98
    %s100 = sphi 0, %s98
    %s101 = sphi 0, %s100
    %s115 = sphi 0, %s101
    %s119 = sphi 0, %s119
    %s121 = sphi 0, %s119
    %s122 = sphi 0, %s121
    %s136 = sphi 0, %s122
    %s140 = sphi 0, %s140
    %s142 = sphi 0, %s140
    %s143 = sphi 0, %s142
    %s157 = sphi 0, %s143
    %s161 = sphi 0, %s161
    %s163 = sphi 0, %s161
    %s164 = sphi 0, %s163
    %s178 = sphi 0, %s164
    %s182 = sphi 0, %s182
    %s184 = sphi 0, %s182
    %s185 = sphi 0, %s184
    %s199 = sphi 0, %s185
    %s203 = sphi 0, %s203
    %s205 = sphi 0, %s203
    %s206 = sphi 0, %s205
    %s220 = sphi 0, %s206
    %s224 = sphi 0, %s224
    %s226 = sphi 0, %s224
    %s227 = sphi 0, %s226
    %s241 = sphi 0, %s227
    %s245 = sphi 0, %s245
    %s247 = sphi 0, %s245
    %s248 = sphi 0, %s247
    %s262 = sphi 0, %s248
    %s266 = sphi 0, %s266
    %s268 = sphi 0, %s266
    %s269 = sphi 0, %s268
    %s283 = sphi 0, %s269
    %s287 = sphi 0, %s287
    %s289 = sphi 0, %s287
    %s290 = sphi 0, %s289
    %s304 = sphi 0, %s290
    %s308 = sphi 0, %s308
    %s310 = sphi 0, %s308
    %s311 = sphi 0, %s310
    %s325 = sphi 0, %s311
    %s329 = sphi 0, %s329
    %s331 = sphi 0, %s329
    %s332 = sphi 0, %s331
    %s346 = sphi 0, %s332
    %s350 = sphi 0, %s350
    %s352 = sphi 0, %s350
    %s353 = sphi 0, %s352
    %s367 = sphi 0, %s353
    %s373 = sphi 0, %s375
    %s376 = sphi 0, %s373
    %s377 = sphi 0, %s376
    %s393 = sphi 0, %s377
  $region4: #{_lambda_.2} parent=0 // loop_header_branch
    %25 = sbr.rel (%p23) target = $region8
  $region5: #{_lambda_.2} parent=0 // loop_body
    %s27 = ssub.s32 %s22, 1
    %s28 = ssub.s32 %s22, 2
    %s29 = sadd.s32 %s22, 1
    %s30 = ssub.s32 %s22, %s29
    %p31 = scmp.eq.s32.totalorder %s30, 0
    %s33 = sadd.s32 %s32, 1
    %s34 = scalar_select %p31, %s32, %s33
    %p37 = pneg %p31
    %p38 = scmp.eq.s32.totalorder %s22, 1
    %p39 = por %p37, %p38
    %p40 = scmp.ne.s32.totalorder %s32, %s35
    %p41 = scmp.eq.s32.totalorder %s22, 0
    %p42 = por %p40, %p41
    %p43 = scmp.ne.s32.totalorder %s32, %s35
    %p44 = scmp.eq.s32.totalorder %s27, 1
    %p45 = por %p43, %p44
    %p46 = scmp.ne.s32.totalorder %s35, %s36
    %p47 = scmp.eq.s32.totalorder %s27, 0
    %p48 = por %p46, %p47
    %p49 = scmp.ne.s32.totalorder %s35, %s36
    %p50 = scmp.eq.s32.totalorder %s28, 1
    %p51 = por %p49, %p50
    %p53 = scmp.ne.s32.totalorder %s36, %s52
    %p54 = scmp.eq.s32.totalorder %s28, 0
    %p55 = por %p53, %p54
    %s57 = sadd.s32 %s56, 1
    %p60 = scmp.eq.s32.totalorder %s22, 1
    %p61 = scmp.ne.s32.totalorder %s56, %s58
    %p62 = scmp.eq.s32.totalorder %s22, 0
    %p63 = por %p61, %p62
    %p64 = scmp.ne.s32.totalorder %s56, %s58
    %p65 = scmp.eq.s32.totalorder %s27, 1
    %p66 = por %p64, %p65
    %p67 = scmp.ne.s32.totalorder %s58, %s59
    %p68 = scmp.eq.s32.totalorder %s27, 0
    %p69 = por %p67, %p68
    %p70 = scmp.ne.s32.totalorder %s58, %s59
    %p71 = scmp.eq.s32.totalorder %s28, 1
    %p72 = por %p70, %p71
    %p74 = scmp.ne.s32.totalorder %s59, %s73
    %p75 = scmp.eq.s32.totalorder %s28, 0
    %p76 = por %p74, %p75
    %s78 = sadd.s32 %s77, 1
    %p81 = scmp.eq.s32.totalorder %s22, 1
    %p82 = scmp.ne.s32.totalorder %s77, %s79
    %p83 = scmp.eq.s32.totalorder %s22, 0
    %p84 = por %p82, %p83
    %p85 = scmp.ne.s32.totalorder %s77, %s79
    %p86 = scmp.eq.s32.totalorder %s27, 1
    %p87 = por %p85, %p86
    %p88 = scmp.ne.s32.totalorder %s79, %s80
    %p89 = scmp.eq.s32.totalorder %s27, 0
    %p90 = por %p88, %p89
    %p91 = scmp.ne.s32.totalorder %s79, %s80
    %p92 = scmp.eq.s32.totalorder %s28, 1
    %p93 = por %p91, %p92
    %p95 = scmp.ne.s32.totalorder %s80, %s94
    %p96 = scmp.eq.s32.totalorder %s28, 0
    %p97 = por %p95, %p96
    %s99 = sadd.s32 %s98, 1
    %p102 = scmp.eq.s32.totalorder %s22, 1
    %p103 = scmp.ne.s32.totalorder %s98, %s100
    %p104 = scmp.eq.s32.totalorder %s22, 0
    %p105 = por %p103, %p104
    %p106 = scmp.ne.s32.totalorder %s98, %s100
    %p107 = scmp.eq.s32.totalorder %s27, 1
    %p108 = por %p106, %p107
    %p109 = scmp.ne.s32.totalorder %s100, %s101
    %p110 = scmp.eq.s32.totalorder %s27, 0
    %p111 = por %p109, %p110
    %p112 = scmp.ne.s32.totalorder %s100, %s101
    %p113 = scmp.eq.s32.totalorder %s28, 1
    %p114 = por %p112, %p113
    %p116 = scmp.ne.s32.totalorder %s101, %s115
    %p117 = scmp.eq.s32.totalorder %s28, 0
    %p118 = por %p116, %p117
    %s120 = sadd.s32 %s119, 1
    %p123 = scmp.eq.s32.totalorder %s22, 1
    %p124 = scmp.ne.s32.totalorder %s119, %s121
    %p125 = scmp.eq.s32.totalorder %s22, 0
    %p126 = por %p124, %p125
    %p127 = scmp.ne.s32.totalorder %s119, %s121
    %p128 = scmp.eq.s32.totalorder %s27, 1
    %p129 = por %p127, %p128
    %p130 = scmp.ne.s32.totalorder %s121, %s122
    %p131 = scmp.eq.s32.totalorder %s27, 0
    %p132 = por %p130, %p131
    %p133 = scmp.ne.s32.totalorder %s121, %s122
    %p134 = scmp.eq.s32.totalorder %s28, 1
    %p135 = por %p133, %p134
    %p137 = scmp.ne.s32.totalorder %s122, %s136
    %p138 = scmp.eq.s32.totalorder %s28, 0
    %p139 = por %p137, %p138
    %s141 = sadd.s32 %s140, 1
    %p144 = scmp.eq.s32.totalorder %s22, 1
    %p145 = scmp.ne.s32.totalorder %s140, %s142
    %p146 = scmp.eq.s32.totalorder %s22, 0
    %p147 = por %p145, %p146
    %p148 = scmp.ne.s32.totalorder %s140, %s142
    %p149 = scmp.eq.s32.totalorder %s27, 1
    %p150 = por %p148, %p149
    %p151 = scmp.ne.s32.totalorder %s142, %s143
    %p152 = scmp.eq.s32.totalorder %s27, 0
    %p153 = por %p151, %p152
    %p154 = scmp.ne.s32.totalorder %s142, %s143
    %p155 = scmp.eq.s32.totalorder %s28, 1
    %p156 = por %p154, %p155
    %p158 = scmp.ne.s32.totalorder %s143, %s157
    %p159 = scmp.eq.s32.totalorder %s28, 0
    %p160 = por %p158, %p159
    %s162 = sadd.s32 %s161, 1
    %p165 = scmp.eq.s32.totalorder %s22, 1
    %p166 = scmp.ne.s32.totalorder %s161, %s163
    %p167 = scmp.eq.s32.totalorder %s22, 0
    %p168 = por %p166, %p167
    %p169 = scmp.ne.s32.totalorder %s161, %s163
    %p170 = scmp.eq.s32.totalorder %s27, 1
    %p171 = por %p169, %p170
    %p172 = scmp.ne.s32.totalorder %s163, %s164
    %p173 = scmp.eq.s32.totalorder %s27, 0
    %p174 = por %p172, %p173
    %p175 = scmp.ne.s32.totalorder %s163, %s164
    %p176 = scmp.eq.s32.totalorder %s28, 1
    %p177 = por %p175, %p176
    %p179 = scmp.ne.s32.totalorder %s164, %s178
    %p180 = scmp.eq.s32.totalorder %s28, 0
    %p181 = por %p179, %p180
    %s183 = sadd.s32 %s182, 1
    %p186 = scmp.eq.s32.totalorder %s22, 1
    %p187 = scmp.ne.s32.totalorder %s182, %s184
    %p188 = scmp.eq.s32.totalorder %s22, 0
    %p189 = por %p187, %p188
    %p190 = scmp.ne.s32.totalorder %s182, %s184
    %p191 = scmp.eq.s32.totalorder %s27, 1
    %p192 = por %p190, %p191
    %p193 = scmp.ne.s32.totalorder %s184, %s185
    %p194 = scmp.eq.s32.totalorder %s27, 0
    %p195 = por %p193, %p194
    %p196 = scmp.ne.s32.totalorder %s184, %s185
    %p197 = scmp.eq.s32.totalorder %s28, 1
    %p198 = por %p196, %p197
    %p200 = scmp.ne.s32.totalorder %s185, %s199
    %p201 = scmp.eq.s32.totalorder %s28, 0
    %p202 = por %p200, %p201
    %s204 = sadd.s32 %s203, 1
    %p207 = scmp.eq.s32.totalorder %s22, 1
    %p208 = scmp.ne.s32.totalorder %s203, %s205
    %p209 = scmp.eq.s32.totalorder %s22, 0
    %p210 = por %p208, %p209
    %p211 = scmp.ne.s32.totalorder %s203, %s205
    %p212 = scmp.eq.s32.totalorder %s27, 1
    %p213 = por %p211, %p212
    %p214 = scmp.ne.s32.totalorder %s205, %s206
    %p215 = scmp.eq.s32.totalorder %s27, 0
    %p216 = por %p214, %p215
    %p217 = scmp.ne.s32.totalorder %s205, %s206
    %p218 = scmp.eq.s32.totalorder %s28, 1
    %p219 = por %p217, %p218
    %p221 = scmp.ne.s32.totalorder %s206, %s220
    %p222 = scmp.eq.s32.totalorder %s28, 0
    %p223 = por %p221, %p222
    %s225 = sadd.s32 %s224, 1
    %p228 = scmp.eq.s32.totalorder %s22, 1
    %p229 = scmp.ne.s32.totalorder %s224, %s226
    %p230 = scmp.eq.s32.totalorder %s22, 0
    %p231 = por %p229, %p230
    %p232 = scmp.ne.s32.totalorder %s224, %s226
    %p233 = scmp.eq.s32.totalorder %s27, 1
    %p234 = por %p232, %p233
    %p235 = scmp.ne.s32.totalorder %s226, %s227
    %p236 = scmp.eq.s32.totalorder %s27, 0
    %p237 = por %p235, %p236
    %p238 = scmp.ne.s32.totalorder %s226, %s227
    %p239 = scmp.eq.s32.totalorder %s28, 1
    %p240 = por %p238, %p239
    %p242 = scmp.ne.s32.totalorder %s227, %s241
    %p243 = scmp.eq.s32.totalorder %s28, 0
    %p244 = por %p242, %p243
    %s246 = sadd.s32 %s245, 1
    %p249 = scmp.eq.s32.totalorder %s22, 1
    %p250 = scmp.ne.s32.totalorder %s245, %s247
    %p251 = scmp.eq.s32.totalorder %s22, 0
    %p252 = por %p250, %p251
    %p253 = scmp.ne.s32.totalorder %s245, %s247
    %p254 = scmp.eq.s32.totalorder %s27, 1
    %p255 = por %p253, %p254
    %p256 = scmp.ne.s32.totalorder %s247, %s248
    %p257 = scmp.eq.s32.totalorder %s27, 0
    %p258 = por %p256, %p257
    %p259 = scmp.ne.s32.totalorder %s247, %s248
    %p260 = scmp.eq.s32.totalorder %s28, 1
    %p261 = por %p259, %p260
    %p263 = scmp.ne.s32.totalorder %s248, %s262
    %p264 = scmp.eq.s32.totalorder %s28, 0
    %p265 = por %p263, %p264
    %s267 = sadd.s32 %s266, 1
    %p270 = scmp.eq.s32.totalorder %s22, 1
    %p271 = scmp.ne.s32.totalorder %s266, %s268
    %p272 = scmp.eq.s32.totalorder %s22, 0
    %p273 = por %p271, %p272
    %p274 = scmp.ne.s32.totalorder %s266, %s268
    %p275 = scmp.eq.s32.totalorder %s27, 1
    %p276 = por %p274, %p275
    %p277 = scmp.ne.s32.totalorder %s268, %s269
    %p278 = scmp.eq.s32.totalorder %s27, 0
    %p279 = por %p277, %p278
    %p280 = scmp.ne.s32.totalorder %s268, %s269
    %p281 = scmp.eq.s32.totalorder %s28, 1
    %p282 = por %p280, %p281
    %p284 = scmp.ne.s32.totalorder %s269, %s283
    %p285 = scmp.eq.s32.totalorder %s28, 0
    %p286 = por %p284, %p285
    %s288 = sadd.s32 %s287, 1
    %p291 = scmp.eq.s32.totalorder %s22, 1
    %p292 = scmp.ne.s32.totalorder %s287, %s289
    %p293 = scmp.eq.s32.totalorder %s22, 0
    %p294 = por %p292, %p293
    %p295 = scmp.ne.s32.totalorder %s287, %s289
    %p296 = scmp.eq.s32.totalorder %s27, 1
    %p297 = por %p295, %p296
    %p298 = scmp.ne.s32.totalorder %s289, %s290
    %p299 = scmp.eq.s32.totalorder %s27, 0
    %p300 = por %p298, %p299
    %p301 = scmp.ne.s32.totalorder %s289, %s290
    %p302 = scmp.eq.s32.totalorder %s28, 1
    %p303 = por %p301, %p302
    %p305 = scmp.ne.s32.totalorder %s290, %s304
    %p306 = scmp.eq.s32.totalorder %s28, 0
    %p307 = por %p305, %p306
    %s309 = sadd.s32 %s308, 1
    %p312 = scmp.eq.s32.totalorder %s22, 1
    %p313 = scmp.ne.s32.totalorder %s308, %s310
    %p314 = scmp.eq.s32.totalorder %s22, 0
    %p315 = por %p313, %p314
    %p316 = scmp.ne.s32.totalorder %s308, %s310
    %p317 = scmp.eq.s32.totalorder %s27, 1
    %p318 = por %p316, %p317
    %p319 = scmp.ne.s32.totalorder %s310, %s311
    %p320 = scmp.eq.s32.totalorder %s27, 0
    %p321 = por %p319, %p320
    %p322 = scmp.ne.s32.totalorder %s310, %s311
    %p323 = scmp.eq.s32.totalorder %s28, 1
    %p324 = por %p322, %p323
    %p326 = scmp.ne.s32.totalorder %s311, %s325
    %p327 = scmp.eq.s32.totalorder %s28, 0
    %p328 = por %p326, %p327
    %s330 = sadd.s32 %s329, 1
    %p333 = scmp.eq.s32.totalorder %s22, 1
    %p334 = scmp.ne.s32.totalorder %s329, %s331
    %p335 = scmp.eq.s32.totalorder %s22, 0
    %p336 = por %p334, %p335
    %p337 = scmp.ne.s32.totalorder %s329, %s331
    %p338 = scmp.eq.s32.totalorder %s27, 1
    %p339 = por %p337, %p338
    %p340 = scmp.ne.s32.totalorder %s331, %s332
    %p341 = scmp.eq.s32.totalorder %s27, 0
    %p342 = por %p340, %p341
    %p343 = scmp.ne.s32.totalorder %s331, %s332
    %p344 = scmp.eq.s32.totalorder %s28, 1
    %p345 = por %p343, %p344
    %p347 = scmp.ne.s32.totalorder %s332, %s346
    %p348 = scmp.eq.s32.totalorder %s28, 0
    %p349 = por %p347, %p348
    %s351 = sadd.s32 %s350, 1
    %p354 = scmp.eq.s32.totalorder %s22, 1
    %p355 = scmp.ne.s32.totalorder %s350, %s352
    %p356 = scmp.eq.s32.totalorder %s22, 0
    %p357 = por %p355, %p356
    %p358 = scmp.ne.s32.totalorder %s350, %s352
    %p359 = scmp.eq.s32.totalorder %s27, 1
    %p360 = por %p358, %p359
    %p361 = scmp.ne.s32.totalorder %s352, %s353
    %p362 = scmp.eq.s32.totalorder %s27, 0
    %p363 = por %p361, %p362
    %p364 = scmp.ne.s32.totalorder %s352, %s353
    %p365 = scmp.eq.s32.totalorder %s28, 1
    %p366 = por %p364, %p365
    %p368 = scmp.ne.s32.totalorder %s353, %s367
    %p369 = scmp.eq.s32.totalorder %s28, 0
    %p370 = por %p368, %p369
    %s371 = ssub.s32 %s22, %s29
    %p372 = scmp.eq.s32.totalorder %s371, 0
    %s374 = sadd.s32 %s373, 1
    %s375 = scalar_select %p372, %s373, %s374
    %p378 = pneg %p372
    %p379 = scmp.eq.s32.totalorder %s22, 1
    %p380 = por %p378, %p379
    %p381 = scmp.ne.s32.totalorder %s373, %s376
    %p382 = scmp.eq.s32.totalorder %s22, 0
    %p383 = por %p381, %p382
    %p384 = scmp.ne.s32.totalorder %s373, %s376
    %p385 = scmp.eq.s32.totalorder %s27, 1
    %p386 = por %p384, %p385
    %p387 = scmp.ne.s32.totalorder %s376, %s377
    %p388 = scmp.eq.s32.totalorder %s27, 0
    %p389 = por %p387, %p388
    %p390 = scmp.ne.s32.totalorder %s376, %s377
    %p391 = scmp.eq.s32.totalorder %s28, 1
    %p392 = por %p390, %p391
    %p394 = scmp.ne.s32.totalorder %s377, %s393
    %p395 = scmp.eq.s32.totalorder %s28, 0
    %p396 = por %p394, %p395
    %p397 = scmp.le.s32.totalorder 1, %s22
    %p398 = scmp.lt.s32.totalorder %s22, 3
    %p399 = pnand %p397, %p398
    %p400 = pneg %p399
    // Predicated region
    $region9: #{_lambda_.2} parent=5 // pred_check
      _
    $region10: #{_lambda_.2} parent=5 // pred_check_branch
      %402 = sbr.rel (%p399) target = $region12
    $region11: #{_lambda_.2} parent=5 // pred_region
      %s403 = ssub.s32 %s22, 1
      // Predicated region
      $region13: #{_lambda_.2} parent=11 // pred_check
        %p404 = pneg %p69
      $region14: #{_lambda_.2} parent=11 // pred_check_branch
        %406 = sbr.rel (%p404) target = $region16
      $region15: #{_lambda_.2} parent=11 // pred_region
        _
      $region16: #{_lambda_.2} parent=11 // pred_fallthru
        _
      // Predicated region
      $region17: #{_lambda_.2} parent=11 // pred_check
        %p407 = pneg %p90
      $region18: #{_lambda_.2} parent=11 // pred_check_branch
        %409 = sbr.rel (%p407) target = $region20
      $region19: #{_lambda_.2} parent=11 // pred_region
        _
      $region20: #{_lambda_.2} parent=11 // pred_fallthru
        _
      // Predicated region
      $region21: #{_lambda_.2} parent=11 // pred_check
        %p410 = pneg %p111
      $region22: #{_lambda_.2} parent=11 // pred_check_branch
        %412 = sbr.rel (%p410) target = $region24
      $region23: #{_lambda_.2} parent=11 // pred_region
        _
      $region24: #{_lambda_.2} parent=11 // pred_fallthru
        _
      // Predicated region
      $region25: #{_lambda_.2} parent=11 // pred_check
        %p413 = pneg %p132
      $region26: #{_lambda_.2} parent=11 // pred_check_branch
        %415 = sbr.rel (%p413) target = $region28
      $region27: #{_lambda_.2} parent=11 // pred_region
        _
      $region28: #{_lambda_.2} parent=11 // pred_fallthru
        _
      // Predicated region
      $region29: #{_lambda_.2} parent=11 // pred_check
        %p416 = pneg %p153
      $region30: #{_lambda_.2} parent=11 // pred_check_branch
        %418 = sbr.rel (%p416) target = $region32
      $region31: #{_lambda_.2} parent=11 // pred_region
        _
      $region32: #{_lambda_.2} parent=11 // pred_fallthru
        _
      // Predicated region
      $region33: #{_lambda_.2} parent=11 // pred_check
        %p419 = pneg %p174
      $region34: #{_lambda_.2} parent=11 // pred_check_branch
        %421 = sbr.rel (%p419) target = $region36
      $region35: #{_lambda_.2} parent=11 // pred_region
        _
      $region36: #{_lambda_.2} parent=11 // pred_fallthru
        _
      // Predicated region
      $region37: #{_lambda_.2} parent=11 // pred_check
        %p422 = pneg %p195
      $region38: #{_lambda_.2} parent=11 // pred_check_branch
        %424 = sbr.rel (%p422) target = $region40
      $region39: #{_lambda_.2} parent=11 // pred_region
        _
      $region40: #{_lambda_.2} parent=11 // pred_fallthru
        _
      // Predicated region
      $region41: #{_lambda_.2} parent=11 // pred_check
        %p425 = pneg %p216
      $region42: #{_lambda_.2} parent=11 // pred_check_branch
        %427 = sbr.rel (%p425) target = $region44
      $region43: #{_lambda_.2} parent=11 // pred_region
        _
      $region44: #{_lambda_.2} parent=11 // pred_fallthru
        _
      // Predicated region
      $region45: #{_lambda_.2} parent=11 // pred_check
        %p428 = pneg %p237
      $region46: #{_lambda_.2} parent=11 // pred_check_branch
        %430 = sbr.rel (%p428) target = $region48
      $region47: #{_lambda_.2} parent=11 // pred_region
        _
      $region48: #{_lambda_.2} parent=11 // pred_fallthru
        _
      // Predicated region
      $region49: #{_lambda_.2} parent=11 // pred_check
        %p431 = pneg %p258
      $region50: #{_lambda_.2} parent=11 // pred_check_branch
        %433 = sbr.rel (%p431) target = $region52
      $region51: #{_lambda_.2} parent=11 // pred_region
        _
      $region52: #{_lambda_.2} parent=11 // pred_fallthru
        _
      // Predicated region
      $region53: #{_lambda_.2} parent=11 // pred_check
        %p434 = pneg %p279
      $region54: #{_lambda_.2} parent=11 // pred_check_branch
        %436 = sbr.rel (%p434) target = $region56
      $region55: #{_lambda_.2} parent=11 // pred_region
        _
      $region56: #{_lambda_.2} parent=11 // pred_fallthru
        _
      // Predicated region
      $region57: #{_lambda_.2} parent=11 // pred_check
        %p437 = pneg %p300
      $region58: #{_lambda_.2} parent=11 // pred_check_branch
        %439 = sbr.rel (%p437) target = $region60
      $region59: #{_lambda_.2} parent=11 // pred_region
        _
      $region60: #{_lambda_.2} parent=11 // pred_fallthru
        _
      // Predicated region
      $region61: #{_lambda_.2} parent=11 // pred_check
        %p440 = pneg %p321
      $region62: #{_lambda_.2} parent=11 // pred_check_branch
        %442 = sbr.rel (%p440) target = $region64
      $region63: #{_lambda_.2} parent=11 // pred_region
        _
      $region64: #{_lambda_.2} parent=11 // pred_fallthru
        _
      // Predicated region
      $region65: #{_lambda_.2} parent=11 // pred_check
        %p443 = pneg %p342
      $region66: #{_lambda_.2} parent=11 // pred_check_branch
        %445 = sbr.rel (%p443) target = $region68
      $region67: #{_lambda_.2} parent=11 // pred_region
        _
      $region68: #{_lambda_.2} parent=11 // pred_fallthru
        _
      // Predicated region
      $region69: #{_lambda_.2} parent=11 // pred_check
        %p446 = pneg %p363
      $region70: #{_lambda_.2} parent=11 // pred_check_branch
        %448 = sbr.rel (%p446) target = $region72
      $region71: #{_lambda_.2} parent=11 // pred_region
        _
      $region72: #{_lambda_.2} parent=11 // pred_fallthru
        _
    $region12: #{_lambda_.2} parent=5 // pred_fallthru
      _
    %p449 = scmp.lt.s32.totalorder %s22, 2
    // Predicated region
    $region73: #{_lambda_.2} parent=5 // pred_check
      %p450 = pneg %p449
    $region74: #{_lambda_.2} parent=5 // pred_check_branch
      %452 = sbr.rel (%p450) target = $region76
    $region75: #{_lambda_.2} parent=5 // pred_region
      // Predicated region
      $region77: #{_lambda_.2} parent=75 // pred_check
        %p453 = pneg %p42
      $region78: #{_lambda_.2} parent=75 // pred_check_branch
        %455 = sbr.rel (%p453) target = $region80
      $region79: #{_lambda_.2} parent=75 // pred_region
        %s456 = smul.u32 4, %s22
        %p457 = scmp.lt.s32.totalorder %s456, 7
        %s458 = scalar_select %p457, %s456, 7
        %s459 = smul.addr %s458, 8
        %s460 = smul.addr %s459, 8
        %s461 = scalar_lea.vmem %s0, %s460
        %s462 = smul.u32 4, %s22
      $region80: #{_lambda_.2} parent=75 // pred_fallthru
        _
    $region76: #{_lambda_.2} parent=5 // pred_fallthru
      _
    %p463 = scmp.le.s32.totalorder 1, %s22
    %p464 = scmp.lt.s32.totalorder %s22, 3
    %p465 = pnand %p463, %p464
    %p466 = pneg %p465
    // Predicated region
    $region81: #{_lambda_.2} parent=5 // pred_check
      _
    $region82: #{_lambda_.2} parent=5 // pred_check_branch
      %468 = sbr.rel (%p465) target = $region84
    $region83: #{_lambda_.2} parent=5 // pred_region
      %s469 = ssub.s32 %s22, 1
      %s470 = smul.u32 4, %s27
      %p471 = scmp.lt.s32.totalorder %s470, 7
      %s472 = scalar_select %p471, %s470, 7
      %s473 = smul.addr %s472, 8
      %s474 = smul.addr %s473, 8
      %s475 = scalar_lea.vmem %s0, %s474
      %p476 = pneg %p48
      %p477 = pneg %p45
      %p478 = pneg %p69
      %p479 = pneg %p66
      %p480 = pneg %p90
      %p481 = pneg %p87
      %p482 = pneg %p111
      %p483 = pneg %p108
      %p484 = pneg %p132
      %p485 = pneg %p129
      %p486 = pneg %p153
      %p487 = pneg %p150
      %p488 = pneg %p174
      %p489 = pneg %p171
      %p490 = pneg %p195
      %p491 = pneg %p192
      %p492 = pneg %p216
      %p493 = pneg %p213
      %p494 = pneg %p237
      %p495 = pneg %p234
      %p496 = pneg %p258
      %p497 = pneg %p255
      %p498 = pneg %p279
      %p499 = pneg %p276
      %p500 = pneg %p300
      %p501 = pneg %p297
      %p502 = pneg %p321
      %p503 = pneg %p318
      %p504 = pneg %p342
      %p505 = pneg %p339
      %p506 = pneg %p363
      %p507 = pneg %p360
      %p508 = pneg %p389
      %p509 = pneg %p386
      %s510 = smul.u32 4, %s27
      %p511 = scmp.lt.s32.totalorder %s510, 7
      %s512 = scalar_select %p511, %s510, 7
      %s513 = smul.addr %s512, 8
      %s514 = smul.addr %s513, 8
      %s515 = scalar_lea.vmem %s16, %s514
      %s516 = smul.u32 4, %s27
      %p517 = scmp.lt.s32.totalorder %s516, 7
      %s518 = scalar_select %p517, %s516, 7
      %s519 = smul.addr %s518, 8
      %s520 = smul.addr %s519, 8
      %s521 = scalar_lea.vmem %s0, %s520
      %s522 = smul.u32 4, %s27
      %s523 = smul.u32 4, %s27
      %p524 = scmp.lt.s32.totalorder %s523, 7
      %s525 = scalar_select %p524, %s523, 7
      %s526 = smul.addr %s525, 8
      %s527 = smul.addr %s526, 8
      %s528 = scalar_lea.vmem %s16, %s527
      %s529 = smul.u32 4, %s27
      %v531 = vld [vmem:[%s521] sm:$0xff]
      %v532 = vld [vmem:[%s521 + $0x8] sm:$0xff]
      %v533 = vld [vmem:[%s521 + $0x10] sm:$0xff]
      %v534 = vld [vmem:[%s521 + $0x18] sm:$0xff]
      %v535 = vld [vmem:[%s521 + $0x20] sm:$0xff]
      %v536 = vld [vmem:[%s521 + $0x28] sm:$0xff]
      %v537 = vld [vmem:[%s521 + $0x30] sm:$0xff]
      %v538 = vld [vmem:[%s521 + $0x38] sm:$0xff]
      %v539 = vld [vmem:[%s521 + $0x40] sm:$0xff]
      %v540 = vld [vmem:[%s521 + $0x48] sm:$0xff]
      %v541 = vld [vmem:[%s521 + $0x50] sm:$0xff]
      %v542 = vld [vmem:[%s521 + $0x58] sm:$0xff]
      %v543 = vld [vmem:[%s521 + $0x60] sm:$0xff]
      %v544 = vld [vmem:[%s521 + $0x68] sm:$0xff]
      %v545 = vld [vmem:[%s521 + $0x70] sm:$0xff]
      %v546 = vld [vmem:[%s521 + $0x78] sm:$0xff]
      %v547 = vld [vmem:[%s521 + $0x80] sm:$0xff]
      %v548 = vld [vmem:[%s521 + $0x88] sm:$0xff]
      %v549 = vld [vmem:[%s521 + $0x90] sm:$0xff]
      %v550 = vld [vmem:[%s521 + $0x98] sm:$0xff]
      %v551 = vld [vmem:[%s521 + $0xa0] sm:$0xff]
      %v552 = vld [vmem:[%s521 + $0xa8] sm:$0xff]
      %v553 = vld [vmem:[%s521 + $0xb0] sm:$0xff]
      %v554 = vld [vmem:[%s521 + $0xb8] sm:$0xff]
      %v555 = vld [vmem:[%s521 + $0xc0] sm:$0xff]
      %v556 = vld [vmem:[%s521 + $0xc8] sm:$0xff]
      %v557 = vld [vmem:[%s521 + $0xd0] sm:$0xff]
      %v558 = vld [vmem:[%s521 + $0xd8] sm:$0xff]
      %v559 = vld [vmem:[%s521 + $0xe0] sm:$0xff]
      %v560 = vld [vmem:[%s521 + $0xe8] sm:$0xff]
      %v561 = vld [vmem:[%s521 + $0xf0] sm:$0xff]
      %v562 = vld [vmem:[%s521 + $0xf8] sm:$0xff]
      %v563 = vld [vmem:[%s2] sm:$0xf]
      %v564 = vpack.c.bf16 %v532, %v531
      %v565 = vpack.c.bf16 %v534, %v533
      %v566 = vpack.c.bf16 %v536, %v535
      %v567 = vpack.c.bf16 %v538, %v537
      %v568 = vpack.c.bf16 %v540, %v539
      %v569 = vpack.c.bf16 %v542, %v541
      %v570 = vpack.c.bf16 %v544, %v543
      %v571 = vpack.c.bf16 %v546, %v545
      %v572 = vpack.c.bf16 %v548, %v547
      %v573 = vpack.c.bf16 %v550, %v549
      %v574 = vpack.c.bf16 %v552, %v551
      %v575 = vpack.c.bf16 %v554, %v553
      %v576 = vpack.c.bf16 %v556, %v555
      %v577 = vpack.c.bf16 %v558, %v557
      %v578 = vpack.c.bf16 %v560, %v559
      %v579 = vpack.c.bf16 %v562, %v561
      %v580 = vpack.c.bf16 %v563, %v563
      %v581 = vld [vmem:[%s3] sm:$0x1]
      %v583 = vlaneseq
      %v584 = vshrl.u32 %v583, 7
      %v585 = vsub.s32 0, %v584
      %v586 = vrot.slane %v581, %v585
      %vm588 = vcmask 31744
      %v590 = vsel %vm588, %v564, 0
      %v593 = vsel %vm588, %v565, 0
      %v596 = vsel %vm588, %v566, 0
      %v599 = vsel %vm588, %v567, 0
      %v602 = vsel %vm588, %v568, 0
      %v605 = vsel %vm588, %v569, 0
      %v608 = vsel %vm588, %v570, 0
      %v611 = vsel %vm588, %v571, 0
      %v614 = vsel %vm588, %v572, 0
      %v617 = vsel %vm588, %v573, 0
      %v620 = vsel %vm588, %v574, 0
      %v623 = vsel %vm588, %v575, 0
      %v626 = vsel %vm588, %v576, 0
      %v629 = vsel %vm588, %v577, 0
      %v632 = vsel %vm588, %v578, 0
      %v635 = vsel %vm588, %v579, 0
      %vm637 = vcmask 1041408
      %v639 = vsel %vm637, %v580, 0
      %641 = vmatprep.subr.bf16.mxu0 0
      %642 = vmatpush1.bf16.msra.mxu0 %v639
      %643 = vmatprep.subr.bf16.mxu0 0
      %644 = vmatpush1.bf16.msra.mxu0 0
      %645 = vmatprep.subr.bf16.mxu0 0
      %646 = vmatpush1.bf16.msra.mxu0 0
      %647 = vmatprep.subr.bf16.mxu0 0
      %648 = vmatpush1.bf16.msra.mxu0 0
      %649 = vmatprep.subr.bf16.mxu0 0
      %650 = vmatpush1.bf16.msra.mxu0 0
      %651 = vmatprep.subr.bf16.mxu0 0
      %652 = vmatpush1.bf16.msra.mxu0 0
      %653 = vmatprep.subr.bf16.mxu0 0
      %654 = vmatpush1.bf16.msra.mxu0 0
      %655 = vmatprep.subr.bf16.mxu0 0
      %656 = vmatpush1.bf16.msra.mxu0 0
      %657 = vmatprep.subr.bf16.mxu0 0
      %658 = vmatpush1.bf16.msra.mxu0 0
      %659 = vmatprep.subr.bf16.mxu0 0
      %660 = vmatpush1.bf16.msra.mxu0 0
      %661 = vmatprep.subr.bf16.mxu0 0
      %662 = vmatpush1.bf16.msra.mxu0 0
      %663 = vmatprep.subr.bf16.mxu0 0
      %664 = vmatpush1.bf16.msra.mxu0 0
      %665 = vmatprep.subr.bf16.mxu0 0
      %666 = vmatpush1.bf16.msra.mxu0 0
      %667 = vmatprep.subr.bf16.mxu0 0
      %668 = vmatpush1.bf16.msra.mxu0 0
      %669 = vmatprep.subr.bf16.mxu0 0
      %670 = vmatpush1.bf16.msra.mxu0 0
      %671 = vmatprep.subr.bf16.mxu0 0
      %672 = vmatpush1.bf16.msra.mxu0 0
      %673 = vmatprep.mubr.bf16.mxu0 0
      %674 = vmatmul.mubr.bf16.gmra.mrb[0].mxu0 %v590
      %v675 = vpop.f32.mrb[0].mxu0
      %v676 = vadd.f32 %v586, %v675
      %v677 = vpop.f32.mrb[0].mxu0
      %v678 = vpop.f32.mrb[0].mxu0
      %v679 = vadd.f32 %v586, %v678
      %v680 = vpop.f32.mrb[0].mxu0
      %681 = vmatprep.mubr.bf16.mxu0 0
      %682 = vmatmul.mubr.bf16.gmra.mrb[0].mxu0 %v593
      %v683 = vpop.f32.mrb[0].mxu0
      %v684 = vadd.f32 %v586, %v683
      %v685 = vpop.f32.mrb[0].mxu0
      %v686 = vpop.f32.mrb[0].mxu0
      %v687 = vadd.f32 %v586, %v686
      %v688 = vpop.f32.mrb[0].mxu0
      %689 = vmatprep.mubr.bf16.mxu0 0
      %690 = vmatmul.mubr.bf16.gmra.mrb[0].mxu0 %v596
      %v691 = vpop.f32.mrb[0].mxu0
      %v692 = vadd.f32 %v586, %v691
      %v693 = vpop.f32.mrb[0].mxu0
      %v694 = vpop.f32.mrb[0].mxu0
      %v695 = vadd.f32 %v586, %v694
      %v696 = vpop.f32.mrb[0].mxu0
      %697 = vmatprep.mubr.bf16.mxu0 0
      %698 = vmatmul.mubr.bf16.gmra.mrb[0].mxu0 %v599
      %v699 = vpop.f32.mrb[0].mxu0
      %v700 = vadd.f32 %v586, %v699
      %v701 = vpop.f32.mrb[0].mxu0
      %v702 = vpop.f32.mrb[0].mxu0
      %v703 = vadd.f32 %v586, %v702
      %v704 = vpop.f32.mrb[0].mxu0
      %705 = vmatprep.mubr.bf16.mxu0 0
      %706 = vmatmul.mubr.bf16.gmra.mrb[0].mxu0 %v602
      %v707 = vpop.f32.mrb[0].mxu0
      %v708 = vadd.f32 %v586, %v707
      %v709 = vpop.f32.mrb[0].mxu0
      %v710 = vpop.f32.mrb[0].mxu0
      %v711 = vadd.f32 %v586, %v710
      %v712 = vpop.f32.mrb[0].mxu0
      %713 = vmatprep.mubr.bf16.mxu0 0
      %714 = vmatmul.mubr.bf16.gmra.mrb[0].mxu0 %v605
      %v715 = vpop.f32.mrb[0].mxu0
      %v716 = vadd.f32 %v586, %v715
      %v717 = vpop.f32.mrb[0].mxu0
      %v718 = vpop.f32.mrb[0].mxu0
      %v719 = vadd.f32 %v586, %v718
      %v720 = vpop.f32.mrb[0].mxu0
      %721 = vmatprep.mubr.bf16.mxu0 0
      %722 = vmatmul.mubr.bf16.gmra.mrb[0].mxu0 %v608
      %v723 = vpop.f32.mrb[0].mxu0
      %v724 = vadd.f32 %v586, %v723
      %v725 = vpop.f32.mrb[0].mxu0
      %v726 = vpop.f32.mrb[0].mxu0
      %v727 = vadd.f32 %v586, %v726
      %v728 = vpop.f32.mrb[0].mxu0
      %729 = vmatprep.mubr.bf16.mxu0 0
      %730 = vmatmul.mubr.bf16.gmra.mrb[0].mxu0 %v611
      %v731 = vpop.f32.mrb[0].mxu0
      %v732 = vadd.f32 %v586, %v731
      %v733 = vpop.f32.mrb[0].mxu0
      %v734 = vpop.f32.mrb[0].mxu0
      %v735 = vadd.f32 %v586, %v734
      %v736 = vpop.f32.mrb[0].mxu0
      %737 = vmatprep.mubr.bf16.mxu0 0
      %738 = vmatmul.mubr.bf16.gmra.mrb[0].mxu0 %v614
      %v739 = vpop.f32.mrb[0].mxu0
      %v740 = vadd.f32 %v586, %v739
      %v741 = vpop.f32.mrb[0].mxu0
      %v742 = vpop.f32.mrb[0].mxu0
      %v743 = vadd.f32 %v586, %v742
      %v744 = vpop.f32.mrb[0].mxu0
      %745 = vmatprep.mubr.bf16.mxu0 0
      %746 = vmatmul.mubr.bf16.gmra.mrb[0].mxu0 %v617
      %v747 = vpop.f32.mrb[0].mxu0
      %v748 = vadd.f32 %v586, %v747
      %v749 = vpop.f32.mrb[0].mxu0
      %v750 = vpop.f32.mrb[0].mxu0
      %v751 = vadd.f32 %v586, %v750
      %v752 = vpop.f32.mrb[0].mxu0
      %753 = vmatprep.mubr.bf16.mxu0 0
      %754 = vmatmul.mubr.bf16.gmra.mrb[0].mxu0 %v620
      %v755 = vpop.f32.mrb[0].mxu0
      %v756 = vadd.f32 %v586, %v755
      %v757 = vpop.f32.mrb[0].mxu0
      %v758 = vpop.f32.mrb[0].mxu0
      %v759 = vadd.f32 %v586, %v758
      %v760 = vpop.f32.mrb[0].mxu0
      %761 = vmatprep.mubr.bf16.mxu0 0
      %762 = vmatmul.mubr.bf16.gmra.mrb[0].mxu0 %v623
      %v763 = vpop.f32.mrb[0].mxu0
      %v764 = vadd.f32 %v586, %v763
      %v765 = vpop.f32.mrb[0].mxu0
      %v766 = vpop.f32.mrb[0].mxu0
      %v767 = vadd.f32 %v586, %v766
      %v768 = vpop.f32.mrb[0].mxu0
      %769 = vmatprep.mubr.bf16.mxu0 0
      %770 = vmatmul.mubr.bf16.gmra.mrb[0].mxu0 %v626
      %v771 = vpop.f32.mrb[0].mxu0
      %v772 = vadd.f32 %v586, %v771
      %v773 = vpop.f32.mrb[0].mxu0
      %v774 = vpop.f32.mrb[0].mxu0
      %v775 = vadd.f32 %v586, %v774
      %v776 = vpop.f32.mrb[0].mxu0
      %777 = vmatprep.mubr.bf16.mxu0 0
      %778 = vmatmul.mubr.bf16.gmra.mrb[0].mxu0 %v629
      %v779 = vpop.f32.mrb[0].mxu0
      %v780 = vadd.f32 %v586, %v779
      %v781 = vpop.f32.mrb[0].mxu0
      %v782 = vpop.f32.mrb[0].mxu0
      %v783 = vadd.f32 %v586, %v782
      %v784 = vpop.f32.mrb[0].mxu0
      %785 = vmatprep.mubr.bf16.mxu0 0
      %786 = vmatmul.mubr.bf16.gmra.mrb[0].mxu0 %v632
      %v787 = vpop.f32.mrb[0].mxu0
      %v788 = vadd.f32 %v586, %v787
      %v789 = vpop.f32.mrb[0].mxu0
      %v790 = vpop.f32.mrb[0].mxu0
      %v791 = vadd.f32 %v586, %v790
      %v792 = vpop.f32.mrb[0].mxu0
      %793 = vmatprep.mubr.bf16.mxu0 0
      %794 = vmatmul.mubr.bf16.gmra.mrb[0].mxu0 %v635
      %v795 = vpop.f32.mrb[0].mxu0
      %v796 = vadd.f32 %v586, %v795
      %v797 = vpop.f32.mrb[0].mxu0
      %v798 = vpop.f32.mrb[0].mxu0
      %v799 = vadd.f32 %v586, %v798
      %v800 = vpop.f32.mrb[0].mxu0
      %801 = vdwg.mxu0
      %v802 = vsub.f32 0.0, %v676
      %v803 = vsub.f32 0.0, %v679
      %v804 = vsub.f32 0.0, %v684
      %v805 = vsub.f32 0.0, %v687
      %v806 = vsub.f32 0.0, %v692
      %v807 = vsub.f32 0.0, %v695
      %v808 = vsub.f32 0.0, %v700
      %v809 = vsub.f32 0.0, %v703
      %v810 = vsub.f32 0.0, %v708
      %v811 = vsub.f32 0.0, %v711
      %v812 = vsub.f32 0.0, %v716
      %v813 = vsub.f32 0.0, %v719
      %v814 = vsub.f32 0.0, %v724
      %v815 = vsub.f32 0.0, %v727
      %v816 = vsub.f32 0.0, %v732
      %v817 = vsub.f32 0.0, %v735
      %v818 = vsub.f32 0.0, %v740
      %v819 = vsub.f32 0.0, %v743
      %v820 = vsub.f32 0.0, %v748
      %v821 = vsub.f32 0.0, %v751
      %v822 = vsub.f32 0.0, %v756
      %v823 = vsub.f32 0.0, %v759
      %v824 = vsub.f32 0.0, %v764
      %v825 = vsub.f32 0.0, %v767
      %v826 = vsub.f32 0.0, %v772
      %v827 = vsub.f32 0.0, %v775
      %v828 = vsub.f32 0.0, %v780
      %v829 = vsub.f32 0.0, %v783
      %v830 = vsub.f32 0.0, %v788
      %v831 = vsub.f32 0.0, %v791
      %v832 = vsub.f32 0.0, %v796
      %v833 = vsub.f32 0.0, %v799
      %v834 = vmul.f32 %v802, 1.442695
      %v835 = vpow.pop %v834
      %v836 = vmul.f32 %v803, 1.442695
      %v837 = vpow.pop %v836
      %v838 = vmul.f32 %v804, 1.442695
      %v839 = vpow.pop %v838
      %v840 = vmul.f32 %v805, 1.442695
      %v841 = vpow.pop %v840
      %v842 = vmul.f32 %v806, 1.442695
      %v843 = vpow.pop %v842
      %v844 = vmul.f32 %v807, 1.442695
      %v845 = vpow.pop %v844
      %v846 = vmul.f32 %v808, 1.442695
      %v847 = vpow.pop %v846
      %v848 = vmul.f32 %v809, 1.442695
      %v849 = vpow.pop %v848
      %v850 = vmul.f32 %v810, 1.442695
      %v851 = vpow.pop %v850
      %v852 = vmul.f32 %v811, 1.442695
      %v853 = vpow.pop %v852
      %v854 = vmul.f32 %v812, 1.442695
      %v855 = vpow.pop %v854
      %v856 = vmul.f32 %v813, 1.442695
      %v857 = vpow.pop %v856
      %v858 = vmul.f32 %v814, 1.442695
      %v859 = vpow.pop %v858
      %v860 = vmul.f32 %v815, 1.442695
      %v861 = vpow.pop %v860
      %v862 = vmul.f32 %v816, 1.442695
      %v863 = vpow.pop %v862
      %v864 = vmul.f32 %v817, 1.442695
      %v865 = vpow.pop %v864
      %v866 = vmul.f32 %v818, 1.442695
      %v867 = vpow.pop %v866
      %v868 = vmul.f32 %v819, 1.442695
      %v869 = vpow.pop %v868
      %v870 = vmul.f32 %v820, 1.442695
      %v871 = vpow.pop %v870
      %v872 = vmul.f32 %v821, 1.442695
      %v873 = vpow.pop %v872
      %v874 = vmul.f32 %v822, 1.442695
      %v875 = vpow.pop %v874
      %v876 = vmul.f32 %v823, 1.442695
      %v877 = vpow.pop %v876
      %v878 = vmul.f32 %v824, 1.442695
      %v879 = vpow.pop %v878
      %v880 = vmul.f32 %v825, 1.442695
      %v881 = vpow.pop %v880
      %v882 = vmul.f32 %v826, 1.442695
      %v883 = vpow.pop %v882
      %v884 = vmul.f32 %v827, 1.442695
      %v885 = vpow.pop %v884
      %v886 = vmul.f32 %v828, 1.442695
      %v887 = vpow.pop %v886
      %v888 = vmul.f32 %v829, 1.442695
      %v889 = vpow.pop %v888
      %v890 = vmul.f32 %v830, 1.442695
      %v891 = vpow.pop %v890
      %v892 = vmul.f32 %v831, 1.442695
      %v893 = vpow.pop %v892
      %v894 = vmul.f32 %v832, 1.442695
      %v895 = vpow.pop %v894
      %v896 = vmul.f32 %v833, 1.442695
      %v897 = vpow.pop %v896
      %v898 = vadd.f32 %v835, 1.0
      %v899 = vadd.f32 %v837, 1.0
      %v900 = vadd.f32 %v839, 1.0
      %v901 = vadd.f32 %v841, 1.0
      %v902 = vadd.f32 %v843, 1.0
      %v903 = vadd.f32 %v845, 1.0
      %v904 = vadd.f32 %v847, 1.0
      %v905 = vadd.f32 %v849, 1.0
      %v906 = vadd.f32 %v851, 1.0
      %v907 = vadd.f32 %v853, 1.0
      %v908 = vadd.f32 %v855, 1.0
      %v909 = vadd.f32 %v857, 1.0
      %v910 = vadd.f32 %v859, 1.0
      %v911 = vadd.f32 %v861, 1.0
      %v912 = vadd.f32 %v863, 1.0
      %v913 = vadd.f32 %v865, 1.0
      %v914 = vadd.f32 %v867, 1.0
      %v915 = vadd.f32 %v869, 1.0
      %v916 = vadd.f32 %v871, 1.0
      %v917 = vadd.f32 %v873, 1.0
      %v918 = vadd.f32 %v875, 1.0
      %v919 = vadd.f32 %v877, 1.0
      %v920 = vadd.f32 %v879, 1.0
      %v921 = vadd.f32 %v881, 1.0
      %v922 = vadd.f32 %v883, 1.0
      %v923 = vadd.f32 %v885, 1.0
      %v924 = vadd.f32 %v887, 1.0
      %v925 = vadd.f32 %v889, 1.0
      %v926 = vadd.f32 %v891, 1.0
      %v927 = vadd.f32 %v893, 1.0
      %v928 = vadd.f32 %v895, 1.0
      %v929 = vadd.f32 %v897, 1.0
      %v930 = vrcp.pop %v898
      %v931 = vmul.f32 1.0, %v930
      %v932 = vrcp.pop %v899
      %v933 = vmul.f32 1.0, %v932
      %v934 = vrcp.pop %v900
      %v935 = vmul.f32 1.0, %v934
      %v936 = vrcp.pop %v901
      %v937 = vmul.f32 1.0, %v936
      %v938 = vrcp.pop %v902
      %v939 = vmul.f32 1.0, %v938
      %v940 = vrcp.pop %v903
      %v941 = vmul.f32 1.0, %v940
      %v942 = vrcp.pop %v904
      %v943 = vmul.f32 1.0, %v942
      %v944 = vrcp.pop %v905
      %v945 = vmul.f32 1.0, %v944
      %v946 = vrcp.pop %v906
      %v947 = vmul.f32 1.0, %v946
      %v948 = vrcp.pop %v907
      %v949 = vmul.f32 1.0, %v948
      %v950 = vrcp.pop %v908
      %v951 = vmul.f32 1.0, %v950
      %v952 = vrcp.pop %v909
      %v953 = vmul.f32 1.0, %v952
      %v954 = vrcp.pop %v910
      %v955 = vmul.f32 1.0, %v954
      %v956 = vrcp.pop %v911
      %v957 = vmul.f32 1.0, %v956
      %v958 = vrcp.pop %v912
      %v959 = vmul.f32 1.0, %v958
      %v960 = vrcp.pop %v913
      %v961 = vmul.f32 1.0, %v960
      %v962 = vrcp.pop %v914
      %v963 = vmul.f32 1.0, %v962
      %v964 = vrcp.pop %v915
      %v965 = vmul.f32 1.0, %v964
      %v966 = vrcp.pop %v916
      %v967 = vmul.f32 1.0, %v966
      %v968 = vrcp.pop %v917
      %v969 = vmul.f32 1.0, %v968
      %v970 = vrcp.pop %v918
      %v971 = vmul.f32 1.0, %v970
      %v972 = vrcp.pop %v919
      %v973 = vmul.f32 1.0, %v972
      %v974 = vrcp.pop %v920
      %v975 = vmul.f32 1.0, %v974
      %v976 = vrcp.pop %v921
      %v977 = vmul.f32 1.0, %v976
      %v978 = vrcp.pop %v922
      %v979 = vmul.f32 1.0, %v978
      %v980 = vrcp.pop %v923
      %v981 = vmul.f32 1.0, %v980
      %v982 = vrcp.pop %v924
      %v983 = vmul.f32 1.0, %v982
      %v984 = vrcp.pop %v925
      %v985 = vmul.f32 1.0, %v984
      %v986 = vrcp.pop %v926
      %v987 = vmul.f32 1.0, %v986
      %v988 = vrcp.pop %v927
      %v989 = vmul.f32 1.0, %v988
      %v990 = vrcp.pop %v928
      %v991 = vmul.f32 1.0, %v990
      %v992 = vrcp.pop %v929
      %v993 = vmul.f32 1.0, %v992
      %v994 = vmul.f32 %v676, %v931
      %v995 = vmul.f32 %v679, %v933
      %v996 = vmul.f32 %v684, %v935
      %v997 = vmul.f32 %v687, %v937
      %v998 = vmul.f32 %v692, %v939
      %v999 = vmul.f32 %v695, %v941
      %v1000 = vmul.f32 %v700, %v943
      %v1001 = vmul.f32 %v703, %v945
      %v1002 = vmul.f32 %v708, %v947
      %v1003 = vmul.f32 %v711, %v949
      %v1004 = vmul.f32 %v716, %v951
      %v1005 = vmul.f32 %v719, %v953
      %v1006 = vmul.f32 %v724, %v955
      %v1007 = vmul.f32 %v727, %v957
      %v1008 = vmul.f32 %v732, %v959
      %v1009 = vmul.f32 %v735, %v961
      %v1010 = vmul.f32 %v740, %v963
      %v1011 = vmul.f32 %v743, %v965
      %v1012 = vmul.f32 %v748, %v967
      %v1013 = vmul.f32 %v751, %v969
      %v1014 = vmul.f32 %v756, %v971
      %v1015 = vmul.f32 %v759, %v973
      %v1016 = vmul.f32 %v764, %v975
      %v1017 = vmul.f32 %v767, %v977
      %v1018 = vmul.f32 %v772, %v979
      %v1019 = vmul.f32 %v775, %v981
      %v1020 = vmul.f32 %v780, %v983
      %v1021 = vmul.f32 %v783, %v985
      %v1022 = vmul.f32 %v788, %v987
      %v1023 = vmul.f32 %v791, %v989
      %v1024 = vmul.f32 %v796, %v991
      %v1025 = vmul.f32 %v799, %v993
      %vm1026 = vcmask 261120
      %v1027 = vsel %vm1026, %v994, 0.0
      %1028 = vadd.xlane.f32.xlu0 %v1027
      %v1029 = vpop.xlane.xlu0 %1028
      %v1030 = vsel %vm1026, %v995, 0.0
      %1031 = vadd.xlane.f32.xlu0 %v1030
      %v1032 = vpop.xlane.xlu0 %1031
      %v1033 = vsel %vm1026, %v996, 0.0
      %1034 = vadd.xlane.f32.xlu0 %v1033
      %v1035 = vpop.xlane.xlu0 %1034
      %v1036 = vsel %vm1026, %v997, 0.0
      %1037 = vadd.xlane.f32.xlu0 %v1036
      %v1038 = vpop.xlane.xlu0 %1037
      %v1039 = vsel %vm1026, %v998, 0.0
      %1040 = vadd.xlane.f32.xlu0 %v1039
      %v1041 = vpop.xlane.xlu0 %1040
      %v1042 = vsel %vm1026, %v999, 0.0
      %1043 = vadd.xlane.f32.xlu0 %v1042
      %v1044 = vpop.xlane.xlu0 %1043
      %v1045 = vsel %vm1026, %v1000, 0.0
      %1046 = vadd.xlane.f32.xlu0 %v1045
      %v1047 = vpop.xlane.xlu0 %1046
      %v1048 = vsel %vm1026, %v1001, 0.0
      %1049 = vadd.xlane.f32.xlu0 %v1048
      %v1050 = vpop.xlane.xlu0 %1049
      %v1051 = vsel %vm1026, %v1002, 0.0
      %1052 = vadd.xlane.f32.xlu0 %v1051
      %v1053 = vpop.xlane.xlu0 %1052
      %v1054 = vsel %vm1026, %v1003, 0.0
      %1055 = vadd.xlane.f32.xlu0 %v1054
      %v1056 = vpop.xlane.xlu0 %1055
      %v1057 = vsel %vm1026, %v1004, 0.0
      %1058 = vadd.xlane.f32.xlu0 %v1057
      %v1059 = vpop.xlane.xlu0 %1058
      %v1060 = vsel %vm1026, %v1005, 0.0
      %1061 = vadd.xlane.f32.xlu0 %v1060
      %v1062 = vpop.xlane.xlu0 %1061
      %v1063 = vsel %vm1026, %v1006, 0.0
      %1064 = vadd.xlane.f32.xlu0 %v1063
      %v1065 = vpop.xlane.xlu0 %1064
      %v1066 = vsel %vm1026, %v1007, 0.0
      %1067 = vadd.xlane.f32.xlu0 %v1066
      %v1068 = vpop.xlane.xlu0 %1067
      %v1069 = vsel %vm1026, %v1008, 0.0
      %1070 = vadd.xlane.f32.xlu0 %v1069
      %v1071 = vpop.xlane.xlu0 %1070
      %v1072 = vsel %vm1026, %v1009, 0.0
      %1073 = vadd.xlane.f32.xlu0 %v1072
      %v1074 = vpop.xlane.xlu0 %1073
      %v1075 = vsel %vm1026, %v1010, 0.0
      %1076 = vadd.xlane.f32.xlu0 %v1075
      %v1077 = vpop.xlane.xlu0 %1076
      %v1078 = vsel %vm1026, %v1011, 0.0
      %1079 = vadd.xlane.f32.xlu0 %v1078
      %v1080 = vpop.xlane.xlu0 %1079
      %v1081 = vsel %vm1026, %v1012, 0.0
      %1082 = vadd.xlane.f32.xlu0 %v1081
      %v1083 = vpop.xlane.xlu0 %1082
      %v1084 = vsel %vm1026, %v1013, 0.0
      %1085 = vadd.xlane.f32.xlu0 %v1084
      %v1086 = vpop.xlane.xlu0 %1085
      %v1087 = vsel %vm1026, %v1014, 0.0
      %1088 = vadd.xlane.f32.xlu0 %v1087
      %v1089 = vpop.xlane.xlu0 %1088
      %v1090 = vsel %vm1026, %v1015, 0.0
      %1091 = vadd.xlane.f32.xlu0 %v1090
      %v1092 = vpop.xlane.xlu0 %1091
      %v1093 = vsel %vm1026, %v1016, 0.0
      %1094 = vadd.xlane.f32.xlu0 %v1093
      %v1095 = vpop.xlane.xlu0 %1094
      %v1096 = vsel %vm1026, %v1017, 0.0
      %1097 = vadd.xlane.f32.xlu0 %v1096
      %v1098 = vpop.xlane.xlu0 %1097
      %v1099 = vsel %vm1026, %v1018, 0.0
      %1100 = vadd.xlane.f32.xlu0 %v1099
      %v1101 = vpop.xlane.xlu0 %1100
      %v1102 = vsel %vm1026, %v1019, 0.0
      %1103 = vadd.xlane.f32.xlu0 %v1102
      %v1104 = vpop.xlane.xlu0 %1103
      %v1105 = vsel %vm1026, %v1020, 0.0
      %1106 = vadd.xlane.f32.xlu0 %v1105
      %v1107 = vpop.xlane.xlu0 %1106
      %v1108 = vsel %vm1026, %v1021, 0.0
      %1109 = vadd.xlane.f32.xlu0 %v1108
      %v1110 = vpop.xlane.xlu0 %1109
      %v1111 = vsel %vm1026, %v1022, 0.0
      %1112 = vadd.xlane.f32.xlu0 %v1111
      %v1113 = vpop.xlane.xlu0 %1112
      %v1114 = vsel %vm1026, %v1023, 0.0
      %1115 = vadd.xlane.f32.xlu0 %v1114
      %v1116 = vpop.xlane.xlu0 %1115
      %v1117 = vsel %vm1026, %v1024, 0.0
      %1118 = vadd.xlane.f32.xlu0 %v1117
      %v1119 = vpop.xlane.xlu0 %1118
      %v1120 = vsel %vm1026, %v1025, 0.0
      %1121 = vadd.xlane.f32.xlu0 %v1120
      %v1122 = vpop.xlane.xlu0 %1121
      %v1123 = vrcp.pop 32.0
      %v1124 = vmul.f32 %v1029, %v1123
      %v1125 = vmul.f32 %v1032, %v1123
      %v1126 = vmul.f32 %v1035, %v1123
      %v1127 = vmul.f32 %v1038, %v1123
      %v1128 = vmul.f32 %v1041, %v1123
      %v1129 = vmul.f32 %v1044, %v1123
      %v1130 = vmul.f32 %v1047, %v1123
      %v1131 = vmul.f32 %v1050, %v1123
      %v1132 = vmul.f32 %v1053, %v1123
      %v1133 = vmul.f32 %v1056, %v1123
      %v1134 = vmul.f32 %v1059, %v1123
      %v1135 = vmul.f32 %v1062, %v1123
      %v1136 = vmul.f32 %v1065, %v1123
      %v1137 = vmul.f32 %v1068, %v1123
      %v1138 = vmul.f32 %v1071, %v1123
      %v1139 = vmul.f32 %v1074, %v1123
      %v1140 = vmul.f32 %v1077, %v1123
      %v1141 = vmul.f32 %v1080, %v1123
      %v1142 = vmul.f32 %v1083, %v1123
      %v1143 = vmul.f32 %v1086, %v1123
      %v1144 = vmul.f32 %v1089, %v1123
      %v1145 = vmul.f32 %v1092, %v1123
      %v1146 = vmul.f32 %v1095, %v1123
      %v1147 = vmul.f32 %v1098, %v1123
      %v1148 = vmul.f32 %v1101, %v1123
      %v1149 = vmul.f32 %v1104, %v1123
      %v1150 = vmul.f32 %v1107, %v1123
      %v1151 = vmul.f32 %v1110, %v1123
      %v1152 = vmul.f32 %v1113, %v1123
      %v1153 = vmul.f32 %v1116, %v1123
      %v1154 = vmul.f32 %v1119, %v1123
      %v1155 = vmul.f32 %v1122, %v1123
      %v1156 = vsub.f32 %v994, %v1124
      %v1157 = vsub.f32 %v995, %v1125
      %v1158 = vsub.f32 %v996, %v1126
      %v1159 = vsub.f32 %v997, %v1127
      %v1160 = vsub.f32 %v998, %v1128
      %v1161 = vsub.f32 %v999, %v1129
      %v1162 = vsub.f32 %v1000, %v1130
      %v1163 = vsub.f32 %v1001, %v1131
      %v1164 = vsub.f32 %v1002, %v1132
      %v1165 = vsub.f32 %v1003, %v1133
      %v1166 = vsub.f32 %v1004, %v1134
      %v1167 = vsub.f32 %v1005, %v1135
      %v1168 = vsub.f32 %v1006, %v1136
      %v1169 = vsub.f32 %v1007, %v1137
      %v1170 = vsub.f32 %v1008, %v1138
      %v1171 = vsub.f32 %v1009, %v1139
      %v1172 = vsub.f32 %v1010, %v1140
      %v1173 = vsub.f32 %v1011, %v1141
      %v1174 = vsub.f32 %v1012, %v1142
      %v1175 = vsub.f32 %v1013, %v1143
      %v1176 = vsub.f32 %v1014, %v1144
      %v1177 = vsub.f32 %v1015, %v1145
      %v1178 = vsub.f32 %v1016, %v1146
      %v1179 = vsub.f32 %v1017, %v1147
      %v1180 = vsub.f32 %v1018, %v1148
      %v1181 = vsub.f32 %v1019, %v1149
      %v1182 = vsub.f32 %v1020, %v1150
      %v1183 = vsub.f32 %v1021, %v1151
      %v1184 = vsub.f32 %v1022, %v1152
      %v1185 = vsub.f32 %v1023, %v1153
      %v1186 = vsub.f32 %v1024, %v1154
      %v1187 = vsub.f32 %v1025, %v1155
      %v1188 = vmul.f32 %v1156, %v1156
      %v1189 = vmul.f32 %v1157, %v1157
      %v1190 = vmul.f32 %v1158, %v1158
      %v1191 = vmul.f32 %v1159, %v1159
      %v1192 = vmul.f32 %v1160, %v1160
      %v1193 = vmul.f32 %v1161, %v1161
      %v1194 = vmul.f32 %v1162, %v1162
      %v1195 = vmul.f32 %v1163, %v1163
      %v1196 = vmul.f32 %v1164, %v1164
      %v1197 = vmul.f32 %v1165, %v1165
      %v1198 = vmul.f32 %v1166, %v1166
      %v1199 = vmul.f32 %v1167, %v1167
      %v1200 = vmul.f32 %v1168, %v1168
      %v1201 = vmul.f32 %v1169, %v1169
      %v1202 = vmul.f32 %v1170, %v1170
      %v1203 = vmul.f32 %v1171, %v1171
      %v1204 = vmul.f32 %v1172, %v1172
      %v1205 = vmul.f32 %v1173, %v1173
      %v1206 = vmul.f32 %v1174, %v1174
      %v1207 = vmul.f32 %v1175, %v1175
      %v1208 = vmul.f32 %v1176, %v1176
      %v1209 = vmul.f32 %v1177, %v1177
      %v1210 = vmul.f32 %v1178, %v1178
      %v1211 = vmul.f32 %v1179, %v1179
      %v1212 = vmul.f32 %v1180, %v1180
      %v1213 = vmul.f32 %v1181, %v1181
      %v1214 = vmul.f32 %v1182, %v1182
      %v1215 = vmul.f32 %v1183, %v1183
      %v1216 = vmul.f32 %v1184, %v1184
      %v1217 = vmul.f32 %v1185, %v1185
      %v1218 = vmul.f32 %v1186, %v1186
      %v1219 = vmul.f32 %v1187, %v1187
      %v1220 = vsel %vm1026, %v1188, 0.0
      %1221 = vadd.xlane.f32.xlu0 %v1220
      %v1222 = vpop.xlane.xlu0 %1221
      %v1223 = vsel %vm1026, %v1189, 0.0
      %1224 = vadd.xlane.f32.xlu0 %v1223
      %v1225 = vpop.xlane.xlu0 %1224
      %v1226 = vsel %vm1026, %v1190, 0.0
      %1227 = vadd.xlane.f32.xlu0 %v1226
      %v1228 = vpop.xlane.xlu0 %1227
      %v1229 = vsel %vm1026, %v1191, 0.0
      %1230 = vadd.xlane.f32.xlu0 %v1229
      %v1231 = vpop.xlane.xlu0 %1230
      %v1232 = vsel %vm1026, %v1192, 0.0
      %1233 = vadd.xlane.f32.xlu0 %v1232
      %v1234 = vpop.xlane.xlu0 %1233
      %v1235 = vsel %vm1026, %v1193, 0.0
      %1236 = vadd.xlane.f32.xlu0 %v1235
      %v1237 = vpop.xlane.xlu0 %1236
      %v1238 = vsel %vm1026, %v1194, 0.0
      %1239 = vadd.xlane.f32.xlu0 %v1238
      %v1240 = vpop.xlane.xlu0 %1239
      %v1241 = vsel %vm1026, %v1195, 0.0
      %1242 = vadd.xlane.f32.xlu0 %v1241
      %v1243 = vpop.xlane.xlu0 %1242
      %v1244 = vsel %vm1026, %v1196, 0.0
      %1245 = vadd.xlane.f32.xlu0 %v1244
      %v1246 = vpop.xlane.xlu0 %1245
      %v1247 = vsel %vm1026, %v1197, 0.0
      %1248 = vadd.xlane.f32.xlu0 %v1247
      %v1249 = vpop.xlane.xlu0 %1248
      %v1250 = vsel %vm1026, %v1198, 0.0
      %1251 = vadd.xlane.f32.xlu0 %v1250
      %v1252 = vpop.xlane.xlu0 %1251
      %v1253 = vsel %vm1026, %v1199, 0.0
      %1254 = vadd.xlane.f32.xlu0 %v1253
      %v1255 = vpop.xlane.xlu0 %1254
      %v1256 = vsel %vm1026, %v1200, 0.0
      %1257 = vadd.xlane.f32.xlu0 %v1256
      %v1258 = vpop.xlane.xlu0 %1257
      %v1259 = vsel %vm1026, %v1201, 0.0
      %1260 = vadd.xlane.f32.xlu0 %v1259
      %v1261 = vpop.xlane.xlu0 %1260
      %v1262 = vsel %vm1026, %v1202, 0.0
      %1263 = vadd.xlane.f32.xlu0 %v1262
      %v1264 = vpop.xlane.xlu0 %1263
      %v1265 = vsel %vm1026, %v1203, 0.0
      %1266 = vadd.xlane.f32.xlu0 %v1265
      %v1267 = vpop.xlane.xlu0 %1266
      %v1268 = vsel %vm1026, %v1204, 0.0
      %1269 = vadd.xlane.f32.xlu0 %v1268
      %v1270 = vpop.xlane.xlu0 %1269
      %v1271 = vsel %vm1026, %v1205, 0.0
      %1272 = vadd.xlane.f32.xlu0 %v1271
      %v1273 = vpop.xlane.xlu0 %1272
      %v1274 = vsel %vm1026, %v1206, 0.0
      %1275 = vadd.xlane.f32.xlu0 %v1274
      %v1276 = vpop.xlane.xlu0 %1275
      %v1277 = vsel %vm1026, %v1207, 0.0
      %1278 = vadd.xlane.f32.xlu0 %v1277
      %v1279 = vpop.xlane.xlu0 %1278
      %v1280 = vsel %vm1026, %v1208, 0.0
      %1281 = vadd.xlane.f32.xlu0 %v1280
      %v1282 = vpop.xlane.xlu0 %1281
      %v1283 = vsel %vm1026, %v1209, 0.0
      %1284 = vadd.xlane.f32.xlu0 %v1283
      %v1285 = vpop.xlane.xlu0 %1284
      %v1286 = vsel %vm1026, %v1210, 0.0
      %1287 = vadd.xlane.f32.xlu0 %v1286
      %v1288 = vpop.xlane.xlu0 %1287
      %v1289 = vsel %vm1026, %v1211, 0.0
      %1290 = vadd.xlane.f32.xlu0 %v1289
      %v1291 = vpop.xlane.xlu0 %1290
      %v1292 = vsel %vm1026, %v1212, 0.0
      %1293 = vadd.xlane.f32.xlu0 %v1292
      %v1294 = vpop.xlane.xlu0 %1293
      %v1295 = vsel %vm1026, %v1213, 0.0
      %1296 = vadd.xlane.f32.xlu0 %v1295
      %v1297 = vpop.xlane.xlu0 %1296
      %v1298 = vsel %vm1026, %v1214, 0.0
      %1299 = vadd.xlane.f32.xlu0 %v1298
      %v1300 = vpop.xlane.xlu0 %1299
      %v1301 = vsel %vm1026, %v1215, 0.0
      %1302 = vadd.xlane.f32.xlu0 %v1301
      %v1303 = vpop.xlane.xlu0 %1302
      %v1304 = vsel %vm1026, %v1216, 0.0
      %1305 = vadd.xlane.f32.xlu0 %v1304
      %v1306 = vpop.xlane.xlu0 %1305
      %v1307 = vsel %vm1026, %v1217, 0.0
      %1308 = vadd.xlane.f32.xlu0 %v1307
      %v1309 = vpop.xlane.xlu0 %1308
      %v1310 = vsel %vm1026, %v1218, 0.0
      %1311 = vadd.xlane.f32.xlu0 %v1310
      %v1312 = vpop.xlane.xlu0 %1311
      %v1313 = vsel %vm1026, %v1219, 0.0
      %1314 = vadd.xlane.f32.xlu0 %v1313
      %v1315 = vpop.xlane.xlu0 %1314
      %v1316 = vmul.f32 %v1222, %v1123
      %v1317 = vmul.f32 %v1225, %v1123
      %v1318 = vmul.f32 %v1228, %v1123
      %v1319 = vmul.f32 %v1231, %v1123
      %v1320 = vmul.f32 %v1234, %v1123
      %v1321 = vmul.f32 %v1237, %v1123
      %v1322 = vmul.f32 %v1240, %v1123
      %v1323 = vmul.f32 %v1243, %v1123
      %v1324 = vmul.f32 %v1246, %v1123
      %v1325 = vmul.f32 %v1249, %v1123
      %v1326 = vmul.f32 %v1252, %v1123
      %v1327 = vmul.f32 %v1255, %v1123
      %v1328 = vmul.f32 %v1258, %v1123
      %v1329 = vmul.f32 %v1261, %v1123
      %v1330 = vmul.f32 %v1264, %v1123
      %v1331 = vmul.f32 %v1267, %v1123
      %v1332 = vmul.f32 %v1270, %v1123
      %v1333 = vmul.f32 %v1273, %v1123
      %v1334 = vmul.f32 %v1276, %v1123
      %v1335 = vmul.f32 %v1279, %v1123
      %v1336 = vmul.f32 %v1282, %v1123
      %v1337 = vmul.f32 %v1285, %v1123
      %v1338 = vmul.f32 %v1288, %v1123
      %v1339 = vmul.f32 %v1291, %v1123
      %v1340 = vmul.f32 %v1294, %v1123
      %v1341 = vmul.f32 %v1297, %v1123
      %v1342 = vmul.f32 %v1300, %v1123
      %v1343 = vmul.f32 %v1303, %v1123
      %v1344 = vmul.f32 %v1306, %v1123
      %v1345 = vmul.f32 %v1309, %v1123
      %v1346 = vmul.f32 %v1312, %v1123
      %v1347 = vmul.f32 %v1315, %v1123
      %v1348 = vadd.f32 %v1316, 1e-05
      %v1349 = vadd.f32 %v1317, 1e-05
      %v1350 = vadd.f32 %v1318, 1e-05
      %v1351 = vadd.f32 %v1319, 1e-05
      %v1352 = vadd.f32 %v1320, 1e-05
      %v1353 = vadd.f32 %v1321, 1e-05
      %v1354 = vadd.f32 %v1322, 1e-05
      %v1355 = vadd.f32 %v1323, 1e-05
      %v1356 = vadd.f32 %v1324, 1e-05
      %v1357 = vadd.f32 %v1325, 1e-05
      %v1358 = vadd.f32 %v1326, 1e-05
      %v1359 = vadd.f32 %v1327, 1e-05
      %v1360 = vadd.f32 %v1328, 1e-05
      %v1361 = vadd.f32 %v1329, 1e-05
      %v1362 = vadd.f32 %v1330, 1e-05
      %v1363 = vadd.f32 %v1331, 1e-05
      %v1364 = vadd.f32 %v1332, 1e-05
      %v1365 = vadd.f32 %v1333, 1e-05
      %v1366 = vadd.f32 %v1334, 1e-05
      %v1367 = vadd.f32 %v1335, 1e-05
      %v1368 = vadd.f32 %v1336, 1e-05
      %v1369 = vadd.f32 %v1337, 1e-05
      %v1370 = vadd.f32 %v1338, 1e-05
      %v1371 = vadd.f32 %v1339, 1e-05
      %v1372 = vadd.f32 %v1340, 1e-05
      %v1373 = vadd.f32 %v1341, 1e-05
      %v1374 = vadd.f32 %v1342, 1e-05
      %v1375 = vadd.f32 %v1343, 1e-05
      %v1376 = vadd.f32 %v1344, 1e-05
      %v1377 = vadd.f32 %v1345, 1e-05
      %v1378 = vadd.f32 %v1346, 1e-05
      %v1379 = vadd.f32 %v1347, 1e-05
      %v1380 = vrsqrt.pop %v1348
      %v1381 = vrsqrt.pop %v1349
      %v1382 = vrsqrt.pop %v1350
      %v1383 = vrsqrt.pop %v1351
      %v1384 = vrsqrt.pop %v1352
      %v1385 = vrsqrt.pop %v1353
      %v1386 = vrsqrt.pop %v1354
      %v1387 = vrsqrt.pop %v1355
      %v1388 = vrsqrt.pop %v1356
      %v1389 = vrsqrt.pop %v1357
      %v1390 = vrsqrt.pop %v1358
      %v1391 = vrsqrt.pop %v1359
      %v1392 = vrsqrt.pop %v1360
      %v1393 = vrsqrt.pop %v1361
      %v1394 = vrsqrt.pop %v1362
      %v1395 = vrsqrt.pop %v1363
      %v1396 = vrsqrt.pop %v1364
      %v1397 = vrsqrt.pop %v1365
      %v1398 = vrsqrt.pop %v1366
      %v1399 = vrsqrt.pop %v1367
      %v1400 = vrsqrt.pop %v1368
      %v1401 = vrsqrt.pop %v1369
      %v1402 = vrsqrt.pop %v1370
      %v1403 = vrsqrt.pop %v1371
      %v1404 = vrsqrt.pop %v1372
      %v1405 = vrsqrt.pop %v1373
      %v1406 = vrsqrt.pop %v1374
      %v1407 = vrsqrt.pop %v1375
      %v1408 = vrsqrt.pop %v1376
      %v1409 = vrsqrt.pop %v1377
      %v1410 = vrsqrt.pop %v1378
      %v1411 = vrsqrt.pop %v1379
      %v1412 = vmul.f32 %v1156, %v1380
      %v1413 = vmul.f32 %v1157, %v1381
      %v1414 = vmul.f32 %v1158, %v1382
      %v1415 = vmul.f32 %v1159, %v1383
      %v1416 = vmul.f32 %v1160, %v1384
      %v1417 = vmul.f32 %v1161, %v1385
      %v1418 = vmul.f32 %v1162, %v1386
      %v1419 = vmul.f32 %v1163, %v1387
      %v1420 = vmul.f32 %v1164, %v1388
      %v1421 = vmul.f32 %v1165, %v1389
      %v1422 = vmul.f32 %v1166, %v1390
      %v1423 = vmul.f32 %v1167, %v1391
      %v1424 = vmul.f32 %v1168, %v1392
      %v1425 = vmul.f32 %v1169, %v1393
      %v1426 = vmul.f32 %v1170, %v1394
      %v1427 = vmul.f32 %v1171, %v1395
      %v1428 = vmul.f32 %v1172, %v1396
      %v1429 = vmul.f32 %v1173, %v1397
      %v1430 = vmul.f32 %v1174, %v1398
      %v1431 = vmul.f32 %v1175, %v1399
      %v1432 = vmul.f32 %v1176, %v1400
      %v1433 = vmul.f32 %v1177, %v1401
      %v1434 = vmul.f32 %v1178, %v1402
      %v1435 = vmul.f32 %v1179, %v1403
      %v1436 = vmul.f32 %v1180, %v1404
      %v1437 = vmul.f32 %v1181, %v1405
      %v1438 = vmul.f32 %v1182, %v1406
      %v1439 = vmul.f32 %v1183, %v1407
      %v1440 = vmul.f32 %v1184, %v1408
      %v1441 = vmul.f32 %v1185, %v1409
      %v1442 = vmul.f32 %v1186, %v1410
      %v1443 = vmul.f32 %v1187, %v1411
      %v1444 = vld [vmem:[%s4] sm:$0x1]
      %v1446 = vlaneseq
      %v1447 = vshrl.u32 %v1446, 7
      %v1448 = vsub.s32 0, %v1447
      %v1449 = vrot.slane %v1444, %v1448
      %v1451 = vmul.f32 %v1412, %v1449
      %v1452 = vmul.f32 %v1413, %v1449
      %v1453 = vmul.f32 %v1414, %v1449
      %v1454 = vmul.f32 %v1415, %v1449
      %v1455 = vmul.f32 %v1416, %v1449
      %v1456 = vmul.f32 %v1417, %v1449
      %v1457 = vmul.f32 %v1418, %v1449
      %v1458 = vmul.f32 %v1419, %v1449
      %v1459 = vmul.f32 %v1420, %v1449
      %v1460 = vmul.f32 %v1421, %v1449
      %v1461 = vmul.f32 %v1422, %v1449
      %v1462 = vmul.f32 %v1423, %v1449
      %v1463 = vmul.f32 %v1424, %v1449
      %v1464 = vmul.f32 %v1425, %v1449
      %v1465 = vmul.f32 %v1426, %v1449
      %v1466 = vmul.f32 %v1427, %v1449
      %v1467 = vmul.f32 %v1428, %v1449
      %v1468 = vmul.f32 %v1429, %v1449
      %v1469 = vmul.f32 %v1430, %v1449
      %v1470 = vmul.f32 %v1431, %v1449
      %v1471 = vmul.f32 %v1432, %v1449
      %v1472 = vmul.f32 %v1433, %v1449
      %v1473 = vmul.f32 %v1434, %v1449
      %v1474 = vmul.f32 %v1435, %v1449
      %v1475 = vmul.f32 %v1436, %v1449
      %v1476 = vmul.f32 %v1437, %v1449
      %v1477 = vmul.f32 %v1438, %v1449
      %v1478 = vmul.f32 %v1439, %v1449
      %v1479 = vmul.f32 %v1440, %v1449
      %v1480 = vmul.f32 %v1441, %v1449
      %v1481 = vmul.f32 %v1442, %v1449
      %v1482 = vmul.f32 %v1443, %v1449
      %v1483 = vld [vmem:[%s5] sm:$0x1]
      %v1485 = vlaneseq
      %v1486 = vshrl.u32 %v1485, 7
      %v1487 = vsub.s32 0, %v1486
      %v1488 = vrot.slane %v1483, %v1487
      %v1490 = vadd.f32 %v1451, %v1488
      %v1491 = vadd.f32 %v1452, %v1488
      %v1492 = vadd.f32 %v1453, %v1488
      %v1493 = vadd.f32 %v1454, %v1488
      %v1494 = vadd.f32 %v1455, %v1488
      %v1495 = vadd.f32 %v1456, %v1488
      %v1496 = vadd.f32 %v1457, %v1488
      %v1497 = vadd.f32 %v1458, %v1488
      %v1498 = vadd.f32 %v1459, %v1488
      %v1499 = vadd.f32 %v1460, %v1488
      %v1500 = vadd.f32 %v1461, %v1488
      %v1501 = vadd.f32 %v1462, %v1488
      %v1502 = vadd.f32 %v1463, %v1488
      %v1503 = vadd.f32 %v1464, %v1488
      %v1504 = vadd.f32 %v1465, %v1488
      %v1505 = vadd.f32 %v1466, %v1488
      %v1506 = vadd.f32 %v1467, %v1488
      %v1507 = vadd.f32 %v1468, %v1488
      %v1508 = vadd.f32 %v1469, %v1488
      %v1509 = vadd.f32 %v1470, %v1488
      %v1510 = vadd.f32 %v1471, %v1488
      %v1511 = vadd.f32 %v1472, %v1488
      %v1512 = vadd.f32 %v1473, %v1488
      %v1513 = vadd.f32 %v1474, %v1488
      %v1514 = vadd.f32 %v1475, %v1488
      %v1515 = vadd.f32 %v1476, %v1488
      %v1516 = vadd.f32 %v1477, %v1488
      %v1517 = vadd.f32 %v1478, %v1488
      %v1518 = vadd.f32 %v1479, %v1488
      %v1519 = vadd.f32 %v1480, %v1488
      %v1520 = vadd.f32 %v1481, %v1488
      %v1521 = vadd.f32 %v1482, %v1488
      %v1522 = vld [vmem:[%s6] sm:$0xff]
      %v1523 = vld [vmem:[%s6 + $0x8] sm:$0xff]
      %v1524 = vld [vmem:[%s6 + $0x10] sm:$0xff]
      %v1525 = vld [vmem:[%s6 + $0x18] sm:$0xff]
      %v1526 = vpack.c.bf16 %v1491, %v1490
      %v1527 = vpack.c.bf16 %v1493, %v1492
      %v1528 = vpack.c.bf16 %v1495, %v1494
      %v1529 = vpack.c.bf16 %v1497, %v1496
      %v1530 = vpack.c.bf16 %v1499, %v1498
      %v1531 = vpack.c.bf16 %v1501, %v1500
      %v1532 = vpack.c.bf16 %v1503, %v1502
      %v1533 = vpack.c.bf16 %v1505, %v1504
      %v1534 = vpack.c.bf16 %v1507, %v1506
      %v1535 = vpack.c.bf16 %v1509, %v1508
      %v1536 = vpack.c.bf16 %v1511, %v1510
      %v1537 = vpack.c.bf16 %v1513, %v1512
      %v1538 = vpack.c.bf16 %v1515, %v1514
      %v1539 = vpack.c.bf16 %v1517, %v1516
      %v1540 = vpack.c.bf16 %v1519, %v1518
      %v1541 = vpack.c.bf16 %v1521, %v1520
      %v1542 = vpack.c.bf16 %v1523, %v1522
      %v1543 = vpack.c.bf16 %v1525, %v1524
      %v1544 = vld [vmem:[%s7] sm:$0x1]
      %v1546 = vlaneseq
      %v1547 = vshrl.u32 %v1546, 7
      %v1548 = vsub.s32 0, %v1547
      %v1549 = vrot.slane %v1544, %v1548
      %v1552 = vsel %vm1026, %v1526, 0
      %v1555 = vsel %vm1026, %v1527, 0
      %v1558 = vsel %vm1026, %v1528, 0
      %v1561 = vsel %vm1026, %v1529, 0
      %v1564 = vsel %vm1026, %v1530, 0
      %v1567 = vsel %vm1026, %v1531, 0
      %v1570 = vsel %vm1026, %v1532, 0
      %v1573 = vsel %vm1026, %v1533, 0
      %v1576 = vsel %vm1026, %v1534, 0
      %v1579 = vsel %vm1026, %v1535, 0
      %v1582 = vsel %vm1026, %v1536, 0
      %v1585 = vsel %vm1026, %v1537, 0
      %v1588 = vsel %vm1026, %v1538, 0
      %v1591 = vsel %vm1026, %v1539, 0
      %v1594 = vsel %vm1026, %v1540, 0
      %v1597 = vsel %vm1026, %v1541, 0
      %1599 = vmatprep.subr.bf16.mxu0 0
      %1600 = vmatpush1.bf16.msra.mxu0 %v1542
      %1601 = vmatprep.subr.bf16.mxu0 0
      %1602 = vmatpush1.bf16.msra.mxu0 %v1543
      %1603 = vmatprep.subr.bf16.mxu0 0
      %1604 = vmatpush1.bf16.msra.mxu0 0
      %1605 = vmatprep.subr.bf16.mxu0 0
      %1606 = vmatpush1.bf16.msra.mxu0 0
      %1607 = vmatprep.subr.bf16.mxu0 0
      %1608 = vmatpush1.bf16.msra.mxu0 0
      %1609 = vmatprep.subr.bf16.mxu0 0
      %1610 = vmatpush1.bf16.msra.mxu0 0
      %1611 = vmatprep.subr.bf16.mxu0 0
      %1612 = vmatpush1.bf16.msra.mxu0 0
      %1613 = vmatprep.subr.bf16.mxu0 0
      %1614 = vmatpush1.bf16.msra.mxu0 0
      %1615 = vmatprep.subr.bf16.mxu0 0
      %1616 = vmatpush1.bf16.msra.mxu0 0
      %1617 = vmatprep.subr.bf16.mxu0 0
      %1618 = vmatpush1.bf16.msra.mxu0 0
      %1619 = vmatprep.subr.bf16.mxu0 0
      %1620 = vmatpush1.bf16.msra.mxu0 0
      %1621 = vmatprep.subr.bf16.mxu0 0
      %1622 = vmatpush1.bf16.msra.mxu0 0
      %1623 = vmatprep.subr.bf16.mxu0 0
      %1624 = vmatpush1.bf16.msra.mxu0 0
      %1625 = vmatprep.subr.bf16.mxu0 0
      %1626 = vmatpush1.bf16.msra.mxu0 0
      %1627 = vmatprep.subr.bf16.mxu0 0
      %1628 = vmatpush1.bf16.msra.mxu0 0
      %1629 = vmatprep.subr.bf16.mxu0 0
      %1630 = vmatpush1.bf16.msra.mxu0 0
      %1631 = vmatprep.mubr.bf16.mxu0 0
      %1632 = vmatmul.mubr.bf16.gmra.mrb[0].mxu0 %v1552
      %v1633 = vpop.f32.mrb[0].mxu0
      %v1634 = vadd.f32 %v1549, %v1633
      %v1635 = vpop.f32.mrb[0].mxu0
      %v1636 = vpop.f32.mrb[0].mxu0
      %v1637 = vadd.f32 %v1549, %v1636
      %v1638 = vpop.f32.mrb[0].mxu0
      %1639 = vmatprep.mubr.bf16.mxu0 0
      %1640 = vmatmul.mubr.bf16.gmra.mrb[0].mxu0 %v1555
      %v1641 = vpop.f32.mrb[0].mxu0
      %v1642 = vadd.f32 %v1549, %v1641
      %v1643 = vpop.f32.mrb[0].mxu0
      %v1644 = vpop.f32.mrb[0].mxu0
      %v1645 = vadd.f32 %v1549, %v1644
      %v1646 = vpop.f32.mrb[0].mxu0
      %1647 = vmatprep.mubr.bf16.mxu0 0
      %1648 = vmatmul.mubr.bf16.gmra.mrb[0].mxu0 %v1558
      %v1649 = vpop.f32.mrb[0].mxu0
      %v1650 = vadd.f32 %v1549, %v1649
      %v1651 = vpop.f32.mrb[0].mxu0
      %v1652 = vpop.f32.mrb[0].mxu0
      %v1653 = vadd.f32 %v1549, %v1652
      %v1654 = vpop.f32.mrb[0].mxu0
      %1655 = vmatprep.mubr.bf16.mxu0 0
      %1656 = vmatmul.mubr.bf16.gmra.mrb[0].mxu0 %v1561
      %v1657 = vpop.f32.mrb[0].mxu0
      %v1658 = vadd.f32 %v1549, %v1657
      %v1659 = vpop.f32.mrb[0].mxu0
      %v1660 = vpop.f32.mrb[0].mxu0
      %v1661 = vadd.f32 %v1549, %v1660
      %v1662 = vpop.f32.mrb[0].mxu0
      %1663 = vmatprep.mubr.bf16.mxu0 0
      %1664 = vmatmul.mubr.bf16.gmra.mrb[0].mxu0 %v1564
      %v1665 = vpop.f32.mrb[0].mxu0
      %v1666 = vadd.f32 %v1549, %v1665
      %v1667 = vpop.f32.mrb[0].mxu0
      %v1668 = vpop.f32.mrb[0].mxu0
      %v1669 = vadd.f32 %v1549, %v1668
      %v1670 = vpop.f32.mrb[0].mxu0
      %1671 = vmatprep.mubr.bf16.mxu0 0
      %1672 = vmatmul.mubr.bf16.gmra.mrb[0].mxu0 %v1567
      %v1673 = vpop.f32.mrb[0].mxu0
      %v1674 = vadd.f32 %v1549, %v1673
      %v1675 = vpop.f32.mrb[0].mxu0
      %v1676 = vpop.f32.mrb[0].mxu0
      %v1677 = vadd.f32 %v1549, %v1676
      %v1678 = vpop.f32.mrb[0].mxu0
      %1679 = vmatprep.mubr.bf16.mxu0 0
      %1680 = vmatmul.mubr.bf16.gmra.mrb[0].mxu0 %v1570
      %v1681 = vpop.f32.mrb[0].mxu0
      %v1682 = vadd.f32 %v1549, %v1681
      %v1683 = vpop.f32.mrb[0].mxu0
      %v1684 = vpop.f32.mrb[0].mxu0
      %v1685 = vadd.f32 %v1549, %v1684
      %v1686 = vpop.f32.mrb[0].mxu0
      %1687 = vmatprep.mubr.bf16.mxu0 0
      %1688 = vmatmul.mubr.bf16.gmra.mrb[0].mxu0 %v1573
      %v1689 = vpop.f32.mrb[0].mxu0
      %v1690 = vadd.f32 %v1549, %v1689
      %v1691 = vpop.f32.mrb[0].mxu0
      %v1692 = vpop.f32.mrb[0].mxu0
      %v1693 = vadd.f32 %v1549, %v1692
      %v1694 = vpop.f32.mrb[0].mxu0
      %1695 = vmatprep.mubr.bf16.mxu0 0
      %1696 = vmatmul.mubr.bf16.gmra.mrb[0].mxu0 %v1576
      %v1697 = vpop.f32.mrb[0].mxu0
      %v1698 = vadd.f32 %v1549, %v1697
      %v1699 = vpop.f32.mrb[0].mxu0
      %v1700 = vpop.f32.mrb[0].mxu0
      %v1701 = vadd.f32 %v1549, %v1700
      %v1702 = vpop.f32.mrb[0].mxu0
      %1703 = vmatprep.mubr.bf16.mxu0 0
      %1704 = vmatmul.mubr.bf16.gmra.mrb[0].mxu0 %v1579
      %v1705 = vpop.f32.mrb[0].mxu0
      %v1706 = vadd.f32 %v1549, %v1705
      %v1707 = vpop.f32.mrb[0].mxu0
      %v1708 = vpop.f32.mrb[0].mxu0
      %v1709 = vadd.f32 %v1549, %v1708
      %v1710 = vpop.f32.mrb[0].mxu0
      %1711 = vmatprep.mubr.bf16.mxu0 0
      %1712 = vmatmul.mubr.bf16.gmra.mrb[0].mxu0 %v1582
      %v1713 = vpop.f32.mrb[0].mxu0
      %v1714 = vadd.f32 %v1549, %v1713
      %v1715 = vpop.f32.mrb[0].mxu0
      %v1716 = vpop.f32.mrb[0].mxu0
      %v1717 = vadd.f32 %v1549, %v1716
      %v1718 = vpop.f32.mrb[0].mxu0
      %1719 = vmatprep.mubr.bf16.mxu0 0
      %1720 = vmatmul.mubr.bf16.gmra.mrb[0].mxu0 %v1585
      %v1721 = vpop.f32.mrb[0].mxu0
      %v1722 = vadd.f32 %v1549, %v1721
      %v1723 = vpop.f32.mrb[0].mxu0
      %v1724 = vpop.f32.mrb[0].mxu0
      %v1725 = vadd.f32 %v1549, %v1724
      %v1726 = vpop.f32.mrb[0].mxu0
      %1727 = vmatprep.mubr.bf16.mxu0 0
      %1728 = vmatmul.mubr.bf16.gmra.mrb[0].mxu0 %v1588
      %v1729 = vpop.f32.mrb[0].mxu0
      %v1730 = vadd.f32 %v1549, %v1729
      %v1731 = vpop.f32.mrb[0].mxu0
      %v1732 = vpop.f32.mrb[0].mxu0
      %v1733 = vadd.f32 %v1549, %v1732
      %v1734 = vpop.f32.mrb[0].mxu0
      %1735 = vmatprep.mubr.bf16.mxu0 0
      %1736 = vmatmul.mubr.bf16.gmra.mrb[0].mxu0 %v1591
      %v1737 = vpop.f32.mrb[0].mxu0
      %v1738 = vadd.f32 %v1549, %v1737
      %v1739 = vpop.f32.mrb[0].mxu0
      %v1740 = vpop.f32.mrb[0].mxu0
      %v1741 = vadd.f32 %v1549, %v1740
      %v1742 = vpop.f32.mrb[0].mxu0
      %1743 = vmatprep.mubr.bf16.mxu0 0
      %1744 = vmatmul.mubr.bf16.gmra.mrb[0].mxu0 %v1594
      %v1745 = vpop.f32.mrb[0].mxu0
      %v1746 = vadd.f32 %v1549, %v1745
      %v1747 = vpop.f32.mrb[0].mxu0
      %v1748 = vpop.f32.mrb[0].mxu0
      %v1749 = vadd.f32 %v1549, %v1748
      %v1750 = vpop.f32.mrb[0].mxu0
      %1751 = vmatprep.mubr.bf16.mxu0 0
      %1752 = vmatmul.mubr.bf16.gmra.mrb[0].mxu0 %v1597
      %v1753 = vpop.f32.mrb[0].mxu0
      %v1754 = vadd.f32 %v1549, %v1753
      %v1755 = vpop.f32.mrb[0].mxu0
      %v1756 = vpop.f32.mrb[0].mxu0
      %v1757 = vadd.f32 %v1549, %v1756
      %v1758 = vpop.f32.mrb[0].mxu0
      %1759 = vdwg.mxu0
      %v1760 = vpack.c.bf16 %v1637, %v1634
      %v1761 = vpack.c.bf16 %v1645, %v1642
      %v1762 = vpack.c.bf16 %v1653, %v1650
      %v1763 = vpack.c.bf16 %v1661, %v1658
      %v1764 = vpack.c.bf16 %v1669, %v1666
      %v1765 = vpack.c.bf16 %v1677, %v1674
      %v1766 = vpack.c.bf16 %v1685, %v1682
      %v1767 = vpack.c.bf16 %v1693, %v1690
      %v1768 = vpack.c.bf16 %v1701, %v1698
      %v1769 = vpack.c.bf16 %v1709, %v1706
      %v1770 = vpack.c.bf16 %v1717, %v1714
      %v1771 = vpack.c.bf16 %v1725, %v1722
      %v1772 = vpack.c.bf16 %v1733, %v1730
      %v1773 = vpack.c.bf16 %v1741, %v1738
      %v1774 = vpack.c.bf16 %v1749, %v1746
      %v1775 = vpack.c.bf16 %v1757, %v1754
      %v1776 = vld [vmem:[%s1] sm:$0xff]
      %v1777 = vld [vmem:[%s1 + $0x8] sm:$0xff]
      %v1778 = vld [vmem:[%s1 + $0x10] sm:$0xff]
      %v1779 = vld [vmem:[%s1 + $0x18] sm:$0xff]
      %v1780 = vld [vmem:[%s1 + $0x20] sm:$0xff]
      %v1781 = vld [vmem:[%s1 + $0x28] sm:$0xff]
      %v1782 = vld [vmem:[%s1 + $0x30] sm:$0xff]
      %v1783 = vld [vmem:[%s1 + $0x38] sm:$0xff]
      %1788 = vrot.lane.b32.xlu0 %v1760, 96
      %v1789 = vpop.permute.xlu0 %1788
      %1790 = vrot.lane.b32.xlu0 %v1761, 96
      %v1791 = vpop.permute.xlu0 %1790
      %1792 = vrot.lane.b32.xlu0 %v1762, 96
      %v1793 = vpop.permute.xlu0 %1792
      %1794 = vrot.lane.b32.xlu0 %v1763, 96
      %v1795 = vpop.permute.xlu0 %1794
      %vm1796 = vcmask 130048
      %v1798 = vsel %vm1796, %v1760, 0
      %v1801 = vsel %vm1796, %v1761, 0
      %v1804 = vsel %vm1796, %v1762, 0
      %v1807 = vsel %vm1796, %v1763, 0
      %v1810 = vsel %vm1796, %v1789, 0
      %v1813 = vsel %vm1796, %v1791, 0
      %v1816 = vsel %vm1796, %v1793, 0
      %v1819 = vsel %vm1796, %v1795, 0
      %1821 = vmatprep.subr.bf16.mxu0 0
      %1822 = vmatpush1.bf16.xpose.msra.mxu0 %v1810
      %1823 = vmatprep.subr.bf16.mxu0 0
      %1824 = vmatpush1.bf16.xpose.msra.mxu0 %v1813
      %1825 = vmatprep.subr.bf16.mxu0 0
      %1826 = vmatpush1.bf16.xpose.msra.mxu0 %v1816
      %1827 = vmatprep.subr.bf16.mxu0 0
      %1828 = vmatpush1.bf16.xpose.msra.mxu0 %v1819
      %1829 = vmatprep.subr.bf16.mxu0 0
      %1830 = vmatpush1.bf16.xpose.msra.mxu0 0
      %1831 = vmatprep.subr.bf16.mxu0 0
      %1832 = vmatpush1.bf16.xpose.msra.mxu0 0
      %1833 = vmatprep.subr.bf16.mxu0 0
      %1834 = vmatpush1.bf16.xpose.msra.mxu0 0
      %1835 = vmatprep.subr.bf16.mxu0 0
      %1836 = vmatpush1.bf16.xpose.msra.mxu0 0
      %1837 = vmatprep.subr.bf16.mxu0 0
      %1838 = vmatpush1.bf16.xpose.msra.mxu0 0
      %1839 = vmatprep.subr.bf16.mxu0 0
      %1840 = vmatpush1.bf16.xpose.msra.mxu0 0
      %1841 = vmatprep.subr.bf16.mxu0 0
      %1842 = vmatpush1.bf16.xpose.msra.mxu0 0
      %1843 = vmatprep.subr.bf16.mxu0 0
      %1844 = vmatpush1.bf16.xpose.msra.mxu0 0
      %1845 = vmatprep.subr.bf16.mxu0 0
      %1846 = vmatpush1.bf16.xpose.msra.mxu0 0
      %1847 = vmatprep.subr.bf16.mxu0 0
      %1848 = vmatpush1.bf16.xpose.msra.mxu0 0
      %1849 = vmatprep.subr.bf16.mxu0 0
      %1850 = vmatpush1.bf16.xpose.msra.mxu0 0
      %1851 = vmatprep.subr.bf16.mxu0 0
      %1852 = vmatpush1.bf16.xpose.msra.mxu0 0
      %1853 = vmatprep.mubr.bf16.mxu0 0
      %1854 = vmatmul.mubr.bf16.gmra.mrb[0].mxu0 %v1798
      %v1855 = vpop.f32.mrb[0].mxu0
      %v1856 = vadd.f32 %v1776, %v1855
      %v1857 = vpop.f32.mrb[0].mxu0
      %v1858 = vpop.f32.mrb[0].mxu0
      %v1859 = vadd.f32 %v1777, %v1858
      %v1860 = vpop.f32.mrb[0].mxu0
      %1861 = vmatprep.mubr.bf16.mxu0 0
      %1862 = vmatmul.mubr.bf16.gmra.mrb[0].mxu0 %v1801
      %v1863 = vpop.f32.mrb[0].mxu0
      %v1864 = vadd.f32 %v1778, %v1863
      %v1865 = vpop.f32.mrb[0].mxu0
      %v1866 = vpop.f32.mrb[0].mxu0
      %v1867 = vadd.f32 %v1779, %v1866
      %v1868 = vpop.f32.mrb[0].mxu0
      %1869 = vmatprep.mubr.bf16.mxu0 0
      %1870 = vmatmul.mubr.bf16.gmra.mrb[0].mxu0 %v1804
      %v1871 = vpop.f32.mrb[0].mxu0
      %v1872 = vadd.f32 %v1780, %v1871
      %v1873 = vpop.f32.mrb[0].mxu0
      %v1874 = vpop.f32.mrb[0].mxu0
      %v1875 = vadd.f32 %v1781, %v1874
      %v1876 = vpop.f32.mrb[0].mxu0
      %1877 = vmatprep.mubr.bf16.mxu0 0
      %1878 = vmatmul.mubr.bf16.gmra.mrb[0].mxu0 %v1807
      %v1879 = vpop.f32.mrb[0].mxu0
      %v1880 = vadd.f32 %v1782, %v1879
      %v1881 = vpop.f32.mrb[0].mxu0
      %v1882 = vpop.f32.mrb[0].mxu0
      %v1883 = vadd.f32 %v1783, %v1882
      %v1884 = vpop.f32.mrb[0].mxu0
      %1885 = vdwg.mxu0
      %1890 = vrot.lane.b32.xlu0 %v1764, 96
      %v1891 = vpop.permute.xlu0 %1890
      %1892 = vrot.lane.b32.xlu0 %v1765, 96
      %v1893 = vpop.permute.xlu0 %1892
      %1894 = vrot.lane.b32.xlu0 %v1766, 96
      %v1895 = vpop.permute.xlu0 %1894
      %1896 = vrot.lane.b32.xlu0 %v1767, 96
      %v1897 = vpop.permute.xlu0 %1896
      %v1899 = vsel %vm1796, %v1764, 0
      %v1902 = vsel %vm1796, %v1765, 0
      %v1905 = vsel %vm1796, %v1766, 0
      %v1908 = vsel %vm1796, %v1767, 0
      %v1911 = vsel %vm1796, %v1891, 0
      %v1914 = vsel %vm1796, %v1893, 0
      %v1917 = vsel %vm1796, %v1895, 0
      %v1920 = vsel %vm1796, %v1897, 0
      %1922 = vmatprep.subr.bf16.mxu0 0
      %1923 = vmatpush1.bf16.xpose.msra.mxu0 %v1911
      %1924 = vmatprep.subr.bf16.mxu0 0
      %1925 = vmatpush1.bf16.xpose.msra.mxu0 %v1914
      %1926 = vmatprep.subr.bf16.mxu0 0
      %1927 = vmatpush1.bf16.xpose.msra.mxu0 %v1917
      %1928 = vmatprep.subr.bf16.mxu0 0
      %1929 = vmatpush1.bf16.xpose.msra.mxu0 %v1920
      %1930 = vmatprep.subr.bf16.mxu0 0
      %1931 = vmatpush1.bf16.xpose.msra.mxu0 0
      %1932 = vmatprep.subr.bf16.mxu0 0
      %1933 = vmatpush1.bf16.xpose.msra.mxu0 0
      %1934 = vmatprep.subr.bf16.mxu0 0
      %1935 = vmatpush1.bf16.xpose.msra.mxu0 0
      %1936 = vmatprep.subr.bf16.mxu0 0
      %1937 = vmatpush1.bf16.xpose.msra.mxu0 0
      %1938 = vmatprep.subr.bf16.mxu0 0
      %1939 = vmatpush1.bf16.xpose.msra.mxu0 0
      %1940 = vmatprep.subr.bf16.mxu0 0
      %1941 = vmatpush1.bf16.xpose.msra.mxu0 0
      %1942 = vmatprep.subr.bf16.mxu0 0
      %1943 = vmatpush1.bf16.xpose.msra.mxu0 0
      %1944 = vmatprep.subr.bf16.mxu0 0
      %1945 = vmatpush1.bf16.xpose.msra.mxu0 0
      %1946 = vmatprep.subr.bf16.mxu0 0
      %1947 = vmatpush1.bf16.xpose.msra.mxu0 0
      %1948 = vmatprep.subr.bf16.mxu0 0
      %1949 = vmatpush1.bf16.xpose.msra.mxu0 0
      %1950 = vmatprep.subr.bf16.mxu0 0
      %1951 = vmatpush1.bf16.xpose.msra.mxu0 0
      %1952 = vmatprep.subr.bf16.mxu0 0
      %1953 = vmatpush1.bf16.xpose.msra.mxu0 0
      %1954 = vmatprep.mubr.bf16.mxu0 0
      %1955 = vmatmul.mubr.bf16.gmra.mrb[0].mxu0 %v1899
      %v1956 = vpop.f32.mrb[0].mxu0
      %v1957 = vadd.f32 %v1776, %v1956
      %v1958 = vpop.f32.mrb[0].mxu0
      %v1959 = vpop.f32.mrb[0].mxu0
      %v1960 = vadd.f32 %v1777, %v1959
      %v1961 = vpop.f32.mrb[0].mxu0
      %1962 = vmatprep.mubr.bf16.mxu0 0
      %1963 = vmatmul.mubr.bf16.gmra.mrb[0].mxu0 %v1902
      %v1964 = vpop.f32.mrb[0].mxu0
      %v1965 = vadd.f32 %v1778, %v1964
      %v1966 = vpop.f32.mrb[0].mxu0
      %v1967 = vpop.f32.mrb[0].mxu0
      %v1968 = vadd.f32 %v1779, %v1967
      %v1969 = vpop.f32.mrb[0].mxu0
      %1970 = vmatprep.mubr.bf16.mxu0 0
      %1971 = vmatmul.mubr.bf16.gmra.mrb[0].mxu0 %v1905
      %v1972 = vpop.f32.mrb[0].mxu0
      %v1973 = vadd.f32 %v1780, %v1972
      %v1974 = vpop.f32.mrb[0].mxu0
      %v1975 = vpop.f32.mrb[0].mxu0
      %v1976 = vadd.f32 %v1781, %v1975
      %v1977 = vpop.f32.mrb[0].mxu0
      %1978 = vmatprep.mubr.bf16.mxu0 0
      %1979 = vmatmul.mubr.bf16.gmra.mrb[0].mxu0 %v1908
      %v1980 = vpop.f32.mrb[0].mxu0
      %v1981 = vadd.f32 %v1782, %v1980
      %v1982 = vpop.f32.mrb[0].mxu0
      %v1983 = vpop.f32.mrb[0].mxu0
      %v1984 = vadd.f32 %v1783, %v1983
      %v1985 = vpop.f32.mrb[0].mxu0
      %1986 = vdwg.mxu0
      %1991 = vrot.lane.b32.xlu0 %v1768, 96
      %v1992 = vpop.permute.xlu0 %1991
      %1993 = vrot.lane.b32.xlu0 %v1769, 96
      %v1994 = vpop.permute.xlu0 %1993
      %1995 = vrot.lane.b32.xlu0 %v1770, 96
      %v1996 = vpop.permute.xlu0 %1995
      %1997 = vrot.lane.b32.xlu0 %v1771, 96
      %v1998 = vpop.permute.xlu0 %1997
      %v2000 = vsel %vm1796, %v1768, 0
      %v2003 = vsel %vm1796, %v1769, 0
      %v2006 = vsel %vm1796, %v1770, 0
      %v2009 = vsel %vm1796, %v1771, 0
      %v2012 = vsel %vm1796, %v1992, 0
      %v2015 = vsel %vm1796, %v1994, 0
      %v2018 = vsel %vm1796, %v1996, 0
      %v2021 = vsel %vm1796, %v1998, 0
      %2023 = vmatprep.subr.bf16.mxu0 0
      %2024 = vmatpush1.bf16.xpose.msra.mxu0 %v2012
      %2025 = vmatprep.subr.bf16.mxu0 0
      %2026 = vmatpush1.bf16.xpose.msra.mxu0 %v2015
      %2027 = vmatprep.subr.bf16.mxu0 0
      %2028 = vmatpush1.bf16.xpose.msra.mxu0 %v2018
      %2029 = vmatprep.subr.bf16.mxu0 0
      %2030 = vmatpush1.bf16.xpose.msra.mxu0 %v2021
      %2031 = vmatprep.subr.bf16.mxu0 0
      %2032 = vmatpush1.bf16.xpose.msra.mxu0 0
      %2033 = vmatprep.subr.bf16.mxu0 0
      %2034 = vmatpush1.bf16.xpose.msra.mxu0 0
      %2035 = vmatprep.subr.bf16.mxu0 0
      %2036 = vmatpush1.bf16.xpose.msra.mxu0 0
      %2037 = vmatprep.subr.bf16.mxu0 0
      %2038 = vmatpush1.bf16.xpose.msra.mxu0 0
      %2039 = vmatprep.subr.bf16.mxu0 0
      %2040 = vmatpush1.bf16.xpose.msra.mxu0 0
      %2041 = vmatprep.subr.bf16.mxu0 0
      %2042 = vmatpush1.bf16.xpose.msra.mxu0 0
      %2043 = vmatprep.subr.bf16.mxu0 0
      %2044 = vmatpush1.bf16.xpose.msra.mxu0 0
      %2045 = vmatprep.subr.bf16.mxu0 0
      %2046 = vmatpush1.bf16.xpose.msra.mxu0 0
      %2047 = vmatprep.subr.bf16.mxu0 0
      %2048 = vmatpush1.bf16.xpose.msra.mxu0 0
      %2049 = vmatprep.subr.bf16.mxu0 0
      %2050 = vmatpush1.bf16.xpose.msra.mxu0 0
      %2051 = vmatprep.subr.bf16.mxu0 0
      %2052 = vmatpush1.bf16.xpose.msra.mxu0 0
      %2053 = vmatprep.subr.bf16.mxu0 0
      %2054 = vmatpush1.bf16.xpose.msra.mxu0 0
      %2055 = vmatprep.mubr.bf16.mxu0 0
      %2056 = vmatmul.mubr.bf16.gmra.mrb[0].mxu0 %v2000
      %v2057 = vpop.f32.mrb[0].mxu0
      %v2058 = vadd.f32 %v1776, %v2057
      %v2059 = vpop.f32.mrb[0].mxu0
      %v2060 = vpop.f32.mrb[0].mxu0
      %v2061 = vadd.f32 %v1777, %v2060
      %v2062 = vpop.f32.mrb[0].mxu0
      %2063 = vmatprep.mubr.bf16.mxu0 0
      %2064 = vmatmul.mubr.bf16.gmra.mrb[0].mxu0 %v2003
      %v2065 = vpop.f32.mrb[0].mxu0
      %v2066 = vadd.f32 %v1778, %v2065
      %v2067 = vpop.f32.mrb[0].mxu0
      %v2068 = vpop.f32.mrb[0].mxu0
      %v2069 = vadd.f32 %v1779, %v2068
      %v2070 = vpop.f32.mrb[0].mxu0
      %2071 = vmatprep.mubr.bf16.mxu0 0
      %2072 = vmatmul.mubr.bf16.gmra.mrb[0].mxu0 %v2006
      %v2073 = vpop.f32.mrb[0].mxu0
      %v2074 = vadd.f32 %v1780, %v2073
      %v2075 = vpop.f32.mrb[0].mxu0
      %v2076 = vpop.f32.mrb[0].mxu0
      %v2077 = vadd.f32 %v1781, %v2076
      %v2078 = vpop.f32.mrb[0].mxu0
      %2079 = vmatprep.mubr.bf16.mxu0 0
      %2080 = vmatmul.mubr.bf16.gmra.mrb[0].mxu0 %v2009
      %v2081 = vpop.f32.mrb[0].mxu0
      %v2082 = vadd.f32 %v1782, %v2081
      %v2083 = vpop.f32.mrb[0].mxu0
      %v2084 = vpop.f32.mrb[0].mxu0
      %v2085 = vadd.f32 %v1783, %v2084
      %v2086 = vpop.f32.mrb[0].mxu0
      %2087 = vdwg.mxu0
      %2092 = vrot.lane.b32.xlu0 %v1772, 96
      %v2093 = vpop.permute.xlu0 %2092
      %2094 = vrot.lane.b32.xlu0 %v1773, 96
      %v2095 = vpop.permute.xlu0 %2094
      %2096 = vrot.lane.b32.xlu0 %v1774, 96
      %v2097 = vpop.permute.xlu0 %2096
      %2098 = vrot.lane.b32.xlu0 %v1775, 96
      %v2099 = vpop.permute.xlu0 %2098
      %v2101 = vsel %vm1796, %v1772, 0
      %v2104 = vsel %vm1796, %v1773, 0
      %v2107 = vsel %vm1796, %v1774, 0
      %v2110 = vsel %vm1796, %v1775, 0
      %v2113 = vsel %vm1796, %v2093, 0
      %v2116 = vsel %vm1796, %v2095, 0
      %v2119 = vsel %vm1796, %v2097, 0
      %v2122 = vsel %vm1796, %v2099, 0
      %2124 = vmatprep.subr.bf16.mxu0 0
      %2125 = vmatpush1.bf16.xpose.msra.mxu0 %v2113
      %2126 = vmatprep.subr.bf16.mxu0 0
      %2127 = vmatpush1.bf16.xpose.msra.mxu0 %v2116
      %2128 = vmatprep.subr.bf16.mxu0 0
      %2129 = vmatpush1.bf16.xpose.msra.mxu0 %v2119
      %2130 = vmatprep.subr.bf16.mxu0 0
      %2131 = vmatpush1.bf16.xpose.msra.mxu0 %v2122
      %2132 = vmatprep.subr.bf16.mxu0 0
      %2133 = vmatpush1.bf16.xpose.msra.mxu0 0
      %2134 = vmatprep.subr.bf16.mxu0 0
      %2135 = vmatpush1.bf16.xpose.msra.mxu0 0
      %2136 = vmatprep.subr.bf16.mxu0 0
      %2137 = vmatpush1.bf16.xpose.msra.mxu0 0
      %2138 = vmatprep.subr.bf16.mxu0 0
      %2139 = vmatpush1.bf16.xpose.msra.mxu0 0
      %2140 = vmatprep.subr.bf16.mxu0 0
      %2141 = vmatpush1.bf16.xpose.msra.mxu0 0
      %2142 = vmatprep.subr.bf16.mxu0 0
      %2143 = vmatpush1.bf16.xpose.msra.mxu0 0
      %2144 = vmatprep.subr.bf16.mxu0 0
      %2145 = vmatpush1.bf16.xpose.msra.mxu0 0
      %2146 = vmatprep.subr.bf16.mxu0 0
      %2147 = vmatpush1.bf16.xpose.msra.mxu0 0
      %2148 = vmatprep.subr.bf16.mxu0 0
      %2149 = vmatpush1.bf16.xpose.msra.mxu0 0
      %2150 = vmatprep.subr.bf16.mxu0 0
      %2151 = vmatpush1.bf16.xpose.msra.mxu0 0
      %2152 = vmatprep.subr.bf16.mxu0 0
      %2153 = vmatpush1.bf16.xpose.msra.mxu0 0
      %2154 = vmatprep.subr.bf16.mxu0 0
      %2155 = vmatpush1.bf16.xpose.msra.mxu0 0
      %2156 = vmatprep.mubr.bf16.mxu0 0
      %2157 = vmatmul.mubr.bf16.gmra.mrb[0].mxu0 %v2101
      %v2158 = vpop.f32.mrb[0].mxu0
      %v2159 = vadd.f32 %v1776, %v2158
      %v2160 = vpop.f32.mrb[0].mxu0
      %v2161 = vpop.f32.mrb[0].mxu0
      %v2162 = vadd.f32 %v1777, %v2161
      %v2163 = vpop.f32.mrb[0].mxu0
      %2164 = vmatprep.mubr.bf16.mxu0 0
      %2165 = vmatmul.mubr.bf16.gmra.mrb[0].mxu0 %v2104
      %v2166 = vpop.f32.mrb[0].mxu0
      %v2167 = vadd.f32 %v1778, %v2166
      %v2168 = vpop.f32.mrb[0].mxu0
      %v2169 = vpop.f32.mrb[0].mxu0
      %v2170 = vadd.f32 %v1779, %v2169
      %v2171 = vpop.f32.mrb[0].mxu0
      %2172 = vmatprep.mubr.bf16.mxu0 0
      %2173 = vmatmul.mubr.bf16.gmra.mrb[0].mxu0 %v2107
      %v2174 = vpop.f32.mrb[0].mxu0
      %v2175 = vadd.f32 %v1780, %v2174
      %v2176 = vpop.f32.mrb[0].mxu0
      %v2177 = vpop.f32.mrb[0].mxu0
      %v2178 = vadd.f32 %v1781, %v2177
      %v2179 = vpop.f32.mrb[0].mxu0
      %2180 = vmatprep.mubr.bf16.mxu0 0
      %2181 = vmatmul.mubr.bf16.gmra.mrb[0].mxu0 %v2110
      %v2182 = vpop.f32.mrb[0].mxu0
      %v2183 = vadd.f32 %v1782, %v2182
      %v2184 = vpop.f32.mrb[0].mxu0
      %v2185 = vpop.f32.mrb[0].mxu0
      %v2186 = vadd.f32 %v1783, %v2185
      %v2187 = vpop.f32.mrb[0].mxu0
      %2188 = vdwg.mxu0
      %vm2189 = vcmask 523264
      %v2190 = vsel %vm2189, %v1856, -inf
      %2191 = vmax.xlane.f32.xlu0 %v2190
      %v2192 = vpop.xlane.xlu0 %2191
      %v2193 = vsel %vm2189, %v1859, -inf
      %2194 = vmax.xlane.f32.xlu0 %v2193
      %v2195 = vpop.xlane.xlu0 %2194
      %v2196 = vsel %vm2189, %v1864, -inf
      %2197 = vmax.xlane.f32.xlu0 %v2196
      %v2198 = vpop.xlane.xlu0 %2197
      %v2199 = vsel %vm2189, %v1867, -inf
      %2200 = vmax.xlane.f32.xlu0 %v2199
      %v2201 = vpop.xlane.xlu0 %2200
      %v2202 = vsel %vm2189, %v1872, -inf
      %2203 = vmax.xlane.f32.xlu0 %v2202
      %v2204 = vpop.xlane.xlu0 %2203
      %v2205 = vsel %vm2189, %v1875, -inf
      %2206 = vmax.xlane.f32.xlu0 %v2205
      %v2207 = vpop.xlane.xlu0 %2206
      %v2208 = vsel %vm2189, %v1880, -inf
      %2209 = vmax.xlane.f32.xlu0 %v2208
      %v2210 = vpop.xlane.xlu0 %2209
      %v2211 = vsel %vm2189, %v1883, -inf
      %2212 = vmax.xlane.f32.xlu0 %v2211
      %v2213 = vpop.xlane.xlu0 %2212
      %v2214 = vsel %vm2189, %v1957, -inf
      %2215 = vmax.xlane.f32.xlu0 %v2214
      %v2216 = vpop.xlane.xlu0 %2215
      %v2217 = vsel %vm2189, %v1960, -inf
      %2218 = vmax.xlane.f32.xlu0 %v2217
      %v2219 = vpop.xlane.xlu0 %2218
      %v2220 = vsel %vm2189, %v1965, -inf
      %2221 = vmax.xlane.f32.xlu0 %v2220
      %v2222 = vpop.xlane.xlu0 %2221
      %v2223 = vsel %vm2189, %v1968, -inf
      %2224 = vmax.xlane.f32.xlu0 %v2223
      %v2225 = vpop.xlane.xlu0 %2224
      %v2226 = vsel %vm2189, %v1973, -inf
      %2227 = vmax.xlane.f32.xlu0 %v2226
      %v2228 = vpop.xlane.xlu0 %2227
      %v2229 = vsel %vm2189, %v1976, -inf
      %2230 = vmax.xlane.f32.xlu0 %v2229
      %v2231 = vpop.xlane.xlu0 %2230
      %v2232 = vsel %vm2189, %v1981, -inf
      %2233 = vmax.xlane.f32.xlu0 %v2232
      %v2234 = vpop.xlane.xlu0 %2233
      %v2235 = vsel %vm2189, %v1984, -inf
      %2236 = vmax.xlane.f32.xlu0 %v2235
      %v2237 = vpop.xlane.xlu0 %2236
      %v2238 = vsel %vm2189, %v2058, -inf
      %2239 = vmax.xlane.f32.xlu0 %v2238
      %v2240 = vpop.xlane.xlu0 %2239
      %v2241 = vsel %vm2189, %v2061, -inf
      %2242 = vmax.xlane.f32.xlu0 %v2241
      %v2243 = vpop.xlane.xlu0 %2242
      %v2244 = vsel %vm2189, %v2066, -inf
      %2245 = vmax.xlane.f32.xlu0 %v2244
      %v2246 = vpop.xlane.xlu0 %2245
      %v2247 = vsel %vm2189, %v2069, -inf
      %2248 = vmax.xlane.f32.xlu0 %v2247
      %v2249 = vpop.xlane.xlu0 %2248
      %v2250 = vsel %vm2189, %v2074, -inf
      %2251 = vmax.xlane.f32.xlu0 %v2250
      %v2252 = vpop.xlane.xlu0 %2251
      %v2253 = vsel %vm2189, %v2077, -inf
      %2254 = vmax.xlane.f32.xlu0 %v2253
      %v2255 = vpop.xlane.xlu0 %2254
      %v2256 = vsel %vm2189, %v2082, -inf
      %2257 = vmax.xlane.f32.xlu0 %v2256
      %v2258 = vpop.xlane.xlu0 %2257
      %v2259 = vsel %vm2189, %v2085, -inf
      %2260 = vmax.xlane.f32.xlu0 %v2259
      %v2261 = vpop.xlane.xlu0 %2260
      %v2262 = vsel %vm2189, %v2159, -inf
      %2263 = vmax.xlane.f32.xlu0 %v2262
      %v2264 = vpop.xlane.xlu0 %2263
      %v2265 = vsel %vm2189, %v2162, -inf
      %2266 = vmax.xlane.f32.xlu0 %v2265
      %v2267 = vpop.xlane.xlu0 %2266
      %v2268 = vsel %vm2189, %v2167, -inf
      %2269 = vmax.xlane.f32.xlu0 %v2268
      %v2270 = vpop.xlane.xlu0 %2269
      %v2271 = vsel %vm2189, %v2170, -inf
      %2272 = vmax.xlane.f32.xlu0 %v2271
      %v2273 = vpop.xlane.xlu0 %2272
      %v2274 = vsel %vm2189, %v2175, -inf
      %2275 = vmax.xlane.f32.xlu0 %v2274
      %v2276 = vpop.xlane.xlu0 %2275
      %v2277 = vsel %vm2189, %v2178, -inf
      %2278 = vmax.xlane.f32.xlu0 %v2277
      %v2279 = vpop.xlane.xlu0 %2278
      %v2280 = vsel %vm2189, %v2183, -inf
      %2281 = vmax.xlane.f32.xlu0 %v2280
      %v2282 = vpop.xlane.xlu0 %2281
      %v2283 = vsel %vm2189, %v2186, -inf
      %2284 = vmax.xlane.f32.xlu0 %v2283
      %v2285 = vpop.xlane.xlu0 %2284
      %v2286 = vsub.f32 %v1856, %v2192
      %v2287 = vsub.f32 %v1859, %v2195
      %v2288 = vsub.f32 %v1864, %v2198
      %v2289 = vsub.f32 %v1867, %v2201
      %v2290 = vsub.f32 %v1872, %v2204
      %v2291 = vsub.f32 %v1875, %v2207
      %v2292 = vsub.f32 %v1880, %v2210
      %v2293 = vsub.f32 %v1883, %v2213
      %v2294 = vsub.f32 %v1957, %v2216
      %v2295 = vsub.f32 %v1960, %v2219
      %v2296 = vsub.f32 %v1965, %v2222
      %v2297 = vsub.f32 %v1968, %v2225
      %v2298 = vsub.f32 %v1973, %v2228
      %v2299 = vsub.f32 %v1976, %v2231
      %v2300 = vsub.f32 %v1981, %v2234
      %v2301 = vsub.f32 %v1984, %v2237
      %v2302 = vsub.f32 %v2058, %v2240
      %v2303 = vsub.f32 %v2061, %v2243
      %v2304 = vsub.f32 %v2066, %v2246
      %v2305 = vsub.f32 %v2069, %v2249
      %v2306 = vsub.f32 %v2074, %v2252
      %v2307 = vsub.f32 %v2077, %v2255
      %v2308 = vsub.f32 %v2082, %v2258
      %v2309 = vsub.f32 %v2085, %v2261
      %v2310 = vsub.f32 %v2159, %v2264
      %v2311 = vsub.f32 %v2162, %v2267
      %v2312 = vsub.f32 %v2167, %v2270
      %v2313 = vsub.f32 %v2170, %v2273
      %v2314 = vsub.f32 %v2175, %v2276
      %v2315 = vsub.f32 %v2178, %v2279
      %v2316 = vsub.f32 %v2183, %v2282
      %v2317 = vsub.f32 %v2186, %v2285
      %v2318 = vmul.f32 %v2286, 1.442695
      %v2319 = vpow.pop %v2318
      %v2320 = vmul.f32 %v2287, 1.442695
      %v2321 = vpow.pop %v2320
      %v2322 = vmul.f32 %v2288, 1.442695
      %v2323 = vpow.pop %v2322
      %v2324 = vmul.f32 %v2289, 1.442695
      %v2325 = vpow.pop %v2324
      %v2326 = vmul.f32 %v2290, 1.442695
      %v2327 = vpow.pop %v2326
      %v2328 = vmul.f32 %v2291, 1.442695
      %v2329 = vpow.pop %v2328
      %v2330 = vmul.f32 %v2292, 1.442695
      %v2331 = vpow.pop %v2330
      %v2332 = vmul.f32 %v2293, 1.442695
      %v2333 = vpow.pop %v2332
      %v2334 = vmul.f32 %v2294, 1.442695
      %v2335 = vpow.pop %v2334
      %v2336 = vmul.f32 %v2295, 1.442695
      %v2337 = vpow.pop %v2336
      %v2338 = vmul.f32 %v2296, 1.442695
      %v2339 = vpow.pop %v2338
      %v2340 = vmul.f32 %v2297, 1.442695
      %v2341 = vpow.pop %v2340
      %v2342 = vmul.f32 %v2298, 1.442695
      %v2343 = vpow.pop %v2342
      %v2344 = vmul.f32 %v2299, 1.442695
      %v2345 = vpow.pop %v2344
      %v2346 = vmul.f32 %v2300, 1.442695
      %v2347 = vpow.pop %v2346
      %v2348 = vmul.f32 %v2301, 1.442695
      %v2349 = vpow.pop %v2348
      %v2350 = vmul.f32 %v2302, 1.442695
      %v2351 = vpow.pop %v2350
      %v2352 = vmul.f32 %v2303, 1.442695
      %v2353 = vpow.pop %v2352
      %v2354 = vmul.f32 %v2304, 1.442695
      %v2355 = vpow.pop %v2354
      %v2356 = vmul.f32 %v2305, 1.442695
      %v2357 = vpow.pop %v2356
      %v2358 = vmul.f32 %v2306, 1.442695
      %v2359 = vpow.pop %v2358
      %v2360 = vmul.f32 %v2307, 1.442695
      %v2361 = vpow.pop %v2360
      %v2362 = vmul.f32 %v2308, 1.442695
      %v2363 = vpow.pop %v2362
      %v2364 = vmul.f32 %v2309, 1.442695
      %v2365 = vpow.pop %v2364
      %v2366 = vmul.f32 %v2310, 1.442695
      %v2367 = vpow.pop %v2366
      %v2368 = vmul.f32 %v2311, 1.442695
      %v2369 = vpow.pop %v2368
      %v2370 = vmul.f32 %v2312, 1.442695
      %v2371 = vpow.pop %v2370
      %v2372 = vmul.f32 %v2313, 1.442695
      %v2373 = vpow.pop %v2372
      %v2374 = vmul.f32 %v2314, 1.442695
      %v2375 = vpow.pop %v2374
      %v2376 = vmul.f32 %v2315, 1.442695
      %v2377 = vpow.pop %v2376
      %v2378 = vmul.f32 %v2316, 1.442695
      %v2379 = vpow.pop %v2378
      %v2380 = vmul.f32 %v2317, 1.442695
      %v2381 = vpow.pop %v2380
      %v2382 = vsel %vm2189, %v2319, 0.0
      %2383 = vadd.xlane.f32.xlu0 %v2382
      %v2384 = vpop.xlane.xlu0 %2383
      %v2385 = vsel %vm2189, %v2321, 0.0
      %2386 = vadd.xlane.f32.xlu0 %v2385
      %v2387 = vpop.xlane.xlu0 %2386
      %v2388 = vsel %vm2189, %v2323, 0.0
      %2389 = vadd.xlane.f32.xlu0 %v2388
      %v2390 = vpop.xlane.xlu0 %2389
      %v2391 = vsel %vm2189, %v2325, 0.0
      %2392 = vadd.xlane.f32.xlu0 %v2391
      %v2393 = vpop.xlane.xlu0 %2392
      %v2394 = vsel %vm2189, %v2327, 0.0
      %2395 = vadd.xlane.f32.xlu0 %v2394
      %v2396 = vpop.xlane.xlu0 %2395
      %v2397 = vsel %vm2189, %v2329, 0.0
      %2398 = vadd.xlane.f32.xlu0 %v2397
      %v2399 = vpop.xlane.xlu0 %2398
      %v2400 = vsel %vm2189, %v2331, 0.0
      %2401 = vadd.xlane.f32.xlu0 %v2400
      %v2402 = vpop.xlane.xlu0 %2401
      %v2403 = vsel %vm2189, %v2333, 0.0
      %2404 = vadd.xlane.f32.xlu0 %v2403
      %v2405 = vpop.xlane.xlu0 %2404
      %v2406 = vsel %vm2189, %v2335, 0.0
      %2407 = vadd.xlane.f32.xlu0 %v2406
      %v2408 = vpop.xlane.xlu0 %2407
      %v2409 = vsel %vm2189, %v2337, 0.0
      %2410 = vadd.xlane.f32.xlu0 %v2409
      %v2411 = vpop.xlane.xlu0 %2410
      %v2412 = vsel %vm2189, %v2339, 0.0
      %2413 = vadd.xlane.f32.xlu0 %v2412
      %v2414 = vpop.xlane.xlu0 %2413
      %v2415 = vsel %vm2189, %v2341, 0.0
      %2416 = vadd.xlane.f32.xlu0 %v2415
      %v2417 = vpop.xlane.xlu0 %2416
      %v2418 = vsel %vm2189, %v2343, 0.0
      %2419 = vadd.xlane.f32.xlu0 %v2418
      %v2420 = vpop.xlane.xlu0 %2419
      %v2421 = vsel %vm2189, %v2345, 0.0
      %2422 = vadd.xlane.f32.xlu0 %v2421
      %v2423 = vpop.xlane.xlu0 %2422
      %v2424 = vsel %vm2189, %v2347, 0.0
      %2425 = vadd.xlane.f32.xlu0 %v2424
      %v2426 = vpop.xlane.xlu0 %2425
      %v2427 = vsel %vm2189, %v2349, 0.0
      %2428 = vadd.xlane.f32.xlu0 %v2427
      %v2429 = vpop.xlane.xlu0 %2428
      %v2430 = vsel %vm2189, %v2351, 0.0
      %2431 = vadd.xlane.f32.xlu0 %v2430
      %v2432 = vpop.xlane.xlu0 %2431
      %v2433 = vsel %vm2189, %v2353, 0.0
      %2434 = vadd.xlane.f32.xlu0 %v2433
      %v2435 = vpop.xlane.xlu0 %2434
      %v2436 = vsel %vm2189, %v2355, 0.0
      %2437 = vadd.xlane.f32.xlu0 %v2436
      %v2438 = vpop.xlane.xlu0 %2437
      %v2439 = vsel %vm2189, %v2357, 0.0
      %2440 = vadd.xlane.f32.xlu0 %v2439
      %v2441 = vpop.xlane.xlu0 %2440
      %v2442 = vsel %vm2189, %v2359, 0.0
      %2443 = vadd.xlane.f32.xlu0 %v2442
      %v2444 = vpop.xlane.xlu0 %2443
      %v2445 = vsel %vm2189, %v2361, 0.0
      %2446 = vadd.xlane.f32.xlu0 %v2445
      %v2447 = vpop.xlane.xlu0 %2446
      %v2448 = vsel %vm2189, %v2363, 0.0
      %2449 = vadd.xlane.f32.xlu0 %v2448
      %v2450 = vpop.xlane.xlu0 %2449
      %v2451 = vsel %vm2189, %v2365, 0.0
      %2452 = vadd.xlane.f32.xlu0 %v2451
      %v2453 = vpop.xlane.xlu0 %2452
      %v2454 = vsel %vm2189, %v2367, 0.0
      %2455 = vadd.xlane.f32.xlu0 %v2454
      %v2456 = vpop.xlane.xlu0 %2455
      %v2457 = vsel %vm2189, %v2369, 0.0
      %2458 = vadd.xlane.f32.xlu0 %v2457
      %v2459 = vpop.xlane.xlu0 %2458
      %v2460 = vsel %vm2189, %v2371, 0.0
      %2461 = vadd.xlane.f32.xlu0 %v2460
      %v2462 = vpop.xlane.xlu0 %2461
      %v2463 = vsel %vm2189, %v2373, 0.0
      %2464 = vadd.xlane.f32.xlu0 %v2463
      %v2465 = vpop.xlane.xlu0 %2464
      %v2466 = vsel %vm2189, %v2375, 0.0
      %2467 = vadd.xlane.f32.xlu0 %v2466
      %v2468 = vpop.xlane.xlu0 %2467
      %v2469 = vsel %vm2189, %v2377, 0.0
      %2470 = vadd.xlane.f32.xlu0 %v2469
      %v2471 = vpop.xlane.xlu0 %2470
      %v2472 = vsel %vm2189, %v2379, 0.0
      %2473 = vadd.xlane.f32.xlu0 %v2472
      %v2474 = vpop.xlane.xlu0 %2473
      %v2475 = vsel %vm2189, %v2381, 0.0
      %2476 = vadd.xlane.f32.xlu0 %v2475
      %v2477 = vpop.xlane.xlu0 %2476
      %v2478 = vrcp.pop %v2384
      %v2479 = vrcp.pop %v2387
      %v2480 = vrcp.pop %v2390
      %v2481 = vrcp.pop %v2393
      %v2482 = vrcp.pop %v2396
      %v2483 = vrcp.pop %v2399
      %v2484 = vrcp.pop %v2402
      %v2485 = vrcp.pop %v2405
      %v2486 = vrcp.pop %v2408
      %v2487 = vrcp.pop %v2411
      %v2488 = vrcp.pop %v2414
      %v2489 = vrcp.pop %v2417
      %v2490 = vrcp.pop %v2420
      %v2491 = vrcp.pop %v2423
      %v2492 = vrcp.pop %v2426
      %v2493 = vrcp.pop %v2429
      %v2494 = vrcp.pop %v2432
      %v2495 = vrcp.pop %v2435
      %v2496 = vrcp.pop %v2438
      %v2497 = vrcp.pop %v2441
      %v2498 = vrcp.pop %v2444
      %v2499 = vrcp.pop %v2447
      %v2500 = vrcp.pop %v2450
      %v2501 = vrcp.pop %v2453
      %v2502 = vrcp.pop %v2456
      %v2503 = vrcp.pop %v2459
      %v2504 = vrcp.pop %v2462
      %v2505 = vrcp.pop %v2465
      %v2506 = vrcp.pop %v2468
      %v2507 = vrcp.pop %v2471
      %v2508 = vrcp.pop %v2474
      %v2509 = vrcp.pop %v2477
      %v2510 = vmul.f32 %v2319, %v2478
      %v2511 = vmul.f32 %v2321, %v2479
      %v2512 = vmul.f32 %v2323, %v2480
      %v2513 = vmul.f32 %v2325, %v2481
      %v2514 = vmul.f32 %v2327, %v2482
      %v2515 = vmul.f32 %v2329, %v2483
      %v2516 = vmul.f32 %v2331, %v2484
      %v2517 = vmul.f32 %v2333, %v2485
      %v2518 = vmul.f32 %v2335, %v2486
      %v2519 = vmul.f32 %v2337, %v2487
      %v2520 = vmul.f32 %v2339, %v2488
      %v2521 = vmul.f32 %v2341, %v2489
      %v2522 = vmul.f32 %v2343, %v2490
      %v2523 = vmul.f32 %v2345, %v2491
      %v2524 = vmul.f32 %v2347, %v2492
      %v2525 = vmul.f32 %v2349, %v2493
      %v2526 = vmul.f32 %v2351, %v2494
      %v2527 = vmul.f32 %v2353, %v2495
      %v2528 = vmul.f32 %v2355, %v2496
      %v2529 = vmul.f32 %v2357, %v2497
      %v2530 = vmul.f32 %v2359, %v2498
      %v2531 = vmul.f32 %v2361, %v2499
      %v2532 = vmul.f32 %v2363, %v2500
      %v2533 = vmul.f32 %v2365, %v2501
      %v2534 = vmul.f32 %v2367, %v2502
      %v2535 = vmul.f32 %v2369, %v2503
      %v2536 = vmul.f32 %v2371, %v2504
      %v2537 = vmul.f32 %v2373, %v2505
      %v2538 = vmul.f32 %v2375, %v2506
      %v2539 = vmul.f32 %v2377, %v2507
      %v2540 = vmul.f32 %v2379, %v2508
      %v2541 = vmul.f32 %v2381, %v2509
      %v2542 = vpack.c.bf16 %v2511, %v2510
      %v2543 = vpack.c.bf16 %v2513, %v2512
      %v2544 = vpack.c.bf16 %v2515, %v2514
      %v2545 = vpack.c.bf16 %v2517, %v2516
      %v2546 = vpack.c.bf16 %v2519, %v2518
      %v2547 = vpack.c.bf16 %v2521, %v2520
      %v2548 = vpack.c.bf16 %v2523, %v2522
      %v2549 = vpack.c.bf16 %v2525, %v2524
      %v2550 = vpack.c.bf16 %v2527, %v2526
      %v2551 = vpack.c.bf16 %v2529, %v2528
      %v2552 = vpack.c.bf16 %v2531, %v2530
      %v2553 = vpack.c.bf16 %v2533, %v2532
      %v2554 = vpack.c.bf16 %v2535, %v2534
      %v2555 = vpack.c.bf16 %v2537, %v2536
      %v2556 = vpack.c.bf16 %v2539, %v2538
      %v2557 = vpack.c.bf16 %v2541, %v2540
      %2558 = vrot.lane.b32.xlu0 %v1760, 64
      %v2559 = vpop.permute.xlu0 %2558
      %2560 = vrot.lane.b32.xlu0 %v1761, 64
      %v2561 = vpop.permute.xlu0 %2560
      %2562 = vrot.lane.b32.xlu0 %v1762, 64
      %v2563 = vpop.permute.xlu0 %2562
      %2564 = vrot.lane.b32.xlu0 %v1763, 64
      %v2565 = vpop.permute.xlu0 %2564
      %v2571 = vsel %vm2189, %v2542, 0
      %v2574 = vsel %vm2189, %v2543, 0
      %v2577 = vsel %vm2189, %v2544, 0
      %v2580 = vsel %vm2189, %v2545, 0
      %2582 = vmatprep.subr.bf16.mxu0 0
      %2583 = vmatpush1.bf16.msra.mxu0 %v2559
      %2584 = vmatprep.subr.bf16.mxu0 0
      %2585 = vmatpush1.bf16.msra.mxu0 %v2561
      %2586 = vmatprep.subr.bf16.mxu0 0
      %2587 = vmatpush1.bf16.msra.mxu0 %v2563
      %2588 = vmatprep.subr.bf16.mxu0 0
      %2589 = vmatpush1.bf16.msra.mxu0 %v2565
      %2590 = vmatprep.subr.bf16.mxu0 0
      %2591 = vmatpush1.bf16.msra.mxu0 0
      %2592 = vmatprep.subr.bf16.mxu0 0
      %2593 = vmatpush1.bf16.msra.mxu0 0
      %2594 = vmatprep.subr.bf16.mxu0 0
      %2595 = vmatpush1.bf16.msra.mxu0 0
      %2596 = vmatprep.subr.bf16.mxu0 0
      %2597 = vmatpush1.bf16.msra.mxu0 0
      %2598 = vmatprep.subr.bf16.mxu0 0
      %2599 = vmatpush1.bf16.msra.mxu0 0
      %2600 = vmatprep.subr.bf16.mxu0 0
      %2601 = vmatpush1.bf16.msra.mxu0 0
      %2602 = vmatprep.subr.bf16.mxu0 0
      %2603 = vmatpush1.bf16.msra.mxu0 0
      %2604 = vmatprep.subr.bf16.mxu0 0
      %2605 = vmatpush1.bf16.msra.mxu0 0
      %2606 = vmatprep.subr.bf16.mxu0 0
      %2607 = vmatpush1.bf16.msra.mxu0 0
      %2608 = vmatprep.subr.bf16.mxu0 0
      %2609 = vmatpush1.bf16.msra.mxu0 0
      %2610 = vmatprep.subr.bf16.mxu0 0
      %2611 = vmatpush1.bf16.msra.mxu0 0
      %2612 = vmatprep.subr.bf16.mxu0 0
      %2613 = vmatpush1.bf16.msra.mxu0 0
      %2614 = vmatprep.mubr.bf16.mxu0 0
      %2615 = vmatmul.mubr.bf16.gmra.mrb[0].mxu0 %v2571
      %v2616 = vpop.f32.mrb[0].mxu0
      %v2617 = vadd.f32 0.0, %v2616
      %v2618 = vpop.f32.mrb[0].mxu0
      %v2619 = vpop.f32.mrb[0].mxu0
      %v2620 = vadd.f32 0.0, %v2619
      %v2621 = vpop.f32.mrb[0].mxu0
      %2622 = vmatprep.mubr.bf16.mxu0 0
      %2623 = vmatmul.mubr.bf16.gmra.mrb[0].mxu0 %v2574
      %v2624 = vpop.f32.mrb[0].mxu0
      %v2625 = vadd.f32 0.0, %v2624
      %v2626 = vpop.f32.mrb[0].mxu0
      %v2627 = vpop.f32.mrb[0].mxu0
      %v2628 = vadd.f32 0.0, %v2627
      %v2629 = vpop.f32.mrb[0].mxu0
      %2630 = vmatprep.mubr.bf16.mxu0 0
      %2631 = vmatmul.mubr.bf16.gmra.mrb[0].mxu0 %v2577
      %v2632 = vpop.f32.mrb[0].mxu0
      %v2633 = vadd.f32 0.0, %v2632
      %v2634 = vpop.f32.mrb[0].mxu0
      %v2635 = vpop.f32.mrb[0].mxu0
      %v2636 = vadd.f32 0.0, %v2635
      %v2637 = vpop.f32.mrb[0].mxu0
      %2638 = vmatprep.mubr.bf16.mxu0 0
      %2639 = vmatmul.mubr.bf16.gmra.mrb[0].mxu0 %v2580
      %v2640 = vpop.f32.mrb[0].mxu0
      %v2641 = vadd.f32 0.0, %v2640
      %v2642 = vpop.f32.mrb[0].mxu0
      %v2643 = vpop.f32.mrb[0].mxu0
      %v2644 = vadd.f32 0.0, %v2643
      %v2645 = vpop.f32.mrb[0].mxu0
      %2646 = vdwg.mxu0
      %2647 = vrot.lane.b32.xlu0 %v1764, 64
      %v2648 = vpop.permute.xlu0 %2647
      %2649 = vrot.lane.b32.xlu0 %v1765, 64
      %v2650 = vpop.permute.xlu0 %2649
      %2651 = vrot.lane.b32.xlu0 %v1766, 64
      %v2652 = vpop.permute.xlu0 %2651
      %2653 = vrot.lane.b32.xlu0 %v1767, 64
      %v2654 = vpop.permute.xlu0 %2653
      %v2660 = vsel %vm2189, %v2546, 0
      %v2663 = vsel %vm2189, %v2547, 0
      %v2666 = vsel %vm2189, %v2548, 0
      %v2669 = vsel %vm2189, %v2549, 0
      %2671 = vmatprep.subr.bf16.mxu0 0
      %2672 = vmatpush1.bf16.msra.mxu0 %v2648
      %2673 = vmatprep.subr.bf16.mxu0 0
      %2674 = vmatpush1.bf16.msra.mxu0 %v2650
      %2675 = vmatprep.subr.bf16.mxu0 0
      %2676 = vmatpush1.bf16.msra.mxu0 %v2652
      %2677 = vmatprep.subr.bf16.mxu0 0
      %2678 = vmatpush1.bf16.msra.mxu0 %v2654
      %2679 = vmatprep.subr.bf16.mxu0 0
      %2680 = vmatpush1.bf16.msra.mxu0 0
      %2681 = vmatprep.subr.bf16.mxu0 0
      %2682 = vmatpush1.bf16.msra.mxu0 0
      %2683 = vmatprep.subr.bf16.mxu0 0
      %2684 = vmatpush1.bf16.msra.mxu0 0
      %2685 = vmatprep.subr.bf16.mxu0 0
      %2686 = vmatpush1.bf16.msra.mxu0 0
      %2687 = vmatprep.subr.bf16.mxu0 0
      %2688 = vmatpush1.bf16.msra.mxu0 0
      %2689 = vmatprep.subr.bf16.mxu0 0
      %2690 = vmatpush1.bf16.msra.mxu0 0
      %2691 = vmatprep.subr.bf16.mxu0 0
      %2692 = vmatpush1.bf16.msra.mxu0 0
      %2693 = vmatprep.subr.bf16.mxu0 0
      %2694 = vmatpush1.bf16.msra.mxu0 0
      %2695 = vmatprep.subr.bf16.mxu0 0
      %2696 = vmatpush1.bf16.msra.mxu0 0
      %2697 = vmatprep.subr.bf16.mxu0 0
      %2698 = vmatpush1.bf16.msra.mxu0 0
      %2699 = vmatprep.subr.bf16.mxu0 0
      %2700 = vmatpush1.bf16.msra.mxu0 0
      %2701 = vmatprep.subr.bf16.mxu0 0
      %2702 = vmatpush1.bf16.msra.mxu0 0
      %2703 = vmatprep.mubr.bf16.mxu0 0
      %2704 = vmatmul.mubr.bf16.gmra.mrb[0].mxu0 %v2660
      %v2705 = vpop.f32.mrb[0].mxu0
      %v2706 = vadd.f32 0.0, %v2705
      %v2707 = vpop.f32.mrb[0].mxu0
      %v2708 = vpop.f32.mrb[0].mxu0
      %v2709 = vadd.f32 0.0, %v2708
      %v2710 = vpop.f32.mrb[0].mxu0
      %2711 = vmatprep.mubr.bf16.mxu0 0
      %2712 = vmatmul.mubr.bf16.gmra.mrb[0].mxu0 %v2663
      %v2713 = vpop.f32.mrb[0].mxu0
      %v2714 = vadd.f32 0.0, %v2713
      %v2715 = vpop.f32.mrb[0].mxu0
      %v2716 = vpop.f32.mrb[0].mxu0
      %v2717 = vadd.f32 0.0, %v2716
      %v2718 = vpop.f32.mrb[0].mxu0
      %2719 = vmatprep.mubr.bf16.mxu0 0
      %2720 = vmatmul.mubr.bf16.gmra.mrb[0].mxu0 %v2666
      %v2721 = vpop.f32.mrb[0].mxu0
      %v2722 = vadd.f32 0.0, %v2721
      %v2723 = vpop.f32.mrb[0].mxu0
      %v2724 = vpop.f32.mrb[0].mxu0
      %v2725 = vadd.f32 0.0, %v2724
      %v2726 = vpop.f32.mrb[0].mxu0
      %2727 = vmatprep.mubr.bf16.mxu0 0
      %2728 = vmatmul.mubr.bf16.gmra.mrb[0].mxu0 %v2669
      %v2729 = vpop.f32.mrb[0].mxu0
      %v2730 = vadd.f32 0.0, %v2729
      %v2731 = vpop.f32.mrb[0].mxu0
      %v2732 = vpop.f32.mrb[0].mxu0
      %v2733 = vadd.f32 0.0, %v2732
      %v2734 = vpop.f32.mrb[0].mxu0
      %2735 = vdwg.mxu0
      %2736 = vrot.lane.b32.xlu0 %v1768, 64
      %v2737 = vpop.permute.xlu0 %2736
      %2738 = vrot.lane.b32.xlu0 %v1769, 64
      %v2739 = vpop.permute.xlu0 %2738
      %2740 = vrot.lane.b32.xlu0 %v1770, 64
      %v2741 = vpop.permute.xlu0 %2740
      %2742 = vrot.lane.b32.xlu0 %v1771, 64
      %v2743 = vpop.permute.xlu0 %2742
      %v2749 = vsel %vm2189, %v2550, 0
      %v2752 = vsel %vm2189, %v2551, 0
      %v2755 = vsel %vm2189, %v2552, 0
      %v2758 = vsel %vm2189, %v2553, 0
      %2760 = vmatprep.subr.bf16.mxu0 0
      %2761 = vmatpush1.bf16.msra.mxu0 %v2737
      %2762 = vmatprep.subr.bf16.mxu0 0
      %2763 = vmatpush1.bf16.msra.mxu0 %v2739
      %2764 = vmatprep.subr.bf16.mxu0 0
      %2765 = vmatpush1.bf16.msra.mxu0 %v2741
      %2766 = vmatprep.subr.bf16.mxu0 0
      %2767 = vmatpush1.bf16.msra.mxu0 %v2743
      %2768 = vmatprep.subr.bf16.mxu0 0
      %2769 = vmatpush1.bf16.msra.mxu0 0
      %2770 = vmatprep.subr.bf16.mxu0 0
      %2771 = vmatpush1.bf16.msra.mxu0 0
      %2772 = vmatprep.subr.bf16.mxu0 0
      %2773 = vmatpush1.bf16.msra.mxu0 0
      %2774 = vmatprep.subr.bf16.mxu0 0
      %2775 = vmatpush1.bf16.msra.mxu0 0
      %2776 = vmatprep.subr.bf16.mxu0 0
      %2777 = vmatpush1.bf16.msra.mxu0 0
      %2778 = vmatprep.subr.bf16.mxu0 0
      %2779 = vmatpush1.bf16.msra.mxu0 0
      %2780 = vmatprep.subr.bf16.mxu0 0
      %2781 = vmatpush1.bf16.msra.mxu0 0
      %2782 = vmatprep.subr.bf16.mxu0 0
      %2783 = vmatpush1.bf16.msra.mxu0 0
      %2784 = vmatprep.subr.bf16.mxu0 0
      %2785 = vmatpush1.bf16.msra.mxu0 0
      %2786 = vmatprep.subr.bf16.mxu0 0
      %2787 = vmatpush1.bf16.msra.mxu0 0
      %2788 = vmatprep.subr.bf16.mxu0 0
      %2789 = vmatpush1.bf16.msra.mxu0 0
      %2790 = vmatprep.subr.bf16.mxu0 0
      %2791 = vmatpush1.bf16.msra.mxu0 0
      %2792 = vmatprep.mubr.bf16.mxu0 0
      %2793 = vmatmul.mubr.bf16.gmra.mrb[0].mxu0 %v2749
      %v2794 = vpop.f32.mrb[0].mxu0
      %v2795 = vadd.f32 0.0, %v2794
      %v2796 = vpop.f32.mrb[0].mxu0
      %v2797 = vpop.f32.mrb[0].mxu0
      %v2798 = vadd.f32 0.0, %v2797
      %v2799 = vpop.f32.mrb[0].mxu0
      %2800 = vmatprep.mubr.bf16.mxu0 0
      %2801 = vmatmul.mubr.bf16.gmra.mrb[0].mxu0 %v2752
      %v2802 = vpop.f32.mrb[0].mxu0
      %v2803 = vadd.f32 0.0, %v2802
      %v2804 = vpop.f32.mrb[0].mxu0
      %v2805 = vpop.f32.mrb[0].mxu0
      %v2806 = vadd.f32 0.0, %v2805
      %v2807 = vpop.f32.mrb[0].mxu0
      %2808 = vmatprep.mubr.bf16.mxu0 0
      %2809 = vmatmul.mubr.bf16.gmra.mrb[0].mxu0 %v2755
      %v2810 = vpop.f32.mrb[0].mxu0
      %v2811 = vadd.f32 0.0, %v2810
      %v2812 = vpop.f32.mrb[0].mxu0
      %v2813 = vpop.f32.mrb[0].mxu0
      %v2814 = vadd.f32 0.0, %v2813
      %v2815 = vpop.f32.mrb[0].mxu0
      %2816 = vmatprep.mubr.bf16.mxu0 0
      %2817 = vmatmul.mubr.bf16.gmra.mrb[0].mxu0 %v2758
      %v2818 = vpop.f32.mrb[0].mxu0
      %v2819 = vadd.f32 0.0, %v2818
      %v2820 = vpop.f32.mrb[0].mxu0
      %v2821 = vpop.f32.mrb[0].mxu0
      %v2822 = vadd.f32 0.0, %v2821
      %v2823 = vpop.f32.mrb[0].mxu0
      %2824 = vdwg.mxu0
      %2825 = vrot.lane.b32.xlu0 %v1772, 64
      %v2826 = vpop.permute.xlu0 %2825
      %2827 = vrot.lane.b32.xlu0 %v1773, 64
      %v2828 = vpop.permute.xlu0 %2827
      %2829 = vrot.lane.b32.xlu0 %v1774, 64
      %v2830 = vpop.permute.xlu0 %2829
      %2831 = vrot.lane.b32.xlu0 %v1775, 64
      %v2832 = vpop.permute.xlu0 %2831
      %v2838 = vsel %vm2189, %v2554, 0
      %v2841 = vsel %vm2189, %v2555, 0
      %v2844 = vsel %vm2189, %v2556, 0
      %v2847 = vsel %vm2189, %v2557, 0
      %2849 = vmatprep.subr.bf16.mxu0 0
      %2850 = vmatpush1.bf16.msra.mxu0 %v2826
      %2851 = vmatprep.subr.bf16.mxu0 0
      %2852 = vmatpush1.bf16.msra.mxu0 %v2828
      %2853 = vmatprep.subr.bf16.mxu0 0
      %2854 = vmatpush1.bf16.msra.mxu0 %v2830
      %2855 = vmatprep.subr.bf16.mxu0 0
      %2856 = vmatpush1.bf16.msra.mxu0 %v2832
      %2857 = vmatprep.subr.bf16.mxu0 0
      %2858 = vmatpush1.bf16.msra.mxu0 0
      %2859 = vmatprep.subr.bf16.mxu0 0
      %2860 = vmatpush1.bf16.msra.mxu0 0
      %2861 = vmatprep.subr.bf16.mxu0 0
      %2862 = vmatpush1.bf16.msra.mxu0 0
      %2863 = vmatprep.subr.bf16.mxu0 0
      %2864 = vmatpush1.bf16.msra.mxu0 0
      %2865 = vmatprep.subr.bf16.mxu0 0
      %2866 = vmatpush1.bf16.msra.mxu0 0
      %2867 = vmatprep.subr.bf16.mxu0 0
      %2868 = vmatpush1.bf16.msra.mxu0 0
      %2869 = vmatprep.subr.bf16.mxu0 0
      %2870 = vmatpush1.bf16.msra.mxu0 0
      %2871 = vmatprep.subr.bf16.mxu0 0
      %2872 = vmatpush1.bf16.msra.mxu0 0
      %2873 = vmatprep.subr.bf16.mxu0 0
      %2874 = vmatpush1.bf16.msra.mxu0 0
      %2875 = vmatprep.subr.bf16.mxu0 0
      %2876 = vmatpush1.bf16.msra.mxu0 0
      %2877 = vmatprep.subr.bf16.mxu0 0
      %2878 = vmatpush1.bf16.msra.mxu0 0
      %2879 = vmatprep.subr.bf16.mxu0 0
      %2880 = vmatpush1.bf16.msra.mxu0 0
      %2881 = vmatprep.mubr.bf16.mxu0 0
      %2882 = vmatmul.mubr.bf16.gmra.mrb[0].mxu0 %v2838
      %v2883 = vpop.f32.mrb[0].mxu0
      %v2884 = vadd.f32 0.0, %v2883
      %v2885 = vpop.f32.mrb[0].mxu0
      %v2886 = vpop.f32.mrb[0].mxu0
      %v2887 = vadd.f32 0.0, %v2886
      %v2888 = vpop.f32.mrb[0].mxu0
      %2889 = vmatprep.mubr.bf16.mxu0 0
      %2890 = vmatmul.mubr.bf16.gmra.mrb[0].mxu0 %v2841
      %v2891 = vpop.f32.mrb[0].mxu0
      %v2892 = vadd.f32 0.0, %v2891
      %v2893 = vpop.f32.mrb[0].mxu0
      %v2894 = vpop.f32.mrb[0].mxu0
      %v2895 = vadd.f32 0.0, %v2894
      %v2896 = vpop.f32.mrb[0].mxu0
      %2897 = vmatprep.mubr.bf16.mxu0 0
      %2898 = vmatmul.mubr.bf16.gmra.mrb[0].mxu0 %v2844
      %v2899 = vpop.f32.mrb[0].mxu0
      %v2900 = vadd.f32 0.0, %v2899
      %v2901 = vpop.f32.mrb[0].mxu0
      %v2902 = vpop.f32.mrb[0].mxu0
      %v2903 = vadd.f32 0.0, %v2902
      %v2904 = vpop.f32.mrb[0].mxu0
      %2905 = vmatprep.mubr.bf16.mxu0 0
      %2906 = vmatmul.mubr.bf16.gmra.mrb[0].mxu0 %v2847
      %v2907 = vpop.f32.mrb[0].mxu0
      %v2908 = vadd.f32 0.0, %v2907
      %v2909 = vpop.f32.mrb[0].mxu0
      %v2910 = vpop.f32.mrb[0].mxu0
      %v2911 = vadd.f32 0.0, %v2910
      %v2912 = vpop.f32.mrb[0].mxu0
      %2913 = vdwg.mxu0
      %s2914 = scalar_lea.vmem %s1, 64
      %v2915 = vld [vmem:[%s2914] sm:$0xff]
      %v2916 = vld [vmem:[%s2914 + $0x8] sm:$0xff]
      %v2917 = vld [vmem:[%s2914 + $0x10] sm:$0xff]
      %v2918 = vld [vmem:[%s2914 + $0x18] sm:$0xff]
      %v2919 = vld [vmem:[%s2914 + $0x20] sm:$0xff]
      %v2920 = vld [vmem:[%s2914 + $0x28] sm:$0xff]
      %v2921 = vld [vmem:[%s2914 + $0x30] sm:$0xff]
      %v2922 = vld [vmem:[%s2914 + $0x38] sm:$0xff]
      %2923 = vrot.lane.b32.xlu0 %v1760, 112
      %v2924 = vpop.permute.xlu0 %2923
      %2925 = vrot.lane.b32.xlu0 %v1761, 112
      %v2926 = vpop.permute.xlu0 %2925
      %2927 = vrot.lane.b32.xlu0 %v1762, 112
      %v2928 = vpop.permute.xlu0 %2927
      %2929 = vrot.lane.b32.xlu0 %v1763, 112
      %v2930 = vpop.permute.xlu0 %2929
      %2931 = vrot.lane.b32.xlu0 %v1760, 80
      %v2932 = vpop.permute.xlu0 %2931
      %2933 = vrot.lane.b32.xlu0 %v1761, 80
      %v2934 = vpop.permute.xlu0 %2933
      %2935 = vrot.lane.b32.xlu0 %v1762, 80
      %v2936 = vpop.permute.xlu0 %2935
      %2937 = vrot.lane.b32.xlu0 %v1763, 80
      %v2938 = vpop.permute.xlu0 %2937
      %v2940 = vsel %vm1796, %v2924, 0
      %v2943 = vsel %vm1796, %v2926, 0
      %v2946 = vsel %vm1796, %v2928, 0
      %v2949 = vsel %vm1796, %v2930, 0
      %v2952 = vsel %vm1796, %v2932, 0
      %v2955 = vsel %vm1796, %v2934, 0
      %v2958 = vsel %vm1796, %v2936, 0
      %v2961 = vsel %vm1796, %v2938, 0
      %2963 = vmatprep.subr.bf16.mxu0 0
      %2964 = vmatpush1.bf16.xpose.msra.mxu0 %v2952
      %2965 = vmatprep.subr.bf16.mxu0 0
      %2966 = vmatpush1.bf16.xpose.msra.mxu0 %v2955
      %2967 = vmatprep.subr.bf16.mxu0 0
      %2968 = vmatpush1.bf16.xpose.msra.mxu0 %v2958
      %2969 = vmatprep.subr.bf16.mxu0 0
      %2970 = vmatpush1.bf16.xpose.msra.mxu0 %v2961
      %2971 = vmatprep.subr.bf16.mxu0 0
      %2972 = vmatpush1.bf16.xpose.msra.mxu0 0
      %2973 = vmatprep.subr.bf16.mxu0 0
      %2974 = vmatpush1.bf16.xpose.msra.mxu0 0
      %2975 = vmatprep.subr.bf16.mxu0 0
      %2976 = vmatpush1.bf16.xpose.msra.mxu0 0
      %2977 = vmatprep.subr.bf16.mxu0 0
      %2978 = vmatpush1.bf16.xpose.msra.mxu0 0
      %2979 = vmatprep.subr.bf16.mxu0 0
      %2980 = vmatpush1.bf16.xpose.msra.mxu0 0
      %2981 = vmatprep.subr.bf16.mxu0 0
      %2982 = vmatpush1.bf16.xpose.msra.mxu0 0
      %2983 = vmatprep.subr.bf16.mxu0 0
      %2984 = vmatpush1.bf16.xpose.msra.mxu0 0
      %2985 = vmatprep.subr.bf16.mxu0 0
      %2986 = vmatpush1.bf16.xpose.msra.mxu0 0
      %2987 = vmatprep.subr.bf16.mxu0 0
      %2988 = vmatpush1.bf16.xpose.msra.mxu0 0
      %2989 = vmatprep.subr.bf16.mxu0 0
      %2990 = vmatpush1.bf16.xpose.msra.mxu0 0
      %2991 = vmatprep.subr.bf16.mxu0 0
      %2992 = vmatpush1.bf16.xpose.msra.mxu0 0
      %2993 = vmatprep.subr.bf16.mxu0 0
      %2994 = vmatpush1.bf16.xpose.msra.mxu0 0
      %2995 = vmatprep.mubr.bf16.mxu0 0
      %2996 = vmatmul.mubr.bf16.gmra.mrb[0].mxu0 %v2940
      %v2997 = vpop.f32.mrb[0].mxu0
      %v2998 = vadd.f32 %v2915, %v2997
      %v2999 = vpop.f32.mrb[0].mxu0
      %v3000 = vpop.f32.mrb[0].mxu0
      %v3001 = vadd.f32 %v2916, %v3000
      %v3002 = vpop.f32.mrb[0].mxu0
      %3003 = vmatprep.mubr.bf16.mxu0 0
      %3004 = vmatmul.mubr.bf16.gmra.mrb[0].mxu0 %v2943
      %v3005 = vpop.f32.mrb[0].mxu0
      %v3006 = vadd.f32 %v2917, %v3005
      %v3007 = vpop.f32.mrb[0].mxu0
      %v3008 = vpop.f32.mrb[0].mxu0
      %v3009 = vadd.f32 %v2918, %v3008
      %v3010 = vpop.f32.mrb[0].mxu0
      %3011 = vmatprep.mubr.bf16.mxu0 0
      %3012 = vmatmul.mubr.bf16.gmra.mrb[0].mxu0 %v2946
      %v3013 = vpop.f32.mrb[0].mxu0
      %v3014 = vadd.f32 %v2919, %v3013
      %v3015 = vpop.f32.mrb[0].mxu0
      %v3016 = vpop.f32.mrb[0].mxu0
      %v3017 = vadd.f32 %v2920, %v3016
      %v3018 = vpop.f32.mrb[0].mxu0
      %3019 = vmatprep.mubr.bf16.mxu0 0
      %3020 = vmatmul.mubr.bf16.gmra.mrb[0].mxu0 %v2949
      %v3021 = vpop.f32.mrb[0].mxu0
      %v3022 = vadd.f32 %v2921, %v3021
      %v3023 = vpop.f32.mrb[0].mxu0
      %v3024 = vpop.f32.mrb[0].mxu0
      %v3025 = vadd.f32 %v2922, %v3024
      %v3026 = vpop.f32.mrb[0].mxu0
      %3027 = vdwg.mxu0
      %3028 = vrot.lane.b32.xlu0 %v1764, 112
      %v3029 = vpop.permute.xlu0 %3028
      %3030 = vrot.lane.b32.xlu0 %v1765, 112
      %v3031 = vpop.permute.xlu0 %3030
      %3032 = vrot.lane.b32.xlu0 %v1766, 112
      %v3033 = vpop.permute.xlu0 %3032
      %3034 = vrot.lane.b32.xlu0 %v1767, 112
      %v3035 = vpop.permute.xlu0 %3034
      %3036 = vrot.lane.b32.xlu0 %v1764, 80
      %v3037 = vpop.permute.xlu0 %3036
      %3038 = vrot.lane.b32.xlu0 %v1765, 80
      %v3039 = vpop.permute.xlu0 %3038
      %3040 = vrot.lane.b32.xlu0 %v1766, 80
      %v3041 = vpop.permute.xlu0 %3040
      %3042 = vrot.lane.b32.xlu0 %v1767, 80
      %v3043 = vpop.permute.xlu0 %3042
      %v3045 = vsel %vm1796, %v3029, 0
      %v3048 = vsel %vm1796, %v3031, 0
      %v3051 = vsel %vm1796, %v3033, 0
      %v3054 = vsel %vm1796, %v3035, 0
      %v3057 = vsel %vm1796, %v3037, 0
      %v3060 = vsel %vm1796, %v3039, 0
      %v3063 = vsel %vm1796, %v3041, 0
      %v3066 = vsel %vm1796, %v3043, 0
      %3068 = vmatprep.subr.bf16.mxu0 0
      %3069 = vmatpush1.bf16.xpose.msra.mxu0 %v3057
      %3070 = vmatprep.subr.bf16.mxu0 0
      %3071 = vmatpush1.bf16.xpose.msra.mxu0 %v3060
      %3072 = vmatprep.subr.bf16.mxu0 0
      %3073 = vmatpush1.bf16.xpose.msra.mxu0 %v3063
      %3074 = vmatprep.subr.bf16.mxu0 0
      %3075 = vmatpush1.bf16.xpose.msra.mxu0 %v3066
      %3076 = vmatprep.subr.bf16.mxu0 0
      %3077 = vmatpush1.bf16.xpose.msra.mxu0 0
      %3078 = vmatprep.subr.bf16.mxu0 0
      %3079 = vmatpush1.bf16.xpose.msra.mxu0 0
      %3080 = vmatprep.subr.bf16.mxu0 0
      %3081 = vmatpush1.bf16.xpose.msra.mxu0 0
      %3082 = vmatprep.subr.bf16.mxu0 0
      %3083 = vmatpush1.bf16.xpose.msra.mxu0 0
      %3084 = vmatprep.subr.bf16.mxu0 0
      %3085 = vmatpush1.bf16.xpose.msra.mxu0 0
      %3086 = vmatprep.subr.bf16.mxu0 0
      %3087 = vmatpush1.bf16.xpose.msra.mxu0 0
      %3088 = vmatprep.subr.bf16.mxu0 0
      %3089 = vmatpush1.bf16.xpose.msra.mxu0 0
      %3090 = vmatprep.subr.bf16.mxu0 0
      %3091 = vmatpush1.bf16.xpose.msra.mxu0 0
      %3092 = vmatprep.subr.bf16.mxu0 0
      %3093 = vmatpush1.bf16.xpose.msra.mxu0 0
      %3094 = vmatprep.subr.bf16.mxu0 0
      %3095 = vmatpush1.bf16.xpose.msra.mxu0 0
      %3096 = vmatprep.subr.bf16.mxu0 0
      %3097 = vmatpush1.bf16.xpose.msra.mxu0 0
      %3098 = vmatprep.subr.bf16.mxu0 0
      %3099 = vmatpush1.bf16.xpose.msra.mxu0 0
      %3100 = vmatprep.mubr.bf16.mxu0 0
      %3101 = vmatmul.mubr.bf16.gmra.mrb[0].mxu0 %v3045
      %v3102 = vpop.f32.mrb[0].mxu0
      %v3103 = vadd.f32 %v2915, %v3102
      %v3104 = vpop.f32.mrb[0].mxu0
      %v3105 = vpop.f32.mrb[0].mxu0
      %v3106 = vadd.f32 %v2916, %v3105
      %v3107 = vpop.f32.mrb[0].mxu0
      %3108 = vmatprep.mubr.bf16.mxu0 0
      %3109 = vmatmul.mubr.bf16.gmra.mrb[0].mxu0 %v3048
      %v3110 = vpop.f32.mrb[0].mxu0
      %v3111 = vadd.f32 %v2917, %v3110
      %v3112 = vpop.f32.mrb[0].mxu0
      %v3113 = vpop.f32.mrb[0].mxu0
      %v3114 = vadd.f32 %v2918, %v3113
      %v3115 = vpop.f32.mrb[0].mxu0
      %3116 = vmatprep.mubr.bf16.mxu0 0
      %3117 = vmatmul.mubr.bf16.gmra.mrb[0].mxu0 %v3051
      %v3118 = vpop.f32.mrb[0].mxu0
      %v3119 = vadd.f32 %v2919, %v3118
      %v3120 = vpop.f32.mrb[0].mxu0
      %v3121 = vpop.f32.mrb[0].mxu0
      %v3122 = vadd.f32 %v2920, %v3121
      %v3123 = vpop.f32.mrb[0].mxu0
      %3124 = vmatprep.mubr.bf16.mxu0 0
      %3125 = vmatmul.mubr.bf16.gmra.mrb[0].mxu0 %v3054
      %v3126 = vpop.f32.mrb[0].mxu0
      %v3127 = vadd.f32 %v2921, %v3126
      %v3128 = vpop.f32.mrb[0].mxu0
      %v3129 = vpop.f32.mrb[0].mxu0
      %v3130 = vadd.f32 %v2922, %v3129
      %v3131 = vpop.f32.mrb[0].mxu0
      %3132 = vdwg.mxu0
      %3133 = vrot.lane.b32.xlu0 %v1768, 112
      %v3134 = vpop.permute.xlu0 %3133
      %3135 = vrot.lane.b32.xlu0 %v1769, 112
      %v3136 = vpop.permute.xlu0 %3135
      %3137 = vrot.lane.b32.xlu0 %v1770, 112
      %v3138 = vpop.permute.xlu0 %3137
      %3139 = vrot.lane.b32.xlu0 %v1771, 112
      %v3140 = vpop.permute.xlu0 %3139
      %3141 = vrot.lane.b32.xlu0 %v1768, 80
      %v3142 = vpop.permute.xlu0 %3141
      %3143 = vrot.lane.b32.xlu0 %v1769, 80
      %v3144 = vpop.permute.xlu0 %3143
      %3145 = vrot.lane.b32.xlu0 %v1770, 80
      %v3146 = vpop.permute.xlu0 %3145
      %3147 = vrot.lane.b32.xlu0 %v1771, 80
      %v3148 = vpop.permute.xlu0 %3147
      %v3150 = vsel %vm1796, %v3134, 0
      %v3153 = vsel %vm1796, %v3136, 0
      %v3156 = vsel %vm1796, %v3138, 0
      %v3159 = vsel %vm1796, %v3140, 0
      %v3162 = vsel %vm1796, %v3142, 0
      %v3165 = vsel %vm1796, %v3144, 0
      %v3168 = vsel %vm1796, %v3146, 0
      %v3171 = vsel %vm1796, %v3148, 0
      %3173 = vmatprep.subr.bf16.mxu0 0
      %3174 = vmatpush1.bf16.xpose.msra.mxu0 %v3162
      %3175 = vmatprep.subr.bf16.mxu0 0
      %3176 = vmatpush1.bf16.xpose.msra.mxu0 %v3165
      %3177 = vmatprep.subr.bf16.mxu0 0
      %3178 = vmatpush1.bf16.xpose.msra.mxu0 %v3168
      %3179 = vmatprep.subr.bf16.mxu0 0
      %3180 = vmatpush1.bf16.xpose.msra.mxu0 %v3171
      %3181 = vmatprep.subr.bf16.mxu0 0
      %3182 = vmatpush1.bf16.xpose.msra.mxu0 0
      %3183 = vmatprep.subr.bf16.mxu0 0
      %3184 = vmatpush1.bf16.xpose.msra.mxu0 0
      %3185 = vmatprep.subr.bf16.mxu0 0
      %3186 = vmatpush1.bf16.xpose.msra.mxu0 0
      %3187 = vmatprep.subr.bf16.mxu0 0
      %3188 = vmatpush1.bf16.xpose.msra.mxu0 0
      %3189 = vmatprep.subr.bf16.mxu0 0
      %3190 = vmatpush1.bf16.xpose.msra.mxu0 0
      %3191 = vmatprep.subr.bf16.mxu0 0
      %3192 = vmatpush1.bf16.xpose.msra.mxu0 0
      %3193 = vmatprep.subr.bf16.mxu0 0
      %3194 = vmatpush1.bf16.xpose.msra.mxu0 0
      %3195 = vmatprep.subr.bf16.mxu0 0
      %3196 = vmatpush1.bf16.xpose.msra.mxu0 0
      %3197 = vmatprep.subr.bf16.mxu0 0
      %3198 = vmatpush1.bf16.xpose.msra.mxu0 0
      %3199 = vmatprep.subr.bf16.mxu0 0
      %3200 = vmatpush1.bf16.xpose.msra.mxu0 0
      %3201 = vmatprep.subr.bf16.mxu0 0
      %3202 = vmatpush1.bf16.xpose.msra.mxu0 0
      %3203 = vmatprep.subr.bf16.mxu0 0
      %3204 = vmatpush1.bf16.xpose.msra.mxu0 0
      %3205 = vmatprep.mubr.bf16.mxu0 0
      %3206 = vmatmul.mubr.bf16.gmra.mrb[0].mxu0 %v3150
      %v3207 = vpop.f32.mrb[0].mxu0
      %v3208 = vadd.f32 %v2915, %v3207
      %v3209 = vpop.f32.mrb[0].mxu0
      %v3210 = vpop.f32.mrb[0].mxu0
      %v3211 = vadd.f32 %v2916, %v3210
      %v3212 = vpop.f32.mrb[0].mxu0
      %3213 = vmatprep.mubr.bf16.mxu0 0
      %3214 = vmatmul.mubr.bf16.gmra.mrb[0].mxu0 %v3153
      %v3215 = vpop.f32.mrb[0].mxu0
      %v3216 = vadd.f32 %v2917, %v3215
      %v3217 = vpop.f32.mrb[0].mxu0
      %v3218 = vpop.f32.mrb[0].mxu0
      %v3219 = vadd.f32 %v2918, %v3218
      %v3220 = vpop.f32.mrb[0].mxu0
      %3221 = vmatprep.mubr.bf16.mxu0 0
      %3222 = vmatmul.mubr.bf16.gmra.mrb[0].mxu0 %v3156
      %v3223 = vpop.f32.mrb[0].mxu0
      %v3224 = vadd.f32 %v2919, %v3223
      %v3225 = vpop.f32.mrb[0].mxu0
      %v3226 = vpop.f32.mrb[0].mxu0
      %v3227 = vadd.f32 %v2920, %v3226
      %v3228 = vpop.f32.mrb[0].mxu0
      %3229 = vmatprep.mubr.bf16.mxu0 0
      %3230 = vmatmul.mubr.bf16.gmra.mrb[0].mxu0 %v3159
      %v3231 = vpop.f32.mrb[0].mxu0
      %v3232 = vadd.f32 %v2921, %v3231
      %v3233 = vpop.f32.mrb[0].mxu0
      %v3234 = vpop.f32.mrb[0].mxu0
      %v3235 = vadd.f32 %v2922, %v3234
      %v3236 = vpop.f32.mrb[0].mxu0
      %3237 = vdwg.mxu0
      %3238 = vrot.lane.b32.xlu0 %v1772, 112
      %v3239 = vpop.permute.xlu0 %3238
      %3240 = vrot.lane.b32.xlu0 %v1773, 112
      %v3241 = vpop.permute.xlu0 %3240
      %3242 = vrot.lane.b32.xlu0 %v1774, 112
      %v3243 = vpop.permute.xlu0 %3242
      %3244 = vrot.lane.b32.xlu0 %v1775, 112
      %v3245 = vpop.permute.xlu0 %3244
      %3246 = vrot.lane.b32.xlu0 %v1772, 80
      %v3247 = vpop.permute.xlu0 %3246
      %3248 = vrot.lane.b32.xlu0 %v1773, 80
      %v3249 = vpop.permute.xlu0 %3248
      %3250 = vrot.lane.b32.xlu0 %v1774, 80
      %v3251 = vpop.permute.xlu0 %3250
      %3252 = vrot.lane.b32.xlu0 %v1775, 80
      %v3253 = vpop.permute.xlu0 %3252
      %v3255 = vsel %vm1796, %v3239, 0
      %v3258 = vsel %vm1796, %v3241, 0
      %v3261 = vsel %vm1796, %v3243, 0
      %v3264 = vsel %vm1796, %v3245, 0
      %v3267 = vsel %vm1796, %v3247, 0
      %v3270 = vsel %vm1796, %v3249, 0
      %v3273 = vsel %vm1796, %v3251, 0
      %v3276 = vsel %vm1796, %v3253, 0
      %3278 = vmatprep.subr.bf16.mxu0 0
      %3279 = vmatpush1.bf16.xpose.msra.mxu0 %v3267
      %3280 = vmatprep.subr.bf16.mxu0 0
      %3281 = vmatpush1.bf16.xpose.msra.mxu0 %v3270
      %3282 = vmatprep.subr.bf16.mxu0 0
      %3283 = vmatpush1.bf16.xpose.msra.mxu0 %v3273
      %3284 = vmatprep.subr.bf16.mxu0 0
      %3285 = vmatpush1.bf16.xpose.msra.mxu0 %v3276
      %3286 = vmatprep.subr.bf16.mxu0 0
      %3287 = vmatpush1.bf16.xpose.msra.mxu0 0
      %3288 = vmatprep.subr.bf16.mxu0 0
      %3289 = vmatpush1.bf16.xpose.msra.mxu0 0
      %3290 = vmatprep.subr.bf16.mxu0 0
      %3291 = vmatpush1.bf16.xpose.msra.mxu0 0
      %3292 = vmatprep.subr.bf16.mxu0 0
      %3293 = vmatpush1.bf16.xpose.msra.mxu0 0
      %3294 = vmatprep.subr.bf16.mxu0 0
      %3295 = vmatpush1.bf16.xpose.msra.mxu0 0
      %3296 = vmatprep.subr.bf16.mxu0 0
      %3297 = vmatpush1.bf16.xpose.msra.mxu0 0
      %3298 = vmatprep.subr.bf16.mxu0 0
      %3299 = vmatpush1.bf16.xpose.msra.mxu0 0
      %3300 = vmatprep.subr.bf16.mxu0 0
      %3301 = vmatpush1.bf16.xpose.msra.mxu0 0
      %3302 = vmatprep.subr.bf16.mxu0 0
      %3303 = vmatpush1.bf16.xpose.msra.mxu0 0
      %3304 = vmatprep.subr.bf16.mxu0 0
      %3305 = vmatpush1.bf16.xpose.msra.mxu0 0
      %3306 = vmatprep.subr.bf16.mxu0 0
      %3307 = vmatpush1.bf16.xpose.msra.mxu0 0
      %3308 = vmatprep.subr.bf16.mxu0 0
      %3309 = vmatpush1.bf16.xpose.msra.mxu0 0
      %3310 = vmatprep.mubr.bf16.mxu0 0
      %3311 = vmatmul.mubr.bf16.gmra.mrb[0].mxu0 %v3255
      %v3312 = vpop.f32.mrb[0].mxu0
      %v3313 = vadd.f32 %v2915, %v3312
      %v3314 = vpop.f32.mrb[0].mxu0
      %v3315 = vpop.f32.mrb[0].mxu0
      %v3316 = vadd.f32 %v2916, %v3315
      %v3317 = vpop.f32.mrb[0].mxu0
      %3318 = vmatprep.mubr.bf16.mxu0 0
      %3319 = vmatmul.mubr.bf16.gmra.mrb[0].mxu0 %v3258
      %v3320 = vpop.f32.mrb[0].mxu0
      %v3321 = vadd.f32 %v2917, %v3320
      %v3322 = vpop.f32.mrb[0].mxu0
      %v3323 = vpop.f32.mrb[0].mxu0
      %v3324 = vadd.f32 %v2918, %v3323
      %v3325 = vpop.f32.mrb[0].mxu0
      %3326 = vmatprep.mubr.bf16.mxu0 0
      %3327 = vmatmul.mubr.bf16.gmra.mrb[0].mxu0 %v3261
      %v3328 = vpop.f32.mrb[0].mxu0
      %v3329 = vadd.f32 %v2919, %v3328
      %v3330 = vpop.f32.mrb[0].mxu0
      %v3331 = vpop.f32.mrb[0].mxu0
      %v3332 = vadd.f32 %v2920, %v3331
      %v3333 = vpop.f32.mrb[0].mxu0
      %3334 = vmatprep.mubr.bf16.mxu0 0
      %3335 = vmatmul.mubr.bf16.gmra.mrb[0].mxu0 %v3264
      %v3336 = vpop.f32.mrb[0].mxu0
      %v3337 = vadd.f32 %v2921, %v3336
      %v3338 = vpop.f32.mrb[0].mxu0
      %v3339 = vpop.f32.mrb[0].mxu0
      %v3340 = vadd.f32 %v2922, %v3339
      %v3341 = vpop.f32.mrb[0].mxu0
      %3342 = vdwg.mxu0
      %v3343 = vsel %vm2189, %v2998, -inf
      %3344 = vmax.xlane.f32.xlu0 %v3343
      %v3345 = vpop.xlane.xlu0 %3344
      %v3346 = vsel %vm2189, %v3001, -inf
      %3347 = vmax.xlane.f32.xlu0 %v3346
      %v3348 = vpop.xlane.xlu0 %3347
      %v3349 = vsel %vm2189, %v3006, -inf
      %3350 = vmax.xlane.f32.xlu0 %v3349
      %v3351 = vpop.xlane.xlu0 %3350
      %v3352 = vsel %vm2189, %v3009, -inf
      %3353 = vmax.xlane.f32.xlu0 %v3352
      %v3354 = vpop.xlane.xlu0 %3353
      %v3355 = vsel %vm2189, %v3014, -inf
      %3356 = vmax.xlane.f32.xlu0 %v3355
      %v3357 = vpop.xlane.xlu0 %3356
      %v3358 = vsel %vm2189, %v3017, -inf
      %3359 = vmax.xlane.f32.xlu0 %v3358
      %v3360 = vpop.xlane.xlu0 %3359
      %v3361 = vsel %vm2189, %v3022, -inf
      %3362 = vmax.xlane.f32.xlu0 %v3361
      %v3363 = vpop.xlane.xlu0 %3362
      %v3364 = vsel %vm2189, %v3025, -inf
      %3365 = vmax.xlane.f32.xlu0 %v3364
      %v3366 = vpop.xlane.xlu0 %3365
      %v3367 = vsel %vm2189, %v3103, -inf
      %3368 = vmax.xlane.f32.xlu0 %v3367
      %v3369 = vpop.xlane.xlu0 %3368
      %v3370 = vsel %vm2189, %v3106, -inf
      %3371 = vmax.xlane.f32.xlu0 %v3370
      %v3372 = vpop.xlane.xlu0 %3371
      %v3373 = vsel %vm2189, %v3111, -inf
      %3374 = vmax.xlane.f32.xlu0 %v3373
      %v3375 = vpop.xlane.xlu0 %3374
      %v3376 = vsel %vm2189, %v3114, -inf
      %3377 = vmax.xlane.f32.xlu0 %v3376
      %v3378 = vpop.xlane.xlu0 %3377
      %v3379 = vsel %vm2189, %v3119, -inf
      %3380 = vmax.xlane.f32.xlu0 %v3379
      %v3381 = vpop.xlane.xlu0 %3380
      %v3382 = vsel %vm2189, %v3122, -inf
      %3383 = vmax.xlane.f32.xlu0 %v3382
      %v3384 = vpop.xlane.xlu0 %3383
      %v3385 = vsel %vm2189, %v3127, -inf
      %3386 = vmax.xlane.f32.xlu0 %v3385
      %v3387 = vpop.xlane.xlu0 %3386
      %v3388 = vsel %vm2189, %v3130, -inf
      %3389 = vmax.xlane.f32.xlu0 %v3388
      %v3390 = vpop.xlane.xlu0 %3389
      %v3391 = vsel %vm2189, %v3208, -inf
      %3392 = vmax.xlane.f32.xlu0 %v3391
      %v3393 = vpop.xlane.xlu0 %3392
      %v3394 = vsel %vm2189, %v3211, -inf
      %3395 = vmax.xlane.f32.xlu0 %v3394
      %v3396 = vpop.xlane.xlu0 %3395
      %v3397 = vsel %vm2189, %v3216, -inf
      %3398 = vmax.xlane.f32.xlu0 %v3397
      %v3399 = vpop.xlane.xlu0 %3398
      %v3400 = vsel %vm2189, %v3219, -inf
      %3401 = vmax.xlane.f32.xlu0 %v3400
      %v3402 = vpop.xlane.xlu0 %3401
      %v3403 = vsel %vm2189, %v3224, -inf
      %3404 = vmax.xlane.f32.xlu0 %v3403
      %v3405 = vpop.xlane.xlu0 %3404
      %v3406 = vsel %vm2189, %v3227, -inf
      %3407 = vmax.xlane.f32.xlu0 %v3406
      %v3408 = vpop.xlane.xlu0 %3407
      %v3409 = vsel %vm2189, %v3232, -inf
      %3410 = vmax.xlane.f32.xlu0 %v3409
      %v3411 = vpop.xlane.xlu0 %3410
      %v3412 = vsel %vm2189, %v3235, -inf
      %3413 = vmax.xlane.f32.xlu0 %v3412
      %v3414 = vpop.xlane.xlu0 %3413
      %v3415 = vsel %vm2189, %v3313, -inf
      %3416 = vmax.xlane.f32.xlu0 %v3415
      %v3417 = vpop.xlane.xlu0 %3416
      %v3418 = vsel %vm2189, %v3316, -inf
      %3419 = vmax.xlane.f32.xlu0 %v3418
      %v3420 = vpop.xlane.xlu0 %3419
      %v3421 = vsel %vm2189, %v3321, -inf
      %3422 = vmax.xlane.f32.xlu0 %v3421
      %v3423 = vpop.xlane.xlu0 %3422
      %v3424 = vsel %vm2189, %v3324, -inf
      %3425 = vmax.xlane.f32.xlu0 %v3424
      %v3426 = vpop.xlane.xlu0 %3425
      %v3427 = vsel %vm2189, %v3329, -inf
      %3428 = vmax.xlane.f32.xlu0 %v3427
      %v3429 = vpop.xlane.xlu0 %3428
      %v3430 = vsel %vm2189, %v3332, -inf
      %3431 = vmax.xlane.f32.xlu0 %v3430
      %v3432 = vpop.xlane.xlu0 %3431
      %v3433 = vsel %vm2189, %v3337, -inf
      %3434 = vmax.xlane.f32.xlu0 %v3433
      %v3435 = vpop.xlane.xlu0 %3434
      %v3436 = vsel %vm2189, %v3340, -inf
      %3437 = vmax.xlane.f32.xlu0 %v3436
      %v3438 = vpop.xlane.xlu0 %3437
      %v3439 = vsub.f32 %v2998, %v3345
      %v3440 = vsub.f32 %v3001, %v3348
      %v3441 = vsub.f32 %v3006, %v3351
      %v3442 = vsub.f32 %v3009, %v3354
      %v3443 = vsub.f32 %v3014, %v3357
      %v3444 = vsub.f32 %v3017, %v3360
      %v3445 = vsub.f32 %v3022, %v3363
      %v3446 = vsub.f32 %v3025, %v3366
      %v3447 = vsub.f32 %v3103, %v3369
      %v3448 = vsub.f32 %v3106, %v3372
      %v3449 = vsub.f32 %v3111, %v3375
      %v3450 = vsub.f32 %v3114, %v3378
      %v3451 = vsub.f32 %v3119, %v3381
      %v3452 = vsub.f32 %v3122, %v3384
      %v3453 = vsub.f32 %v3127, %v3387
      %v3454 = vsub.f32 %v3130, %v3390
      %v3455 = vsub.f32 %v3208, %v3393
      %v3456 = vsub.f32 %v3211, %v3396
      %v3457 = vsub.f32 %v3216, %v3399
      %v3458 = vsub.f32 %v3219, %v3402
      %v3459 = vsub.f32 %v3224, %v3405
      %v3460 = vsub.f32 %v3227, %v3408
      %v3461 = vsub.f32 %v3232, %v3411
      %v3462 = vsub.f32 %v3235, %v3414
      %v3463 = vsub.f32 %v3313, %v3417
      %v3464 = vsub.f32 %v3316, %v3420
      %v3465 = vsub.f32 %v3321, %v3423
      %v3466 = vsub.f32 %v3324, %v3426
      %v3467 = vsub.f32 %v3329, %v3429
      %v3468 = vsub.f32 %v3332, %v3432
      %v3469 = vsub.f32 %v3337, %v3435
      %v3470 = vsub.f32 %v3340, %v3438
      %v3471 = vmul.f32 %v3439, 1.442695
      %v3472 = vpow.pop %v3471
      %v3473 = vmul.f32 %v3440, 1.442695
      %v3474 = vpow.pop %v3473
      %v3475 = vmul.f32 %v3441, 1.442695
      %v3476 = vpow.pop %v3475
      %v3477 = vmul.f32 %v3442, 1.442695
      %v3478 = vpow.pop %v3477
      %v3479 = vmul.f32 %v3443, 1.442695
      %v3480 = vpow.pop %v3479
      %v3481 = vmul.f32 %v3444, 1.442695
      %v3482 = vpow.pop %v3481
      %v3483 = vmul.f32 %v3445, 1.442695
      %v3484 = vpow.pop %v3483
      %v3485 = vmul.f32 %v3446, 1.442695
      %v3486 = vpow.pop %v3485
      %v3487 = vmul.f32 %v3447, 1.442695
      %v3488 = vpow.pop %v3487
      %v3489 = vmul.f32 %v3448, 1.442695
      %v3490 = vpow.pop %v3489
      %v3491 = vmul.f32 %v3449, 1.442695
      %v3492 = vpow.pop %v3491
      %v3493 = vmul.f32 %v3450, 1.442695
      %v3494 = vpow.pop %v3493
      %v3495 = vmul.f32 %v3451, 1.442695
      %v3496 = vpow.pop %v3495
      %v3497 = vmul.f32 %v3452, 1.442695
      %v3498 = vpow.pop %v3497
      %v3499 = vmul.f32 %v3453, 1.442695
      %v3500 = vpow.pop %v3499
      %v3501 = vmul.f32 %v3454, 1.442695
      %v3502 = vpow.pop %v3501
      %v3503 = vmul.f32 %v3455, 1.442695
      %v3504 = vpow.pop %v3503
      %v3505 = vmul.f32 %v3456, 1.442695
      %v3506 = vpow.pop %v3505
      %v3507 = vmul.f32 %v3457, 1.442695
      %v3508 = vpow.pop %v3507
      %v3509 = vmul.f32 %v3458, 1.442695
      %v3510 = vpow.pop %v3509
      %v3511 = vmul.f32 %v3459, 1.442695
      %v3512 = vpow.pop %v3511
      %v3513 = vmul.f32 %v3460, 1.442695
      %v3514 = vpow.pop %v3513
      %v3515 = vmul.f32 %v3461, 1.442695
      %v3516 = vpow.pop %v3515
      %v3517 = vmul.f32 %v3462, 1.442695
      %v3518 = vpow.pop %v3517
      %v3519 = vmul.f32 %v3463, 1.442695
      %v3520 = vpow.pop %v3519
      %v3521 = vmul.f32 %v3464, 1.442695
      %v3522 = vpow.pop %v3521
      %v3523 = vmul.f32 %v3465, 1.442695
      %v3524 = vpow.pop %v3523
      %v3525 = vmul.f32 %v3466, 1.442695
      %v3526 = vpow.pop %v3525
      %v3527 = vmul.f32 %v3467, 1.442695
      %v3528 = vpow.pop %v3527
      %v3529 = vmul.f32 %v3468, 1.442695
      %v3530 = vpow.pop %v3529
      %v3531 = vmul.f32 %v3469, 1.442695
      %v3532 = vpow.pop %v3531
      %v3533 = vmul.f32 %v3470, 1.442695
      %v3534 = vpow.pop %v3533
      %v3535 = vsel %vm2189, %v3472, 0.0
      %3536 = vadd.xlane.f32.xlu0 %v3535
      %v3537 = vpop.xlane.xlu0 %3536
      %v3538 = vsel %vm2189, %v3474, 0.0
      %3539 = vadd.xlane.f32.xlu0 %v3538
      %v3540 = vpop.xlane.xlu0 %3539
      %v3541 = vsel %vm2189, %v3476, 0.0
      %3542 = vadd.xlane.f32.xlu0 %v3541
      %v3543 = vpop.xlane.xlu0 %3542
      %v3544 = vsel %vm2189, %v3478, 0.0
      %3545 = vadd.xlane.f32.xlu0 %v3544
      %v3546 = vpop.xlane.xlu0 %3545
      %v3547 = vsel %vm2189, %v3480, 0.0
      %3548 = vadd.xlane.f32.xlu0 %v3547
      %v3549 = vpop.xlane.xlu0 %3548
      %v3550 = vsel %vm2189, %v3482, 0.0
      %3551 = vadd.xlane.f32.xlu0 %v3550
      %v3552 = vpop.xlane.xlu0 %3551
      %v3553 = vsel %vm2189, %v3484, 0.0
      %3554 = vadd.xlane.f32.xlu0 %v3553
      %v3555 = vpop.xlane.xlu0 %3554
      %v3556 = vsel %vm2189, %v3486, 0.0
      %3557 = vadd.xlane.f32.xlu0 %v3556
      %v3558 = vpop.xlane.xlu0 %3557
      %v3559 = vsel %vm2189, %v3488, 0.0
      %3560 = vadd.xlane.f32.xlu0 %v3559
      %v3561 = vpop.xlane.xlu0 %3560
      %v3562 = vsel %vm2189, %v3490, 0.0
      %3563 = vadd.xlane.f32.xlu0 %v3562
      %v3564 = vpop.xlane.xlu0 %3563
      %v3565 = vsel %vm2189, %v3492, 0.0
      %3566 = vadd.xlane.f32.xlu0 %v3565
      %v3567 = vpop.xlane.xlu0 %3566
      %v3568 = vsel %vm2189, %v3494, 0.0
      %3569 = vadd.xlane.f32.xlu0 %v3568
      %v3570 = vpop.xlane.xlu0 %3569
      %v3571 = vsel %vm2189, %v3496, 0.0
      %3572 = vadd.xlane.f32.xlu0 %v3571
      %v3573 = vpop.xlane.xlu0 %3572
      %v3574 = vsel %vm2189, %v3498, 0.0
      %3575 = vadd.xlane.f32.xlu0 %v3574
      %v3576 = vpop.xlane.xlu0 %3575
      %v3577 = vsel %vm2189, %v3500, 0.0
      %3578 = vadd.xlane.f32.xlu0 %v3577
      %v3579 = vpop.xlane.xlu0 %3578
      %v3580 = vsel %vm2189, %v3502, 0.0
      %3581 = vadd.xlane.f32.xlu0 %v3580
      %v3582 = vpop.xlane.xlu0 %3581
      %v3583 = vsel %vm2189, %v3504, 0.0
      %3584 = vadd.xlane.f32.xlu0 %v3583
      %v3585 = vpop.xlane.xlu0 %3584
      %v3586 = vsel %vm2189, %v3506, 0.0
      %3587 = vadd.xlane.f32.xlu0 %v3586
      %v3588 = vpop.xlane.xlu0 %3587
      %v3589 = vsel %vm2189, %v3508, 0.0
      %3590 = vadd.xlane.f32.xlu0 %v3589
      %v3591 = vpop.xlane.xlu0 %3590
      %v3592 = vsel %vm2189, %v3510, 0.0
      %3593 = vadd.xlane.f32.xlu0 %v3592
      %v3594 = vpop.xlane.xlu0 %3593
      %v3595 = vsel %vm2189, %v3512, 0.0
      %3596 = vadd.xlane.f32.xlu0 %v3595
      %v3597 = vpop.xlane.xlu0 %3596
      %v3598 = vsel %vm2189, %v3514, 0.0
      %3599 = vadd.xlane.f32.xlu0 %v3598
      %v3600 = vpop.xlane.xlu0 %3599
      %v3601 = vsel %vm2189, %v3516, 0.0
      %3602 = vadd.xlane.f32.xlu0 %v3601
      %v3603 = vpop.xlane.xlu0 %3602
      %v3604 = vsel %vm2189, %v3518, 0.0
      %3605 = vadd.xlane.f32.xlu0 %v3604
      %v3606 = vpop.xlane.xlu0 %3605
      %v3607 = vsel %vm2189, %v3520, 0.0
      %3608 = vadd.xlane.f32.xlu0 %v3607
      %v3609 = vpop.xlane.xlu0 %3608
      %v3610 = vsel %vm2189, %v3522, 0.0
      %3611 = vadd.xlane.f32.xlu0 %v3610
      %v3612 = vpop.xlane.xlu0 %3611
      %v3613 = vsel %vm2189, %v3524, 0.0
      %3614 = vadd.xlane.f32.xlu0 %v3613
      %v3615 = vpop.xlane.xlu0 %3614
      %v3616 = vsel %vm2189, %v3526, 0.0
      %3617 = vadd.xlane.f32.xlu0 %v3616
      %v3618 = vpop.xlane.xlu0 %3617
      %v3619 = vsel %vm2189, %v3528, 0.0
      %3620 = vadd.xlane.f32.xlu0 %v3619
      %v3621 = vpop.xlane.xlu0 %3620
      %v3622 = vsel %vm2189, %v3530, 0.0
      %3623 = vadd.xlane.f32.xlu0 %v3622
      %v3624 = vpop.xlane.xlu0 %3623
      %v3625 = vsel %vm2189, %v3532, 0.0
      %3626 = vadd.xlane.f32.xlu0 %v3625
      %v3627 = vpop.xlane.xlu0 %3626
      %v3628 = vsel %vm2189, %v3534, 0.0
      %3629 = vadd.xlane.f32.xlu0 %v3628
      %v3630 = vpop.xlane.xlu0 %3629
      %v3631 = vrcp.pop %v3537
      %v3632 = vrcp.pop %v3540
      %v3633 = vrcp.pop %v3543
      %v3634 = vrcp.pop %v3546
      %v3635 = vrcp.pop %v3549
      %v3636 = vrcp.pop %v3552
      %v3637 = vrcp.pop %v3555
      %v3638 = vrcp.pop %v3558
      %v3639 = vrcp.pop %v3561
      %v3640 = vrcp.pop %v3564
      %v3641 = vrcp.pop %v3567
      %v3642 = vrcp.pop %v3570
      %v3643 = vrcp.pop %v3573
      %v3644 = vrcp.pop %v3576
      %v3645 = vrcp.pop %v3579
      %v3646 = vrcp.pop %v3582
      %v3647 = vrcp.pop %v3585
      %v3648 = vrcp.pop %v3588
      %v3649 = vrcp.pop %v3591
      %v3650 = vrcp.pop %v3594
      %v3651 = vrcp.pop %v3597
      %v3652 = vrcp.pop %v3600
      %v3653 = vrcp.pop %v3603
      %v3654 = vrcp.pop %v3606
      %v3655 = vrcp.pop %v3609
      %v3656 = vrcp.pop %v3612
      %v3657 = vrcp.pop %v3615
      %v3658 = vrcp.pop %v3618
      %v3659 = vrcp.pop %v3621
      %v3660 = vrcp.pop %v3624
      %v3661 = vrcp.pop %v3627
      %v3662 = vrcp.pop %v3630
      %v3663 = vmul.f32 %v3472, %v3631
      %v3664 = vmul.f32 %v3474, %v3632
      %v3665 = vmul.f32 %v3476, %v3633
      %v3666 = vmul.f32 %v3478, %v3634
      %v3667 = vmul.f32 %v3480, %v3635
      %v3668 = vmul.f32 %v3482, %v3636
      %v3669 = vmul.f32 %v3484, %v3637
      %v3670 = vmul.f32 %v3486, %v3638
      %v3671 = vmul.f32 %v3488, %v3639
      %v3672 = vmul.f32 %v3490, %v3640
      %v3673 = vmul.f32 %v3492, %v3641
      %v3674 = vmul.f32 %v3494, %v3642
      %v3675 = vmul.f32 %v3496, %v3643
      %v3676 = vmul.f32 %v3498, %v3644
      %v3677 = vmul.f32 %v3500, %v3645
      %v3678 = vmul.f32 %v3502, %v3646
      %v3679 = vmul.f32 %v3504, %v3647
      %v3680 = vmul.f32 %v3506, %v3648
      %v3681 = vmul.f32 %v3508, %v3649
      %v3682 = vmul.f32 %v3510, %v3650
      %v3683 = vmul.f32 %v3512, %v3651
      %v3684 = vmul.f32 %v3514, %v3652
      %v3685 = vmul.f32 %v3516, %v3653
      %v3686 = vmul.f32 %v3518, %v3654
      %v3687 = vmul.f32 %v3520, %v3655
      %v3688 = vmul.f32 %v3522, %v3656
      %v3689 = vmul.f32 %v3524, %v3657
      %v3690 = vmul.f32 %v3526, %v3658
      %v3691 = vmul.f32 %v3528, %v3659
      %v3692 = vmul.f32 %v3530, %v3660
      %v3693 = vmul.f32 %v3532, %v3661
      %v3694 = vmul.f32 %v3534, %v3662
      %v3695 = vpack.c.bf16 %v3664, %v3663
      %v3696 = vpack.c.bf16 %v3666, %v3665
      %v3697 = vpack.c.bf16 %v3668, %v3667
      %v3698 = vpack.c.bf16 %v3670, %v3669
      %v3699 = vpack.c.bf16 %v3672, %v3671
      %v3700 = vpack.c.bf16 %v3674, %v3673
      %v3701 = vpack.c.bf16 %v3676, %v3675
      %v3702 = vpack.c.bf16 %v3678, %v3677
      %v3703 = vpack.c.bf16 %v3680, %v3679
      %v3704 = vpack.c.bf16 %v3682, %v3681
      %v3705 = vpack.c.bf16 %v3684, %v3683
      %v3706 = vpack.c.bf16 %v3686, %v3685
      %v3707 = vpack.c.bf16 %v3688, %v3687
      %v3708 = vpack.c.bf16 %v3690, %v3689
      %v3709 = vpack.c.bf16 %v3692, %v3691
      %v3710 = vpack.c.bf16 %v3694, %v3693
      %3711 = vrot.lane.b32.xlu0 %v1760, 48
      %v3712 = vpop.permute.xlu0 %3711
      %3713 = vrot.lane.b32.xlu0 %v1761, 48
      %v3714 = vpop.permute.xlu0 %3713
      %3715 = vrot.lane.b32.xlu0 %v1762, 48
      %v3716 = vpop.permute.xlu0 %3715
      %3717 = vrot.lane.b32.xlu0 %v1763, 48
      %v3718 = vpop.permute.xlu0 %3717
      %v3724 = vsel %vm2189, %v3695, 0
      %v3727 = vsel %vm2189, %v3696, 0
      %v3730 = vsel %vm2189, %v3697, 0
      %v3733 = vsel %vm2189, %v3698, 0
      %3735 = vmatprep.subr.bf16.mxu0 0
      %3736 = vmatpush1.bf16.msra.mxu0 %v3712
      %3737 = vmatprep.subr.bf16.mxu0 0
      %3738 = vmatpush1.bf16.msra.mxu0 %v3714
      %3739 = vmatprep.subr.bf16.mxu0 0
      %3740 = vmatpush1.bf16.msra.mxu0 %v3716
      %3741 = vmatprep.subr.bf16.mxu0 0
      %3742 = vmatpush1.bf16.msra.mxu0 %v3718
      %3743 = vmatprep.subr.bf16.mxu0 0
      %3744 = vmatpush1.bf16.msra.mxu0 0
      %3745 = vmatprep.subr.bf16.mxu0 0
      %3746 = vmatpush1.bf16.msra.mxu0 0
      %3747 = vmatprep.subr.bf16.mxu0 0
      %3748 = vmatpush1.bf16.msra.mxu0 0
      %3749 = vmatprep.subr.bf16.mxu0 0
      %3750 = vmatpush1.bf16.msra.mxu0 0
      %3751 = vmatprep.subr.bf16.mxu0 0
      %3752 = vmatpush1.bf16.msra.mxu0 0
      %3753 = vmatprep.subr.bf16.mxu0 0
      %3754 = vmatpush1.bf16.msra.mxu0 0
      %3755 = vmatprep.subr.bf16.mxu0 0
      %3756 = vmatpush1.bf16.msra.mxu0 0
      %3757 = vmatprep.subr.bf16.mxu0 0
      %3758 = vmatpush1.bf16.msra.mxu0 0
      %3759 = vmatprep.subr.bf16.mxu0 0
      %3760 = vmatpush1.bf16.msra.mxu0 0
      %3761 = vmatprep.subr.bf16.mxu0 0
      %3762 = vmatpush1.bf16.msra.mxu0 0
      %3763 = vmatprep.subr.bf16.mxu0 0
      %3764 = vmatpush1.bf16.msra.mxu0 0
      %3765 = vmatprep.subr.bf16.mxu0 0
      %3766 = vmatpush1.bf16.msra.mxu0 0
      %3767 = vmatprep.mubr.bf16.mxu0 0
      %3768 = vmatmul.mubr.bf16.gmra.mrb[0].mxu0 %v3724
      %v3769 = vpop.f32.mrb[0].mxu0
      %v3770 = vadd.f32 0.0, %v3769
      %v3771 = vpop.f32.mrb[0].mxu0
      %v3772 = vpop.f32.mrb[0].mxu0
      %v3773 = vadd.f32 0.0, %v3772
      %v3774 = vpop.f32.mrb[0].mxu0
      %3775 = vmatprep.mubr.bf16.mxu0 0
      %3776 = vmatmul.mubr.bf16.gmra.mrb[0].mxu0 %v3727
      %v3777 = vpop.f32.mrb[0].mxu0
      %v3778 = vadd.f32 0.0, %v3777
      %v3779 = vpop.f32.mrb[0].mxu0
      %v3780 = vpop.f32.mrb[0].mxu0
      %v3781 = vadd.f32 0.0, %v3780
      %v3782 = vpop.f32.mrb[0].mxu0
      %3783 = vmatprep.mubr.bf16.mxu0 0
      %3784 = vmatmul.mubr.bf16.gmra.mrb[0].mxu0 %v3730
      %v3785 = vpop.f32.mrb[0].mxu0
      %v3786 = vadd.f32 0.0, %v3785
      %v3787 = vpop.f32.mrb[0].mxu0
      %v3788 = vpop.f32.mrb[0].mxu0
      %v3789 = vadd.f32 0.0, %v3788
      %v3790 = vpop.f32.mrb[0].mxu0
      %3791 = vmatprep.mubr.bf16.mxu0 0
      %3792 = vmatmul.mubr.bf16.gmra.mrb[0].mxu0 %v3733
      %v3793 = vpop.f32.mrb[0].mxu0
      %v3794 = vadd.f32 0.0, %v3793
      %v3795 = vpop.f32.mrb[0].mxu0
      %v3796 = vpop.f32.mrb[0].mxu0
      %v3797 = vadd.f32 0.0, %v3796
      %v3798 = vpop.f32.mrb[0].mxu0
      %3799 = vdwg.mxu0
      %3800 = vrot.lane.b32.xlu0 %v1764, 48
      %v3801 = vpop.permute.xlu0 %3800
      %3802 = vrot.lane.b32.xlu0 %v1765, 48
      %v3803 = vpop.permute.xlu0 %3802
      %3804 = vrot.lane.b32.xlu0 %v1766, 48
      %v3805 = vpop.permute.xlu0 %3804
      %3806 = vrot.lane.b32.xlu0 %v1767, 48
      %v3807 = vpop.permute.xlu0 %3806
      %v3813 = vsel %vm2189, %v3699, 0
      %v3816 = vsel %vm2189, %v3700, 0
      %v3819 = vsel %vm2189, %v3701, 0
      %v3822 = vsel %vm2189, %v3702, 0
      %3824 = vmatprep.subr.bf16.mxu0 0
      %3825 = vmatpush1.bf16.msra.mxu0 %v3801
      %3826 = vmatprep.subr.bf16.mxu0 0
      %3827 = vmatpush1.bf16.msra.mxu0 %v3803
      %3828 = vmatprep.subr.bf16.mxu0 0
      %3829 = vmatpush1.bf16.msra.mxu0 %v3805
      %3830 = vmatprep.subr.bf16.mxu0 0
      %3831 = vmatpush1.bf16.msra.mxu0 %v3807
      %3832 = vmatprep.subr.bf16.mxu0 0
      %3833 = vmatpush1.bf16.msra.mxu0 0
      %3834 = vmatprep.subr.bf16.mxu0 0
      %3835 = vmatpush1.bf16.msra.mxu0 0
      %3836 = vmatprep.subr.bf16.mxu0 0
      %3837 = vmatpush1.bf16.msra.mxu0 0
      %3838 = vmatprep.subr.bf16.mxu0 0
      %3839 = vmatpush1.bf16.msra.mxu0 0
      %3840 = vmatprep.subr.bf16.mxu0 0
      %3841 = vmatpush1.bf16.msra.mxu0 0
      %3842 = vmatprep.subr.bf16.mxu0 0
      %3843 = vmatpush1.bf16.msra.mxu0 0
      %3844 = vmatprep.subr.bf16.mxu0 0
      %3845 = vmatpush1.bf16.msra.mxu0 0
      %3846 = vmatprep.subr.bf16.mxu0 0
      %3847 = vmatpush1.bf16.msra.mxu0 0
      %3848 = vmatprep.subr.bf16.mxu0 0
      %3849 = vmatpush1.bf16.msra.mxu0 0
      %3850 = vmatprep.subr.bf16.mxu0 0
      %3851 = vmatpush1.bf16.msra.mxu0 0
      %3852 = vmatprep.subr.bf16.mxu0 0
      %3853 = vmatpush1.bf16.msra.mxu0 0
      %3854 = vmatprep.subr.bf16.mxu0 0
      %3855 = vmatpush1.bf16.msra.mxu0 0
      %3856 = vmatprep.mubr.bf16.mxu0 0
      %3857 = vmatmul.mubr.bf16.gmra.mrb[0].mxu0 %v3813
      %v3858 = vpop.f32.mrb[0].mxu0
      %v3859 = vadd.f32 0.0, %v3858
      %v3860 = vpop.f32.mrb[0].mxu0
      %v3861 = vpop.f32.mrb[0].mxu0
      %v3862 = vadd.f32 0.0, %v3861
      %v3863 = vpop.f32.mrb[0].mxu0
      %3864 = vmatprep.mubr.bf16.mxu0 0
      %3865 = vmatmul.mubr.bf16.gmra.mrb[0].mxu0 %v3816
      %v3866 = vpop.f32.mrb[0].mxu0
      %v3867 = vadd.f32 0.0, %v3866
      %v3868 = vpop.f32.mrb[0].mxu0
      %v3869 = vpop.f32.mrb[0].mxu0
      %v3870 = vadd.f32 0.0, %v3869
      %v3871 = vpop.f32.mrb[0].mxu0
      %3872 = vmatprep.mubr.bf16.mxu0 0
      %3873 = vmatmul.mubr.bf16.gmra.mrb[0].mxu0 %v3819
      %v3874 = vpop.f32.mrb[0].mxu0
      %v3875 = vadd.f32 0.0, %v3874
      %v3876 = vpop.f32.mrb[0].mxu0
      %v3877 = vpop.f32.mrb[0].mxu0
      %v3878 = vadd.f32 0.0, %v3877
      %v3879 = vpop.f32.mrb[0].mxu0
      %3880 = vmatprep.mubr.bf16.mxu0 0
      %3881 = vmatmul.mubr.bf16.gmra.mrb[0].mxu0 %v3822
      %v3882 = vpop.f32.mrb[0].mxu0
      %v3883 = vadd.f32 0.0, %v3882
      %v3884 = vpop.f32.mrb[0].mxu0
      %v3885 = vpop.f32.mrb[0].mxu0
      %v3886 = vadd.f32 0.0, %v3885
      %v3887 = vpop.f32.mrb[0].mxu0
      %3888 = vdwg.mxu0
      %3889 = vrot.lane.b32.xlu0 %v1768, 48
      %v3890 = vpop.permute.xlu0 %3889
      %3891 = vrot.lane.b32.xlu0 %v1769, 48
      %v3892 = vpop.permute.xlu0 %3891
      %3893 = vrot.lane.b32.xlu0 %v1770, 48
      %v3894 = vpop.permute.xlu0 %3893
      %3895 = vrot.lane.b32.xlu0 %v1771, 48
      %v3896 = vpop.permute.xlu0 %3895
      %v3902 = vsel %vm2189, %v3703, 0
      %v3905 = vsel %vm2189, %v3704, 0
      %v3908 = vsel %vm2189, %v3705, 0
      %v3911 = vsel %vm2189, %v3706, 0
      %3913 = vmatprep.subr.bf16.mxu0 0
      %3914 = vmatpush1.bf16.msra.mxu0 %v3890
      %3915 = vmatprep.subr.bf16.mxu0 0
      %3916 = vmatpush1.bf16.msra.mxu0 %v3892
      %3917 = vmatprep.subr.bf16.mxu0 0
      %3918 = vmatpush1.bf16.msra.mxu0 %v3894
      %3919 = vmatprep.subr.bf16.mxu0 0
      %3920 = vmatpush1.bf16.msra.mxu0 %v3896
      %3921 = vmatprep.subr.bf16.mxu0 0
      %3922 = vmatpush1.bf16.msra.mxu0 0
      %3923 = vmatprep.subr.bf16.mxu0 0
      %3924 = vmatpush1.bf16.msra.mxu0 0
      %3925 = vmatprep.subr.bf16.mxu0 0
      %3926 = vmatpush1.bf16.msra.mxu0 0
      %3927 = vmatprep.subr.bf16.mxu0 0
      %3928 = vmatpush1.bf16.msra.mxu0 0
      %3929 = vmatprep.subr.bf16.mxu0 0
      %3930 = vmatpush1.bf16.msra.mxu0 0
      %3931 = vmatprep.subr.bf16.mxu0 0
      %3932 = vmatpush1.bf16.msra.mxu0 0
      %3933 = vmatprep.subr.bf16.mxu0 0
      %3934 = vmatpush1.bf16.msra.mxu0 0
      %3935 = vmatprep.subr.bf16.mxu0 0
      %3936 = vmatpush1.bf16.msra.mxu0 0
      %3937 = vmatprep.subr.bf16.mxu0 0
      %3938 = vmatpush1.bf16.msra.mxu0 0
      %3939 = vmatprep.subr.bf16.mxu0 0
      %3940 = vmatpush1.bf16.msra.mxu0 0
      %3941 = vmatprep.subr.bf16.mxu0 0
      %3942 = vmatpush1.bf16.msra.mxu0 0
      %3943 = vmatprep.subr.bf16.mxu0 0
      %3944 = vmatpush1.bf16.msra.mxu0 0
      %3945 = vmatprep.mubr.bf16.mxu0 0
      %3946 = vmatmul.mubr.bf16.gmra.mrb[0].mxu0 %v3902
      %v3947 = vpop.f32.mrb[0].mxu0
      %v3948 = vadd.f32 0.0, %v3947
      %v3949 = vpop.f32.mrb[0].mxu0
      %v3950 = vpop.f32.mrb[0].mxu0
      %v3951 = vadd.f32 0.0, %v3950
      %v3952 = vpop.f32.mrb[0].mxu0
      %3953 = vmatprep.mubr.bf16.mxu0 0
      %3954 = vmatmul.mubr.bf16.gmra.mrb[0].mxu0 %v3905
      %v3955 = vpop.f32.mrb[0].mxu0
      %v3956 = vadd.f32 0.0, %v3955
      %v3957 = vpop.f32.mrb[0].mxu0
      %v3958 = vpop.f32.mrb[0].mxu0
      %v3959 = vadd.f32 0.0, %v3958
      %v3960 = vpop.f32.mrb[0].mxu0
      %3961 = vmatprep.mubr.bf16.mxu0 0
      %3962 = vmatmul.mubr.bf16.gmra.mrb[0].mxu0 %v3908
      %v3963 = vpop.f32.mrb[0].mxu0
      %v3964 = vadd.f32 0.0, %v3963
      %v3965 = vpop.f32.mrb[0].mxu0
      %v3966 = vpop.f32.mrb[0].mxu0
      %v3967 = vadd.f32 0.0, %v3966
      %v3968 = vpop.f32.mrb[0].mxu0
      %3969 = vmatprep.mubr.bf16.mxu0 0
      %3970 = vmatmul.mubr.bf16.gmra.mrb[0].mxu0 %v3911
      %v3971 = vpop.f32.mrb[0].mxu0
      %v3972 = vadd.f32 0.0, %v3971
      %v3973 = vpop.f32.mrb[0].mxu0
      %v3974 = vpop.f32.mrb[0].mxu0
      %v3975 = vadd.f32 0.0, %v3974
      %v3976 = vpop.f32.mrb[0].mxu0
      %3977 = vdwg.mxu0
      %3978 = vrot.lane.b32.xlu0 %v1772, 48
      %v3979 = vpop.permute.xlu0 %3978
      %3980 = vrot.lane.b32.xlu0 %v1773, 48
      %v3981 = vpop.permute.xlu0 %3980
      %3982 = vrot.lane.b32.xlu0 %v1774, 48
      %v3983 = vpop.permute.xlu0 %3982
      %3984 = vrot.lane.b32.xlu0 %v1775, 48
      %v3985 = vpop.permute.xlu0 %3984
      %v3991 = vsel %vm2189, %v3707, 0
      %v3994 = vsel %vm2189, %v3708, 0
      %v3997 = vsel %vm2189, %v3709, 0
      %v4000 = vsel %vm2189, %v3710, 0
      %4002 = vmatprep.subr.bf16.mxu0 0
      %4003 = vmatpush1.bf16.msra.mxu0 %v3979
      %4004 = vmatprep.subr.bf16.mxu0 0
      %4005 = vmatpush1.bf16.msra.mxu0 %v3981
      %4006 = vmatprep.subr.bf16.mxu0 0
      %4007 = vmatpush1.bf16.msra.mxu0 %v3983
      %4008 = vmatprep.subr.bf16.mxu0 0
      %4009 = vmatpush1.bf16.msra.mxu0 %v3985
      %4010 = vmatprep.subr.bf16.mxu0 0
      %4011 = vmatpush1.bf16.msra.mxu0 0
      %4012 = vmatprep.subr.bf16.mxu0 0
      %4013 = vmatpush1.bf16.msra.mxu0 0
      %4014 = vmatprep.subr.bf16.mxu0 0
      %4015 = vmatpush1.bf16.msra.mxu0 0
      %4016 = vmatprep.subr.bf16.mxu0 0
      %4017 = vmatpush1.bf16.msra.mxu0 0
      %4018 = vmatprep.subr.bf16.mxu0 0
      %4019 = vmatpush1.bf16.msra.mxu0 0
      %4020 = vmatprep.subr.bf16.mxu0 0
      %4021 = vmatpush1.bf16.msra.mxu0 0
      %4022 = vmatprep.subr.bf16.mxu0 0
      %4023 = vmatpush1.bf16.msra.mxu0 0
      %4024 = vmatprep.subr.bf16.mxu0 0
      %4025 = vmatpush1.bf16.msra.mxu0 0
      %4026 = vmatprep.subr.bf16.mxu0 0
      %4027 = vmatpush1.bf16.msra.mxu0 0
      %4028 = vmatprep.subr.bf16.mxu0 0
      %4029 = vmatpush1.bf16.msra.mxu0 0
      %4030 = vmatprep.subr.bf16.mxu0 0
      %4031 = vmatpush1.bf16.msra.mxu0 0
      %4032 = vmatprep.subr.bf16.mxu0 0
      %4033 = vmatpush1.bf16.msra.mxu0 0
      %4034 = vmatprep.mubr.bf16.mxu0 0
      %4035 = vmatmul.mubr.bf16.gmra.mrb[0].mxu0 %v3991
      %v4036 = vpop.f32.mrb[0].mxu0
      %v4037 = vadd.f32 0.0, %v4036
      %v4038 = vpop.f32.mrb[0].mxu0
      %v4039 = vpop.f32.mrb[0].mxu0
      %v4040 = vadd.f32 0.0, %v4039
      %v4041 = vpop.f32.mrb[0].mxu0
      %4042 = vmatprep.mubr.bf16.mxu0 0
      %4043 = vmatmul.mubr.bf16.gmra.mrb[0].mxu0 %v3994
      %v4044 = vpop.f32.mrb[0].mxu0
      %v4045 = vadd.f32 0.0, %v4044
      %v4046 = vpop.f32.mrb[0].mxu0
      %v4047 = vpop.f32.mrb[0].mxu0
      %v4048 = vadd.f32 0.0, %v4047
      %v4049 = vpop.f32.mrb[0].mxu0
      %4050 = vmatprep.mubr.bf16.mxu0 0
      %4051 = vmatmul.mubr.bf16.gmra.mrb[0].mxu0 %v3997
      %v4052 = vpop.f32.mrb[0].mxu0
      %v4053 = vadd.f32 0.0, %v4052
      %v4054 = vpop.f32.mrb[0].mxu0
      %v4055 = vpop.f32.mrb[0].mxu0
      %v4056 = vadd.f32 0.0, %v4055
      %v4057 = vpop.f32.mrb[0].mxu0
      %4058 = vmatprep.mubr.bf16.mxu0 0
      %4059 = vmatmul.mubr.bf16.gmra.mrb[0].mxu0 %v4000
      %v4060 = vpop.f32.mrb[0].mxu0
      %v4061 = vadd.f32 0.0, %v4060
      %v4062 = vpop.f32.mrb[0].mxu0
      %v4063 = vpop.f32.mrb[0].mxu0
      %v4064 = vadd.f32 0.0, %v4063
      %v4065 = vpop.f32.mrb[0].mxu0
      %4066 = vdwg.mxu0
      %4099 = vrot.lane.b32.xlu0 %v3770, 16
      %v4100 = vpop.permute.xlu0 %4099
      %4101 = vrot.lane.b32.xlu0 %v3773, 16
      %v4102 = vpop.permute.xlu0 %4101
      %4103 = vrot.lane.b32.xlu0 %v3778, 16
      %v4104 = vpop.permute.xlu0 %4103
      %4105 = vrot.lane.b32.xlu0 %v3781, 16
      %v4106 = vpop.permute.xlu0 %4105
      %4107 = vrot.lane.b32.xlu0 %v3786, 16
      %v4108 = vpop.permute.xlu0 %4107
      %4109 = vrot.lane.b32.xlu0 %v3789, 16
      %v4110 = vpop.permute.xlu0 %4109
      %4111 = vrot.lane.b32.xlu0 %v3794, 16
      %v4112 = vpop.permute.xlu0 %4111
      %4113 = vrot.lane.b32.xlu0 %v3797, 16
      %v4114 = vpop.permute.xlu0 %4113
      %4115 = vrot.lane.b32.xlu0 %v3859, 16
      %v4116 = vpop.permute.xlu0 %4115
      %4117 = vrot.lane.b32.xlu0 %v3862, 16
      %v4118 = vpop.permute.xlu0 %4117
      %4119 = vrot.lane.b32.xlu0 %v3867, 16
      %v4120 = vpop.permute.xlu0 %4119
      %4121 = vrot.lane.b32.xlu0 %v3870, 16
      %v4122 = vpop.permute.xlu0 %4121
      %4123 = vrot.lane.b32.xlu0 %v3875, 16
      %v4124 = vpop.permute.xlu0 %4123
      %4125 = vrot.lane.b32.xlu0 %v3878, 16
      %v4126 = vpop.permute.xlu0 %4125
      %4127 = vrot.lane.b32.xlu0 %v3883, 16
      %v4128 = vpop.permute.xlu0 %4127
      %4129 = vrot.lane.b32.xlu0 %v3886, 16
      %v4130 = vpop.permute.xlu0 %4129
      %4131 = vrot.lane.b32.xlu0 %v3948, 16
      %v4132 = vpop.permute.xlu0 %4131
      %4133 = vrot.lane.b32.xlu0 %v3951, 16
      %v4134 = vpop.permute.xlu0 %4133
      %4135 = vrot.lane.b32.xlu0 %v3956, 16
      %v4136 = vpop.permute.xlu0 %4135
      %4137 = vrot.lane.b32.xlu0 %v3959, 16
      %v4138 = vpop.permute.xlu0 %4137
      %4139 = vrot.lane.b32.xlu0 %v3964, 16
      %v4140 = vpop.permute.xlu0 %4139
      %4141 = vrot.lane.b32.xlu0 %v3967, 16
      %v4142 = vpop.permute.xlu0 %4141
      %4143 = vrot.lane.b32.xlu0 %v3972, 16
      %v4144 = vpop.permute.xlu0 %4143
      %4145 = vrot.lane.b32.xlu0 %v3975, 16
      %v4146 = vpop.permute.xlu0 %4145
      %4147 = vrot.lane.b32.xlu0 %v4037, 16
      %v4148 = vpop.permute.xlu0 %4147
      %4149 = vrot.lane.b32.xlu0 %v4040, 16
      %v4150 = vpop.permute.xlu0 %4149
      %4151 = vrot.lane.b32.xlu0 %v4045, 16
      %v4152 = vpop.permute.xlu0 %4151
      %4153 = vrot.lane.b32.xlu0 %v4048, 16
      %v4154 = vpop.permute.xlu0 %4153
      %4155 = vrot.lane.b32.xlu0 %v4053, 16
      %v4156 = vpop.permute.xlu0 %4155
      %4157 = vrot.lane.b32.xlu0 %v4056, 16
      %v4158 = vpop.permute.xlu0 %4157
      %4159 = vrot.lane.b32.xlu0 %v4061, 16
      %v4160 = vpop.permute.xlu0 %4159
      %4161 = vrot.lane.b32.xlu0 %v4064, 16
      %v4162 = vpop.permute.xlu0 %4161
      %v4195 = vsel %vm1796, %v2617, %v4100
      %v4196 = vsel %vm1796, %v2620, %v4102
      %v4197 = vsel %vm1796, %v2625, %v4104
      %v4198 = vsel %vm1796, %v2628, %v4106
      %v4199 = vsel %vm1796, %v2633, %v4108
      %v4200 = vsel %vm1796, %v2636, %v4110
      %v4201 = vsel %vm1796, %v2641, %v4112
      %v4202 = vsel %vm1796, %v2644, %v4114
      %v4203 = vsel %vm1796, %v2706, %v4116
      %v4204 = vsel %vm1796, %v2709, %v4118
      %v4205 = vsel %vm1796, %v2714, %v4120
      %v4206 = vsel %vm1796, %v2717, %v4122
      %v4207 = vsel %vm1796, %v2722, %v4124
      %v4208 = vsel %vm1796, %v2725, %v4126
      %v4209 = vsel %vm1796, %v2730, %v4128
      %v4210 = vsel %vm1796, %v2733, %v4130
      %v4211 = vsel %vm1796, %v2795, %v4132
      %v4212 = vsel %vm1796, %v2798, %v4134
      %v4213 = vsel %vm1796, %v2803, %v4136
      %v4214 = vsel %vm1796, %v2806, %v4138
      %v4215 = vsel %vm1796, %v2811, %v4140
      %v4216 = vsel %vm1796, %v2814, %v4142
      %v4217 = vsel %vm1796, %v2819, %v4144
      %v4218 = vsel %vm1796, %v2822, %v4146
      %v4219 = vsel %vm1796, %v2884, %v4148
      %v4220 = vsel %vm1796, %v2887, %v4150
      %v4221 = vsel %vm1796, %v2892, %v4152
      %v4222 = vsel %vm1796, %v2895, %v4154
      %v4223 = vsel %vm1796, %v2900, %v4156
      %v4224 = vsel %vm1796, %v2903, %v4158
      %v4225 = vsel %vm1796, %v2908, %v4160
      %v4226 = vsel %vm1796, %v2911, %v4162
      %v4227 = vld [vmem:[%s8] sm:$0xff]
      %v4228 = vld [vmem:[%s8 + $0x8] sm:$0xff]
      %v4229 = vld [vmem:[%s8 + $0x10] sm:$0xff]
      %v4230 = vld [vmem:[%s8 + $0x18] sm:$0xff]
      %v4231 = vpack.c.bf16 %v4196, %v4195
      %v4232 = vpack.c.bf16 %v4198, %v4197
      %v4233 = vpack.c.bf16 %v4200, %v4199
      %v4234 = vpack.c.bf16 %v4202, %v4201
      %v4235 = vpack.c.bf16 %v4204, %v4203
      %v4236 = vpack.c.bf16 %v4206, %v4205
      %v4237 = vpack.c.bf16 %v4208, %v4207
      %v4238 = vpack.c.bf16 %v4210, %v4209
      %v4239 = vpack.c.bf16 %v4212, %v4211
      %v4240 = vpack.c.bf16 %v4214, %v4213
      %v4241 = vpack.c.bf16 %v4216, %v4215
      %v4242 = vpack.c.bf16 %v4218, %v4217
      %v4243 = vpack.c.bf16 %v4220, %v4219
      %v4244 = vpack.c.bf16 %v4222, %v4221
      %v4245 = vpack.c.bf16 %v4224, %v4223
      %v4246 = vpack.c.bf16 %v4226, %v4225
      %v4247 = vpack.c.bf16 %v4228, %v4227
      %v4248 = vpack.c.bf16 %v4230, %v4229
      %v4250 = vsel %vm1026, %v4231, 0
      %v4253 = vsel %vm1026, %v4232, 0
      %v4256 = vsel %vm1026, %v4233, 0
      %v4259 = vsel %vm1026, %v4234, 0
      %v4262 = vsel %vm1026, %v4235, 0
      %v4265 = vsel %vm1026, %v4236, 0
      %v4268 = vsel %vm1026, %v4237, 0
      %v4271 = vsel %vm1026, %v4238, 0
      %v4274 = vsel %vm1026, %v4239, 0
      %v4277 = vsel %vm1026, %v4240, 0
      %v4280 = vsel %vm1026, %v4241, 0
      %v4283 = vsel %vm1026, %v4242, 0
      %v4286 = vsel %vm1026, %v4243, 0
      %v4289 = vsel %vm1026, %v4244, 0
      %v4292 = vsel %vm1026, %v4245, 0
      %v4295 = vsel %vm1026, %v4246, 0
      %4297 = vmatprep.subr.bf16.mxu0 0
      %4298 = vmatpush1.bf16.msra.mxu0 %v4247
      %4299 = vmatprep.subr.bf16.mxu0 0
      %4300 = vmatpush1.bf16.msra.mxu0 %v4248
      %4301 = vmatprep.subr.bf16.mxu0 0
      %4302 = vmatpush1.bf16.msra.mxu0 0
      %4303 = vmatprep.subr.bf16.mxu0 0
      %4304 = vmatpush1.bf16.msra.mxu0 0
      %4305 = vmatprep.subr.bf16.mxu0 0
      %4306 = vmatpush1.bf16.msra.mxu0 0
      %4307 = vmatprep.subr.bf16.mxu0 0
      %4308 = vmatpush1.bf16.msra.mxu0 0
      %4309 = vmatprep.subr.bf16.mxu0 0
      %4310 = vmatpush1.bf16.msra.mxu0 0
      %4311 = vmatprep.subr.bf16.mxu0 0
      %4312 = vmatpush1.bf16.msra.mxu0 0
      %4313 = vmatprep.subr.bf16.mxu0 0
      %4314 = vmatpush1.bf16.msra.mxu0 0
      %4315 = vmatprep.subr.bf16.mxu0 0
      %4316 = vmatpush1.bf16.msra.mxu0 0
      %4317 = vmatprep.subr.bf16.mxu0 0
      %4318 = vmatpush1.bf16.msra.mxu0 0
      %4319 = vmatprep.subr.bf16.mxu0 0
      %4320 = vmatpush1.bf16.msra.mxu0 0
      %4321 = vmatprep.subr.bf16.mxu0 0
      %4322 = vmatpush1.bf16.msra.mxu0 0
      %4323 = vmatprep.subr.bf16.mxu0 0
      %4324 = vmatpush1.bf16.msra.mxu0 0
      %4325 = vmatprep.subr.bf16.mxu0 0
      %4326 = vmatpush1.bf16.msra.mxu0 0
      %4327 = vmatprep.subr.bf16.mxu0 0
      %4328 = vmatpush1.bf16.msra.mxu0 0
      %4329 = vmatprep.mubr.bf16.mxu0 0
      %4330 = vmatmul.mubr.bf16.gmra.mrb[0].mxu0 %v4250
      %v4331 = vpop.f32.mrb[0].mxu0
      %v4332 = vadd.f32 0.0, %v4331
      %v4333 = vpop.f32.mrb[0].mxu0
      %v4334 = vpop.f32.mrb[0].mxu0
      %v4335 = vadd.f32 0.0, %v4334
      %v4336 = vpop.f32.mrb[0].mxu0
      %4337 = vmatprep.mubr.bf16.mxu0 0
      %4338 = vmatmul.mubr.bf16.gmra.mrb[0].mxu0 %v4253
      %v4339 = vpop.f32.mrb[0].mxu0
      %v4340 = vadd.f32 0.0, %v4339
      %v4341 = vpop.f32.mrb[0].mxu0
      %v4342 = vpop.f32.mrb[0].mxu0
      %v4343 = vadd.f32 0.0, %v4342
      %v4344 = vpop.f32.mrb[0].mxu0
      %4345 = vmatprep.mubr.bf16.mxu0 0
      %4346 = vmatmul.mubr.bf16.gmra.mrb[0].mxu0 %v4256
      %v4347 = vpop.f32.mrb[0].mxu0
      %v4348 = vadd.f32 0.0, %v4347
      %v4349 = vpop.f32.mrb[0].mxu0
      %v4350 = vpop.f32.mrb[0].mxu0
      %v4351 = vadd.f32 0.0, %v4350
      %v4352 = vpop.f32.mrb[0].mxu0
      %4353 = vmatprep.mubr.bf16.mxu0 0
      %4354 = vmatmul.mubr.bf16.gmra.mrb[0].mxu0 %v4259
      %v4355 = vpop.f32.mrb[0].mxu0
      %v4356 = vadd.f32 0.0, %v4355
      %v4357 = vpop.f32.mrb[0].mxu0
      %v4358 = vpop.f32.mrb[0].mxu0
      %v4359 = vadd.f32 0.0, %v4358
      %v4360 = vpop.f32.mrb[0].mxu0
      %4361 = vmatprep.mubr.bf16.mxu0 0
      %4362 = vmatmul.mubr.bf16.gmra.mrb[0].mxu0 %v4262
      %v4363 = vpop.f32.mrb[0].mxu0
      %v4364 = vadd.f32 0.0, %v4363
      %v4365 = vpop.f32.mrb[0].mxu0
      %v4366 = vpop.f32.mrb[0].mxu0
      %v4367 = vadd.f32 0.0, %v4366
      %v4368 = vpop.f32.mrb[0].mxu0
      %4369 = vmatprep.mubr.bf16.mxu0 0
      %4370 = vmatmul.mubr.bf16.gmra.mrb[0].mxu0 %v4265
      %v4371 = vpop.f32.mrb[0].mxu0
      %v4372 = vadd.f32 0.0, %v4371
      %v4373 = vpop.f32.mrb[0].mxu0
      %v4374 = vpop.f32.mrb[0].mxu0
      %v4375 = vadd.f32 0.0, %v4374
      %v4376 = vpop.f32.mrb[0].mxu0
      %4377 = vmatprep.mubr.bf16.mxu0 0
      %4378 = vmatmul.mubr.bf16.gmra.mrb[0].mxu0 %v4268
      %v4379 = vpop.f32.mrb[0].mxu0
      %v4380 = vadd.f32 0.0, %v4379
      %v4381 = vpop.f32.mrb[0].mxu0
      %v4382 = vpop.f32.mrb[0].mxu0
      %v4383 = vadd.f32 0.0, %v4382
      %v4384 = vpop.f32.mrb[0].mxu0
      %4385 = vmatprep.mubr.bf16.mxu0 0
      %4386 = vmatmul.mubr.bf16.gmra.mrb[0].mxu0 %v4271
      %v4387 = vpop.f32.mrb[0].mxu0
      %v4388 = vadd.f32 0.0, %v4387
      %v4389 = vpop.f32.mrb[0].mxu0
      %v4390 = vpop.f32.mrb[0].mxu0
      %v4391 = vadd.f32 0.0, %v4390
      %v4392 = vpop.f32.mrb[0].mxu0
      %4393 = vmatprep.mubr.bf16.mxu0 0
      %4394 = vmatmul.mubr.bf16.gmra.mrb[0].mxu0 %v4274
      %v4395 = vpop.f32.mrb[0].mxu0
      %v4396 = vadd.f32 0.0, %v4395
      %v4397 = vpop.f32.mrb[0].mxu0
      %v4398 = vpop.f32.mrb[0].mxu0
      %v4399 = vadd.f32 0.0, %v4398
      %v4400 = vpop.f32.mrb[0].mxu0
      %4401 = vmatprep.mubr.bf16.mxu0 0
      %4402 = vmatmul.mubr.bf16.gmra.mrb[0].mxu0 %v4277
      %v4403 = vpop.f32.mrb[0].mxu0
      %v4404 = vadd.f32 0.0, %v4403
      %v4405 = vpop.f32.mrb[0].mxu0
      %v4406 = vpop.f32.mrb[0].mxu0
      %v4407 = vadd.f32 0.0, %v4406
      %v4408 = vpop.f32.mrb[0].mxu0
      %4409 = vmatprep.mubr.bf16.mxu0 0
      %4410 = vmatmul.mubr.bf16.gmra.mrb[0].mxu0 %v4280
      %v4411 = vpop.f32.mrb[0].mxu0
      %v4412 = vadd.f32 0.0, %v4411
      %v4413 = vpop.f32.mrb[0].mxu0
      %v4414 = vpop.f32.mrb[0].mxu0
      %v4415 = vadd.f32 0.0, %v4414
      %v4416 = vpop.f32.mrb[0].mxu0
      %4417 = vmatprep.mubr.bf16.mxu0 0
      %4418 = vmatmul.mubr.bf16.gmra.mrb[0].mxu0 %v4283
      %v4419 = vpop.f32.mrb[0].mxu0
      %v4420 = vadd.f32 0.0, %v4419
      %v4421 = vpop.f32.mrb[0].mxu0
      %v4422 = vpop.f32.mrb[0].mxu0
      %v4423 = vadd.f32 0.0, %v4422
      %v4424 = vpop.f32.mrb[0].mxu0
      %4425 = vmatprep.mubr.bf16.mxu0 0
      %4426 = vmatmul.mubr.bf16.gmra.mrb[0].mxu0 %v4286
      %v4427 = vpop.f32.mrb[0].mxu0
      %v4428 = vadd.f32 0.0, %v4427
      %v4429 = vpop.f32.mrb[0].mxu0
      %v4430 = vpop.f32.mrb[0].mxu0
      %v4431 = vadd.f32 0.0, %v4430
      %v4432 = vpop.f32.mrb[0].mxu0
      %4433 = vmatprep.mubr.bf16.mxu0 0
      %4434 = vmatmul.mubr.bf16.gmra.mrb[0].mxu0 %v4289
      %v4435 = vpop.f32.mrb[0].mxu0
      %v4436 = vadd.f32 0.0, %v4435
      %v4437 = vpop.f32.mrb[0].mxu0
      %v4438 = vpop.f32.mrb[0].mxu0
      %v4439 = vadd.f32 0.0, %v4438
      %v4440 = vpop.f32.mrb[0].mxu0
      %4441 = vmatprep.mubr.bf16.mxu0 0
      %4442 = vmatmul.mubr.bf16.gmra.mrb[0].mxu0 %v4292
      %v4443 = vpop.f32.mrb[0].mxu0
      %v4444 = vadd.f32 0.0, %v4443
      %v4445 = vpop.f32.mrb[0].mxu0
      %v4446 = vpop.f32.mrb[0].mxu0
      %v4447 = vadd.f32 0.0, %v4446
      %v4448 = vpop.f32.mrb[0].mxu0
      %4449 = vmatprep.mubr.bf16.mxu0 0
      %4450 = vmatmul.mubr.bf16.gmra.mrb[0].mxu0 %v4295
      %v4451 = vpop.f32.mrb[0].mxu0
      %v4452 = vadd.f32 0.0, %v4451
      %v4453 = vpop.f32.mrb[0].mxu0
      %v4454 = vpop.f32.mrb[0].mxu0
      %v4455 = vadd.f32 0.0, %v4454
      %v4456 = vpop.f32.mrb[0].mxu0
      %4457 = vdwg.mxu0
      %v4458 = vadd.f32 %v994, %v4332
      %v4459 = vadd.f32 %v995, %v4335
      %v4460 = vadd.f32 %v996, %v4340
      %v4461 = vadd.f32 %v997, %v4343
      %v4462 = vadd.f32 %v998, %v4348
      %v4463 = vadd.f32 %v999, %v4351
      %v4464 = vadd.f32 %v1000, %v4356
      %v4465 = vadd.f32 %v1001, %v4359
      %v4466 = vadd.f32 %v1002, %v4364
      %v4467 = vadd.f32 %v1003, %v4367
      %v4468 = vadd.f32 %v1004, %v4372
      %v4469 = vadd.f32 %v1005, %v4375
      %v4470 = vadd.f32 %v1006, %v4380
      %v4471 = vadd.f32 %v1007, %v4383
      %v4472 = vadd.f32 %v1008, %v4388
      %v4473 = vadd.f32 %v1009, %v4391
      %v4474 = vadd.f32 %v1010, %v4396
      %v4475 = vadd.f32 %v1011, %v4399
      %v4476 = vadd.f32 %v1012, %v4404
      %v4477 = vadd.f32 %v1013, %v4407
      %v4478 = vadd.f32 %v1014, %v4412
      %v4479 = vadd.f32 %v1015, %v4415
      %v4480 = vadd.f32 %v1016, %v4420
      %v4481 = vadd.f32 %v1017, %v4423
      %v4482 = vadd.f32 %v1018, %v4428
      %v4483 = vadd.f32 %v1019, %v4431
      %v4484 = vadd.f32 %v1020, %v4436
      %v4485 = vadd.f32 %v1021, %v4439
      %v4486 = vadd.f32 %v1022, %v4444
      %v4487 = vadd.f32 %v1023, %v4447
      %v4488 = vadd.f32 %v1024, %v4452
      %v4489 = vadd.f32 %v1025, %v4455
      %v4490 = vld [vmem:[%s9] sm:$0x1]
      %v4492 = vlaneseq
      %v4493 = vshrl.u32 %v4492, 7
      %v4494 = vsub.s32 0, %v4493
      %v4495 = vrot.slane %v4490, %v4494
      %v4497 = vadd.f32 %v4458, %v4495
      %v4498 = vadd.f32 %v4459, %v4495
      %v4499 = vadd.f32 %v4460, %v4495
      %v4500 = vadd.f32 %v4461, %v4495
      %v4501 = vadd.f32 %v4462, %v4495
      %v4502 = vadd.f32 %v4463, %v4495
      %v4503 = vadd.f32 %v4464, %v4495
      %v4504 = vadd.f32 %v4465, %v4495
      %v4505 = vadd.f32 %v4466, %v4495
      %v4506 = vadd.f32 %v4467, %v4495
      %v4507 = vadd.f32 %v4468, %v4495
      %v4508 = vadd.f32 %v4469, %v4495
      %v4509 = vadd.f32 %v4470, %v4495
      %v4510 = vadd.f32 %v4471, %v4495
      %v4511 = vadd.f32 %v4472, %v4495
      %v4512 = vadd.f32 %v4473, %v4495
      %v4513 = vadd.f32 %v4474, %v4495
      %v4514 = vadd.f32 %v4475, %v4495
      %v4515 = vadd.f32 %v4476, %v4495
      %v4516 = vadd.f32 %v4477, %v4495
      %v4517 = vadd.f32 %v4478, %v4495
      %v4518 = vadd.f32 %v4479, %v4495
      %v4519 = vadd.f32 %v4480, %v4495
      %v4520 = vadd.f32 %v4481, %v4495
      %v4521 = vadd.f32 %v4482, %v4495
      %v4522 = vadd.f32 %v4483, %v4495
      %v4523 = vadd.f32 %v4484, %v4495
      %v4524 = vadd.f32 %v4485, %v4495
      %v4525 = vadd.f32 %v4486, %v4495
      %v4526 = vadd.f32 %v4487, %v4495
      %v4527 = vadd.f32 %v4488, %v4495
      %v4528 = vadd.f32 %v4489, %v4495
      %v4529 = vsel %vm1026, %v4497, 0.0
      %4530 = vadd.xlane.f32.xlu0 %v4529
      %v4531 = vpop.xlane.xlu0 %4530
      %v4532 = vsel %vm1026, %v4498, 0.0
      %4533 = vadd.xlane.f32.xlu0 %v4532
      %v4534 = vpop.xlane.xlu0 %4533
      %v4535 = vsel %vm1026, %v4499, 0.0
      %4536 = vadd.xlane.f32.xlu0 %v4535
      %v4537 = vpop.xlane.xlu0 %4536
      %v4538 = vsel %vm1026, %v4500, 0.0
      %4539 = vadd.xlane.f32.xlu0 %v4538
      %v4540 = vpop.xlane.xlu0 %4539
      %v4541 = vsel %vm1026, %v4501, 0.0
      %4542 = vadd.xlane.f32.xlu0 %v4541
      %v4543 = vpop.xlane.xlu0 %4542
      %v4544 = vsel %vm1026, %v4502, 0.0
      %4545 = vadd.xlane.f32.xlu0 %v4544
      %v4546 = vpop.xlane.xlu0 %4545
      %v4547 = vsel %vm1026, %v4503, 0.0
      %4548 = vadd.xlane.f32.xlu0 %v4547
      %v4549 = vpop.xlane.xlu0 %4548
      %v4550 = vsel %vm1026, %v4504, 0.0
      %4551 = vadd.xlane.f32.xlu0 %v4550
      %v4552 = vpop.xlane.xlu0 %4551
      %v4553 = vsel %vm1026, %v4505, 0.0
      %4554 = vadd.xlane.f32.xlu0 %v4553
      %v4555 = vpop.xlane.xlu0 %4554
      %v4556 = vsel %vm1026, %v4506, 0.0
      %4557 = vadd.xlane.f32.xlu0 %v4556
      %v4558 = vpop.xlane.xlu0 %4557
      %v4559 = vsel %vm1026, %v4507, 0.0
      %4560 = vadd.xlane.f32.xlu0 %v4559
      %v4561 = vpop.xlane.xlu0 %4560
      %v4562 = vsel %vm1026, %v4508, 0.0
      %4563 = vadd.xlane.f32.xlu0 %v4562
      %v4564 = vpop.xlane.xlu0 %4563
      %v4565 = vsel %vm1026, %v4509, 0.0
      %4566 = vadd.xlane.f32.xlu0 %v4565
      %v4567 = vpop.xlane.xlu0 %4566
      %v4568 = vsel %vm1026, %v4510, 0.0
      %4569 = vadd.xlane.f32.xlu0 %v4568
      %v4570 = vpop.xlane.xlu0 %4569
      %v4571 = vsel %vm1026, %v4511, 0.0
      %4572 = vadd.xlane.f32.xlu0 %v4571
      %v4573 = vpop.xlane.xlu0 %4572
      %v4574 = vsel %vm1026, %v4512, 0.0
      %4575 = vadd.xlane.f32.xlu0 %v4574
      %v4576 = vpop.xlane.xlu0 %4575
      %v4577 = vsel %vm1026, %v4513, 0.0
      %4578 = vadd.xlane.f32.xlu0 %v4577
      %v4579 = vpop.xlane.xlu0 %4578
      %v4580 = vsel %vm1026, %v4514, 0.0
      %4581 = vadd.xlane.f32.xlu0 %v4580
      %v4582 = vpop.xlane.xlu0 %4581
      %v4583 = vsel %vm1026, %v4515, 0.0
      %4584 = vadd.xlane.f32.xlu0 %v4583
      %v4585 = vpop.xlane.xlu0 %4584
      %v4586 = vsel %vm1026, %v4516, 0.0
      %4587 = vadd.xlane.f32.xlu0 %v4586
      %v4588 = vpop.xlane.xlu0 %4587
      %v4589 = vsel %vm1026, %v4517, 0.0
      %4590 = vadd.xlane.f32.xlu0 %v4589
      %v4591 = vpop.xlane.xlu0 %4590
      %v4592 = vsel %vm1026, %v4518, 0.0
      %4593 = vadd.xlane.f32.xlu0 %v4592
      %v4594 = vpop.xlane.xlu0 %4593
      %v4595 = vsel %vm1026, %v4519, 0.0
      %4596 = vadd.xlane.f32.xlu0 %v4595
      %v4597 = vpop.xlane.xlu0 %4596
      %v4598 = vsel %vm1026, %v4520, 0.0
      %4599 = vadd.xlane.f32.xlu0 %v4598
      %v4600 = vpop.xlane.xlu0 %4599
      %v4601 = vsel %vm1026, %v4521, 0.0
      %4602 = vadd.xlane.f32.xlu0 %v4601
      %v4603 = vpop.xlane.xlu0 %4602
      %v4604 = vsel %vm1026, %v4522, 0.0
      %4605 = vadd.xlane.f32.xlu0 %v4604
      %v4606 = vpop.xlane.xlu0 %4605
      %v4607 = vsel %vm1026, %v4523, 0.0
      %4608 = vadd.xlane.f32.xlu0 %v4607
      %v4609 = vpop.xlane.xlu0 %4608
      %v4610 = vsel %vm1026, %v4524, 0.0
      %4611 = vadd.xlane.f32.xlu0 %v4610
      %v4612 = vpop.xlane.xlu0 %4611
      %v4613 = vsel %vm1026, %v4525, 0.0
      %4614 = vadd.xlane.f32.xlu0 %v4613
      %v4615 = vpop.xlane.xlu0 %4614
      %v4616 = vsel %vm1026, %v4526, 0.0
      %4617 = vadd.xlane.f32.xlu0 %v4616
      %v4618 = vpop.xlane.xlu0 %4617
      %v4619 = vsel %vm1026, %v4527, 0.0
      %4620 = vadd.xlane.f32.xlu0 %v4619
      %v4621 = vpop.xlane.xlu0 %4620
      %v4622 = vsel %vm1026, %v4528, 0.0
      %4623 = vadd.xlane.f32.xlu0 %v4622
      %v4624 = vpop.xlane.xlu0 %4623
      %v4625 = vmul.f32 %v4531, %v1123
      %v4626 = vmul.f32 %v4534, %v1123
      %v4627 = vmul.f32 %v4537, %v1123
      %v4628 = vmul.f32 %v4540, %v1123
      %v4629 = vmul.f32 %v4543, %v1123
      %v4630 = vmul.f32 %v4546, %v1123
      %v4631 = vmul.f32 %v4549, %v1123
      %v4632 = vmul.f32 %v4552, %v1123
      %v4633 = vmul.f32 %v4555, %v1123
      %v4634 = vmul.f32 %v4558, %v1123
      %v4635 = vmul.f32 %v4561, %v1123
      %v4636 = vmul.f32 %v4564, %v1123
      %v4637 = vmul.f32 %v4567, %v1123
      %v4638 = vmul.f32 %v4570, %v1123
      %v4639 = vmul.f32 %v4573, %v1123
      %v4640 = vmul.f32 %v4576, %v1123
      %v4641 = vmul.f32 %v4579, %v1123
      %v4642 = vmul.f32 %v4582, %v1123
      %v4643 = vmul.f32 %v4585, %v1123
      %v4644 = vmul.f32 %v4588, %v1123
      %v4645 = vmul.f32 %v4591, %v1123
      %v4646 = vmul.f32 %v4594, %v1123
      %v4647 = vmul.f32 %v4597, %v1123
      %v4648 = vmul.f32 %v4600, %v1123
      %v4649 = vmul.f32 %v4603, %v1123
      %v4650 = vmul.f32 %v4606, %v1123
      %v4651 = vmul.f32 %v4609, %v1123
      %v4652 = vmul.f32 %v4612, %v1123
      %v4653 = vmul.f32 %v4615, %v1123
      %v4654 = vmul.f32 %v4618, %v1123
      %v4655 = vmul.f32 %v4621, %v1123
      %v4656 = vmul.f32 %v4624, %v1123
      %v4657 = vsub.f32 %v4497, %v4625
      %v4658 = vsub.f32 %v4498, %v4626
      %v4659 = vsub.f32 %v4499, %v4627
      %v4660 = vsub.f32 %v4500, %v4628
      %v4661 = vsub.f32 %v4501, %v4629
      %v4662 = vsub.f32 %v4502, %v4630
      %v4663 = vsub.f32 %v4503, %v4631
      %v4664 = vsub.f32 %v4504, %v4632
      %v4665 = vsub.f32 %v4505, %v4633
      %v4666 = vsub.f32 %v4506, %v4634
      %v4667 = vsub.f32 %v4507, %v4635
      %v4668 = vsub.f32 %v4508, %v4636
      %v4669 = vsub.f32 %v4509, %v4637
      %v4670 = vsub.f32 %v4510, %v4638
      %v4671 = vsub.f32 %v4511, %v4639
      %v4672 = vsub.f32 %v4512, %v4640
      %v4673 = vsub.f32 %v4513, %v4641
      %v4674 = vsub.f32 %v4514, %v4642
      %v4675 = vsub.f32 %v4515, %v4643
      %v4676 = vsub.f32 %v4516, %v4644
      %v4677 = vsub.f32 %v4517, %v4645
      %v4678 = vsub.f32 %v4518, %v4646
      %v4679 = vsub.f32 %v4519, %v4647
      %v4680 = vsub.f32 %v4520, %v4648
      %v4681 = vsub.f32 %v4521, %v4649
      %v4682 = vsub.f32 %v4522, %v4650
      %v4683 = vsub.f32 %v4523, %v4651
      %v4684 = vsub.f32 %v4524, %v4652
      %v4685 = vsub.f32 %v4525, %v4653
      %v4686 = vsub.f32 %v4526, %v4654
      %v4687 = vsub.f32 %v4527, %v4655
      %v4688 = vsub.f32 %v4528, %v4656
      %v4689 = vmul.f32 %v4657, %v4657
      %v4690 = vmul.f32 %v4658, %v4658
      %v4691 = vmul.f32 %v4659, %v4659
      %v4692 = vmul.f32 %v4660, %v4660
      %v4693 = vmul.f32 %v4661, %v4661
      %v4694 = vmul.f32 %v4662, %v4662
      %v4695 = vmul.f32 %v4663, %v4663
      %v4696 = vmul.f32 %v4664, %v4664
      %v4697 = vmul.f32 %v4665, %v4665
      %v4698 = vmul.f32 %v4666, %v4666
      %v4699 = vmul.f32 %v4667, %v4667
      %v4700 = vmul.f32 %v4668, %v4668
      %v4701 = vmul.f32 %v4669, %v4669
      %v4702 = vmul.f32 %v4670, %v4670
      %v4703 = vmul.f32 %v4671, %v4671
      %v4704 = vmul.f32 %v4672, %v4672
      %v4705 = vmul.f32 %v4673, %v4673
      %v4706 = vmul.f32 %v4674, %v4674
      %v4707 = vmul.f32 %v4675, %v4675
      %v4708 = vmul.f32 %v4676, %v4676
      %v4709 = vmul.f32 %v4677, %v4677
      %v4710 = vmul.f32 %v4678, %v4678
      %v4711 = vmul.f32 %v4679, %v4679
      %v4712 = vmul.f32 %v4680, %v4680
      %v4713 = vmul.f32 %v4681, %v4681
      %v4714 = vmul.f32 %v4682, %v4682
      %v4715 = vmul.f32 %v4683, %v4683
      %v4716 = vmul.f32 %v4684, %v4684
      %v4717 = vmul.f32 %v4685, %v4685
      %v4718 = vmul.f32 %v4686, %v4686
      %v4719 = vmul.f32 %v4687, %v4687
      %v4720 = vmul.f32 %v4688, %v4688
      %v4721 = vsel %vm1026, %v4689, 0.0
      %4722 = vadd.xlane.f32.xlu0 %v4721
      %v4723 = vpop.xlane.xlu0 %4722
      %v4724 = vsel %vm1026, %v4690, 0.0
      %4725 = vadd.xlane.f32.xlu0 %v4724
      %v4726 = vpop.xlane.xlu0 %4725
      %v4727 = vsel %vm1026, %v4691, 0.0
      %4728 = vadd.xlane.f32.xlu0 %v4727
      %v4729 = vpop.xlane.xlu0 %4728
      %v4730 = vsel %vm1026, %v4692, 0.0
      %4731 = vadd.xlane.f32.xlu0 %v4730
      %v4732 = vpop.xlane.xlu0 %4731
      %v4733 = vsel %vm1026, %v4693, 0.0
      %4734 = vadd.xlane.f32.xlu0 %v4733
      %v4735 = vpop.xlane.xlu0 %4734
      %v4736 = vsel %vm1026, %v4694, 0.0
      %4737 = vadd.xlane.f32.xlu0 %v4736
      %v4738 = vpop.xlane.xlu0 %4737
      %v4739 = vsel %vm1026, %v4695, 0.0
      %4740 = vadd.xlane.f32.xlu0 %v4739
      %v4741 = vpop.xlane.xlu0 %4740
      %v4742 = vsel %vm1026, %v4696, 0.0
      %4743 = vadd.xlane.f32.xlu0 %v4742
      %v4744 = vpop.xlane.xlu0 %4743
      %v4745 = vsel %vm1026, %v4697, 0.0
      %4746 = vadd.xlane.f32.xlu0 %v4745
      %v4747 = vpop.xlane.xlu0 %4746
      %v4748 = vsel %vm1026, %v4698, 0.0
      %4749 = vadd.xlane.f32.xlu0 %v4748
      %v4750 = vpop.xlane.xlu0 %4749
      %v4751 = vsel %vm1026, %v4699, 0.0
      %4752 = vadd.xlane.f32.xlu0 %v4751
      %v4753 = vpop.xlane.xlu0 %4752
      %v4754 = vsel %vm1026, %v4700, 0.0
      %4755 = vadd.xlane.f32.xlu0 %v4754
      %v4756 = vpop.xlane.xlu0 %4755
      %v4757 = vsel %vm1026, %v4701, 0.0
      %4758 = vadd.xlane.f32.xlu0 %v4757
      %v4759 = vpop.xlane.xlu0 %4758
      %v4760 = vsel %vm1026, %v4702, 0.0
      %4761 = vadd.xlane.f32.xlu0 %v4760
      %v4762 = vpop.xlane.xlu0 %4761
      %v4763 = vsel %vm1026, %v4703, 0.0
      %4764 = vadd.xlane.f32.xlu0 %v4763
      %v4765 = vpop.xlane.xlu0 %4764
      %v4766 = vsel %vm1026, %v4704, 0.0
      %4767 = vadd.xlane.f32.xlu0 %v4766
      %v4768 = vpop.xlane.xlu0 %4767
      %v4769 = vsel %vm1026, %v4705, 0.0
      %4770 = vadd.xlane.f32.xlu0 %v4769
      %v4771 = vpop.xlane.xlu0 %4770
      %v4772 = vsel %vm1026, %v4706, 0.0
      %4773 = vadd.xlane.f32.xlu0 %v4772
      %v4774 = vpop.xlane.xlu0 %4773
      %v4775 = vsel %vm1026, %v4707, 0.0
      %4776 = vadd.xlane.f32.xlu0 %v4775
      %v4777 = vpop.xlane.xlu0 %4776
      %v4778 = vsel %vm1026, %v4708, 0.0
      %4779 = vadd.xlane.f32.xlu0 %v4778
      %v4780 = vpop.xlane.xlu0 %4779
      %v4781 = vsel %vm1026, %v4709, 0.0
      %4782 = vadd.xlane.f32.xlu0 %v4781
      %v4783 = vpop.xlane.xlu0 %4782
      %v4784 = vsel %vm1026, %v4710, 0.0
      %4785 = vadd.xlane.f32.xlu0 %v4784
      %v4786 = vpop.xlane.xlu0 %4785
      %v4787 = vsel %vm1026, %v4711, 0.0
      %4788 = vadd.xlane.f32.xlu0 %v4787
      %v4789 = vpop.xlane.xlu0 %4788
      %v4790 = vsel %vm1026, %v4712, 0.0
      %4791 = vadd.xlane.f32.xlu0 %v4790
      %v4792 = vpop.xlane.xlu0 %4791
      %v4793 = vsel %vm1026, %v4713, 0.0
      %4794 = vadd.xlane.f32.xlu0 %v4793
      %v4795 = vpop.xlane.xlu0 %4794
      %v4796 = vsel %vm1026, %v4714, 0.0
      %4797 = vadd.xlane.f32.xlu0 %v4796
      %v4798 = vpop.xlane.xlu0 %4797
      %v4799 = vsel %vm1026, %v4715, 0.0
      %4800 = vadd.xlane.f32.xlu0 %v4799
      %v4801 = vpop.xlane.xlu0 %4800
      %v4802 = vsel %vm1026, %v4716, 0.0
      %4803 = vadd.xlane.f32.xlu0 %v4802
      %v4804 = vpop.xlane.xlu0 %4803
      %v4805 = vsel %vm1026, %v4717, 0.0
      %4806 = vadd.xlane.f32.xlu0 %v4805
      %v4807 = vpop.xlane.xlu0 %4806
      %v4808 = vsel %vm1026, %v4718, 0.0
      %4809 = vadd.xlane.f32.xlu0 %v4808
      %v4810 = vpop.xlane.xlu0 %4809
      %v4811 = vsel %vm1026, %v4719, 0.0
      %4812 = vadd.xlane.f32.xlu0 %v4811
      %v4813 = vpop.xlane.xlu0 %4812
      %v4814 = vsel %vm1026, %v4720, 0.0
      %4815 = vadd.xlane.f32.xlu0 %v4814
      %v4816 = vpop.xlane.xlu0 %4815
      %v4817 = vmul.f32 %v4723, %v1123
      %v4818 = vmul.f32 %v4726, %v1123
      %v4819 = vmul.f32 %v4729, %v1123
      %v4820 = vmul.f32 %v4732, %v1123
      %v4821 = vmul.f32 %v4735, %v1123
      %v4822 = vmul.f32 %v4738, %v1123
      %v4823 = vmul.f32 %v4741, %v1123
      %v4824 = vmul.f32 %v4744, %v1123
      %v4825 = vmul.f32 %v4747, %v1123
      %v4826 = vmul.f32 %v4750, %v1123
      %v4827 = vmul.f32 %v4753, %v1123
      %v4828 = vmul.f32 %v4756, %v1123
      %v4829 = vmul.f32 %v4759, %v1123
      %v4830 = vmul.f32 %v4762, %v1123
      %v4831 = vmul.f32 %v4765, %v1123
      %v4832 = vmul.f32 %v4768, %v1123
      %v4833 = vmul.f32 %v4771, %v1123
      %v4834 = vmul.f32 %v4774, %v1123
      %v4835 = vmul.f32 %v4777, %v1123
      %v4836 = vmul.f32 %v4780, %v1123
      %v4837 = vmul.f32 %v4783, %v1123
      %v4838 = vmul.f32 %v4786, %v1123
      %v4839 = vmul.f32 %v4789, %v1123
      %v4840 = vmul.f32 %v4792, %v1123
      %v4841 = vmul.f32 %v4795, %v1123
      %v4842 = vmul.f32 %v4798, %v1123
      %v4843 = vmul.f32 %v4801, %v1123
      %v4844 = vmul.f32 %v4804, %v1123
      %v4845 = vmul.f32 %v4807, %v1123
      %v4846 = vmul.f32 %v4810, %v1123
      %v4847 = vmul.f32 %v4813, %v1123
      %v4848 = vmul.f32 %v4816, %v1123
      %v4849 = vadd.f32 %v4817, 1e-05
      %v4850 = vadd.f32 %v4818, 1e-05
      %v4851 = vadd.f32 %v4819, 1e-05
      %v4852 = vadd.f32 %v4820, 1e-05
      %v4853 = vadd.f32 %v4821, 1e-05
      %v4854 = vadd.f32 %v4822, 1e-05
      %v4855 = vadd.f32 %v4823, 1e-05
      %v4856 = vadd.f32 %v4824, 1e-05
      %v4857 = vadd.f32 %v4825, 1e-05
      %v4858 = vadd.f32 %v4826, 1e-05
      %v4859 = vadd.f32 %v4827, 1e-05
      %v4860 = vadd.f32 %v4828, 1e-05
      %v4861 = vadd.f32 %v4829, 1e-05
      %v4862 = vadd.f32 %v4830, 1e-05
      %v4863 = vadd.f32 %v4831, 1e-05
      %v4864 = vadd.f32 %v4832, 1e-05
      %v4865 = vadd.f32 %v4833, 1e-05
      %v4866 = vadd.f32 %v4834, 1e-05
      %v4867 = vadd.f32 %v4835, 1e-05
      %v4868 = vadd.f32 %v4836, 1e-05
      %v4869 = vadd.f32 %v4837, 1e-05
      %v4870 = vadd.f32 %v4838, 1e-05
      %v4871 = vadd.f32 %v4839, 1e-05
      %v4872 = vadd.f32 %v4840, 1e-05
      %v4873 = vadd.f32 %v4841, 1e-05
      %v4874 = vadd.f32 %v4842, 1e-05
      %v4875 = vadd.f32 %v4843, 1e-05
      %v4876 = vadd.f32 %v4844, 1e-05
      %v4877 = vadd.f32 %v4845, 1e-05
      %v4878 = vadd.f32 %v4846, 1e-05
      %v4879 = vadd.f32 %v4847, 1e-05
      %v4880 = vadd.f32 %v4848, 1e-05
      %v4881 = vrsqrt.pop %v4849
      %v4882 = vrsqrt.pop %v4850
      %v4883 = vrsqrt.pop %v4851
      %v4884 = vrsqrt.pop %v4852
      %v4885 = vrsqrt.pop %v4853
      %v4886 = vrsqrt.pop %v4854
      %v4887 = vrsqrt.pop %v4855
      %v4888 = vrsqrt.pop %v4856
      %v4889 = vrsqrt.pop %v4857
      %v4890 = vrsqrt.pop %v4858
      %v4891 = vrsqrt.pop %v4859
      %v4892 = vrsqrt.pop %v4860
      %v4893 = vrsqrt.pop %v4861
      %v4894 = vrsqrt.pop %v4862
      %v4895 = vrsqrt.pop %v4863
      %v4896 = vrsqrt.pop %v4864
      %v4897 = vrsqrt.pop %v4865
      %v4898 = vrsqrt.pop %v4866
      %v4899 = vrsqrt.pop %v4867
      %v4900 = vrsqrt.pop %v4868
      %v4901 = vrsqrt.pop %v4869
      %v4902 = vrsqrt.pop %v4870
      %v4903 = vrsqrt.pop %v4871
      %v4904 = vrsqrt.pop %v4872
      %v4905 = vrsqrt.pop %v4873
      %v4906 = vrsqrt.pop %v4874
      %v4907 = vrsqrt.pop %v4875
      %v4908 = vrsqrt.pop %v4876
      %v4909 = vrsqrt.pop %v4877
      %v4910 = vrsqrt.pop %v4878
      %v4911 = vrsqrt.pop %v4879
      %v4912 = vrsqrt.pop %v4880
      %v4913 = vmul.f32 %v4657, %v4881
      %v4914 = vmul.f32 %v4658, %v4882
      %v4915 = vmul.f32 %v4659, %v4883
      %v4916 = vmul.f32 %v4660, %v4884
      %v4917 = vmul.f32 %v4661, %v4885
      %v4918 = vmul.f32 %v4662, %v4886
      %v4919 = vmul.f32 %v4663, %v4887
      %v4920 = vmul.f32 %v4664, %v4888
      %v4921 = vmul.f32 %v4665, %v4889
      %v4922 = vmul.f32 %v4666, %v4890
      %v4923 = vmul.f32 %v4667, %v4891
      %v4924 = vmul.f32 %v4668, %v4892
      %v4925 = vmul.f32 %v4669, %v4893
      %v4926 = vmul.f32 %v4670, %v4894
      %v4927 = vmul.f32 %v4671, %v4895
      %v4928 = vmul.f32 %v4672, %v4896
      %v4929 = vmul.f32 %v4673, %v4897
      %v4930 = vmul.f32 %v4674, %v4898
      %v4931 = vmul.f32 %v4675, %v4899
      %v4932 = vmul.f32 %v4676, %v4900
      %v4933 = vmul.f32 %v4677, %v4901
      %v4934 = vmul.f32 %v4678, %v4902
      %v4935 = vmul.f32 %v4679, %v4903
      %v4936 = vmul.f32 %v4680, %v4904
      %v4937 = vmul.f32 %v4681, %v4905
      %v4938 = vmul.f32 %v4682, %v4906
      %v4939 = vmul.f32 %v4683, %v4907
      %v4940 = vmul.f32 %v4684, %v4908
      %v4941 = vmul.f32 %v4685, %v4909
      %v4942 = vmul.f32 %v4686, %v4910
      %v4943 = vmul.f32 %v4687, %v4911
      %v4944 = vmul.f32 %v4688, %v4912
      %v4945 = vld [vmem:[%s10] sm:$0x1]
      %v4947 = vlaneseq
      %v4948 = vshrl.u32 %v4947, 7
      %v4949 = vsub.s32 0, %v4948
      %v4950 = vrot.slane %v4945, %v4949
      %v4952 = vmul.f32 %v4913, %v4950
      %v4953 = vmul.f32 %v4914, %v4950
      %v4954 = vmul.f32 %v4915, %v4950
      %v4955 = vmul.f32 %v4916, %v4950
      %v4956 = vmul.f32 %v4917, %v4950
      %v4957 = vmul.f32 %v4918, %v4950
      %v4958 = vmul.f32 %v4919, %v4950
      %v4959 = vmul.f32 %v4920, %v4950
      %v4960 = vmul.f32 %v4921, %v4950
      %v4961 = vmul.f32 %v4922, %v4950
      %v4962 = vmul.f32 %v4923, %v4950
      %v4963 = vmul.f32 %v4924, %v4950
      %v4964 = vmul.f32 %v4925, %v4950
      %v4965 = vmul.f32 %v4926, %v4950
      %v4966 = vmul.f32 %v4927, %v4950
      %v4967 = vmul.f32 %v4928, %v4950
      %v4968 = vmul.f32 %v4929, %v4950
      %v4969 = vmul.f32 %v4930, %v4950
      %v4970 = vmul.f32 %v4931, %v4950
      %v4971 = vmul.f32 %v4932, %v4950
      %v4972 = vmul.f32 %v4933, %v4950
      %v4973 = vmul.f32 %v4934, %v4950
      %v4974 = vmul.f32 %v4935, %v4950
      %v4975 = vmul.f32 %v4936, %v4950
      %v4976 = vmul.f32 %v4937, %v4950
      %v4977 = vmul.f32 %v4938, %v4950
      %v4978 = vmul.f32 %v4939, %v4950
      %v4979 = vmul.f32 %v4940, %v4950
      %v4980 = vmul.f32 %v4941, %v4950
      %v4981 = vmul.f32 %v4942, %v4950
      %v4982 = vmul.f32 %v4943, %v4950
      %v4983 = vmul.f32 %v4944, %v4950
      %v4984 = vld [vmem:[%s11] sm:$0x1]
      %v4986 = vlaneseq
      %v4987 = vshrl.u32 %v4986, 7
      %v4988 = vsub.s32 0, %v4987
      %v4989 = vrot.slane %v4984, %v4988
      %v4991 = vadd.f32 %v4952, %v4989
      %v4992 = vadd.f32 %v4953, %v4989
      %v4993 = vadd.f32 %v4954, %v4989
      %v4994 = vadd.f32 %v4955, %v4989
      %v4995 = vadd.f32 %v4956, %v4989
      %v4996 = vadd.f32 %v4957, %v4989
      %v4997 = vadd.f32 %v4958, %v4989
      %v4998 = vadd.f32 %v4959, %v4989
      %v4999 = vadd.f32 %v4960, %v4989
      %v5000 = vadd.f32 %v4961, %v4989
      %v5001 = vadd.f32 %v4962, %v4989
      %v5002 = vadd.f32 %v4963, %v4989
      %v5003 = vadd.f32 %v4964, %v4989
      %v5004 = vadd.f32 %v4965, %v4989
      %v5005 = vadd.f32 %v4966, %v4989
      %v5006 = vadd.f32 %v4967, %v4989
      %v5007 = vadd.f32 %v4968, %v4989
      %v5008 = vadd.f32 %v4969, %v4989
      %v5009 = vadd.f32 %v4970, %v4989
      %v5010 = vadd.f32 %v4971, %v4989
      %v5011 = vadd.f32 %v4972, %v4989
      %v5012 = vadd.f32 %v4973, %v4989
      %v5013 = vadd.f32 %v4974, %v4989
      %v5014 = vadd.f32 %v4975, %v4989
      %v5015 = vadd.f32 %v4976, %v4989
      %v5016 = vadd.f32 %v4977, %v4989
      %v5017 = vadd.f32 %v4978, %v4989
      %v5018 = vadd.f32 %v4979, %v4989
      %v5019 = vadd.f32 %v4980, %v4989
      %v5020 = vadd.f32 %v4981, %v4989
      %v5021 = vadd.f32 %v4982, %v4989
      %v5022 = vadd.f32 %v4983, %v4989
      %v5023 = vld [vmem:[%s12] sm:$0xff]
      %v5024 = vld [vmem:[%s12 + $0x8] sm:$0xff]
      %v5025 = vld [vmem:[%s12 + $0x10] sm:$0xff]
      %v5026 = vld [vmem:[%s12 + $0x18] sm:$0xff]
      %v5027 = vpack.c.bf16 %v4992, %v4991
      %v5028 = vpack.c.bf16 %v4994, %v4993
      %v5029 = vpack.c.bf16 %v4996, %v4995
      %v5030 = vpack.c.bf16 %v4998, %v4997
      %v5031 = vpack.c.bf16 %v5000, %v4999
      %v5032 = vpack.c.bf16 %v5002, %v5001
      %v5033 = vpack.c.bf16 %v5004, %v5003
      %v5034 = vpack.c.bf16 %v5006, %v5005
      %v5035 = vpack.c.bf16 %v5008, %v5007
      %v5036 = vpack.c.bf16 %v5010, %v5009
      %v5037 = vpack.c.bf16 %v5012, %v5011
      %v5038 = vpack.c.bf16 %v5014, %v5013
      %v5039 = vpack.c.bf16 %v5016, %v5015
      %v5040 = vpack.c.bf16 %v5018, %v5017
      %v5041 = vpack.c.bf16 %v5020, %v5019
      %v5042 = vpack.c.bf16 %v5022, %v5021
      %v5043 = vpack.c.bf16 %v5024, %v5023
      %v5044 = vpack.c.bf16 %v5026, %v5025
      %v5045 = vld [vmem:[%s13] sm:$0x1]
      %v5047 = vlaneseq
      %v5048 = vshrl.u32 %v5047, 7
      %v5049 = vsub.s32 0, %v5048
      %v5050 = vrot.slane %v5045, %v5049
      %v5053 = vsel %vm1026, %v5027, 0
      %v5056 = vsel %vm1026, %v5028, 0
      %v5059 = vsel %vm1026, %v5029, 0
      %v5062 = vsel %vm1026, %v5030, 0
      %v5065 = vsel %vm1026, %v5031, 0
      %v5068 = vsel %vm1026, %v5032, 0
      %v5071 = vsel %vm1026, %v5033, 0
      %v5074 = vsel %vm1026, %v5034, 0
      %v5077 = vsel %vm1026, %v5035, 0
      %v5080 = vsel %vm1026, %v5036, 0
      %v5083 = vsel %vm1026, %v5037, 0
      %v5086 = vsel %vm1026, %v5038, 0
      %v5089 = vsel %vm1026, %v5039, 0
      %v5092 = vsel %vm1026, %v5040, 0
      %v5095 = vsel %vm1026, %v5041, 0
      %v5098 = vsel %vm1026, %v5042, 0
      %5100 = vmatprep.subr.bf16.mxu0 0
      %5101 = vmatpush1.bf16.msra.mxu0 %v5043
      %5102 = vmatprep.subr.bf16.mxu0 0
      %5103 = vmatpush1.bf16.msra.mxu0 %v5044
      %5104 = vmatprep.subr.bf16.mxu0 0
      %5105 = vmatpush1.bf16.msra.mxu0 0
      %5106 = vmatprep.subr.bf16.mxu0 0
      %5107 = vmatpush1.bf16.msra.mxu0 0
      %5108 = vmatprep.subr.bf16.mxu0 0
      %5109 = vmatpush1.bf16.msra.mxu0 0
      %5110 = vmatprep.subr.bf16.mxu0 0
      %5111 = vmatpush1.bf16.msra.mxu0 0
      %5112 = vmatprep.subr.bf16.mxu0 0
      %5113 = vmatpush1.bf16.msra.mxu0 0
      %5114 = vmatprep.subr.bf16.mxu0 0
      %5115 = vmatpush1.bf16.msra.mxu0 0
      %5116 = vmatprep.subr.bf16.mxu0 0
      %5117 = vmatpush1.bf16.msra.mxu0 0
      %5118 = vmatprep.subr.bf16.mxu0 0
      %5119 = vmatpush1.bf16.msra.mxu0 0
      %5120 = vmatprep.subr.bf16.mxu0 0
      %5121 = vmatpush1.bf16.msra.mxu0 0
      %5122 = vmatprep.subr.bf16.mxu0 0
      %5123 = vmatpush1.bf16.msra.mxu0 0
      %5124 = vmatprep.subr.bf16.mxu0 0
      %5125 = vmatpush1.bf16.msra.mxu0 0
      %5126 = vmatprep.subr.bf16.mxu0 0
      %5127 = vmatpush1.bf16.msra.mxu0 0
      %5128 = vmatprep.subr.bf16.mxu0 0
      %5129 = vmatpush1.bf16.msra.mxu0 0
      %5130 = vmatprep.subr.bf16.mxu0 0
      %5131 = vmatpush1.bf16.msra.mxu0 0
      %5132 = vmatprep.mubr.bf16.mxu0 0
      %5133 = vmatmul.mubr.bf16.gmra.mrb[0].mxu0 %v5053
      %v5134 = vpop.f32.mrb[0].mxu0
      %v5135 = vadd.f32 %v5050, %v5134
      %v5136 = vpop.f32.mrb[0].mxu0
      %v5137 = vpop.f32.mrb[0].mxu0
      %v5138 = vadd.f32 %v5050, %v5137
      %v5139 = vpop.f32.mrb[0].mxu0
      %5140 = vmatprep.mubr.bf16.mxu0 0
      %5141 = vmatmul.mubr.bf16.gmra.mrb[0].mxu0 %v5056
      %v5142 = vpop.f32.mrb[0].mxu0
      %v5143 = vadd.f32 %v5050, %v5142
      %v5144 = vpop.f32.mrb[0].mxu0
      %v5145 = vpop.f32.mrb[0].mxu0
      %v5146 = vadd.f32 %v5050, %v5145
      %v5147 = vpop.f32.mrb[0].mxu0
      %5148 = vmatprep.mubr.bf16.mxu0 0
      %5149 = vmatmul.mubr.bf16.gmra.mrb[0].mxu0 %v5059
      %v5150 = vpop.f32.mrb[0].mxu0
      %v5151 = vadd.f32 %v5050, %v5150
      %v5152 = vpop.f32.mrb[0].mxu0
      %v5153 = vpop.f32.mrb[0].mxu0
      %v5154 = vadd.f32 %v5050, %v5153
      %v5155 = vpop.f32.mrb[0].mxu0
      %5156 = vmatprep.mubr.bf16.mxu0 0
      %5157 = vmatmul.mubr.bf16.gmra.mrb[0].mxu0 %v5062
      %v5158 = vpop.f32.mrb[0].mxu0
      %v5159 = vadd.f32 %v5050, %v5158
      %v5160 = vpop.f32.mrb[0].mxu0
      %v5161 = vpop.f32.mrb[0].mxu0
      %v5162 = vadd.f32 %v5050, %v5161
      %v5163 = vpop.f32.mrb[0].mxu0
      %5164 = vmatprep.mubr.bf16.mxu0 0
      %5165 = vmatmul.mubr.bf16.gmra.mrb[0].mxu0 %v5065
      %v5166 = vpop.f32.mrb[0].mxu0
      %v5167 = vadd.f32 %v5050, %v5166
      %v5168 = vpop.f32.mrb[0].mxu0
      %v5169 = vpop.f32.mrb[0].mxu0
      %v5170 = vadd.f32 %v5050, %v5169
      %v5171 = vpop.f32.mrb[0].mxu0
      %5172 = vmatprep.mubr.bf16.mxu0 0
      %5173 = vmatmul.mubr.bf16.gmra.mrb[0].mxu0 %v5068
      %v5174 = vpop.f32.mrb[0].mxu0
      %v5175 = vadd.f32 %v5050, %v5174
      %v5176 = vpop.f32.mrb[0].mxu0
      %v5177 = vpop.f32.mrb[0].mxu0
      %v5178 = vadd.f32 %v5050, %v5177
      %v5179 = vpop.f32.mrb[0].mxu0
      %5180 = vmatprep.mubr.bf16.mxu0 0
      %5181 = vmatmul.mubr.bf16.gmra.mrb[0].mxu0 %v5071
      %v5182 = vpop.f32.mrb[0].mxu0
      %v5183 = vadd.f32 %v5050, %v5182
      %v5184 = vpop.f32.mrb[0].mxu0
      %v5185 = vpop.f32.mrb[0].mxu0
      %v5186 = vadd.f32 %v5050, %v5185
      %v5187 = vpop.f32.mrb[0].mxu0
      %5188 = vmatprep.mubr.bf16.mxu0 0
      %5189 = vmatmul.mubr.bf16.gmra.mrb[0].mxu0 %v5074
      %v5190 = vpop.f32.mrb[0].mxu0
      %v5191 = vadd.f32 %v5050, %v5190
      %v5192 = vpop.f32.mrb[0].mxu0
      %v5193 = vpop.f32.mrb[0].mxu0
      %v5194 = vadd.f32 %v5050, %v5193
      %v5195 = vpop.f32.mrb[0].mxu0
      %5196 = vmatprep.mubr.bf16.mxu0 0
      %5197 = vmatmul.mubr.bf16.gmra.mrb[0].mxu0 %v5077
      %v5198 = vpop.f32.mrb[0].mxu0
      %v5199 = vadd.f32 %v5050, %v5198
      %v5200 = vpop.f32.mrb[0].mxu0
      %v5201 = vpop.f32.mrb[0].mxu0
      %v5202 = vadd.f32 %v5050, %v5201
      %v5203 = vpop.f32.mrb[0].mxu0
      %5204 = vmatprep.mubr.bf16.mxu0 0
      %5205 = vmatmul.mubr.bf16.gmra.mrb[0].mxu0 %v5080
      %v5206 = vpop.f32.mrb[0].mxu0
      %v5207 = vadd.f32 %v5050, %v5206
      %v5208 = vpop.f32.mrb[0].mxu0
      %v5209 = vpop.f32.mrb[0].mxu0
      %v5210 = vadd.f32 %v5050, %v5209
      %v5211 = vpop.f32.mrb[0].mxu0
      %5212 = vmatprep.mubr.bf16.mxu0 0
      %5213 = vmatmul.mubr.bf16.gmra.mrb[0].mxu0 %v5083
      %v5214 = vpop.f32.mrb[0].mxu0
      %v5215 = vadd.f32 %v5050, %v5214
      %v5216 = vpop.f32.mrb[0].mxu0
      %v5217 = vpop.f32.mrb[0].mxu0
      %v5218 = vadd.f32 %v5050, %v5217
      %v5219 = vpop.f32.mrb[0].mxu0
      %5220 = vmatprep.mubr.bf16.mxu0 0
      %5221 = vmatmul.mubr.bf16.gmra.mrb[0].mxu0 %v5086
      %v5222 = vpop.f32.mrb[0].mxu0
      %v5223 = vadd.f32 %v5050, %v5222
      %v5224 = vpop.f32.mrb[0].mxu0
      %v5225 = vpop.f32.mrb[0].mxu0
      %v5226 = vadd.f32 %v5050, %v5225
      %v5227 = vpop.f32.mrb[0].mxu0
      %5228 = vmatprep.mubr.bf16.mxu0 0
      %5229 = vmatmul.mubr.bf16.gmra.mrb[0].mxu0 %v5089
      %v5230 = vpop.f32.mrb[0].mxu0
      %v5231 = vadd.f32 %v5050, %v5230
      %v5232 = vpop.f32.mrb[0].mxu0
      %v5233 = vpop.f32.mrb[0].mxu0
      %v5234 = vadd.f32 %v5050, %v5233
      %v5235 = vpop.f32.mrb[0].mxu0
      %5236 = vmatprep.mubr.bf16.mxu0 0
      %5237 = vmatmul.mubr.bf16.gmra.mrb[0].mxu0 %v5092
      %v5238 = vpop.f32.mrb[0].mxu0
      %v5239 = vadd.f32 %v5050, %v5238
      %v5240 = vpop.f32.mrb[0].mxu0
      %v5241 = vpop.f32.mrb[0].mxu0
      %v5242 = vadd.f32 %v5050, %v5241
      %v5243 = vpop.f32.mrb[0].mxu0
      %5244 = vmatprep.mubr.bf16.mxu0 0
      %5245 = vmatmul.mubr.bf16.gmra.mrb[0].mxu0 %v5095
      %v5246 = vpop.f32.mrb[0].mxu0
      %v5247 = vadd.f32 %v5050, %v5246
      %v5248 = vpop.f32.mrb[0].mxu0
      %v5249 = vpop.f32.mrb[0].mxu0
      %v5250 = vadd.f32 %v5050, %v5249
      %v5251 = vpop.f32.mrb[0].mxu0
      %5252 = vmatprep.mubr.bf16.mxu0 0
      %5253 = vmatmul.mubr.bf16.gmra.mrb[0].mxu0 %v5098
      %v5254 = vpop.f32.mrb[0].mxu0
      %v5255 = vadd.f32 %v5050, %v5254
      %v5256 = vpop.f32.mrb[0].mxu0
      %v5257 = vpop.f32.mrb[0].mxu0
      %v5258 = vadd.f32 %v5050, %v5257
      %v5259 = vpop.f32.mrb[0].mxu0
      %5260 = vdwg.mxu0
      %v5261 = vsub.f32 0.0, %v5135
      %v5262 = vsub.f32 0.0, %v5138
      %v5263 = vsub.f32 0.0, %v5143
      %v5264 = vsub.f32 0.0, %v5146
      %v5265 = vsub.f32 0.0, %v5151
      %v5266 = vsub.f32 0.0, %v5154
      %v5267 = vsub.f32 0.0, %v5159
      %v5268 = vsub.f32 0.0, %v5162
      %v5269 = vsub.f32 0.0, %v5167
      %v5270 = vsub.f32 0.0, %v5170
      %v5271 = vsub.f32 0.0, %v5175
      %v5272 = vsub.f32 0.0, %v5178
      %v5273 = vsub.f32 0.0, %v5183
      %v5274 = vsub.f32 0.0, %v5186
      %v5275 = vsub.f32 0.0, %v5191
      %v5276 = vsub.f32 0.0, %v5194
      %v5277 = vsub.f32 0.0, %v5199
      %v5278 = vsub.f32 0.0, %v5202
      %v5279 = vsub.f32 0.0, %v5207
      %v5280 = vsub.f32 0.0, %v5210
      %v5281 = vsub.f32 0.0, %v5215
      %v5282 = vsub.f32 0.0, %v5218
      %v5283 = vsub.f32 0.0, %v5223
      %v5284 = vsub.f32 0.0, %v5226
      %v5285 = vsub.f32 0.0, %v5231
      %v5286 = vsub.f32 0.0, %v5234
      %v5287 = vsub.f32 0.0, %v5239
      %v5288 = vsub.f32 0.0, %v5242
      %v5289 = vsub.f32 0.0, %v5247
      %v5290 = vsub.f32 0.0, %v5250
      %v5291 = vsub.f32 0.0, %v5255
      %v5292 = vsub.f32 0.0, %v5258
      %v5293 = vmul.f32 %v5261, 1.442695
      %v5294 = vpow.pop %v5293
      %v5295 = vmul.f32 %v5262, 1.442695
      %v5296 = vpow.pop %v5295
      %v5297 = vmul.f32 %v5263, 1.442695
      %v5298 = vpow.pop %v5297
      %v5299 = vmul.f32 %v5264, 1.442695
      %v5300 = vpow.pop %v5299
      %v5301 = vmul.f32 %v5265, 1.442695
      %v5302 = vpow.pop %v5301
      %v5303 = vmul.f32 %v5266, 1.442695
      %v5304 = vpow.pop %v5303
      %v5305 = vmul.f32 %v5267, 1.442695
      %v5306 = vpow.pop %v5305
      %v5307 = vmul.f32 %v5268, 1.442695
      %v5308 = vpow.pop %v5307
      %v5309 = vmul.f32 %v5269, 1.442695
      %v5310 = vpow.pop %v5309
      %v5311 = vmul.f32 %v5270, 1.442695
      %v5312 = vpow.pop %v5311
      %v5313 = vmul.f32 %v5271, 1.442695
      %v5314 = vpow.pop %v5313
      %v5315 = vmul.f32 %v5272, 1.442695
      %v5316 = vpow.pop %v5315
      %v5317 = vmul.f32 %v5273, 1.442695
      %v5318 = vpow.pop %v5317
      %v5319 = vmul.f32 %v5274, 1.442695
      %v5320 = vpow.pop %v5319
      %v5321 = vmul.f32 %v5275, 1.442695
      %v5322 = vpow.pop %v5321
      %v5323 = vmul.f32 %v5276, 1.442695
      %v5324 = vpow.pop %v5323
      %v5325 = vmul.f32 %v5277, 1.442695
      %v5326 = vpow.pop %v5325
      %v5327 = vmul.f32 %v5278, 1.442695
      %v5328 = vpow.pop %v5327
      %v5329 = vmul.f32 %v5279, 1.442695
      %v5330 = vpow.pop %v5329
      %v5331 = vmul.f32 %v5280, 1.442695
      %v5332 = vpow.pop %v5331
      %v5333 = vmul.f32 %v5281, 1.442695
      %v5334 = vpow.pop %v5333
      %v5335 = vmul.f32 %v5282, 1.442695
      %v5336 = vpow.pop %v5335
      %v5337 = vmul.f32 %v5283, 1.442695
      %v5338 = vpow.pop %v5337
      %v5339 = vmul.f32 %v5284, 1.442695
      %v5340 = vpow.pop %v5339
      %v5341 = vmul.f32 %v5285, 1.442695
      %v5342 = vpow.pop %v5341
      %v5343 = vmul.f32 %v5286, 1.442695
      %v5344 = vpow.pop %v5343
      %v5345 = vmul.f32 %v5287, 1.442695
      %v5346 = vpow.pop %v5345
      %v5347 = vmul.f32 %v5288, 1.442695
      %v5348 = vpow.pop %v5347
      %v5349 = vmul.f32 %v5289, 1.442695
      %v5350 = vpow.pop %v5349
      %v5351 = vmul.f32 %v5290, 1.442695
      %v5352 = vpow.pop %v5351
      %v5353 = vmul.f32 %v5291, 1.442695
      %v5354 = vpow.pop %v5353
      %v5355 = vmul.f32 %v5292, 1.442695
      %v5356 = vpow.pop %v5355
      %v5357 = vadd.f32 %v5294, 1.0
      %v5358 = vadd.f32 %v5296, 1.0
      %v5359 = vadd.f32 %v5298, 1.0
      %v5360 = vadd.f32 %v5300, 1.0
      %v5361 = vadd.f32 %v5302, 1.0
      %v5362 = vadd.f32 %v5304, 1.0
      %v5363 = vadd.f32 %v5306, 1.0
      %v5364 = vadd.f32 %v5308, 1.0
      %v5365 = vadd.f32 %v5310, 1.0
      %v5366 = vadd.f32 %v5312, 1.0
      %v5367 = vadd.f32 %v5314, 1.0
      %v5368 = vadd.f32 %v5316, 1.0
      %v5369 = vadd.f32 %v5318, 1.0
      %v5370 = vadd.f32 %v5320, 1.0
      %v5371 = vadd.f32 %v5322, 1.0
      %v5372 = vadd.f32 %v5324, 1.0
      %v5373 = vadd.f32 %v5326, 1.0
      %v5374 = vadd.f32 %v5328, 1.0
      %v5375 = vadd.f32 %v5330, 1.0
      %v5376 = vadd.f32 %v5332, 1.0
      %v5377 = vadd.f32 %v5334, 1.0
      %v5378 = vadd.f32 %v5336, 1.0
      %v5379 = vadd.f32 %v5338, 1.0
      %v5380 = vadd.f32 %v5340, 1.0
      %v5381 = vadd.f32 %v5342, 1.0
      %v5382 = vadd.f32 %v5344, 1.0
      %v5383 = vadd.f32 %v5346, 1.0
      %v5384 = vadd.f32 %v5348, 1.0
      %v5385 = vadd.f32 %v5350, 1.0
      %v5386 = vadd.f32 %v5352, 1.0
      %v5387 = vadd.f32 %v5354, 1.0
      %v5388 = vadd.f32 %v5356, 1.0
      %v5389 = vrcp.pop %v5357
      %v5390 = vmul.f32 1.0, %v5389
      %v5391 = vrcp.pop %v5358
      %v5392 = vmul.f32 1.0, %v5391
      %v5393 = vrcp.pop %v5359
      %v5394 = vmul.f32 1.0, %v5393
      %v5395 = vrcp.pop %v5360
      %v5396 = vmul.f32 1.0, %v5395
      %v5397 = vrcp.pop %v5361
      %v5398 = vmul.f32 1.0, %v5397
      %v5399 = vrcp.pop %v5362
      %v5400 = vmul.f32 1.0, %v5399
      %v5401 = vrcp.pop %v5363
      %v5402 = vmul.f32 1.0, %v5401
      %v5403 = vrcp.pop %v5364
      %v5404 = vmul.f32 1.0, %v5403
      %v5405 = vrcp.pop %v5365
      %v5406 = vmul.f32 1.0, %v5405
      %v5407 = vrcp.pop %v5366
      %v5408 = vmul.f32 1.0, %v5407
      %v5409 = vrcp.pop %v5367
      %v5410 = vmul.f32 1.0, %v5409
      %v5411 = vrcp.pop %v5368
      %v5412 = vmul.f32 1.0, %v5411
      %v5413 = vrcp.pop %v5369
      %v5414 = vmul.f32 1.0, %v5413
      %v5415 = vrcp.pop %v5370
      %v5416 = vmul.f32 1.0, %v5415
      %v5417 = vrcp.pop %v5371
      %v5418 = vmul.f32 1.0, %v5417
      %v5419 = vrcp.pop %v5372
      %v5420 = vmul.f32 1.0, %v5419
      %v5421 = vrcp.pop %v5373
      %v5422 = vmul.f32 1.0, %v5421
      %v5423 = vrcp.pop %v5374
      %v5424 = vmul.f32 1.0, %v5423
      %v5425 = vrcp.pop %v5375
      %v5426 = vmul.f32 1.0, %v5425
      %v5427 = vrcp.pop %v5376
      %v5428 = vmul.f32 1.0, %v5427
      %v5429 = vrcp.pop %v5377
      %v5430 = vmul.f32 1.0, %v5429
      %v5431 = vrcp.pop %v5378
      %v5432 = vmul.f32 1.0, %v5431
      %v5433 = vrcp.pop %v5379
      %v5434 = vmul.f32 1.0, %v5433
      %v5435 = vrcp.pop %v5380
      %v5436 = vmul.f32 1.0, %v5435
      %v5437 = vrcp.pop %v5381
      %v5438 = vmul.f32 1.0, %v5437
      %v5439 = vrcp.pop %v5382
      %v5440 = vmul.f32 1.0, %v5439
      %v5441 = vrcp.pop %v5383
      %v5442 = vmul.f32 1.0, %v5441
      %v5443 = vrcp.pop %v5384
      %v5444 = vmul.f32 1.0, %v5443
      %v5445 = vrcp.pop %v5385
      %v5446 = vmul.f32 1.0, %v5445
      %v5447 = vrcp.pop %v5386
      %v5448 = vmul.f32 1.0, %v5447
      %v5449 = vrcp.pop %v5387
      %v5450 = vmul.f32 1.0, %v5449
      %v5451 = vrcp.pop %v5388
      %v5452 = vmul.f32 1.0, %v5451
      %v5453 = vmul.f32 %v5135, %v5390
      %v5454 = vmul.f32 %v5138, %v5392
      %v5455 = vmul.f32 %v5143, %v5394
      %v5456 = vmul.f32 %v5146, %v5396
      %v5457 = vmul.f32 %v5151, %v5398
      %v5458 = vmul.f32 %v5154, %v5400
      %v5459 = vmul.f32 %v5159, %v5402
      %v5460 = vmul.f32 %v5162, %v5404
      %v5461 = vmul.f32 %v5167, %v5406
      %v5462 = vmul.f32 %v5170, %v5408
      %v5463 = vmul.f32 %v5175, %v5410
      %v5464 = vmul.f32 %v5178, %v5412
      %v5465 = vmul.f32 %v5183, %v5414
      %v5466 = vmul.f32 %v5186, %v5416
      %v5467 = vmul.f32 %v5191, %v5418
      %v5468 = vmul.f32 %v5194, %v5420
      %v5469 = vmul.f32 %v5199, %v5422
      %v5470 = vmul.f32 %v5202, %v5424
      %v5471 = vmul.f32 %v5207, %v5426
      %v5472 = vmul.f32 %v5210, %v5428
      %v5473 = vmul.f32 %v5215, %v5430
      %v5474 = vmul.f32 %v5218, %v5432
      %v5475 = vmul.f32 %v5223, %v5434
      %v5476 = vmul.f32 %v5226, %v5436
      %v5477 = vmul.f32 %v5231, %v5438
      %v5478 = vmul.f32 %v5234, %v5440
      %v5479 = vmul.f32 %v5239, %v5442
      %v5480 = vmul.f32 %v5242, %v5444
      %v5481 = vmul.f32 %v5247, %v5446
      %v5482 = vmul.f32 %v5250, %v5448
      %v5483 = vmul.f32 %v5255, %v5450
      %v5484 = vmul.f32 %v5258, %v5452
      %v5485 = vld [vmem:[%s14] sm:$0xff]
      %v5486 = vld [vmem:[%s14 + $0x8] sm:$0xff]
      %v5487 = vld [vmem:[%s14 + $0x10] sm:$0xff]
      %v5488 = vld [vmem:[%s14 + $0x18] sm:$0xff]
      %v5489 = vld [vmem:[%s14 + $0x20] sm:$0xff]
      %v5490 = vld [vmem:[%s14 + $0x28] sm:$0xff]
      %v5491 = vld [vmem:[%s14 + $0x30] sm:$0xff]
      %v5492 = vld [vmem:[%s14 + $0x38] sm:$0xff]
      %v5493 = vld [vmem:[%s14 + $0x40] sm:$0xff]
      %v5494 = vld [vmem:[%s14 + $0x48] sm:$0xff]
      %v5495 = vld [vmem:[%s14 + $0x50] sm:$0xff]
      %v5496 = vld [vmem:[%s14 + $0x58] sm:$0xff]
      %v5497 = vld [vmem:[%s14 + $0x60] sm:$0xff]
      %v5498 = vld [vmem:[%s14 + $0x68] sm:$0xff]
      %v5499 = vld [vmem:[%s14 + $0x70] sm:$0xff]
      %v5500 = vld [vmem:[%s14 + $0x78] sm:$0xff]
      %v5501 = vpack.c.bf16 %v5454, %v5453
      %v5502 = vpack.c.bf16 %v5456, %v5455
      %v5503 = vpack.c.bf16 %v5458, %v5457
      %v5504 = vpack.c.bf16 %v5460, %v5459
      %v5505 = vpack.c.bf16 %v5462, %v5461
      %v5506 = vpack.c.bf16 %v5464, %v5463
      %v5507 = vpack.c.bf16 %v5466, %v5465
      %v5508 = vpack.c.bf16 %v5468, %v5467
      %v5509 = vpack.c.bf16 %v5470, %v5469
      %v5510 = vpack.c.bf16 %v5472, %v5471
      %v5511 = vpack.c.bf16 %v5474, %v5473
      %v5512 = vpack.c.bf16 %v5476, %v5475
      %v5513 = vpack.c.bf16 %v5478, %v5477
      %v5514 = vpack.c.bf16 %v5480, %v5479
      %v5515 = vpack.c.bf16 %v5482, %v5481
      %v5516 = vpack.c.bf16 %v5484, %v5483
      %v5517 = vpack.c.bf16 %v5486, %v5485
      %v5518 = vpack.c.bf16 %v5488, %v5487
      %v5519 = vpack.c.bf16 %v5490, %v5489
      %v5520 = vpack.c.bf16 %v5492, %v5491
      %v5521 = vpack.c.bf16 %v5494, %v5493
      %v5522 = vpack.c.bf16 %v5496, %v5495
      %v5523 = vpack.c.bf16 %v5498, %v5497
      %v5524 = vpack.c.bf16 %v5500, %v5499
      %5525 = vmatprep.subr.bf16.mxu0 0
      %5526 = vmatpush1.bf16.msra.mxu0 %v5517
      %5527 = vmatprep.subr.bf16.mxu0 0
      %5528 = vmatpush1.bf16.msra.mxu0 %v5518
      %5529 = vmatprep.subr.bf16.mxu0 0
      %5530 = vmatpush1.bf16.msra.mxu0 %v5519
      %5531 = vmatprep.subr.bf16.mxu0 0
      %5532 = vmatpush1.bf16.msra.mxu0 %v5520
      %5533 = vmatprep.subr.bf16.mxu0 0
      %5534 = vmatpush1.bf16.msra.mxu0 %v5521
      %5535 = vmatprep.subr.bf16.mxu0 0
      %5536 = vmatpush1.bf16.msra.mxu0 %v5522
      %5537 = vmatprep.subr.bf16.mxu0 0
      %5538 = vmatpush1.bf16.msra.mxu0 %v5523
      %5539 = vmatprep.subr.bf16.mxu0 0
      %5540 = vmatpush1.bf16.msra.mxu0 %v5524
      %5541 = vmatprep.subr.bf16.mxu0 0
      %5542 = vmatpush1.bf16.msra.mxu0 0
      %5543 = vmatprep.subr.bf16.mxu0 0
      %5544 = vmatpush1.bf16.msra.mxu0 0
      %5545 = vmatprep.subr.bf16.mxu0 0
      %5546 = vmatpush1.bf16.msra.mxu0 0
      %5547 = vmatprep.subr.bf16.mxu0 0
      %5548 = vmatpush1.bf16.msra.mxu0 0
      %5549 = vmatprep.subr.bf16.mxu0 0
      %5550 = vmatpush1.bf16.msra.mxu0 0
      %5551 = vmatprep.subr.bf16.mxu0 0
      %5552 = vmatpush1.bf16.msra.mxu0 0
      %5553 = vmatprep.subr.bf16.mxu0 0
      %5554 = vmatpush1.bf16.msra.mxu0 0
      %5555 = vmatprep.subr.bf16.mxu0 0
      %5556 = vmatpush1.bf16.msra.mxu0 0
      %5557 = vmatprep.mubr.bf16.mxu0 0
      %5558 = vmatmul.mubr.bf16.gmra.mrb[0].mxu0 %v5501
      %v5559 = vpop.f32.mrb[0].mxu0
      %v5560 = vadd.f32 0.0, %v5559
      %v5561 = vpop.f32.mrb[0].mxu0
      %v5562 = vpop.f32.mrb[0].mxu0
      %v5563 = vadd.f32 0.0, %v5562
      %v5564 = vpop.f32.mrb[0].mxu0
      %5565 = vmatprep.mubr.bf16.mxu0 0
      %5566 = vmatmul.mubr.bf16.gmra.mrb[0].mxu0 %v5502
      %v5567 = vpop.f32.mrb[0].mxu0
      %v5568 = vadd.f32 0.0, %v5567
      %v5569 = vpop.f32.mrb[0].mxu0
      %v5570 = vpop.f32.mrb[0].mxu0
      %v5571 = vadd.f32 0.0, %v5570
      %v5572 = vpop.f32.mrb[0].mxu0
      %5573 = vmatprep.mubr.bf16.mxu0 0
      %5574 = vmatmul.mubr.bf16.gmra.mrb[0].mxu0 %v5503
      %v5575 = vpop.f32.mrb[0].mxu0
      %v5576 = vadd.f32 0.0, %v5575
      %v5577 = vpop.f32.mrb[0].mxu0
      %v5578 = vpop.f32.mrb[0].mxu0
      %v5579 = vadd.f32 0.0, %v5578
      %v5580 = vpop.f32.mrb[0].mxu0
      %5581 = vmatprep.mubr.bf16.mxu0 0
      %5582 = vmatmul.mubr.bf16.gmra.mrb[0].mxu0 %v5504
      %v5583 = vpop.f32.mrb[0].mxu0
      %v5584 = vadd.f32 0.0, %v5583
      %v5585 = vpop.f32.mrb[0].mxu0
      %v5586 = vpop.f32.mrb[0].mxu0
      %v5587 = vadd.f32 0.0, %v5586
      %v5588 = vpop.f32.mrb[0].mxu0
      %5589 = vmatprep.mubr.bf16.mxu0 0
      %5590 = vmatmul.mubr.bf16.gmra.mrb[0].mxu0 %v5505
      %v5591 = vpop.f32.mrb[0].mxu0
      %v5592 = vadd.f32 0.0, %v5591
      %v5593 = vpop.f32.mrb[0].mxu0
      %v5594 = vpop.f32.mrb[0].mxu0
      %v5595 = vadd.f32 0.0, %v5594
      %v5596 = vpop.f32.mrb[0].mxu0
      %5597 = vmatprep.mubr.bf16.mxu0 0
      %5598 = vmatmul.mubr.bf16.gmra.mrb[0].mxu0 %v5506
      %v5599 = vpop.f32.mrb[0].mxu0
      %v5600 = vadd.f32 0.0, %v5599
      %v5601 = vpop.f32.mrb[0].mxu0
      %v5602 = vpop.f32.mrb[0].mxu0
      %v5603 = vadd.f32 0.0, %v5602
      %v5604 = vpop.f32.mrb[0].mxu0
      %5605 = vmatprep.mubr.bf16.mxu0 0
      %5606 = vmatmul.mubr.bf16.gmra.mrb[0].mxu0 %v5507
      %v5607 = vpop.f32.mrb[0].mxu0
      %v5608 = vadd.f32 0.0, %v5607
      %v5609 = vpop.f32.mrb[0].mxu0
      %v5610 = vpop.f32.mrb[0].mxu0
      %v5611 = vadd.f32 0.0, %v5610
      %v5612 = vpop.f32.mrb[0].mxu0
      %5613 = vmatprep.mubr.bf16.mxu0 0
      %5614 = vmatmul.mubr.bf16.gmra.mrb[0].mxu0 %v5508
      %v5615 = vpop.f32.mrb[0].mxu0
      %v5616 = vadd.f32 0.0, %v5615
      %v5617 = vpop.f32.mrb[0].mxu0
      %v5618 = vpop.f32.mrb[0].mxu0
      %v5619 = vadd.f32 0.0, %v5618
      %v5620 = vpop.f32.mrb[0].mxu0
      %5621 = vmatprep.mubr.bf16.mxu0 0
      %5622 = vmatmul.mubr.bf16.gmra.mrb[0].mxu0 %v5509
      %v5623 = vpop.f32.mrb[0].mxu0
      %v5624 = vadd.f32 0.0, %v5623
      %v5625 = vpop.f32.mrb[0].mxu0
      %v5626 = vpop.f32.mrb[0].mxu0
      %v5627 = vadd.f32 0.0, %v5626
      %v5628 = vpop.f32.mrb[0].mxu0
      %5629 = vmatprep.mubr.bf16.mxu0 0
      %5630 = vmatmul.mubr.bf16.gmra.mrb[0].mxu0 %v5510
      %v5631 = vpop.f32.mrb[0].mxu0
      %v5632 = vadd.f32 0.0, %v5631
      %v5633 = vpop.f32.mrb[0].mxu0
      %v5634 = vpop.f32.mrb[0].mxu0
      %v5635 = vadd.f32 0.0, %v5634
      %v5636 = vpop.f32.mrb[0].mxu0
      %5637 = vmatprep.mubr.bf16.mxu0 0
      %5638 = vmatmul.mubr.bf16.gmra.mrb[0].mxu0 %v5511
      %v5639 = vpop.f32.mrb[0].mxu0
      %v5640 = vadd.f32 0.0, %v5639
      %v5641 = vpop.f32.mrb[0].mxu0
      %v5642 = vpop.f32.mrb[0].mxu0
      %v5643 = vadd.f32 0.0, %v5642
      %v5644 = vpop.f32.mrb[0].mxu0
      %5645 = vmatprep.mubr.bf16.mxu0 0
      %5646 = vmatmul.mubr.bf16.gmra.mrb[0].mxu0 %v5512
      %v5647 = vpop.f32.mrb[0].mxu0
      %v5648 = vadd.f32 0.0, %v5647
      %v5649 = vpop.f32.mrb[0].mxu0
      %v5650 = vpop.f32.mrb[0].mxu0
      %v5651 = vadd.f32 0.0, %v5650
      %v5652 = vpop.f32.mrb[0].mxu0
      %5653 = vmatprep.mubr.bf16.mxu0 0
      %5654 = vmatmul.mubr.bf16.gmra.mrb[0].mxu0 %v5513
      %v5655 = vpop.f32.mrb[0].mxu0
      %v5656 = vadd.f32 0.0, %v5655
      %v5657 = vpop.f32.mrb[0].mxu0
      %v5658 = vpop.f32.mrb[0].mxu0
      %v5659 = vadd.f32 0.0, %v5658
      %v5660 = vpop.f32.mrb[0].mxu0
      %5661 = vmatprep.mubr.bf16.mxu0 0
      %5662 = vmatmul.mubr.bf16.gmra.mrb[0].mxu0 %v5514
      %v5663 = vpop.f32.mrb[0].mxu0
      %v5664 = vadd.f32 0.0, %v5663
      %v5665 = vpop.f32.mrb[0].mxu0
      %v5666 = vpop.f32.mrb[0].mxu0
      %v5667 = vadd.f32 0.0, %v5666
      %v5668 = vpop.f32.mrb[0].mxu0
      %5669 = vmatprep.mubr.bf16.mxu0 0
      %5670 = vmatmul.mubr.bf16.gmra.mrb[0].mxu0 %v5515
      %v5671 = vpop.f32.mrb[0].mxu0
      %v5672 = vadd.f32 0.0, %v5671
      %v5673 = vpop.f32.mrb[0].mxu0
      %v5674 = vpop.f32.mrb[0].mxu0
      %v5675 = vadd.f32 0.0, %v5674
      %v5676 = vpop.f32.mrb[0].mxu0
      %5677 = vmatprep.mubr.bf16.mxu0 0
      %5678 = vmatmul.mubr.bf16.gmra.mrb[0].mxu0 %v5516
      %v5679 = vpop.f32.mrb[0].mxu0
      %v5680 = vadd.f32 0.0, %v5679
      %v5681 = vpop.f32.mrb[0].mxu0
      %v5682 = vpop.f32.mrb[0].mxu0
      %v5683 = vadd.f32 0.0, %v5682
      %v5684 = vpop.f32.mrb[0].mxu0
      %5685 = vdwg.mxu0
      %v5686 = vadd.f32 %v4497, %v5560
      %v5687 = vadd.f32 %v4498, %v5563
      %v5688 = vadd.f32 %v4499, %v5568
      %v5689 = vadd.f32 %v4500, %v5571
      %v5690 = vadd.f32 %v4501, %v5576
      %v5691 = vadd.f32 %v4502, %v5579
      %v5692 = vadd.f32 %v4503, %v5584
      %v5693 = vadd.f32 %v4504, %v5587
      %v5694 = vadd.f32 %v4505, %v5592
      %v5695 = vadd.f32 %v4506, %v5595
      %v5696 = vadd.f32 %v4507, %v5600
      %v5697 = vadd.f32 %v4508, %v5603
      %v5698 = vadd.f32 %v4509, %v5608
      %v5699 = vadd.f32 %v4510, %v5611
      %v5700 = vadd.f32 %v4511, %v5616
      %v5701 = vadd.f32 %v4512, %v5619
      %v5702 = vadd.f32 %v4513, %v5624
      %v5703 = vadd.f32 %v4514, %v5627
      %v5704 = vadd.f32 %v4515, %v5632
      %v5705 = vadd.f32 %v4516, %v5635
      %v5706 = vadd.f32 %v4517, %v5640
      %v5707 = vadd.f32 %v4518, %v5643
      %v5708 = vadd.f32 %v4519, %v5648
      %v5709 = vadd.f32 %v4520, %v5651
      %v5710 = vadd.f32 %v4521, %v5656
      %v5711 = vadd.f32 %v4522, %v5659
      %v5712 = vadd.f32 %v4523, %v5664
      %v5713 = vadd.f32 %v4524, %v5667
      %v5714 = vadd.f32 %v4525, %v5672
      %v5715 = vadd.f32 %v4526, %v5675
      %v5716 = vadd.f32 %v4527, %v5680
      %v5717 = vadd.f32 %v4528, %v5683
      %v5718 = vld [vmem:[%s15] sm:$0x1]
      %v5720 = vlaneseq
      %v5721 = vshrl.u32 %v5720, 7
      %v5722 = vsub.s32 0, %v5721
      %v5723 = vrot.slane %v5718, %v5722
      %v5725 = vadd.f32 %v5686, %v5723
      %v5726 = vadd.f32 %v5687, %v5723
      %v5727 = vadd.f32 %v5688, %v5723
      %v5728 = vadd.f32 %v5689, %v5723
      %v5729 = vadd.f32 %v5690, %v5723
      %v5730 = vadd.f32 %v5691, %v5723
      %v5731 = vadd.f32 %v5692, %v5723
      %v5732 = vadd.f32 %v5693, %v5723
      %v5733 = vadd.f32 %v5694, %v5723
      %v5734 = vadd.f32 %v5695, %v5723
      %v5735 = vadd.f32 %v5696, %v5723
      %v5736 = vadd.f32 %v5697, %v5723
      %v5737 = vadd.f32 %v5698, %v5723
      %v5738 = vadd.f32 %v5699, %v5723
      %v5739 = vadd.f32 %v5700, %v5723
      %v5740 = vadd.f32 %v5701, %v5723
      %v5741 = vadd.f32 %v5702, %v5723
      %v5742 = vadd.f32 %v5703, %v5723
      %v5743 = vadd.f32 %v5704, %v5723
      %v5744 = vadd.f32 %v5705, %v5723
      %v5745 = vadd.f32 %v5706, %v5723
      %v5746 = vadd.f32 %v5707, %v5723
      %v5747 = vadd.f32 %v5708, %v5723
      %v5748 = vadd.f32 %v5709, %v5723
      %v5749 = vadd.f32 %v5710, %v5723
      %v5750 = vadd.f32 %v5711, %v5723
      %v5751 = vadd.f32 %v5712, %v5723
      %v5752 = vadd.f32 %v5713, %v5723
      %v5753 = vadd.f32 %v5714, %v5723
      %v5754 = vadd.f32 %v5715, %v5723
      %v5755 = vadd.f32 %v5716, %v5723
      %v5756 = vadd.f32 %v5717, %v5723
      %5757 = vst.msk [vmem:[%s528] sm:$0xff] %vm1026, %v5725
      %5758 = vst.msk [vmem:[%s528 + $0x8] sm:$0xff] %vm1026, %v5726
      %5759 = vst.msk [vmem:[%s528 + $0x10] sm:$0xff] %vm1026, %v5727
      %5760 = vst.msk [vmem:[%s528 + $0x18] sm:$0xff] %vm1026, %v5728
      %5761 = vst.msk [vmem:[%s528 + $0x20] sm:$0xff] %vm1026, %v5729
      %5762 = vst.msk [vmem:[%s528 + $0x28] sm:$0xff] %vm1026, %v5730
      %5763 = vst.msk [vmem:[%s528 + $0x30] sm:$0xff] %vm1026, %v5731
      %5764 = vst.msk [vmem:[%s528 + $0x38] sm:$0xff] %vm1026, %v5732
      %5765 = vst.msk [vmem:[%s528 + $0x40] sm:$0xff] %vm1026, %v5733
      %5766 = vst.msk [vmem:[%s528 + $0x48] sm:$0xff] %vm1026, %v5734
      %5767 = vst.msk [vmem:[%s528 + $0x50] sm:$0xff] %vm1026, %v5735
      %5768 = vst.msk [vmem:[%s528 + $0x58] sm:$0xff] %vm1026, %v5736
      %5769 = vst.msk [vmem:[%s528 + $0x60] sm:$0xff] %vm1026, %v5737
      %5770 = vst.msk [vmem:[%s528 + $0x68] sm:$0xff] %vm1026, %v5738
      %5771 = vst.msk [vmem:[%s528 + $0x70] sm:$0xff] %vm1026, %v5739
      %5772 = vst.msk [vmem:[%s528 + $0x78] sm:$0xff] %vm1026, %v5740
      %5773 = vst.msk [vmem:[%s528 + $0x80] sm:$0xff] %vm1026, %v5741
      %5774 = vst.msk [vmem:[%s528 + $0x88] sm:$0xff] %vm1026, %v5742
      %5775 = vst.msk [vmem:[%s528 + $0x90] sm:$0xff] %vm1026, %v5743
      %5776 = vst.msk [vmem:[%s528 + $0x98] sm:$0xff] %vm1026, %v5744
      %5777 = vst.msk [vmem:[%s528 + $0xa0] sm:$0xff] %vm1026, %v5745
      %5778 = vst.msk [vmem:[%s528 + $0xa8] sm:$0xff] %vm1026, %v5746
      %5779 = vst.msk [vmem:[%s528 + $0xb0] sm:$0xff] %vm1026, %v5747
      %5780 = vst.msk [vmem:[%s528 + $0xb8] sm:$0xff] %vm1026, %v5748
      %5781 = vst.msk [vmem:[%s528 + $0xc0] sm:$0xff] %vm1026, %v5749
      %5782 = vst.msk [vmem:[%s528 + $0xc8] sm:$0xff] %vm1026, %v5750
      %5783 = vst.msk [vmem:[%s528 + $0xd0] sm:$0xff] %vm1026, %v5751
      %5784 = vst.msk [vmem:[%s528 + $0xd8] sm:$0xff] %vm1026, %v5752
      %5785 = vst.msk [vmem:[%s528 + $0xe0] sm:$0xff] %vm1026, %v5753
      %5786 = vst.msk [vmem:[%s528 + $0xe8] sm:$0xff] %vm1026, %v5754
      %5787 = vst.msk [vmem:[%s528 + $0xf0] sm:$0xff] %vm1026, %v5755
      %5788 = vst.msk [vmem:[%s528 + $0xf8] sm:$0xff] %vm1026, %v5756
      %s5789 = smul.u32 4, %s27
      %p5790 = scmp.lt.s32.totalorder %s5789, 7
      %s5791 = scalar_select %p5790, %s5789, 7
      %s5792 = smul.addr %s5791, 8
      %s5793 = smul.addr %s5792, 8
      %s5794 = scalar_lea.vmem %s16, %s5793
      // Predicated region
      $region85: #{_lambda_.2} parent=83 // pred_check
        %p5795 = pneg %p386
      $region86: #{_lambda_.2} parent=83 // pred_check_branch
        %5797 = sbr.rel (%p5795) target = $region88
      $region87: #{_lambda_.2} parent=83 // pred_region
        %s5798 = smul.u32 4, %s27
      $region88: #{_lambda_.2} parent=83 // pred_fallthru
        _
    $region84: #{_lambda_.2} parent=5 // pred_fallthru
      _
    %p5799 = scmp.le.s32.totalorder 2, %s22
    // Predicated region
    $region89: #{_lambda_.2} parent=5 // pred_check
      %p5800 = pneg %p5799
    $region90: #{_lambda_.2} parent=5 // pred_check_branch
      %5802 = sbr.rel (%p5800) target = $region92
    $region91: #{_lambda_.2} parent=5 // pred_region
      %s5803 = ssub.s32 %s22, 2
      // Predicated region
      $region93: #{_lambda_.2} parent=91 // pred_check
        %p5804 = pneg %p392
      $region94: #{_lambda_.2} parent=91 // pred_check_branch
        %5806 = sbr.rel (%p5804) target = $region96
      $region95: #{_lambda_.2} parent=91 // pred_region
        %s5807 = smul.u32 4, %s28
        %p5808 = scmp.lt.s32.totalorder %s5807, 7
        %s5809 = scalar_select %p5808, %s5807, 7
        %s5810 = smul.addr %s5809, 8
        %s5811 = smul.addr %s5810, 8
        %s5812 = scalar_lea.vmem %s16, %s5811
      $region96: #{_lambda_.2} parent=91 // pred_fallthru
        _
    $region92: #{_lambda_.2} parent=5 // pred_fallthru
      _
  $region6: #{_lambda_.2} parent=0 // loop_footer
    %s26 = sadd.s32 1, %s22
  $region7: #{_lambda_.2} parent=0 // loop_footer_branch
    %21 = sbr.rel target = $region3
  $region8: #{_lambda_.2} parent=0 // loop_exit
    _

</llo_original>
